<compile_context>
chip_gen: v5e
topology: v5e:2x2
jax: 0.10.0
libtpu: 0.0.40
codegen_flags: <defaults>
</compile_context>

<pallas_src>
import functools
import math

import jax
import jax.numpy as jnp
from jax.experimental import pallas as pl
from jax.experimental.pallas import tpu as pltpu

BN_EPS = 1e-5
BN_SCALE = 1.0 / math.sqrt(1.0 + BN_EPS)     # eval-mode BatchNorm fold

ROW_TILE = 4096                               # rows per grid step for the gated kernel
VMEM_LIMIT = 32 * 1024 * 1024                 # safe scoped-VMEM limit on v5e/v6e/v7x
ATTN_VMEM_BUDGET = 12 * 1024 * 1024           # target per-step working set (spatial)


def _compiler_params():
    return pltpu.CompilerParams(dimension_semantics=("parallel",),
                                vmem_limit_bytes=VMEM_LIMIT)


# ----------------------------- Pallas kernels -----------------------------

def _spatial_attn_kernel(num_heads, d, scale,
                         x_ref, ste_ref, wx_ref, ws_ref, b_ref, wo_ref, bo_ref,
                         o_ref):
    """Fused spatial branch for a block of (batch,step) groups.

    relu(BN(cat(X,STE)@Wqkv)) -> per-head softmax attention over vertices ->
    relu(BN(att@Wo)).  bf16 MXU operands, f32 accumulation & softmax.
    """
    D = num_heads * d
    gb, N, cx = x_ref.shape
    cs = ste_ref.shape[-1]

    x = x_ref[...].reshape(gb * N, cx).astype(jnp.bfloat16)
    st = ste_ref[...].reshape(gb * N, cs).astype(jnp.bfloat16)
    qkv = jnp.dot(x, wx_ref[...], preferred_element_type=jnp.float32)
    qkv = qkv + jnp.dot(st, ws_ref[...], preferred_element_type=jnp.float32)
    qkv = jnp.maximum(qkv + b_ref[...], 0.0).reshape(gb, N, 3 * D)     # f32

    heads = []
    for h in range(num_heads):
        q = qkv[:, :, h * d:(h + 1) * d].astype(jnp.bfloat16)
        k = qkv[:, :, D + h * d:D + (h + 1) * d].astype(jnp.bfloat16)
        v = qkv[:, :, 2 * D + h * d:2 * D + (h + 1) * d].astype(jnp.bfloat16)
        sc = jnp.einsum('gnd,gmd->gnm', q, k,
                        preferred_element_type=jnp.float32) * scale
        sc = sc - jnp.max(sc, axis=-1, keepdims=True)
        p = jnp.exp(sc)
        p = p * pl.reciprocal(jnp.sum(p, axis=-1, keepdims=True))       # exact
        heads.append(jnp.einsum('gnm,gmd->gnd', p.astype(jnp.bfloat16), v,
                                preferred_element_type=jnp.float32))
    att = jnp.concatenate(heads, axis=-1).reshape(gb * N, D).astype(jnp.bfloat16)

    out = jnp.dot(att, wo_ref[...], preferred_element_type=jnp.float32) + bo_ref[...]
    out = jnp.maximum(out, 0.0)
    o_ref[...] = out.reshape(gb, N, D).astype(o_ref.dtype)


def _temporal_attn_kernel(num_heads, d, scale,
                          x_ref, ste_ref, wx_ref, ws_ref, b_ref, wo_ref, bo_ref,
                          o_ref):
    """Fused temporal branch for one batch element (attention over the step axis).

    The T<->N reorder happens in VMEM via pltpu.einshape, so no host transpose.
    """
    D = num_heads * d
    _, T, N, cx = x_ref.shape
    cs = ste_ref.shape[-1]

    x = x_ref[0].reshape(T * N, cx).astype(jnp.bfloat16)
    st = ste_ref[0].reshape(T * N, cs).astype(jnp.bfloat16)
    qkv = jnp.dot(x, wx_ref[...], preferred_element_type=jnp.float32)
    qkv = qkv + jnp.dot(st, ws_ref[...], preferred_element_type=jnp.float32)
    qkv = jnp.maximum(qkv + b_ref[...], 0.0).reshape(T, N, 3 * D)       # f32
    qkv = pltpu.einshape("tnc->ntc", qkv)                               # [N, T, 3D]

    heads = []
    for h in range(num_heads):
        q = qkv[:, :, h * d:(h + 1) * d].astype(jnp.bfloat16)
        k = qkv[:, :, D + h * d:D + (h + 1) * d].astype(jnp.bfloat16)
        v = qkv[:, :, 2 * D + h * d:2 * D + (h + 1) * d].astype(jnp.bfloat16)
        sc = jnp.einsum('ntd,nsd->nts', q, k,
                        preferred_element_type=jnp.float32) * scale
        sc = sc - jnp.max(sc, axis=-1, keepdims=True)
        p = jnp.exp(sc)
        p = p * pl.reciprocal(jnp.sum(p, axis=-1, keepdims=True))       # exact
        heads.append(jnp.einsum('nts,nsd->ntd', p.astype(jnp.bfloat16), v,
                                preferred_element_type=jnp.float32))
    att = jnp.concatenate(heads, axis=-1).reshape(N * T, D).astype(jnp.bfloat16)

    out = jnp.dot(att, wo_ref[...], preferred_element_type=jnp.float32) + bo_ref[...]
    out = jnp.maximum(out, 0.0).reshape(N, T, D)
    out = pltpu.einshape("ntc->tnc", out)                               # [T, N, D]
    o_ref[0] = out.astype(o_ref.dtype)


def _gated_kernel(x_ref, hs_ref, ht_ref, wxs_ref, wxt_ref, bxt_ref,
                  wh1_ref, bh1_ref, wh2_ref, bh2_ref, o_ref):
    """FC_xs, FC_xt, sigmoid gate, two-layer FC_h and the residual add, fused."""
    hs16 = hs_ref[...]                                                  # bf16
    ht16 = ht_ref[...]
    xs = jnp.dot(hs16, wxs_ref[...], preferred_element_type=jnp.float32)
    xt = jnp.dot(ht16, wxt_ref[...], preferred_element_type=jnp.float32) + bxt_ref[...]
    z = 1.0 / (1.0 + jnp.exp(-(xs + xt)))                               # f32 gate
    hg = z * hs16.astype(jnp.float32) + (1.0 - z) * ht16.astype(jnp.float32)
    h1 = jnp.dot(hg.astype(jnp.bfloat16), wh1_ref[...],
                 preferred_element_type=jnp.float32) + bh1_ref[...]
    h1 = jnp.maximum(h1, 0.0)
    h2 = jnp.dot(h1.astype(jnp.bfloat16), wh2_ref[...],
                 preferred_element_type=jnp.float32) + bh2_ref[...]
    o_ref[...] = x_ref[...] + h2


# ----------------------------- wrappers -----------------------------

def _row_tile(M):
    """Row tile for the gated kernel: multiple of 8, and >= 2 grid steps if possible."""
    if M <= 16:
        return M
    tm = min(ROW_TILE, M)
    if tm == M:
        tm = (M + 1) // 2
    tm -= tm % 8
    return max(tm, 8)


def spatial_attention(X, STE, ap, num_heads, d):
    """[B,T,N,D+m], [B,T,N,D] -> HS as [B*T, N, D] (bf16)."""
    B, T, N, cx = X.shape
    cs = STE.shape[-1]
    D = num_heads * d
    G = B * T
    scale = 1.0 / math.sqrt(d)

    # VMEM-budgeted groups per grid step (inputs dbl-buffered, qkv+att, per-head
    # score/prob matrices, bf16 out block dbl-buffered); keep >= 2 grid steps.
    per_group = (4 * N * (2 * (cx + cs) + 3 * D + D)
                 + 4 * num_heads * N * N
                 + 2 * 2 * N * D)
    gb = max(1, min(G, ATTN_VMEM_BUDGET // max(per_group, 1)))
    if G >= 2:
        gb = min(gb, (G + 1) // 2)

    flops = G * (2 * N * (cx + cs) * 3 * D + 4 * N * N * D + 2 * N * D * D)
    trans = G * num_heads * N * N
    bytes_acc = (4 * G * N * (cx + cs) + 2 * G * N * D
                 + 2 * ((cx + cs) * 3 * D + D * D) + 4 * 4 * D)

    return pl.pallas_call(
        functools.partial(_spatial_attn_kernel, num_heads, d, scale),
        out_shape=jax.ShapeDtypeStruct((G, N, D), jnp.bfloat16),
        grid=(pl.cdiv(G, gb),),
        in_specs=[pl.BlockSpec((gb, N, cx), lambda i: (i, 0, 0)),
                  pl.BlockSpec((gb, N, cs), lambda i: (i, 0, 0)),
                  pl.BlockSpec((cx, 3 * D), lambda i: (0, 0)),
                  pl.BlockSpec((cs, 3 * D), lambda i: (0, 0)),
                  pl.BlockSpec((1, 3 * D), lambda i: (0, 0)),
                  pl.BlockSpec((D, D), lambda i: (0, 0)),
                  pl.BlockSpec((1, D), lambda i: (0, 0))],
        out_specs=pl.BlockSpec((gb, N, D), lambda i: (i, 0, 0)),
        compiler_params=_compiler_params(),
        cost_estimate=pl.CostEstimate(flops=flops, transcendentals=trans,
                                      bytes_accessed=bytes_acc),
    )(X.reshape(G, N, cx), STE.reshape(G, N, cs),
      ap['wx'].astype(jnp.bfloat16), ap['ws'].astype(jnp.bfloat16),
      ap['b'].reshape(1, 3 * D),
      ap['wo'].astype(jnp.bfloat16), ap['bo'].reshape(1, D))


def temporal_attention(X, STE, ap, num_heads, d):
    """[B,T,N,D+m], [B,T,N,D] -> HT as [B, T, N, D] (bf16), attention over steps."""
    B, T, N, cx = X.shape
    cs = STE.shape[-1]
    D = num_heads * d
    scale = 1.0 / math.sqrt(d)

    flops = B * (2 * T * N * (cx + cs) * 3 * D + 4 * N * T * T * D + 2 * T * N * D * D)
    trans = B * num_heads * N * T * T
    bytes_acc = (4 * B * T * N * (cx + cs) + 2 * B * T * N * D
                 + 2 * ((cx + cs) * 3 * D + D * D) + 4 * 4 * D)

    return pl.pallas_call(
        functools.partial(_temporal_attn_kernel, num_heads, d, scale),
        out_shape=jax.ShapeDtypeStruct((B, T, N, D), jnp.bfloat16),
        grid=(B,),
        in_specs=[pl.BlockSpec((1, T, N, cx), lambda b: (b, 0, 0, 0)),
                  pl.BlockSpec((1, T, N, cs), lambda b: (b, 0, 0, 0)),
                  pl.BlockSpec((cx, 3 * D), lambda b: (0, 0)),
                  pl.BlockSpec((cs, 3 * D), lambda b: (0, 0)),
                  pl.BlockSpec((1, 3 * D), lambda b: (0, 0)),
                  pl.BlockSpec((D, D), lambda b: (0, 0)),
                  pl.BlockSpec((1, D), lambda b: (0, 0))],
        out_specs=pl.BlockSpec((1, T, N, D), lambda b: (b, 0, 0, 0)),
        compiler_params=_compiler_params(),
        cost_estimate=pl.CostEstimate(flops=flops, transcendentals=trans,
                                      bytes_accessed=bytes_acc),
    )(X, STE,
      ap['wx'].astype(jnp.bfloat16), ap['ws'].astype(jnp.bfloat16),
      ap['b'].reshape(1, 3 * D),
      ap['wo'].astype(jnp.bfloat16), ap['bo'].reshape(1, D))


def gated_fusion_residual(X, HS, HT, g):
    """out = X + FC_h(z*HS + (1-z)*HT),  z = sigmoid(FC_xs(HS) + FC_xt(HT))."""
    lead = X.shape[:-1]
    cxm = X.shape[-1]                                   # D + m
    D = HS.shape[-1]
    M = math.prod(lead)
    tm = _row_tile(M)

    flops = M * (2 * D * D * 3 + 2 * D * cxm)
    trans = M * D
    bytes_acc = 4 * 2 * M * cxm + 2 * 2 * M * D + 2 * (3 * D * D + D * cxm)

    out = pl.pallas_call(
        _gated_kernel,
        out_shape=jax.ShapeDtypeStruct((M, cxm), jnp.float32),
        grid=(pl.cdiv(M, tm),),
        in_specs=[pl.BlockSpec((tm, cxm), lambda i: (i, 0)),
                  pl.BlockSpec((tm, D), lambda i: (i, 0)),
                  pl.BlockSpec((tm, D), lambda i: (i, 0)),
                  pl.BlockSpec((D, D), lambda i: (0, 0)),
                  pl.BlockSpec((D, D), lambda i: (0, 0)),
                  pl.BlockSpec((1, D), lambda i: (0, 0)),
                  pl.BlockSpec((D, D), lambda i: (0, 0)),
                  pl.BlockSpec((1, D), lambda i: (0, 0)),
                  pl.BlockSpec((D, cxm), lambda i: (0, 0)),
                  pl.BlockSpec((1, cxm), lambda i: (0, 0))],
        out_specs=pl.BlockSpec((tm, cxm), lambda i: (i, 0)),
        compiler_params=_compiler_params(),
        cost_estimate=pl.CostEstimate(flops=flops, transcendentals=trans,
                                      bytes_accessed=bytes_acc),
    )(X.reshape(M, cxm),
      HS.reshape(M, D), HT.reshape(M, D),
      g['wxs'].astype(jnp.bfloat16), g['wxt'].astype(jnp.bfloat16),
      g['bxt'].reshape(1, D),
      g['wh1'].astype(jnp.bfloat16), g['bh1'].reshape(1, D),
      g['wh2'].astype(jnp.bfloat16), g['bh2'].reshape(1, cxm))
    return out.reshape(*lead, cxm)


# ----------------------------- STAttBlock forward -----------------------------

def statt_block(params, X, STE, num_heads, d):
    """X: [B, T, N, D+m], STE: [B, T, N, D] -> [B, T, N, D+m] (residual added)."""
    HS = spatial_attention(X, STE, params['sp'], num_heads, d)   # [B*T, N, D] bf16
    HT = temporal_attention(X, STE, params['tp'], num_heads, d)  # [B, T, N, D] bf16
    return gated_fusion_residual(X, HS, HT, params['gate'])


# ----------------------------- parameter init -----------------------------

def _xavier(key, cin, cout):
    bound = math.sqrt(6.0 / (cin + cout))
    return jax.random.uniform(key, (cin, cout), jnp.float32, -bound, bound)


def _init_attention(key, cin_x, cin_s, D):
    """FC_q/FC_k/FC_v fused into one (cin, 3D) matrix, split into X / STE parts."""
    ks = jax.random.split(key, 4)
    wq = _xavier(ks[0], cin_x + cin_s, D)
    wk = _xavier(ks[1], cin_x + cin_s, D)
    wv = _xavier(ks[2], cin_x + cin_s, D)
    wqkv = jnp.concatenate([wq, wk, wv], axis=1) * BN_SCALE      # BN fold
    return {
        'wx': wqkv[:cin_x],                 # rows multiplying X (X first in the cat)
        'ws': wqkv[cin_x:],                 # rows multiplying STE
        'b': jnp.zeros((3 * D,), jnp.float32),
        'wo': _xavier(ks[3], D, D) * BN_SCALE,
        'bo': jnp.zeros((D,), jnp.float32),
    }


def init_statt_block_params(key, K, d, m):
    D = K * d
    ks = jax.random.split(key, 6)
    return {
        'sp': _init_attention(ks[0], D + m, D, D),
        'tp': _init_attention(ks[1], D + m, D, D),
        'gate': {
            'wxs': _xavier(ks[2], D, D) * BN_SCALE,              # FC_xs: no bias
            'wxt': _xavier(ks[3], D, D) * BN_SCALE,
            'bxt': jnp.zeros((D,), jnp.float32),
            'wh1': _xavier(ks[4], D, D) * BN_SCALE,
            'bh1': jnp.zeros((D,), jnp.float32),
            'wh2': _xavier(ks[5], D, D + m) * BN_SCALE,
            'bh2': jnp.zeros((D + m,), jnp.float32),
        },
    }


# ----------------------------- pure-JAX reference -----------------------------

def ref_statt_block(p, X, STE, num_heads, d):
    D = num_heads * d

    def fc(x, w, b, relu):
        y = jnp.einsum('...i,io->...o', x, w) + b
        return jnp.maximum(y, 0.0) if relu else y

    def branch(ap, temporal):
        w = jnp.concatenate([ap['wx'], ap['ws']], axis=0)
        xc = jnp.concatenate([X, STE], axis=-1)
        qkv = fc(xc, w, ap['b'], True)
        q, k, v = qkv[..., :D], qkv[..., D:2 * D], qkv[..., 2 * D:]
        B_, T_, N_, _ = q.shape
        sh = lambda a: a.reshape(B_, T_, N_, num_heads, d)
        qh, kh, vh = sh(q), sh(k), sh(v)
        if temporal:
            s = jnp.einsum('btnhd,bsnhd->bnhts', qh, kh) / math.sqrt(d)
            a = jax.nn.softmax(s, axis=-1)
            o = jnp.einsum('bnhts,bsnhd->btnhd', a, vh)
        else:
            s = jnp.einsum('btnhd,btmhd->bthnm', qh, kh) / math.sqrt(d)
            a = jax.nn.softmax(s, axis=-1)
            o = jnp.einsum('bthnm,btmhd->btnhd', a, vh)
        return fc(o.reshape(B_, T_, N_, D), ap['wo'], ap['bo'], True)

    HS = branch(p['sp'], temporal=False)
    HT = branch(p['tp'], temporal=True)
    g = p['gate']
    xs = jnp.einsum('...i,io->...o', HS, g['wxs'])
    xt = jnp.einsum('...i,io->...o', HT, g['wxt']) + g['bxt']
    z = jax.nn.sigmoid(xs + xt)
    h = z * HS + (1.0 - z) * HT
    h = jnp.maximum(jnp.einsum('...i,io->...o', h, g['wh1']) + g['bh1'], 0.0)
    h = jnp.einsum('...i,io->...o', h, g['wh2']) + g['bh2']
    return X + h


# --------------------------------- main ---------------------------------

if __name__ == "__main__":
    B, T, N = 2, 8, 16          # batch, num_step, num_vertex
    K, d, m = 2, 8, 4           # heads, per-head dim, extra memory channels
    D = K * d

    key = jax.random.PRNGKey(0)
    kp, kx, ks = jax.random.split(key, 3)
    params = init_statt_block_params(kp, K, d, m)
    X = jax.random.normal(kx, (B, T, N, D + m), jnp.float32)
    STE = jax.random.normal(ks, (B, T, N, D), jnp.float32)

    fwd = jax.jit(lambda p, x, ste: statt_block(p, x, ste, K, d))
    out = jax.block_until_ready(fwd(params, X, STE))

    assert out.shape == (B, T, N, D + m), out.shape
    assert bool(jnp.all(jnp.isfinite(out)))

    ref = ref_statt_block(params, X, STE, K, d)
    max_err = float(jnp.max(jnp.abs(out - ref)))
    tol = 5e-2 * (1.0 + float(jnp.max(jnp.abs(ref))))   # relative; bf16 MXU operands
    assert max_err < tol, f"mismatch vs reference: max abs err {max_err} (tol {tol})"

    print("KERNEL_OK")
</pallas_src>

<mosaic_0001>
module attributes {stable_mosaic.version = 11 : i64} {
  func.func @_gated_kernel(%arg0: i32, %arg1: memref<128x20xf32, #tpu.memory_space<vmem>>, %arg2: memref<128x16xbf16, #tpu.memory_space<vmem>>, %arg3: memref<128x16xbf16, #tpu.memory_space<vmem>>, %arg4: memref<16x16xbf16, #tpu.memory_space<vmem>>, %arg5: memref<16x16xbf16, #tpu.memory_space<vmem>>, %arg6: memref<1x16xf32, #tpu.memory_space<vmem>>, %arg7: memref<16x16xbf16, #tpu.memory_space<vmem>>, %arg8: memref<1x16xf32, #tpu.memory_space<vmem>>, %arg9: memref<16x20xbf16, #tpu.memory_space<vmem>>, %arg10: memref<1x20xf32, #tpu.memory_space<vmem>>, %arg11: memref<128x20xf32, #tpu.memory_space<vmem>>) attributes {dimension_semantics = [#tpu.dimension_semantics<parallel>], iteration_bounds = array<i64: 2>, scalar_prefetch = 0 : i64, scratch_operands = 0 : i64, tpu.core_type = #tpu.core_type<tc>, window_params = [{transform_indices = @transform_0, window_bounds = array<i64: 128, 20>}, {transform_indices = @transform_1, window_bounds = array<i64: 128, 16>}, {transform_indices = @transform_2, window_bounds = array<i64: 128, 16>}, {pipeline_mode = #tpu.pipeline_mode<synchronous>, transform_indices = @transform_3, window_bounds = array<i64: 16, 16>}, {pipeline_mode = #tpu.pipeline_mode<synchronous>, transform_indices = @transform_4, window_bounds = array<i64: 16, 16>}, {pipeline_mode = #tpu.pipeline_mode<synchronous>, transform_indices = @transform_5, window_bounds = array<i64: 1, 16>}, {pipeline_mode = #tpu.pipeline_mode<synchronous>, transform_indices = @transform_6, window_bounds = array<i64: 16, 16>}, {pipeline_mode = #tpu.pipeline_mode<synchronous>, transform_indices = @transform_7, window_bounds = array<i64: 1, 16>}, {pipeline_mode = #tpu.pipeline_mode<synchronous>, transform_indices = @transform_8, window_bounds = array<i64: 16, 20>}, {pipeline_mode = #tpu.pipeline_mode<synchronous>, transform_indices = @transform_9, window_bounds = array<i64: 1, 20>}, {transform_indices = @transform_10, window_bounds = array<i64: 128, 20>}]} {
    %c0 = arith.constant 0 : index
    %c0_0 = arith.constant 0 : index
    %0 = vector.load %arg2[%c0, %c0_0] : memref<128x16xbf16, #tpu.memory_space<vmem>>, vector<128x16xbf16>
    %c0_1 = arith.constant 0 : index
    %c0_2 = arith.constant 0 : index
    %1 = vector.load %arg3[%c0_1, %c0_2] : memref<128x16xbf16, #tpu.memory_space<vmem>>, vector<128x16xbf16>
    %c0_3 = arith.constant 0 : index
    %c0_4 = arith.constant 0 : index
    %2 = vector.load %arg4[%c0_3, %c0_4] : memref<16x16xbf16, #tpu.memory_space<vmem>>, vector<16x16xbf16>
    %cst = arith.constant dense<0.000000e+00> : vector<128x16xf32>
    %3 = tpu.matmul %0, %2, %cst {dimension_numbers = #tpu.dot_dimension_numbers<[1], [0], [0], [1], [0, 0, 1, 1], [], []>} : vector<128x16xbf16>, vector<16x16xbf16>, vector<128x16xf32> -> vector<128x16xf32>
    %c0_5 = arith.constant 0 : index
    %c0_6 = arith.constant 0 : index
    %4 = vector.load %arg5[%c0_5, %c0_6] : memref<16x16xbf16, #tpu.memory_space<vmem>>, vector<16x16xbf16>
    %cst_7 = arith.constant dense<0.000000e+00> : vector<128x16xf32>
    %5 = tpu.matmul %1, %4, %cst_7 {dimension_numbers = #tpu.dot_dimension_numbers<[1], [0], [0], [1], [0, 0, 1, 1], [], []>} : vector<128x16xbf16>, vector<16x16xbf16>, vector<128x16xf32> -> vector<128x16xf32>
    %c0_8 = arith.constant 0 : index
    %c0_9 = arith.constant 0 : index
    %6 = vector.load %arg6[%c0_8, %c0_9] : memref<1x16xf32, #tpu.memory_space<vmem>>, vector<1x16xf32>
    %7 = vector.broadcast %6 : vector<1x16xf32> to vector<128x16xf32>
    %8 = arith.addf %5, %7 : vector<128x16xf32>
    %9 = arith.addf %3, %8 : vector<128x16xf32>
    %cst_10 = arith.constant 0.000000e+00 : f32
    %10 = vector.broadcast %cst_10 : f32 to vector<128x16xf32>
    %11 = arith.subf %10, %9 : vector<128x16xf32>
    %12 = math.exp %11 : vector<128x16xf32>
    %cst_11 = arith.constant 1.000000e+00 : f32
    %13 = vector.broadcast %cst_11 : f32 to vector<128x16xf32>
    %14 = arith.addf %13, %12 : vector<128x16xf32>
    %cst_12 = arith.constant 1.000000e+00 : f32
    %15 = vector.broadcast %cst_12 : f32 to vector<128x16xf32>
    %16 = arith.divf %15, %14 : vector<128x16xf32>
    %17 = arith.extf %0 : vector<128x16xbf16> to vector<128x16xf32>
    %18 = arith.mulf %16, %17 : vector<128x16xf32>
    %cst_13 = arith.constant 1.000000e+00 : f32
    %19 = vector.broadcast %cst_13 : f32 to vector<128x16xf32>
    %20 = arith.subf %19, %16 : vector<128x16xf32>
    %21 = arith.extf %1 : vector<128x16xbf16> to vector<128x16xf32>
    %22 = arith.mulf %20, %21 : vector<128x16xf32>
    %23 = arith.addf %18, %22 : vector<128x16xf32>
    %24 = arith.truncf %23 : vector<128x16xf32> to vector<128x16xbf16>
    %c0_14 = arith.constant 0 : index
    %c0_15 = arith.constant 0 : index
    %25 = vector.load %arg7[%c0_14, %c0_15] : memref<16x16xbf16, #tpu.memory_space<vmem>>, vector<16x16xbf16>
    %cst_16 = arith.constant dense<0.000000e+00> : vector<128x16xf32>
    %26 = tpu.matmul %24, %25, %cst_16 {dimension_numbers = #tpu.dot_dimension_numbers<[1], [0], [0], [1], [0, 0, 1, 1], [], []>} : vector<128x16xbf16>, vector<16x16xbf16>, vector<128x16xf32> -> vector<128x16xf32>
    %c0_17 = arith.constant 0 : index
    %c0_18 = arith.constant 0 : index
    %27 = vector.load %arg8[%c0_17, %c0_18] : memref<1x16xf32, #tpu.memory_space<vmem>>, vector<1x16xf32>
    %28 = vector.broadcast %27 : vector<1x16xf32> to vector<128x16xf32>
    %29 = arith.addf %26, %28 : vector<128x16xf32>
    %cst_19 = arith.constant 0.000000e+00 : f32
    %30 = vector.broadcast %cst_19 : f32 to vector<128x16xf32>
    %31 = arith.maximumf %29, %30 : vector<128x16xf32>
    %32 = arith.truncf %31 : vector<128x16xf32> to vector<128x16xbf16>
    %c0_20 = arith.constant 0 : index
    %c0_21 = arith.constant 0 : index
    %33 = vector.load %arg9[%c0_20, %c0_21] : memref<16x20xbf16, #tpu.memory_space<vmem>>, vector<16x20xbf16>
    %cst_22 = arith.constant dense<0.000000e+00> : vector<128x20xf32>
    %34 = tpu.matmul %32, %33, %cst_22 {dimension_numbers = #tpu.dot_dimension_numbers<[1], [0], [0], [1], [0, 0, 1, 1], [], []>} : vector<128x16xbf16>, vector<16x20xbf16>, vector<128x20xf32> -> vector<128x20xf32>
    %c0_23 = arith.constant 0 : index
    %c0_24 = arith.constant 0 : index
    %35 = vector.load %arg10[%c0_23, %c0_24] : memref<1x20xf32, #tpu.memory_space<vmem>>, vector<1x20xf32>
    %36 = vector.broadcast %35 : vector<1x20xf32> to vector<128x20xf32>
    %37 = arith.addf %34, %36 : vector<128x20xf32>
    %c0_25 = arith.constant 0 : index
    %c0_26 = arith.constant 0 : index
    %38 = vector.load %arg1[%c0_25, %c0_26] : memref<128x20xf32, #tpu.memory_space<vmem>>, vector<128x20xf32>
    %39 = arith.addf %38, %37 : vector<128x20xf32>
    %c0_27 = arith.constant 0 : index
    %c0_28 = arith.constant 0 : index
    %40 = vector.load %arg11[%c0_27, %c0_28] : memref<128x20xf32, #tpu.memory_space<vmem>>, vector<128x20xf32>
    tpu.vector_store %arg11[%c0_27, %c0_28], %39 {strides = array<i32>} : memref<128x20xf32, #tpu.memory_space<vmem>>, vector<128x20xf32>,
    return
  }
  func.func @transform_0(%arg0: i32) -> (i32, i32) {
    %c0_i32 = arith.constant 0 : i32
    %c0_i32_0 = arith.constant 0 : i32
    return %arg0, %c0_i32 : i32, i32
  }
  func.func @transform_1(%arg0: i32) -> (i32, i32) {
    %c0_i32 = arith.constant 0 : i32
    %c0_i32_0 = arith.constant 0 : i32
    return %arg0, %c0_i32 : i32, i32
  }
  func.func @transform_2(%arg0: i32) -> (i32, i32) {
    %c0_i32 = arith.constant 0 : i32
    %c0_i32_0 = arith.constant 0 : i32
    return %arg0, %c0_i32 : i32, i32
  }
  func.func @transform_3(%arg0: i32) -> (i32, i32) {
    %c0_i32 = arith.constant 0 : i32
    %c0_i32_0 = arith.constant 0 : i32
    %c0_i32_1 = arith.constant 0 : i32
    return %c0_i32, %c0_i32_0 : i32, i32
  }
  func.func @transform_4(%arg0: i32) -> (i32, i32) {
    %c0_i32 = arith.constant 0 : i32
    %c0_i32_0 = arith.constant 0 : i32
    %c0_i32_1 = arith.constant 0 : i32
    return %c0_i32, %c0_i32_0 : i32, i32
  }
  func.func @transform_5(%arg0: i32) -> (i32, i32) {
    %c0_i32 = arith.constant 0 : i32
    %c0_i32_0 = arith.constant 0 : i32
    %c0_i32_1 = arith.constant 0 : i32
    return %c0_i32, %c0_i32_0 : i32, i32
  }
  func.func @transform_6(%arg0: i32) -> (i32, i32) {
    %c0_i32 = arith.constant 0 : i32
    %c0_i32_0 = arith.constant 0 : i32
    %c0_i32_1 = arith.constant 0 : i32
    return %c0_i32, %c0_i32_0 : i32, i32
  }
  func.func @transform_7(%arg0: i32) -> (i32, i32) {
    %c0_i32 = arith.constant 0 : i32
    %c0_i32_0 = arith.constant 0 : i32
    %c0_i32_1 = arith.constant 0 : i32
    return %c0_i32, %c0_i32_0 : i32, i32
  }
  func.func @transform_8(%arg0: i32) -> (i32, i32) {
    %c0_i32 = arith.constant 0 : i32
    %c0_i32_0 = arith.constant 0 : i32
    %c0_i32_1 = arith.constant 0 : i32
    return %c0_i32, %c0_i32_0 : i32, i32
  }
  func.func @transform_9(%arg0: i32) -> (i32, i32) {
    %c0_i32 = arith.constant 0 : i32
    %c0_i32_0 = arith.constant 0 : i32
    %c0_i32_1 = arith.constant 0 : i32
    return %c0_i32, %c0_i32_0 : i32, i32
  }
  func.func @transform_10(%arg0: i32) -> (i32, i32) {
    %c0_i32 = arith.constant 0 : i32
    %c0_i32_0 = arith.constant 0 : i32
    return %arg0, %c0_i32 : i32, i32
  }
}

module attributes {stable_mosaic.version = 11 : i64} {
  func.func @_spatial_attn_kernel(%arg0: i32, %arg1: memref<8x16x20xf32, #tpu.memory_space<vmem>>, %arg2: memref<8x16x16xf32, #tpu.memory_space<vmem>>, %arg3: memref<20x48xbf16, #tpu.memory_space<vmem>>, %arg4: memref<16x48xbf16, #tpu.memory_space<vmem>>, %arg5: memref<1x48xf32, #tpu.memory_space<vmem>>, %arg6: memref<16x16xbf16, #tpu.memory_space<vmem>>, %arg7: memref<1x16xf32, #tpu.memory_space<vmem>>, %arg8: memref<8x16x16xbf16, #tpu.memory_space<vmem>>) attributes {dimension_semantics = [#tpu.dimension_semantics<parallel>], iteration_bounds = array<i64: 2>, scalar_prefetch = 0 : i64, scratch_operands = 0 : i64, tpu.core_type = #tpu.core_type<tc>, window_params = [{transform_indices = @transform_0, window_bounds = array<i64: 8, 16, 20>}, {transform_indices = @transform_1, window_bounds = array<i64: 8, 16, 16>}, {pipeline_mode = #tpu.pipeline_mode<synchronous>, transform_indices = @transform_2, window_bounds = array<i64: 20, 48>}, {pipeline_mode = #tpu.pipeline_mode<synchronous>, transform_indices = @transform_3, window_bounds = array<i64: 16, 48>}, {pipeline_mode = #tpu.pipeline_mode<synchronous>, transform_indices = @transform_4, window_bounds = array<i64: 1, 48>}, {pipeline_mode = #tpu.pipeline_mode<synchronous>, transform_indices = @transform_5, window_bounds = array<i64: 16, 16>}, {pipeline_mode = #tpu.pipeline_mode<synchronous>, transform_indices = @transform_6, window_bounds = array<i64: 1, 16>}, {transform_indices = @transform_7, window_bounds = array<i64: 8, 16, 16>}]} {
    %c0 = arith.constant 0 : index
    %c0_0 = arith.constant 0 : index
    %c0_1 = arith.constant 0 : index
    %0 = vector.load %arg1[%c0, %c0_0, %c0_1] : memref<8x16x20xf32, #tpu.memory_space<vmem>>, vector<8x16x20xf32>
    %1 = vector.shape_cast %0 : vector<8x16x20xf32> to vector<128x20xf32>
    %2 = arith.truncf %1 : vector<128x20xf32> to vector<128x20xbf16>
    %c0_2 = arith.constant 0 : index
    %c0_3 = arith.constant 0 : index
    %c0_4 = arith.constant 0 : index
    %3 = vector.load %arg2[%c0_2, %c0_3, %c0_4] : memref<8x16x16xf32, #tpu.memory_space<vmem>>, vector<8x16x16xf32>
    %4 = vector.shape_cast %3 : vector<8x16x16xf32> to vector<128x16xf32>
    %5 = arith.truncf %4 : vector<128x16xf32> to vector<128x16xbf16>
    %c0_5 = arith.constant 0 : index
    %c0_6 = arith.constant 0 : index
    %6 = vector.load %arg3[%c0_5, %c0_6] : memref<20x48xbf16, #tpu.memory_space<vmem>>, vector<20x48xbf16>
    %cst = arith.constant dense<0.000000e+00> : vector<128x48xf32>
    %7 = tpu.matmul %2, %6, %cst {dimension_numbers = #tpu.dot_dimension_numbers<[1], [0], [0], [1], [0, 0, 1, 1], [], []>} : vector<128x20xbf16>, vector<20x48xbf16>, vector<128x48xf32> -> vector<128x48xf32>
    %c0_7 = arith.constant 0 : index
    %c0_8 = arith.constant 0 : index
    %8 = vector.load %arg4[%c0_7, %c0_8] : memref<16x48xbf16, #tpu.memory_space<vmem>>, vector<16x48xbf16>
    %cst_9 = arith.constant dense<0.000000e+00> : vector<128x48xf32>
    %9 = tpu.matmul %5, %8, %cst_9 {dimension_numbers = #tpu.dot_dimension_numbers<[1], [0], [0], [1], [0, 0, 1, 1], [], []>} : vector<128x16xbf16>, vector<16x48xbf16>, vector<128x48xf32> -> vector<128x48xf32>
    %10 = arith.addf %7, %9 : vector<128x48xf32>
    %c0_10 = arith.constant 0 : index
    %c0_11 = arith.constant 0 : index
    %11 = vector.load %arg5[%c0_10, %c0_11] : memref<1x48xf32, #tpu.memory_space<vmem>>, vector<1x48xf32>
    %12 = vector.broadcast %11 : vector<1x48xf32> to vector<128x48xf32>
    %13 = arith.addf %10, %12 : vector<128x48xf32>
    %cst_12 = arith.constant 0.000000e+00 : f32
    %14 = vector.broadcast %cst_12 : f32 to vector<128x48xf32>
    %15 = arith.maximumf %13, %14 : vector<128x48xf32>
    %16 = vector.shape_cast %15 : vector<128x48xf32> to vector<8x16x48xf32>
    %17 = vector.extract_strided_slice %16 {offsets = [0, 0, 0], sizes = [8, 16, 8], strides = [1, 1, 1]} : vector<8x16x48xf32> to vector<8x16x8xf32>
    %18 = arith.truncf %17 : vector<8x16x8xf32> to vector<8x16x8xbf16>
    %19 = vector.extract_strided_slice %16 {offsets = [0, 0, 16], sizes = [8, 16, 8], strides = [1, 1, 1]} : vector<8x16x48xf32> to vector<8x16x8xf32>
    %20 = arith.truncf %19 : vector<8x16x8xf32> to vector<8x16x8xbf16>
    %21 = vector.extract_strided_slice %16 {offsets = [0, 0, 32], sizes = [8, 16, 8], strides = [1, 1, 1]} : vector<8x16x48xf32> to vector<8x16x8xf32>
    %22 = arith.truncf %21 : vector<8x16x8xf32> to vector<8x16x8xbf16>
    "tpu.trace_start"() <{level = 10 : i32, message = "gnd,gmd->gnm"}> : () -> ()
    %cst_13 = arith.constant dense<0.000000e+00> : vector<8x16x16xf32>
    %23 = tpu.matmul %18, %20, %cst_13 {dimension_numbers = #tpu.dot_dimension_numbers<[2], [2], [1], [1], [0, 0, 0, 1, 1, 1], [0], [0]>} : vector<8x16x8xbf16>, vector<8x16x8xbf16>, vector<8x16x16xf32> -> vector<8x16x16xf32>
    "tpu.trace_stop"() : () -> ()
    %cst_14 = arith.constant 0.353553385 : f32
    %24 = vector.broadcast %cst_14 : f32 to vector<8x16x16xf32>
    %25 = arith.mulf %23, %24 : vector<8x16x16xf32>
    %cst_15 = arith.constant dense<0xFF800000> : vector<8x16xf32>
    %26 = vector.multi_reduction <maximumf>, %25, %cst_15 [2] : vector<8x16x16xf32> to vector<8x16xf32>
    %27 = vector.shape_cast %26 : vector<8x16xf32> to vector<8x16x1xf32>
    %28 = vector.broadcast %27 : vector<8x16x1xf32> to vector<8x16x16xf32>
    %29 = arith.subf %25, %28 : vector<8x16x16xf32>
    %30 = math.exp %29 : vector<8x16x16xf32>
    %cst_16 = arith.constant dense<0.000000e+00> : vector<8x16xf32>
    %31 = vector.multi_reduction <add>, %30, %cst_16 [2] : vector<8x16x16xf32> to vector<8x16xf32>
    %32 = vector.shape_cast %31 : vector<8x16xf32> to vector<8x16x1xf32>
    %33 = tpu.reciprocal %32 : vector<8x16x1xf32> -> vector<8x16x1xf32>
    %34 = vector.broadcast %33 : vector<8x16x1xf32> to vector<8x16x16xf32>
    %35 = arith.mulf %30, %34 : vector<8x16x16xf32>
    %36 = arith.truncf %35 : vector<8x16x16xf32> to vector<8x16x16xbf16>
    "tpu.trace_start"() <{level = 10 : i32, message = "gnm,gmd->gnd"}> : () -> ()
    %cst_17 = arith.constant dense<0.000000e+00> : vector<8x16x8xf32>
    %37 = tpu.matmul %36, %22, %cst_17 {dimension_numbers = #tpu.dot_dimension_numbers<[2], [1], [1], [2], [0, 0, 0, 1, 1, 2], [0], [0]>} : vector<8x16x16xbf16>, vector<8x16x8xbf16>, vector<8x16x8xf32> -> vector<8x16x8xf32>
    "tpu.trace_stop"() : () -> ()
    %38 = vector.extract_strided_slice %16 {offsets = [0, 0, 8], sizes = [8, 16, 8], strides = [1, 1, 1]} : vector<8x16x48xf32> to vector<8x16x8xf32>
    %39 = arith.truncf %38 : vector<8x16x8xf32> to vector<8x16x8xbf16>
    %40 = vector.extract_strided_slice %16 {offsets = [0, 0, 24], sizes = [8, 16, 8], strides = [1, 1, 1]} : vector<8x16x48xf32> to vector<8x16x8xf32>
    %41 = arith.truncf %40 : vector<8x16x8xf32> to vector<8x16x8xbf16>
    %42 = vector.extract_strided_slice %16 {offsets = [0, 0, 40], sizes = [8, 16, 8], strides = [1, 1, 1]} : vector<8x16x48xf32> to vector<8x16x8xf32>
    %43 = arith.truncf %42 : vector<8x16x8xf32> to vector<8x16x8xbf16>
    "tpu.trace_start"() <{level = 10 : i32, message = "gnd,gmd->gnm"}> : () -> ()
    %cst_18 = arith.constant dense<0.000000e+00> : vector<8x16x16xf32>
    %44 = tpu.matmul %39, %41, %cst_18 {dimension_numbers = #tpu.dot_dimension_numbers<[2], [2], [1], [1], [0, 0, 0, 1, 1, 1], [0], [0]>} : vector<8x16x8xbf16>, vector<8x16x8xbf16>, vector<8x16x16xf32> -> vector<8x16x16xf32>
    "tpu.trace_stop"() : () -> ()
    %cst_19 = arith.constant 0.353553385 : f32
    %45 = vector.broadcast %cst_19 : f32 to vector<8x16x16xf32>
    %46 = arith.mulf %44, %45 : vector<8x16x16xf32>
    %cst_20 = arith.constant dense<0xFF800000> : vector<8x16xf32>
    %47 = vector.multi_reduction <maximumf>, %46, %cst_20 [2] : vector<8x16x16xf32> to vector<8x16xf32>
    %48 = vector.shape_cast %47 : vector<8x16xf32> to vector<8x16x1xf32>
    %49 = vector.broadcast %48 : vector<8x16x1xf32> to vector<8x16x16xf32>
    %50 = arith.subf %46, %49 : vector<8x16x16xf32>
    %51 = math.exp %50 : vector<8x16x16xf32>
    %cst_21 = arith.constant dense<0.000000e+00> : vector<8x16xf32>
    %52 = vector.multi_reduction <add>, %51, %cst_21 [2] : vector<8x16x16xf32> to vector<8x16xf32>
    %53 = vector.shape_cast %52 : vector<8x16xf32> to vector<8x16x1xf32>
    %54 = tpu.reciprocal %53 : vector<8x16x1xf32> -> vector<8x16x1xf32>
    %55 = vector.broadcast %54 : vector<8x16x1xf32> to vector<8x16x16xf32>
    %56 = arith.mulf %51, %55 : vector<8x16x16xf32>
    %57 = arith.truncf %56 : vector<8x16x16xf32> to vector<8x16x16xbf16>
    "tpu.trace_start"() <{level = 10 : i32, message = "gnm,gmd->gnd"}> : () -> ()
    %cst_22 = arith.constant dense<0.000000e+00> : vector<8x16x8xf32>
    %58 = tpu.matmul %57, %43, %cst_22 {dimension_numbers = #tpu.dot_dimension_numbers<[2], [1], [1], [2], [0, 0, 0, 1, 1, 2], [0], [0]>} : vector<8x16x16xbf16>, vector<8x16x8xbf16>, vector<8x16x8xf32> -> vector<8x16x8xf32>
    "tpu.trace_stop"() : () -> ()
    %59 = tpu.concatenate %37, %58 in 2 : vector<8x16x8xf32>, vector<8x16x8xf32> -> vector<8x16x16xf32>
    %60 = vector.shape_cast %59 : vector<8x16x16xf32> to vector<128x16xf32>
    %61 = arith.truncf %60 : vector<128x16xf32> to vector<128x16xbf16>
    %c0_23 = arith.constant 0 : index
    %c0_24 = arith.constant 0 : index
    %62 = vector.load %arg6[%c0_23, %c0_24] : memref<16x16xbf16, #tpu.memory_space<vmem>>, vector<16x16xbf16>
    %cst_25 = arith.constant dense<0.000000e+00> : vector<128x16xf32>
    %63 = tpu.matmul %61, %62, %cst_25 {dimension_numbers = #tpu.dot_dimension_numbers<[1], [0], [0], [1], [0, 0, 1, 1], [], []>} : vector<128x16xbf16>, vector<16x16xbf16>, vector<128x16xf32> -> vector<128x16xf32>
    %c0_26 = arith.constant 0 : index
    %c0_27 = arith.constant 0 : index
    %64 = vector.load %arg7[%c0_26, %c0_27] : memref<1x16xf32, #tpu.memory_space<vmem>>, vector<1x16xf32>
    %65 = vector.broadcast %64 : vector<1x16xf32> to vector<128x16xf32>
    %66 = arith.addf %63, %65 : vector<128x16xf32>
    %cst_28 = arith.constant 0.000000e+00 : f32
    %67 = vector.broadcast %cst_28 : f32 to vector<128x16xf32>
    %68 = arith.maximumf %66, %67 : vector<128x16xf32>
    %69 = vector.shape_cast %68 : vector<128x16xf32> to vector<8x16x16xf32>
    %70 = arith.truncf %69 : vector<8x16x16xf32> to vector<8x16x16xbf16>
    %c0_29 = arith.constant 0 : index
    %c0_30 = arith.constant 0 : index
    %c0_31 = arith.constant 0 : index
    %71 = vector.load %arg8[%c0_29, %c0_30, %c0_31] : memref<8x16x16xbf16, #tpu.memory_space<vmem>>, vector<8x16x16xbf16>
    tpu.vector_store %arg8[%c0_29, %c0_30, %c0_31], %70 {strides = array<i32>} : memref<8x16x16xbf16, #tpu.memory_space<vmem>>, vector<8x16x16xbf16>,
    return
  }
  func.func @transform_0(%arg0: i32) -> (i32, i32, i32) {
    %c0_i32 = arith.constant 0 : i32
    %c0_i32_0 = arith.constant 0 : i32
    %c0_i32_1 = arith.constant 0 : i32
    return %arg0, %c0_i32, %c0_i32_0 : i32, i32, i32
  }
  func.func @transform_1(%arg0: i32) -> (i32, i32, i32) {
    %c0_i32 = arith.constant 0 : i32
    %c0_i32_0 = arith.constant 0 : i32
    %c0_i32_1 = arith.constant 0 : i32
    return %arg0, %c0_i32, %c0_i32_0 : i32, i32, i32
  }
  func.func @transform_2(%arg0: i32) -> (i32, i32) {
    %c0_i32 = arith.constant 0 : i32
    %c0_i32_0 = arith.constant 0 : i32
    %c0_i32_1 = arith.constant 0 : i32
    return %c0_i32, %c0_i32_0 : i32, i32
  }
  func.func @transform_3(%arg0: i32) -> (i32, i32) {
    %c0_i32 = arith.constant 0 : i32
    %c0_i32_0 = arith.constant 0 : i32
    %c0_i32_1 = arith.constant 0 : i32
    return %c0_i32, %c0_i32_0 : i32, i32
  }
  func.func @transform_4(%arg0: i32) -> (i32, i32) {
    %c0_i32 = arith.constant 0 : i32
    %c0_i32_0 = arith.constant 0 : i32
    %c0_i32_1 = arith.constant 0 : i32
    return %c0_i32, %c0_i32_0 : i32, i32
  }
  func.func @transform_5(%arg0: i32) -> (i32, i32) {
    %c0_i32 = arith.constant 0 : i32
    %c0_i32_0 = arith.constant 0 : i32
    %c0_i32_1 = arith.constant 0 : i32
    return %c0_i32, %c0_i32_0 : i32, i32
  }
  func.func @transform_6(%arg0: i32) -> (i32, i32) {
    %c0_i32 = arith.constant 0 : i32
    %c0_i32_0 = arith.constant 0 : i32
    %c0_i32_1 = arith.constant 0 : i32
    return %c0_i32, %c0_i32_0 : i32, i32
  }
  func.func @transform_7(%arg0: i32) -> (i32, i32, i32) {
    %c0_i32 = arith.constant 0 : i32
    %c0_i32_0 = arith.constant 0 : i32
    %c0_i32_1 = arith.constant 0 : i32
    return %arg0, %c0_i32, %c0_i32_0 : i32, i32, i32
  }
}

module attributes {stable_mosaic.version = 11 : i64} {
  func.func @_temporal_attn_kernel(%arg0: i32, %arg1: memref<1x8x16x20xf32, #tpu.memory_space<vmem>>, %arg2: memref<1x8x16x16xf32, #tpu.memory_space<vmem>>, %arg3: memref<20x48xbf16, #tpu.memory_space<vmem>>, %arg4: memref<16x48xbf16, #tpu.memory_space<vmem>>, %arg5: memref<1x48xf32, #tpu.memory_space<vmem>>, %arg6: memref<16x16xbf16, #tpu.memory_space<vmem>>, %arg7: memref<1x16xf32, #tpu.memory_space<vmem>>, %arg8: memref<1x8x16x16xbf16, #tpu.memory_space<vmem>>) attributes {dimension_semantics = [#tpu.dimension_semantics<parallel>], iteration_bounds = array<i64: 2>, scalar_prefetch = 0 : i64, scratch_operands = 0 : i64, tpu.core_type = #tpu.core_type<tc>, window_params = [{transform_indices = @transform_0, window_bounds = array<i64: 1, 8, 16, 20>}, {transform_indices = @transform_1, window_bounds = array<i64: 1, 8, 16, 16>}, {pipeline_mode = #tpu.pipeline_mode<synchronous>, transform_indices = @transform_2, window_bounds = array<i64: 20, 48>}, {pipeline_mode = #tpu.pipeline_mode<synchronous>, transform_indices = @transform_3, window_bounds = array<i64: 16, 48>}, {pipeline_mode = #tpu.pipeline_mode<synchronous>, transform_indices = @transform_4, window_bounds = array<i64: 1, 48>}, {pipeline_mode = #tpu.pipeline_mode<synchronous>, transform_indices = @transform_5, window_bounds = array<i64: 16, 16>}, {pipeline_mode = #tpu.pipeline_mode<synchronous>, transform_indices = @transform_6, window_bounds = array<i64: 1, 16>}, {transform_indices = @transform_7, window_bounds = array<i64: 1, 8, 16, 16>}]} {
    %c0 = arith.constant 0 : index
    %c0_0 = arith.constant 0 : index
    %c0_1 = arith.constant 0 : index
    %c0_2 = arith.constant 0 : index
    %0 = vector.load %arg1[%c0, %c0_0, %c0_1, %c0_2] : memref<1x8x16x20xf32, #tpu.memory_space<vmem>>, vector<1x8x16x20xf32>
    %1 = vector.shape_cast %0 : vector<1x8x16x20xf32> to vector<8x16x20xf32>
    %2 = vector.shape_cast %1 : vector<8x16x20xf32> to vector<128x20xf32>
    %3 = arith.truncf %2 : vector<128x20xf32> to vector<128x20xbf16>
    %c0_3 = arith.constant 0 : index
    %c0_4 = arith.constant 0 : index
    %c0_5 = arith.constant 0 : index
    %c0_6 = arith.constant 0 : index
    %4 = vector.load %arg2[%c0_3, %c0_4, %c0_5, %c0_6] : memref<1x8x16x16xf32, #tpu.memory_space<vmem>>, vector<1x8x16x16xf32>
    %5 = vector.shape_cast %4 : vector<1x8x16x16xf32> to vector<8x16x16xf32>
    %6 = vector.shape_cast %5 : vector<8x16x16xf32> to vector<128x16xf32>
    %7 = arith.truncf %6 : vector<128x16xf32> to vector<128x16xbf16>
    %c0_7 = arith.constant 0 : index
    %c0_8 = arith.constant 0 : index
    %8 = vector.load %arg3[%c0_7, %c0_8] : memref<20x48xbf16, #tpu.memory_space<vmem>>, vector<20x48xbf16>
    %cst = arith.constant dense<0.000000e+00> : vector<128x48xf32>
    %9 = tpu.matmul %3, %8, %cst {dimension_numbers = #tpu.dot_dimension_numbers<[1], [0], [0], [1], [0, 0, 1, 1], [], []>} : vector<128x20xbf16>, vector<20x48xbf16>, vector<128x48xf32> -> vector<128x48xf32>
    %c0_9 = arith.constant 0 : index
    %c0_10 = arith.constant 0 : index
    %10 = vector.load %arg4[%c0_9, %c0_10] : memref<16x48xbf16, #tpu.memory_space<vmem>>, vector<16x48xbf16>
    %cst_11 = arith.constant dense<0.000000e+00> : vector<128x48xf32>
    %11 = tpu.matmul %7, %10, %cst_11 {dimension_numbers = #tpu.dot_dimension_numbers<[1], [0], [0], [1], [0, 0, 1, 1], [], []>} : vector<128x16xbf16>, vector<16x48xbf16>, vector<128x48xf32> -> vector<128x48xf32>
    %12 = arith.addf %9, %11 : vector<128x48xf32>
    %c0_12 = arith.constant 0 : index
    %c0_13 = arith.constant 0 : index
    %13 = vector.load %arg5[%c0_12, %c0_13] : memref<1x48xf32, #tpu.memory_space<vmem>>, vector<1x48xf32>
    %14 = vector.broadcast %13 : vector<1x48xf32> to vector<128x48xf32>
    %15 = arith.addf %12, %14 : vector<128x48xf32>
    %cst_14 = arith.constant 0.000000e+00 : f32
    %16 = vector.broadcast %cst_14 : f32 to vector<128x48xf32>
    %17 = arith.maximumf %15, %16 : vector<128x48xf32>
    %18 = vector.shape_cast %17 : vector<128x48xf32> to vector<8x16x48xf32>
    %19 = tpu.transpose %18, [1, 0, 2] : vector<8x16x48xf32> -> vector<16x8x48xf32>
    %20 = vector.extract_strided_slice %19 {offsets = [0, 0, 0], sizes = [16, 8, 8], strides = [1, 1, 1]} : vector<16x8x48xf32> to vector<16x8x8xf32>
    %21 = arith.truncf %20 : vector<16x8x8xf32> to vector<16x8x8xbf16>
    %22 = vector.extract_strided_slice %19 {offsets = [0, 0, 16], sizes = [16, 8, 8], strides = [1, 1, 1]} : vector<16x8x48xf32> to vector<16x8x8xf32>
    %23 = arith.truncf %22 : vector<16x8x8xf32> to vector<16x8x8xbf16>
    %24 = vector.extract_strided_slice %19 {offsets = [0, 0, 32], sizes = [16, 8, 8], strides = [1, 1, 1]} : vector<16x8x48xf32> to vector<16x8x8xf32>
    %25 = arith.truncf %24 : vector<16x8x8xf32> to vector<16x8x8xbf16>
    "tpu.trace_start"() <{level = 10 : i32, message = "ntd,nsd->nts"}> : () -> ()
    %cst_15 = arith.constant dense<0.000000e+00> : vector<16x8x8xf32>
    %26 = tpu.matmul %21, %23, %cst_15 {dimension_numbers = #tpu.dot_dimension_numbers<[2], [2], [1], [1], [0, 0, 0, 1, 1, 1], [0], [0]>} : vector<16x8x8xbf16>, vector<16x8x8xbf16>, vector<16x8x8xf32> -> vector<16x8x8xf32>
    "tpu.trace_stop"() : () -> ()
    %cst_16 = arith.constant 0.353553385 : f32
    %27 = vector.broadcast %cst_16 : f32 to vector<16x8x8xf32>
    %28 = arith.mulf %26, %27 : vector<16x8x8xf32>
    %cst_17 = arith.constant dense<0xFF800000> : vector<16x8xf32>
    %29 = vector.multi_reduction <maximumf>, %28, %cst_17 [2] : vector<16x8x8xf32> to vector<16x8xf32>
    %30 = vector.shape_cast %29 : vector<16x8xf32> to vector<16x8x1xf32>
    %31 = vector.broadcast %30 : vector<16x8x1xf32> to vector<16x8x8xf32>
    %32 = arith.subf %28, %31 : vector<16x8x8xf32>
    %33 = math.exp %32 : vector<16x8x8xf32>
    %cst_18 = arith.constant dense<0.000000e+00> : vector<16x8xf32>
    %34 = vector.multi_reduction <add>, %33, %cst_18 [2] : vector<16x8x8xf32> to vector<16x8xf32>
    %35 = vector.shape_cast %34 : vector<16x8xf32> to vector<16x8x1xf32>
    %36 = tpu.reciprocal %35 : vector<16x8x1xf32> -> vector<16x8x1xf32>
    %37 = vector.broadcast %36 : vector<16x8x1xf32> to vector<16x8x8xf32>
    %38 = arith.mulf %33, %37 : vector<16x8x8xf32>
    %39 = arith.truncf %38 : vector<16x8x8xf32> to vector<16x8x8xbf16>
    "tpu.trace_start"() <{level = 10 : i32, message = "nts,nsd->ntd"}> : () -> ()
    %cst_19 = arith.constant dense<0.000000e+00> : vector<16x8x8xf32>
    %40 = tpu.matmul %39, %25, %cst_19 {dimension_numbers = #tpu.dot_dimension_numbers<[2], [1], [1], [2], [0, 0, 0, 1, 1, 2], [0], [0]>} : vector<16x8x8xbf16>, vector<16x8x8xbf16>, vector<16x8x8xf32> -> vector<16x8x8xf32>
    "tpu.trace_stop"() : () -> ()
    %41 = vector.extract_strided_slice %19 {offsets = [0, 0, 8], sizes = [16, 8, 8], strides = [1, 1, 1]} : vector<16x8x48xf32> to vector<16x8x8xf32>
    %42 = arith.truncf %41 : vector<16x8x8xf32> to vector<16x8x8xbf16>
    %43 = vector.extract_strided_slice %19 {offsets = [0, 0, 24], sizes = [16, 8, 8], strides = [1, 1, 1]} : vector<16x8x48xf32> to vector<16x8x8xf32>
    %44 = arith.truncf %43 : vector<16x8x8xf32> to vector<16x8x8xbf16>
    %45 = vector.extract_strided_slice %19 {offsets = [0, 0, 40], sizes = [16, 8, 8], strides = [1, 1, 1]} : vector<16x8x48xf32> to vector<16x8x8xf32>
    %46 = arith.truncf %45 : vector<16x8x8xf32> to vector<16x8x8xbf16>
    "tpu.trace_start"() <{level = 10 : i32, message = "ntd,nsd->nts"}> : () -> ()
    %cst_20 = arith.constant dense<0.000000e+00> : vector<16x8x8xf32>
    %47 = tpu.matmul %42, %44, %cst_20 {dimension_numbers = #tpu.dot_dimension_numbers<[2], [2], [1], [1], [0, 0, 0, 1, 1, 1], [0], [0]>} : vector<16x8x8xbf16>, vector<16x8x8xbf16>, vector<16x8x8xf32> -> vector<16x8x8xf32>
    "tpu.trace_stop"() : () -> ()
    %cst_21 = arith.constant 0.353553385 : f32
    %48 = vector.broadcast %cst_21 : f32 to vector<16x8x8xf32>
    %49 = arith.mulf %47, %48 : vector<16x8x8xf32>
    %cst_22 = arith.constant dense<0xFF800000> : vector<16x8xf32>
    %50 = vector.multi_reduction <maximumf>, %49, %cst_22 [2] : vector<16x8x8xf32> to vector<16x8xf32>
    %51 = vector.shape_cast %50 : vector<16x8xf32> to vector<16x8x1xf32>
    %52 = vector.broadcast %51 : vector<16x8x1xf32> to vector<16x8x8xf32>
    %53 = arith.subf %49, %52 : vector<16x8x8xf32>
    %54 = math.exp %53 : vector<16x8x8xf32>
    %cst_23 = arith.constant dense<0.000000e+00> : vector<16x8xf32>
    %55 = vector.multi_reduction <add>, %54, %cst_23 [2] : vector<16x8x8xf32> to vector<16x8xf32>
    %56 = vector.shape_cast %55 : vector<16x8xf32> to vector<16x8x1xf32>
    %57 = tpu.reciprocal %56 : vector<16x8x1xf32> -> vector<16x8x1xf32>
    %58 = vector.broadcast %57 : vector<16x8x1xf32> to vector<16x8x8xf32>
    %59 = arith.mulf %54, %58 : vector<16x8x8xf32>
    %60 = arith.truncf %59 : vector<16x8x8xf32> to vector<16x8x8xbf16>
    "tpu.trace_start"() <{level = 10 : i32, message = "nts,nsd->ntd"}> : () -> ()
    %cst_24 = arith.constant dense<0.000000e+00> : vector<16x8x8xf32>
    %61 = tpu.matmul %60, %46, %cst_24 {dimension_numbers = #tpu.dot_dimension_numbers<[2], [1], [1], [2], [0, 0, 0, 1, 1, 2], [0], [0]>} : vector<16x8x8xbf16>, vector<16x8x8xbf16>, vector<16x8x8xf32> -> vector<16x8x8xf32>
    "tpu.trace_stop"() : () -> ()
    %62 = tpu.concatenate %40, %61 in 2 : vector<16x8x8xf32>, vector<16x8x8xf32> -> vector<16x8x16xf32>
    %63 = vector.shape_cast %62 : vector<16x8x16xf32> to vector<128x16xf32>
    %64 = arith.truncf %63 : vector<128x16xf32> to vector<128x16xbf16>
    %c0_25 = arith.constant 0 : index
    %c0_26 = arith.constant 0 : index
    %65 = vector.load %arg6[%c0_25, %c0_26] : memref<16x16xbf16, #tpu.memory_space<vmem>>, vector<16x16xbf16>
    %cst_27 = arith.constant dense<0.000000e+00> : vector<128x16xf32>
    %66 = tpu.matmul %64, %65, %cst_27 {dimension_numbers = #tpu.dot_dimension_numbers<[1], [0], [0], [1], [0, 0, 1, 1], [], []>} : vector<128x16xbf16>, vector<16x16xbf16>, vector<128x16xf32> -> vector<128x16xf32>
    %c0_28 = arith.constant 0 : index
    %c0_29 = arith.constant 0 : index
    %67 = vector.load %arg7[%c0_28, %c0_29] : memref<1x16xf32, #tpu.memory_space<vmem>>, vector<1x16xf32>
    %68 = vector.broadcast %67 : vector<1x16xf32> to vector<128x16xf32>
    %69 = arith.addf %66, %68 : vector<128x16xf32>
    %cst_30 = arith.constant 0.000000e+00 : f32
    %70 = vector.broadcast %cst_30 : f32 to vector<128x16xf32>
    %71 = arith.maximumf %69, %70 : vector<128x16xf32>
    %72 = vector.shape_cast %71 : vector<128x16xf32> to vector<16x8x16xf32>
    %73 = tpu.transpose %72, [1, 0, 2] : vector<16x8x16xf32> -> vector<8x16x16xf32>
    %74 = arith.truncf %73 : vector<8x16x16xf32> to vector<8x16x16xbf16>
    %c0_31 = arith.constant 0 : index
    %c0_32 = arith.constant 0 : index
    %c0_33 = arith.constant 0 : index
    %c0_34 = arith.constant 0 : index
    %75 = vector.load %arg8[%c0_31, %c0_32, %c0_33, %c0_34] : memref<1x8x16x16xbf16, #tpu.memory_space<vmem>>, vector<1x8x16x16xbf16>
    %76 = vector.shape_cast %75 : vector<1x8x16x16xbf16> to vector<8x16x16xbf16>
    %77 = vector.shape_cast %74 : vector<8x16x16xbf16> to vector<1x8x16x16xbf16>
    tpu.vector_store %arg8[%c0_31, %c0_32, %c0_33, %c0_34], %77 {strides = array<i32>} : memref<1x8x16x16xbf16, #tpu.memory_space<vmem>>, vector<1x8x16x16xbf16>,
    return
  }
  func.func @transform_0(%arg0: i32) -> (i32, i32, i32, i32) {
    %c0_i32 = arith.constant 0 : i32
    %c0_i32_0 = arith.constant 0 : i32
    %c0_i32_1 = arith.constant 0 : i32
    %c0_i32_2 = arith.constant 0 : i32
    return %arg0, %c0_i32, %c0_i32_0, %c0_i32_1 : i32, i32, i32, i32
  }
  func.func @transform_1(%arg0: i32) -> (i32, i32, i32, i32) {
    %c0_i32 = arith.constant 0 : i32
    %c0_i32_0 = arith.constant 0 : i32
    %c0_i32_1 = arith.constant 0 : i32
    %c0_i32_2 = arith.constant 0 : i32
    return %arg0, %c0_i32, %c0_i32_0, %c0_i32_1 : i32, i32, i32, i32
  }
  func.func @transform_2(%arg0: i32) -> (i32, i32) {
    %c0_i32 = arith.constant 0 : i32
    %c0_i32_0 = arith.constant 0 : i32
    %c0_i32_1 = arith.constant 0 : i32
    return %c0_i32, %c0_i32_0 : i32, i32
  }
  func.func @transform_3(%arg0: i32) -> (i32, i32) {
    %c0_i32 = arith.constant 0 : i32
    %c0_i32_0 = arith.constant 0 : i32
    %c0_i32_1 = arith.constant 0 : i32
    return %c0_i32, %c0_i32_0 : i32, i32
  }
  func.func @transform_4(%arg0: i32) -> (i32, i32) {
    %c0_i32 = arith.constant 0 : i32
    %c0_i32_0 = arith.constant 0 : i32
    %c0_i32_1 = arith.constant 0 : i32
    return %c0_i32, %c0_i32_0 : i32, i32
  }
  func.func @transform_5(%arg0: i32) -> (i32, i32) {
    %c0_i32 = arith.constant 0 : i32
    %c0_i32_0 = arith.constant 0 : i32
    %c0_i32_1 = arith.constant 0 : i32
    return %c0_i32, %c0_i32_0 : i32, i32
  }
  func.func @transform_6(%arg0: i32) -> (i32, i32) {
    %c0_i32 = arith.constant 0 : i32
    %c0_i32_0 = arith.constant 0 : i32
    %c0_i32_1 = arith.constant 0 : i32
    return %c0_i32, %c0_i32_0 : i32, i32
  }
  func.func @transform_7(%arg0: i32) -> (i32, i32, i32, i32) {
    %c0_i32 = arith.constant 0 : i32
    %c0_i32_0 = arith.constant 0 : i32
    %c0_i32_1 = arith.constant 0 : i32
    %c0_i32_2 = arith.constant 0 : i32
    return %arg0, %c0_i32, %c0_i32_0, %c0_i32_1 : i32, i32, i32, i32
  }
}

</mosaic_0001>

<llo_original>
// kernel: _lambda_.5
$region0: #{_lambda_.5}
  #allocation0 [shape = 'u32[]', space=smem, size = 0x4, offset = 0x4, fixed_abs, tag = 'smem constant byte address 0x4 - core index']
  #allocation1 [shape = 'u32[72,128]{1,0:T(1,128)}', space=vmem, size = 0x9000, scoped, tag = 'internal scratch']
  %s0 = inlined_call_operand.vmem [shape: f32[256,20], index: 0, kind: input, shape index: {}]
  %s1 = inlined_call_operand.vmem [shape: bf16[256,16], index: 1, kind: input, shape index: {}]
  %s2 = inlined_call_operand.vmem [shape: bf16[256,16], index: 2, kind: input, shape index: {}]
  %s3 = inlined_call_operand.vmem [shape: bf16[16,16], index: 3, kind: input, shape index: {}]
  %s4 = inlined_call_operand.vmem [shape: bf16[16,16], index: 4, kind: input, shape index: {}]
  %s5 = inlined_call_operand.vmem [shape: f32[1,16], index: 5, kind: input, shape index: {}]
  %s6 = inlined_call_operand.vmem [shape: bf16[16,16], index: 6, kind: input, shape index: {}]
  %s7 = inlined_call_operand.vmem [shape: f32[1,16], index: 7, kind: input, shape index: {}]
  %s8 = inlined_call_operand.vmem [shape: bf16[16,20], index: 8, kind: input, shape index: {}]
  %s9 = inlined_call_operand.vmem [shape: f32[1,20], index: 9, kind: input, shape index: {}]
  %s10 = inlined_call_operand.hbm [shape: f32[256,20], index: 10, kind: output, shape index: {}]
  %s11 = sld [smem:[#allocation0]]
  $region73: #{_lambda_.5} parent=0
    _
  %s13 = ssub.s32 1, %s11
  %s14 = scalar_select 0, %s13, %s11
  $region1: #{_lambda_.5} parent=0
    #allocation2 [shape = 'u8[131072]{0}', space=vmem, size = 0x20000, scoped, tag = 'output window, operand 0']
    #allocation3 [shape = 's32[2]{0}', space=sflag, size = 0x8, scoped, tag = 'scoped memory for _lambda_.5']
    %15 = vsyncpa [#allocation3], 0
    %s16 = scalar_lea.sflag [#allocation3], 1
    %17 = vsyncpa %s16, 0
    loop: start=0, step=1, limit=4
    $region2: #{_lambda_.5} parent=1 // loop_pre_header
      _
    $region3: #{_lambda_.5} parent=1 // loop_header
      %s19 = sphi 0, %s23
      %p20 = scmp.ge.s32.totalorder %s19, 4
      %s29 = sphi 0, %s31
      %s32 = sphi 0, %s29
      %s33 = sphi 0, %s32
      %s49 = sphi 0, %s33
      %s55 = sphi 0, %s57
      %s58 = sphi 0, %s55
      %s59 = sphi 0, %s58
      %s75 = sphi 0, %s59
      %s81 = sphi 0, %s83
      %s84 = sphi 0, %s81
      %s85 = sphi 0, %s84
      %s101 = sphi 0, %s85
      %s105 = sphi 0, %s105
      %s107 = sphi 0, %s105
      %s108 = sphi 0, %s107
      %s122 = sphi 0, %s108
      %s126 = sphi 0, %s126
      %s128 = sphi 0, %s126
      %s129 = sphi 0, %s128
      %s143 = sphi 0, %s129
      %s147 = sphi 0, %s147
      %s149 = sphi 0, %s147
      %s150 = sphi 0, %s149
      %s164 = sphi 0, %s150
      %s168 = sphi 0, %s168
      %s170 = sphi 0, %s168
      %s171 = sphi 0, %s170
      %s185 = sphi 0, %s171
      %s189 = sphi 0, %s189
      %s191 = sphi 0, %s189
      %s192 = sphi 0, %s191
      %s206 = sphi 0, %s192
      %s210 = sphi 0, %s210
      %s212 = sphi 0, %s210
      %s213 = sphi 0, %s212
      %s227 = sphi 0, %s213
      %s231 = sphi 0, %s231
      %s233 = sphi 0, %s231
      %s234 = sphi 0, %s233
      %s248 = sphi 0, %s234
      %s254 = sphi 0, %s256
      %s257 = sphi 0, %s254
      %s258 = sphi 0, %s257
      %s274 = sphi 0, %s258
    $region4: #{_lambda_.5} parent=1 // loop_header_branch
      %22 = sbr.rel (%p20) target = $region8
    $region5: #{_lambda_.5} parent=1 // loop_body
      %s24 = ssub.s32 %s19, 1
      %s25 = ssub.s32 %s19, 2
      %s26 = sadd.s32 %s19, 1
      %s27 = ssub.s32 %s19, %s26
      %p28 = scmp.eq.s32.totalorder %s27, 0
      %s30 = sadd.s32 %s29, 1
      %s31 = scalar_select %p28, %s29, %s30
      %p34 = pneg %p28
      %p35 = scmp.eq.s32.totalorder %s19, 1
      %p36 = por %p34, %p35
      %p37 = scmp.ne.s32.totalorder %s29, %s32
      %p38 = scmp.eq.s32.totalorder %s19, 0
      %p39 = por %p37, %p38
      %p40 = scmp.ne.s32.totalorder %s29, %s32
      %p41 = scmp.eq.s32.totalorder %s24, 1
      %p42 = por %p40, %p41
      %p43 = scmp.ne.s32.totalorder %s32, %s33
      %p44 = scmp.eq.s32.totalorder %s24, 0
      %p45 = por %p43, %p44
      %p46 = scmp.ne.s32.totalorder %s32, %s33
      %p47 = scmp.eq.s32.totalorder %s25, 1
      %p48 = por %p46, %p47
      %p50 = scmp.ne.s32.totalorder %s33, %s49
      %p51 = scmp.eq.s32.totalorder %s25, 0
      %p52 = por %p50, %p51
      %s53 = ssub.s32 %s19, %s26
      %p54 = scmp.eq.s32.totalorder %s53, 0
      %s56 = sadd.s32 %s55, 1
      %s57 = scalar_select %p54, %s55, %s56
      %p60 = pneg %p54
      %p61 = scmp.eq.s32.totalorder %s19, 1
      %p62 = por %p60, %p61
      %p63 = scmp.ne.s32.totalorder %s55, %s58
      %p64 = scmp.eq.s32.totalorder %s19, 0
      %p65 = por %p63, %p64
      %p66 = scmp.ne.s32.totalorder %s55, %s58
      %p67 = scmp.eq.s32.totalorder %s24, 1
      %p68 = por %p66, %p67
      %p69 = scmp.ne.s32.totalorder %s58, %s59
      %p70 = scmp.eq.s32.totalorder %s24, 0
      %p71 = por %p69, %p70
      %p72 = scmp.ne.s32.totalorder %s58, %s59
      %p73 = scmp.eq.s32.totalorder %s25, 1
      %p74 = por %p72, %p73
      %p76 = scmp.ne.s32.totalorder %s59, %s75
      %p77 = scmp.eq.s32.totalorder %s25, 0
      %p78 = por %p76, %p77
      %s79 = ssub.s32 %s19, %s26
      %p80 = scmp.eq.s32.totalorder %s79, 0
      %s82 = sadd.s32 %s81, 1
      %s83 = scalar_select %p80, %s81, %s82
      %p86 = pneg %p80
      %p87 = scmp.eq.s32.totalorder %s19, 1
      %p88 = por %p86, %p87
      %p89 = scmp.ne.s32.totalorder %s81, %s84
      %p90 = scmp.eq.s32.totalorder %s19, 0
      %p91 = por %p89, %p90
      %p92 = scmp.ne.s32.totalorder %s81, %s84
      %p93 = scmp.eq.s32.totalorder %s24, 1
      %p94 = por %p92, %p93
      %p95 = scmp.ne.s32.totalorder %s84, %s85
      %p96 = scmp.eq.s32.totalorder %s24, 0
      %p97 = por %p95, %p96
      %p98 = scmp.ne.s32.totalorder %s84, %s85
      %p99 = scmp.eq.s32.totalorder %s25, 1
      %p100 = por %p98, %p99
      %p102 = scmp.ne.s32.totalorder %s85, %s101
      %p103 = scmp.eq.s32.totalorder %s25, 0
      %p104 = por %p102, %p103
      %s106 = sadd.s32 %s105, 1
      %p109 = scmp.eq.s32.totalorder %s19, 1
      %p110 = scmp.ne.s32.totalorder %s105, %s107
      %p111 = scmp.eq.s32.totalorder %s19, 0
      %p112 = por %p110, %p111
      %p113 = scmp.ne.s32.totalorder %s105, %s107
      %p114 = scmp.eq.s32.totalorder %s24, 1
      %p115 = por %p113, %p114
      %p116 = scmp.ne.s32.totalorder %s107, %s108
      %p117 = scmp.eq.s32.totalorder %s24, 0
      %p118 = por %p116, %p117
      %p119 = scmp.ne.s32.totalorder %s107, %s108
      %p120 = scmp.eq.s32.totalorder %s25, 1
      %p121 = por %p119, %p120
      %p123 = scmp.ne.s32.totalorder %s108, %s122
      %p124 = scmp.eq.s32.totalorder %s25, 0
      %p125 = por %p123, %p124
      %s127 = sadd.s32 %s126, 1
      %p130 = scmp.eq.s32.totalorder %s19, 1
      %p131 = scmp.ne.s32.totalorder %s126, %s128
      %p132 = scmp.eq.s32.totalorder %s19, 0
      %p133 = por %p131, %p132
      %p134 = scmp.ne.s32.totalorder %s126, %s128
      %p135 = scmp.eq.s32.totalorder %s24, 1
      %p136 = por %p134, %p135
      %p137 = scmp.ne.s32.totalorder %s128, %s129
      %p138 = scmp.eq.s32.totalorder %s24, 0
      %p139 = por %p137, %p138
      %p140 = scmp.ne.s32.totalorder %s128, %s129
      %p141 = scmp.eq.s32.totalorder %s25, 1
      %p142 = por %p140, %p141
      %p144 = scmp.ne.s32.totalorder %s129, %s143
      %p145 = scmp.eq.s32.totalorder %s25, 0
      %p146 = por %p144, %p145
      %s148 = sadd.s32 %s147, 1
      %p151 = scmp.eq.s32.totalorder %s19, 1
      %p152 = scmp.ne.s32.totalorder %s147, %s149
      %p153 = scmp.eq.s32.totalorder %s19, 0
      %p154 = por %p152, %p153
      %p155 = scmp.ne.s32.totalorder %s147, %s149
      %p156 = scmp.eq.s32.totalorder %s24, 1
      %p157 = por %p155, %p156
      %p158 = scmp.ne.s32.totalorder %s149, %s150
      %p159 = scmp.eq.s32.totalorder %s24, 0
      %p160 = por %p158, %p159
      %p161 = scmp.ne.s32.totalorder %s149, %s150
      %p162 = scmp.eq.s32.totalorder %s25, 1
      %p163 = por %p161, %p162
      %p165 = scmp.ne.s32.totalorder %s150, %s164
      %p166 = scmp.eq.s32.totalorder %s25, 0
      %p167 = por %p165, %p166
      %s169 = sadd.s32 %s168, 1
      %p172 = scmp.eq.s32.totalorder %s19, 1
      %p173 = scmp.ne.s32.totalorder %s168, %s170
      %p174 = scmp.eq.s32.totalorder %s19, 0
      %p175 = por %p173, %p174
      %p176 = scmp.ne.s32.totalorder %s168, %s170
      %p177 = scmp.eq.s32.totalorder %s24, 1
      %p178 = por %p176, %p177
      %p179 = scmp.ne.s32.totalorder %s170, %s171
      %p180 = scmp.eq.s32.totalorder %s24, 0
      %p181 = por %p179, %p180
      %p182 = scmp.ne.s32.totalorder %s170, %s171
      %p183 = scmp.eq.s32.totalorder %s25, 1
      %p184 = por %p182, %p183
      %p186 = scmp.ne.s32.totalorder %s171, %s185
      %p187 = scmp.eq.s32.totalorder %s25, 0
      %p188 = por %p186, %p187
      %s190 = sadd.s32 %s189, 1
      %p193 = scmp.eq.s32.totalorder %s19, 1
      %p194 = scmp.ne.s32.totalorder %s189, %s191
      %p195 = scmp.eq.s32.totalorder %s19, 0
      %p196 = por %p194, %p195
      %p197 = scmp.ne.s32.totalorder %s189, %s191
      %p198 = scmp.eq.s32.totalorder %s24, 1
      %p199 = por %p197, %p198
      %p200 = scmp.ne.s32.totalorder %s191, %s192
      %p201 = scmp.eq.s32.totalorder %s24, 0
      %p202 = por %p200, %p201
      %p203 = scmp.ne.s32.totalorder %s191, %s192
      %p204 = scmp.eq.s32.totalorder %s25, 1
      %p205 = por %p203, %p204
      %p207 = scmp.ne.s32.totalorder %s192, %s206
      %p208 = scmp.eq.s32.totalorder %s25, 0
      %p209 = por %p207, %p208
      %s211 = sadd.s32 %s210, 1
      %p214 = scmp.eq.s32.totalorder %s19, 1
      %p215 = scmp.ne.s32.totalorder %s210, %s212
      %p216 = scmp.eq.s32.totalorder %s19, 0
      %p217 = por %p215, %p216
      %p218 = scmp.ne.s32.totalorder %s210, %s212
      %p219 = scmp.eq.s32.totalorder %s24, 1
      %p220 = por %p218, %p219
      %p221 = scmp.ne.s32.totalorder %s212, %s213
      %p222 = scmp.eq.s32.totalorder %s24, 0
      %p223 = por %p221, %p222
      %p224 = scmp.ne.s32.totalorder %s212, %s213
      %p225 = scmp.eq.s32.totalorder %s25, 1
      %p226 = por %p224, %p225
      %p228 = scmp.ne.s32.totalorder %s213, %s227
      %p229 = scmp.eq.s32.totalorder %s25, 0
      %p230 = por %p228, %p229
      %s232 = sadd.s32 %s231, 1
      %p235 = scmp.eq.s32.totalorder %s19, 1
      %p236 = scmp.ne.s32.totalorder %s231, %s233
      %p237 = scmp.eq.s32.totalorder %s19, 0
      %p238 = por %p236, %p237
      %p239 = scmp.ne.s32.totalorder %s231, %s233
      %p240 = scmp.eq.s32.totalorder %s24, 1
      %p241 = por %p239, %p240
      %p242 = scmp.ne.s32.totalorder %s233, %s234
      %p243 = scmp.eq.s32.totalorder %s24, 0
      %p244 = por %p242, %p243
      %p245 = scmp.ne.s32.totalorder %s233, %s234
      %p246 = scmp.eq.s32.totalorder %s25, 1
      %p247 = por %p245, %p246
      %p249 = scmp.ne.s32.totalorder %s234, %s248
      %p250 = scmp.eq.s32.totalorder %s25, 0
      %p251 = por %p249, %p250
      %s252 = ssub.s32 %s19, %s26
      %p253 = scmp.eq.s32.totalorder %s252, 0
      %s255 = sadd.s32 %s254, 1
      %s256 = scalar_select %p253, %s254, %s255
      %p259 = pneg %p253
      %p260 = scmp.eq.s32.totalorder %s19, 1
      %p261 = por %p259, %p260
      %p262 = scmp.ne.s32.totalorder %s254, %s257
      %p263 = scmp.eq.s32.totalorder %s19, 0
      %p264 = por %p262, %p263
      %p265 = scmp.ne.s32.totalorder %s254, %s257
      %p266 = scmp.eq.s32.totalorder %s24, 1
      %p267 = por %p265, %p266
      %p268 = scmp.ne.s32.totalorder %s257, %s258
      %p269 = scmp.eq.s32.totalorder %s24, 0
      %p270 = por %p268, %p269
      %p271 = scmp.ne.s32.totalorder %s257, %s258
      %p272 = scmp.eq.s32.totalorder %s25, 1
      %p273 = por %p271, %p272
      %p275 = scmp.ne.s32.totalorder %s258, %s274
      %p276 = scmp.eq.s32.totalorder %s25, 0
      %p277 = por %p275, %p276
      %p278 = scmp.le.s32.totalorder 1, %s19
      %p279 = scmp.lt.s32.totalorder %s19, 3
      %p280 = pnand %p278, %p279
      %p281 = pneg %p280
      // Predicated region
      $region9: #{_lambda_.5} parent=5 // pred_check
        _
      $region10: #{_lambda_.5} parent=5 // pred_check_branch
        %283 = sbr.rel (%p280) target = $region12
      $region11: #{_lambda_.5} parent=5 // pred_region
        %s284 = ssub.s32 %s19, 1
        // Predicated region
        $region13: #{_lambda_.5} parent=11 // pred_check
          %p285 = pneg %p118
        $region14: #{_lambda_.5} parent=11 // pred_check_branch
          %287 = sbr.rel (%p285) target = $region16
        $region15: #{_lambda_.5} parent=11 // pred_region
          _
        $region16: #{_lambda_.5} parent=11 // pred_fallthru
          _
        // Predicated region
        $region17: #{_lambda_.5} parent=11 // pred_check
          %p288 = pneg %p139
        $region18: #{_lambda_.5} parent=11 // pred_check_branch
          %290 = sbr.rel (%p288) target = $region20
        $region19: #{_lambda_.5} parent=11 // pred_region
          _
        $region20: #{_lambda_.5} parent=11 // pred_fallthru
          _
        // Predicated region
        $region21: #{_lambda_.5} parent=11 // pred_check
          %p291 = pneg %p160
        $region22: #{_lambda_.5} parent=11 // pred_check_branch
          %293 = sbr.rel (%p291) target = $region24
        $region23: #{_lambda_.5} parent=11 // pred_region
          _
        $region24: #{_lambda_.5} parent=11 // pred_fallthru
          _
        // Predicated region
        $region25: #{_lambda_.5} parent=11 // pred_check
          %p294 = pneg %p181
        $region26: #{_lambda_.5} parent=11 // pred_check_branch
          %296 = sbr.rel (%p294) target = $region28
        $region27: #{_lambda_.5} parent=11 // pred_region
          _
        $region28: #{_lambda_.5} parent=11 // pred_fallthru
          _
        // Predicated region
        $region29: #{_lambda_.5} parent=11 // pred_check
          %p297 = pneg %p202
        $region30: #{_lambda_.5} parent=11 // pred_check_branch
          %299 = sbr.rel (%p297) target = $region32
        $region31: #{_lambda_.5} parent=11 // pred_region
          _
        $region32: #{_lambda_.5} parent=11 // pred_fallthru
          _
        // Predicated region
        $region33: #{_lambda_.5} parent=11 // pred_check
          %p300 = pneg %p223
        $region34: #{_lambda_.5} parent=11 // pred_check_branch
          %302 = sbr.rel (%p300) target = $region36
        $region35: #{_lambda_.5} parent=11 // pred_region
          _
        $region36: #{_lambda_.5} parent=11 // pred_fallthru
          _
        // Predicated region
        $region37: #{_lambda_.5} parent=11 // pred_check
          %p303 = pneg %p244
        $region38: #{_lambda_.5} parent=11 // pred_check_branch
          %305 = sbr.rel (%p303) target = $region40
        $region39: #{_lambda_.5} parent=11 // pred_region
          _
        $region40: #{_lambda_.5} parent=11 // pred_fallthru
          _
      $region12: #{_lambda_.5} parent=5 // pred_fallthru
        _
      %p306 = scmp.lt.s32.totalorder %s19, 2
      // Predicated region
      $region41: #{_lambda_.5} parent=5 // pred_check
        %p307 = pneg %p306
      $region42: #{_lambda_.5} parent=5 // pred_check_branch
        %309 = sbr.rel (%p307) target = $region44
      $region43: #{_lambda_.5} parent=5 // pred_region
        // Predicated region
        $region45: #{_lambda_.5} parent=43 // pred_check
          %p310 = pneg %p39
        $region46: #{_lambda_.5} parent=43 // pred_check_branch
          %312 = sbr.rel (%p310) target = $region48
        $region47: #{_lambda_.5} parent=43 // pred_region
          %s313 = smul.u32 16, %s19
          %p314 = scmp.lt.s32.totalorder %s313, 31
          %s315 = scalar_select %p314, %s313, 31
          %s316 = smul.addr %s315, 8
          %s317 = scalar_lea.vmem %s0, %s316
          %s318 = smul.u32 16, %s19
        $region48: #{_lambda_.5} parent=43 // pred_fallthru
          _
        // Predicated region
        $region49: #{_lambda_.5} parent=43 // pred_check
          %p319 = pneg %p65
        $region50: #{_lambda_.5} parent=43 // pred_check_branch
          %321 = sbr.rel (%p319) target = $region52
        $region51: #{_lambda_.5} parent=43 // pred_region
          %s322 = smul.u32 16, %s19
          %p323 = scmp.lt.s32.totalorder %s322, 31
          %s324 = scalar_select %p323, %s322, 31
          %s325 = smul.addr %s324, 4
          %s326 = scalar_lea.vmem %s1, %s325
          %s327 = smul.u32 16, %s19
        $region52: #{_lambda_.5} parent=43 // pred_fallthru
          _
        // Predicated region
        $region53: #{_lambda_.5} parent=43 // pred_check
          %p328 = pneg %p91
        $region54: #{_lambda_.5} parent=43 // pred_check_branch
          %330 = sbr.rel (%p328) target = $region56
        $region55: #{_lambda_.5} parent=43 // pred_region
          %s331 = smul.u32 16, %s19
          %p332 = scmp.lt.s32.totalorder %s331, 31
          %s333 = scalar_select %p332, %s331, 31
          %s334 = smul.addr %s333, 4
          %s335 = scalar_lea.vmem %s2, %s334
          %s336 = smul.u32 16, %s19
        $region56: #{_lambda_.5} parent=43 // pred_fallthru
          _
      $region44: #{_lambda_.5} parent=5 // pred_fallthru
        _
      %p337 = scmp.le.s32.totalorder 1, %s19
      %p338 = scmp.lt.s32.totalorder %s19, 3
      %p339 = pnand %p337, %p338
      %p340 = pneg %p339
      // Predicated region
      $region57: #{_lambda_.5} parent=5 // pred_check
        _
      $region58: #{_lambda_.5} parent=5 // pred_check_branch
        %342 = sbr.rel (%p339) target = $region60
      $region59: #{_lambda_.5} parent=5 // pred_region
        %s343 = ssub.s32 %s19, 1
        %s344 = smul.u32 16, %s24
        %p345 = scmp.lt.s32.totalorder %s344, 31
        %s346 = scalar_select %p345, %s344, 31
        %s347 = smul.addr %s346, 8
        %s348 = scalar_lea.vmem %s0, %s347
        %p349 = pneg %p45
        %p350 = pneg %p42
        %s351 = smul.u32 16, %s24
        %p352 = scmp.lt.s32.totalorder %s351, 31
        %s353 = scalar_select %p352, %s351, 31
        %s354 = smul.addr %s353, 4
        %s355 = scalar_lea.vmem %s1, %s354
        %p356 = pneg %p71
        %p357 = pneg %p68
        %s358 = smul.u32 16, %s24
        %p359 = scmp.lt.s32.totalorder %s358, 31
        %s360 = scalar_select %p359, %s358, 31
        %s361 = smul.addr %s360, 4
        %s362 = scalar_lea.vmem %s2, %s361
        %p363 = pneg %p97
        %p364 = pneg %p94
        %p365 = pneg %p118
        %p366 = pneg %p115
        %p367 = pneg %p139
        %p368 = pneg %p136
        %p369 = pneg %p160
        %p370 = pneg %p157
        %p371 = pneg %p181
        %p372 = pneg %p178
        %p373 = pneg %p202
        %p374 = pneg %p199
        %p375 = pneg %p223
        %p376 = pneg %p220
        %p377 = pneg %p244
        %p378 = pneg %p241
        %p379 = pneg %p270
        %p380 = pneg %p267
        %s381 = sand.u32 %s257, 1
        %s382 = scalar_lea.sflag [#allocation3], %s381
        %s383 = sand.u32 %s257, 1
        %s384 = smul.addr %s383, 128
        %s385 = scalar_lea.vmem [#allocation2], %s384
        %s386 = smul.u32 16, %s24
        %p387 = scmp.lt.s32.totalorder %s386, 31
        %s388 = scalar_select %p387, %s386, 31
        %s389 = smul.addr %s388, 8
        %s390 = scalar_lea.vmem %s0, %s389
        %s391 = smul.u32 16, %s24
        %s392 = smul.u32 16, %s24
        %p393 = scmp.lt.s32.totalorder %s392, 31
        %s394 = scalar_select %p393, %s392, 31
        %s395 = smul.addr %s394, 4
        %s396 = scalar_lea.vmem %s1, %s395
        %s397 = smul.u32 16, %s24
        %s398 = smul.u32 16, %s24
        %p399 = scmp.lt.s32.totalorder %s398, 31
        %s400 = scalar_select %p399, %s398, 31
        %s401 = smul.addr %s400, 4
        %s402 = scalar_lea.vmem %s2, %s401
        %s403 = smul.u32 16, %s24
        %s404 = smul.u32 16, %s24
        %v406 = vld [vmem:[%s396] sm:$0xf]
        %v407 = vld [vmem:[%s396 + $0x4] sm:$0xf]
        %v408 = vld [vmem:[%s396 + $0x8] sm:$0xf]
        %v409 = vld [vmem:[%s396 + $0xc] sm:$0xf]
        %v410 = vld [vmem:[%s396 + $0x10] sm:$0xf]
        %v411 = vld [vmem:[%s396 + $0x14] sm:$0xf]
        %v412 = vld [vmem:[%s396 + $0x18] sm:$0xf]
        %v413 = vld [vmem:[%s396 + $0x1c] sm:$0xf]
        %v414 = vld [vmem:[%s396 + $0x20] sm:$0xf]
        %v415 = vld [vmem:[%s396 + $0x24] sm:$0xf]
        %v416 = vld [vmem:[%s396 + $0x28] sm:$0xf]
        %v417 = vld [vmem:[%s396 + $0x2c] sm:$0xf]
        %v418 = vld [vmem:[%s396 + $0x30] sm:$0xf]
        %v419 = vld [vmem:[%s396 + $0x34] sm:$0xf]
        %v420 = vld [vmem:[%s396 + $0x38] sm:$0xf]
        %v421 = vld [vmem:[%s396 + $0x3c] sm:$0xf]
        %v422 = vld [vmem:[%s402] sm:$0xf]
        %v423 = vld [vmem:[%s402 + $0x4] sm:$0xf]
        %v424 = vld [vmem:[%s402 + $0x8] sm:$0xf]
        %v425 = vld [vmem:[%s402 + $0xc] sm:$0xf]
        %v426 = vld [vmem:[%s402 + $0x10] sm:$0xf]
        %v427 = vld [vmem:[%s402 + $0x14] sm:$0xf]
        %v428 = vld [vmem:[%s402 + $0x18] sm:$0xf]
        %v429 = vld [vmem:[%s402 + $0x1c] sm:$0xf]
        %v430 = vld [vmem:[%s402 + $0x20] sm:$0xf]
        %v431 = vld [vmem:[%s402 + $0x24] sm:$0xf]
        %v432 = vld [vmem:[%s402 + $0x28] sm:$0xf]
        %v433 = vld [vmem:[%s402 + $0x2c] sm:$0xf]
        %v434 = vld [vmem:[%s402 + $0x30] sm:$0xf]
        %v435 = vld [vmem:[%s402 + $0x34] sm:$0xf]
        %v436 = vld [vmem:[%s402 + $0x38] sm:$0xf]
        %v437 = vld [vmem:[%s402 + $0x3c] sm:$0xf]
        %v438 = vld [vmem:[%s3] sm:$0xf]
        %v439 = vld [vmem:[%s3 + $0x4] sm:$0xf]
        %v440 = vld [vmem:[%s4] sm:$0xf]
        %v441 = vld [vmem:[%s4 + $0x4] sm:$0xf]
        %v442 = vld [vmem:[%s5] sm:$0x1]
        %v444 = vperm.slane %v442, 0
        %v462 = vunpack.c.l.b16 %v422
        %v463 = vunpack.c.l.b16 %v423
        %v464 = vunpack.c.l.b16 %v424
        %v465 = vunpack.c.l.b16 %v425
        %v466 = vunpack.c.l.b16 %v426
        %v467 = vunpack.c.l.b16 %v427
        %v468 = vunpack.c.l.b16 %v428
        %v469 = vunpack.c.l.b16 %v429
        %v470 = vunpack.c.l.b16 %v430
        %v471 = vunpack.c.l.b16 %v431
        %v472 = vunpack.c.l.b16 %v432
        %v473 = vunpack.c.l.b16 %v433
        %v474 = vunpack.c.l.b16 %v434
        %v475 = vunpack.c.l.b16 %v435
        %v476 = vunpack.c.l.b16 %v436
        %v477 = vunpack.c.l.b16 %v437
        %v478 = vpack.c.b16 %v463, %v462
        %v479 = vpack.c.b16 %v465, %v464
        %v480 = vpack.c.b16 %v467, %v466
        %v481 = vpack.c.b16 %v469, %v468
        %v482 = vpack.c.b16 %v471, %v470
        %v483 = vpack.c.b16 %v473, %v472
        %v484 = vpack.c.b16 %v475, %v474
        %v485 = vpack.c.b16 %v477, %v476
        %v488 = vunpack.c.l.b16 %v440
        %v489 = vunpack.c.l.b16 %v441
        %v490 = vpack.c.b16 %v489, %v488
        %vm492 = vcmask 130048
        %v494 = vsel %vm492, %v478, 0
        %v497 = vsel %vm492, %v479, 0
        %v500 = vsel %vm492, %v480, 0
        %v503 = vsel %vm492, %v481, 0
        %v506 = vsel %vm492, %v482, 0
        %v509 = vsel %vm492, %v483, 0
        %v512 = vsel %vm492, %v484, 0
        %v515 = vsel %vm492, %v485, 0
        %517 = vmatpush.bf16.msra.mxu0 0
        %518 = vmatpush.bf16.msra.mxu0 0
        %519 = vmatpush.bf16.msra.mxu0 0
        %520 = vmatpush.bf16.msra.mxu0 0
        %521 = vmatpush.bf16.msra.mxu0 0
        %522 = vmatpush.bf16.msra.mxu0 0
        %523 = vmatpush.bf16.msra.mxu0 0
        %524 = vmatpush.bf16.msra.mxu0 %v490
        %525 = vmatmul.bf16.gmra.mxu0 %v494
        %v526 = vpop.f32.mrf.mxu0
        %v527 = vadd.f32 %v444, %v526
        %v528 = vpop.f32.mrf.mxu0
        %v529 = vadd.f32 %v444, %v528
        %530 = vmatmul.bf16.gmra.mxu0 %v497
        %v531 = vpop.f32.mrf.mxu0
        %v532 = vadd.f32 %v444, %v531
        %v533 = vpop.f32.mrf.mxu0
        %v534 = vadd.f32 %v444, %v533
        %535 = vmatmul.bf16.gmra.mxu0 %v500
        %v536 = vpop.f32.mrf.mxu0
        %v537 = vadd.f32 %v444, %v536
        %v538 = vpop.f32.mrf.mxu0
        %v539 = vadd.f32 %v444, %v538
        %540 = vmatmul.bf16.gmra.mxu0 %v503
        %v541 = vpop.f32.mrf.mxu0
        %v542 = vadd.f32 %v444, %v541
        %v543 = vpop.f32.mrf.mxu0
        %v544 = vadd.f32 %v444, %v543
        %545 = vmatmul.bf16.gmra.mxu0 %v506
        %v546 = vpop.f32.mrf.mxu0
        %v547 = vadd.f32 %v444, %v546
        %v548 = vpop.f32.mrf.mxu0
        %v549 = vadd.f32 %v444, %v548
        %550 = vmatmul.bf16.gmra.mxu0 %v509
        %v551 = vpop.f32.mrf.mxu0
        %v552 = vadd.f32 %v444, %v551
        %v553 = vpop.f32.mrf.mxu0
        %v554 = vadd.f32 %v444, %v553
        %555 = vmatmul.bf16.gmra.mxu0 %v512
        %v556 = vpop.f32.mrf.mxu0
        %v557 = vadd.f32 %v444, %v556
        %v558 = vpop.f32.mrf.mxu0
        %v559 = vadd.f32 %v444, %v558
        %560 = vmatmul.bf16.gmra.mxu0 %v515
        %v561 = vpop.f32.mrf.mxu0
        %v562 = vadd.f32 %v444, %v561
        %v563 = vpop.f32.mrf.mxu0
        %v564 = vadd.f32 %v444, %v563
        %565 = vdwg.mxu0
        %v582 = vunpack.c.l.b16 %v406
        %v583 = vunpack.c.l.b16 %v407
        %v584 = vunpack.c.l.b16 %v408
        %v585 = vunpack.c.l.b16 %v409
        %v586 = vunpack.c.l.b16 %v410
        %v587 = vunpack.c.l.b16 %v411
        %v588 = vunpack.c.l.b16 %v412
        %v589 = vunpack.c.l.b16 %v413
        %v590 = vunpack.c.l.b16 %v414
        %v591 = vunpack.c.l.b16 %v415
        %v592 = vunpack.c.l.b16 %v416
        %v593 = vunpack.c.l.b16 %v417
        %v594 = vunpack.c.l.b16 %v418
        %v595 = vunpack.c.l.b16 %v419
        %v596 = vunpack.c.l.b16 %v420
        %v597 = vunpack.c.l.b16 %v421
        %v598 = vpack.c.b16 %v583, %v582
        %v599 = vpack.c.b16 %v585, %v584
        %v600 = vpack.c.b16 %v587, %v586
        %v601 = vpack.c.b16 %v589, %v588
        %v602 = vpack.c.b16 %v591, %v590
        %v603 = vpack.c.b16 %v593, %v592
        %v604 = vpack.c.b16 %v595, %v594
        %v605 = vpack.c.b16 %v597, %v596
        %v608 = vunpack.c.l.b16 %v438
        %v609 = vunpack.c.l.b16 %v439
        %v610 = vpack.c.b16 %v609, %v608
        %v613 = vsel %vm492, %v598, 0
        %v616 = vsel %vm492, %v599, 0
        %v619 = vsel %vm492, %v600, 0
        %v622 = vsel %vm492, %v601, 0
        %v625 = vsel %vm492, %v602, 0
        %v628 = vsel %vm492, %v603, 0
        %v631 = vsel %vm492, %v604, 0
        %v634 = vsel %vm492, %v605, 0
        %636 = vmatpush.bf16.msra.mxu0 0
        %637 = vmatpush.bf16.msra.mxu0 0
        %638 = vmatpush.bf16.msra.mxu0 0
        %639 = vmatpush.bf16.msra.mxu0 0
        %640 = vmatpush.bf16.msra.mxu0 0
        %641 = vmatpush.bf16.msra.mxu0 0
        %642 = vmatpush.bf16.msra.mxu0 0
        %643 = vmatpush.bf16.msra.mxu0 %v610
        %644 = vmatmul.bf16.gmra.mxu0 %v613
        %v645 = vpop.f32.mrf.mxu0
        %v646 = vadd.f32 %v527, %v645
        %v647 = vpop.f32.mrf.mxu0
        %v648 = vadd.f32 %v529, %v647
        %649 = vmatmul.bf16.gmra.mxu0 %v616
        %v650 = vpop.f32.mrf.mxu0
        %v651 = vadd.f32 %v532, %v650
        %v652 = vpop.f32.mrf.mxu0
        %v653 = vadd.f32 %v534, %v652
        %654 = vmatmul.bf16.gmra.mxu0 %v619
        %v655 = vpop.f32.mrf.mxu0
        %v656 = vadd.f32 %v537, %v655
        %v657 = vpop.f32.mrf.mxu0
        %v658 = vadd.f32 %v539, %v657
        %659 = vmatmul.bf16.gmra.mxu0 %v622
        %v660 = vpop.f32.mrf.mxu0
        %v661 = vadd.f32 %v542, %v660
        %v662 = vpop.f32.mrf.mxu0
        %v663 = vadd.f32 %v544, %v662
        %664 = vmatmul.bf16.gmra.mxu0 %v625
        %v665 = vpop.f32.mrf.mxu0
        %v666 = vadd.f32 %v547, %v665
        %v667 = vpop.f32.mrf.mxu0
        %v668 = vadd.f32 %v549, %v667
        %669 = vmatmul.bf16.gmra.mxu0 %v628
        %v670 = vpop.f32.mrf.mxu0
        %v671 = vadd.f32 %v552, %v670
        %v672 = vpop.f32.mrf.mxu0
        %v673 = vadd.f32 %v554, %v672
        %674 = vmatmul.bf16.gmra.mxu0 %v631
        %v675 = vpop.f32.mrf.mxu0
        %v676 = vadd.f32 %v557, %v675
        %v677 = vpop.f32.mrf.mxu0
        %v678 = vadd.f32 %v559, %v677
        %679 = vmatmul.bf16.gmra.mxu0 %v634
        %v680 = vpop.f32.mrf.mxu0
        %v681 = vadd.f32 %v562, %v680
        %v682 = vpop.f32.mrf.mxu0
        %v683 = vadd.f32 %v564, %v682
        %684 = vdwg.mxu0
        %v685 = vsub.f32 0.0, %v646
        %v686 = vsub.f32 0.0, %v648
        %v687 = vsub.f32 0.0, %v651
        %v688 = vsub.f32 0.0, %v653
        %v689 = vsub.f32 0.0, %v656
        %v690 = vsub.f32 0.0, %v658
        %v691 = vsub.f32 0.0, %v661
        %v692 = vsub.f32 0.0, %v663
        %v693 = vsub.f32 0.0, %v666
        %v694 = vsub.f32 0.0, %v668
        %v695 = vsub.f32 0.0, %v671
        %v696 = vsub.f32 0.0, %v673
        %v697 = vsub.f32 0.0, %v676
        %v698 = vsub.f32 0.0, %v678
        %v699 = vsub.f32 0.0, %v681
        %v700 = vsub.f32 0.0, %v683
        %v701 = vmul.f32 %v685, 1.442695
        %v702 = vpow.pop %v701
        %v703 = vmul.f32 %v686, 1.442695
        %v704 = vpow.pop %v703
        %v705 = vmul.f32 %v687, 1.442695
        %v706 = vpow.pop %v705
        %v707 = vmul.f32 %v688, 1.442695
        %v708 = vpow.pop %v707
        %v709 = vmul.f32 %v689, 1.442695
        %v710 = vpow.pop %v709
        %v711 = vmul.f32 %v690, 1.442695
        %v712 = vpow.pop %v711
        %v713 = vmul.f32 %v691, 1.442695
        %v714 = vpow.pop %v713
        %v715 = vmul.f32 %v692, 1.442695
        %v716 = vpow.pop %v715
        %v717 = vmul.f32 %v693, 1.442695
        %v718 = vpow.pop %v717
        %v719 = vmul.f32 %v694, 1.442695
        %v720 = vpow.pop %v719
        %v721 = vmul.f32 %v695, 1.442695
        %v722 = vpow.pop %v721
        %v723 = vmul.f32 %v696, 1.442695
        %v724 = vpow.pop %v723
        %v725 = vmul.f32 %v697, 1.442695
        %v726 = vpow.pop %v725
        %v727 = vmul.f32 %v698, 1.442695
        %v728 = vpow.pop %v727
        %v729 = vmul.f32 %v699, 1.442695
        %v730 = vpow.pop %v729
        %v731 = vmul.f32 %v700, 1.442695
        %v732 = vpow.pop %v731
        %v733 = vadd.f32 %v702, 1.0
        %v734 = vadd.f32 %v704, 1.0
        %v735 = vadd.f32 %v706, 1.0
        %v736 = vadd.f32 %v708, 1.0
        %v737 = vadd.f32 %v710, 1.0
        %v738 = vadd.f32 %v712, 1.0
        %v739 = vadd.f32 %v714, 1.0
        %v740 = vadd.f32 %v716, 1.0
        %v741 = vadd.f32 %v718, 1.0
        %v742 = vadd.f32 %v720, 1.0
        %v743 = vadd.f32 %v722, 1.0
        %v744 = vadd.f32 %v724, 1.0
        %v745 = vadd.f32 %v726, 1.0
        %v746 = vadd.f32 %v728, 1.0
        %v747 = vadd.f32 %v730, 1.0
        %v748 = vadd.f32 %v732, 1.0
        %v749 = vrcp.pop %v733
        %v750 = vmul.f32 %v733, %v749
        %v751 = vsub.f32 1.0, %v750
        %v752 = vmul.f32 %v749, %v751
        %v753 = vadd.f32 %v749, %v752
        %vm754 = vweird.f32 %v733
        %vm755 = vweird.f32 %v749
        %vm756 = vmor %vm754, %vm755
        %v757 = vsel %vm756, %v749, %v753
        %v758 = vand.u32 2147483647, %v733
        %vm759 = vcmp.eq.f32.partialorder %v758, 8.507059e+37
        %v760 = vand.u32 %v733, 2147483648
        %v761 = vor.u32 1.1754944e-38, %v760
        %v762 = vsel %vm759, %v761, %v757
        %v763 = vmul.f32 1.0, %v762
        %v764 = vrcp.pop %v734
        %v765 = vmul.f32 %v734, %v764
        %v766 = vsub.f32 1.0, %v765
        %v767 = vmul.f32 %v764, %v766
        %v768 = vadd.f32 %v764, %v767
        %vm769 = vweird.f32 %v734
        %vm770 = vweird.f32 %v764
        %vm771 = vmor %vm769, %vm770
        %v772 = vsel %vm771, %v764, %v768
        %v773 = vand.u32 2147483647, %v734
        %vm774 = vcmp.eq.f32.partialorder %v773, 8.507059e+37
        %v775 = vand.u32 %v734, 2147483648
        %v776 = vor.u32 1.1754944e-38, %v775
        %v777 = vsel %vm774, %v776, %v772
        %v778 = vmul.f32 1.0, %v777
        %v779 = vrcp.pop %v735
        %v780 = vmul.f32 %v735, %v779
        %v781 = vsub.f32 1.0, %v780
        %v782 = vmul.f32 %v779, %v781
        %v783 = vadd.f32 %v779, %v782
        %vm784 = vweird.f32 %v735
        %vm785 = vweird.f32 %v779
        %vm786 = vmor %vm784, %vm785
        %v787 = vsel %vm786, %v779, %v783
        %v788 = vand.u32 2147483647, %v735
        %vm789 = vcmp.eq.f32.partialorder %v788, 8.507059e+37
        %v790 = vand.u32 %v735, 2147483648
        %v791 = vor.u32 1.1754944e-38, %v790
        %v792 = vsel %vm789, %v791, %v787
        %v793 = vmul.f32 1.0, %v792
        %v794 = vrcp.pop %v736
        %v795 = vmul.f32 %v736, %v794
        %v796 = vsub.f32 1.0, %v795
        %v797 = vmul.f32 %v794, %v796
        %v798 = vadd.f32 %v794, %v797
        %vm799 = vweird.f32 %v736
        %vm800 = vweird.f32 %v794
        %vm801 = vmor %vm799, %vm800
        %v802 = vsel %vm801, %v794, %v798
        %v803 = vand.u32 2147483647, %v736
        %vm804 = vcmp.eq.f32.partialorder %v803, 8.507059e+37
        %v805 = vand.u32 %v736, 2147483648
        %v806 = vor.u32 1.1754944e-38, %v805
        %v807 = vsel %vm804, %v806, %v802
        %v808 = vmul.f32 1.0, %v807
        %v809 = vrcp.pop %v737
        %v810 = vmul.f32 %v737, %v809
        %v811 = vsub.f32 1.0, %v810
        %v812 = vmul.f32 %v809, %v811
        %v813 = vadd.f32 %v809, %v812
        %vm814 = vweird.f32 %v737
        %vm815 = vweird.f32 %v809
        %vm816 = vmor %vm814, %vm815
        %v817 = vsel %vm816, %v809, %v813
        %v818 = vand.u32 2147483647, %v737
        %vm819 = vcmp.eq.f32.partialorder %v818, 8.507059e+37
        %v820 = vand.u32 %v737, 2147483648
        %v821 = vor.u32 1.1754944e-38, %v820
        %v822 = vsel %vm819, %v821, %v817
        %v823 = vmul.f32 1.0, %v822
        %v824 = vrcp.pop %v738
        %v825 = vmul.f32 %v738, %v824
        %v826 = vsub.f32 1.0, %v825
        %v827 = vmul.f32 %v824, %v826
        %v828 = vadd.f32 %v824, %v827
        %vm829 = vweird.f32 %v738
        %vm830 = vweird.f32 %v824
        %vm831 = vmor %vm829, %vm830
        %v832 = vsel %vm831, %v824, %v828
        %v833 = vand.u32 2147483647, %v738
        %vm834 = vcmp.eq.f32.partialorder %v833, 8.507059e+37
        %v835 = vand.u32 %v738, 2147483648
        %v836 = vor.u32 1.1754944e-38, %v835
        %v837 = vsel %vm834, %v836, %v832
        %v838 = vmul.f32 1.0, %v837
        %v839 = vrcp.pop %v739
        %v840 = vmul.f32 %v739, %v839
        %v841 = vsub.f32 1.0, %v840
        %v842 = vmul.f32 %v839, %v841
        %v843 = vadd.f32 %v839, %v842
        %vm844 = vweird.f32 %v739
        %vm845 = vweird.f32 %v839
        %vm846 = vmor %vm844, %vm845
        %v847 = vsel %vm846, %v839, %v843
        %v848 = vand.u32 2147483647, %v739
        %vm849 = vcmp.eq.f32.partialorder %v848, 8.507059e+37
        %v850 = vand.u32 %v739, 2147483648
        %v851 = vor.u32 1.1754944e-38, %v850
        %v852 = vsel %vm849, %v851, %v847
        %v853 = vmul.f32 1.0, %v852
        %v854 = vrcp.pop %v740
        %v855 = vmul.f32 %v740, %v854
        %v856 = vsub.f32 1.0, %v855
        %v857 = vmul.f32 %v854, %v856
        %v858 = vadd.f32 %v854, %v857
        %vm859 = vweird.f32 %v740
        %vm860 = vweird.f32 %v854
        %vm861 = vmor %vm859, %vm860
        %v862 = vsel %vm861, %v854, %v858
        %v863 = vand.u32 2147483647, %v740
        %vm864 = vcmp.eq.f32.partialorder %v863, 8.507059e+37
        %v865 = vand.u32 %v740, 2147483648
        %v866 = vor.u32 1.1754944e-38, %v865
        %v867 = vsel %vm864, %v866, %v862
        %v868 = vmul.f32 1.0, %v867
        %v869 = vrcp.pop %v741
        %v870 = vmul.f32 %v741, %v869
        %v871 = vsub.f32 1.0, %v870
        %v872 = vmul.f32 %v869, %v871
        %v873 = vadd.f32 %v869, %v872
        %vm874 = vweird.f32 %v741
        %vm875 = vweird.f32 %v869
        %vm876 = vmor %vm874, %vm875
        %v877 = vsel %vm876, %v869, %v873
        %v878 = vand.u32 2147483647, %v741
        %vm879 = vcmp.eq.f32.partialorder %v878, 8.507059e+37
        %v880 = vand.u32 %v741, 2147483648
        %v881 = vor.u32 1.1754944e-38, %v880
        %v882 = vsel %vm879, %v881, %v877
        %v883 = vmul.f32 1.0, %v882
        %v884 = vrcp.pop %v742
        %v885 = vmul.f32 %v742, %v884
        %v886 = vsub.f32 1.0, %v885
        %v887 = vmul.f32 %v884, %v886
        %v888 = vadd.f32 %v884, %v887
        %vm889 = vweird.f32 %v742
        %vm890 = vweird.f32 %v884
        %vm891 = vmor %vm889, %vm890
        %v892 = vsel %vm891, %v884, %v888
        %v893 = vand.u32 2147483647, %v742
        %vm894 = vcmp.eq.f32.partialorder %v893, 8.507059e+37
        %v895 = vand.u32 %v742, 2147483648
        %v896 = vor.u32 1.1754944e-38, %v895
        %v897 = vsel %vm894, %v896, %v892
        %v898 = vmul.f32 1.0, %v897
        %v899 = vrcp.pop %v743
        %v900 = vmul.f32 %v743, %v899
        %v901 = vsub.f32 1.0, %v900
        %v902 = vmul.f32 %v899, %v901
        %v903 = vadd.f32 %v899, %v902
        %vm904 = vweird.f32 %v743
        %vm905 = vweird.f32 %v899
        %vm906 = vmor %vm904, %vm905
        %v907 = vsel %vm906, %v899, %v903
        %v908 = vand.u32 2147483647, %v743
        %vm909 = vcmp.eq.f32.partialorder %v908, 8.507059e+37
        %v910 = vand.u32 %v743, 2147483648
        %v911 = vor.u32 1.1754944e-38, %v910
        %v912 = vsel %vm909, %v911, %v907
        %v913 = vmul.f32 1.0, %v912
        %v914 = vrcp.pop %v744
        %v915 = vmul.f32 %v744, %v914
        %v916 = vsub.f32 1.0, %v915
        %v917 = vmul.f32 %v914, %v916
        %v918 = vadd.f32 %v914, %v917
        %vm919 = vweird.f32 %v744
        %vm920 = vweird.f32 %v914
        %vm921 = vmor %vm919, %vm920
        %v922 = vsel %vm921, %v914, %v918
        %v923 = vand.u32 2147483647, %v744
        %vm924 = vcmp.eq.f32.partialorder %v923, 8.507059e+37
        %v925 = vand.u32 %v744, 2147483648
        %v926 = vor.u32 1.1754944e-38, %v925
        %v927 = vsel %vm924, %v926, %v922
        %v928 = vmul.f32 1.0, %v927
        %v929 = vrcp.pop %v745
        %v930 = vmul.f32 %v745, %v929
        %v931 = vsub.f32 1.0, %v930
        %v932 = vmul.f32 %v929, %v931
        %v933 = vadd.f32 %v929, %v932
        %vm934 = vweird.f32 %v745
        %vm935 = vweird.f32 %v929
        %vm936 = vmor %vm934, %vm935
        %v937 = vsel %vm936, %v929, %v933
        %v938 = vand.u32 2147483647, %v745
        %vm939 = vcmp.eq.f32.partialorder %v938, 8.507059e+37
        %v940 = vand.u32 %v745, 2147483648
        %v941 = vor.u32 1.1754944e-38, %v940
        %v942 = vsel %vm939, %v941, %v937
        %v943 = vmul.f32 1.0, %v942
        %v944 = vrcp.pop %v746
        %v945 = vmul.f32 %v746, %v944
        %v946 = vsub.f32 1.0, %v945
        %v947 = vmul.f32 %v944, %v946
        %v948 = vadd.f32 %v944, %v947
        %vm949 = vweird.f32 %v746
        %vm950 = vweird.f32 %v944
        %vm951 = vmor %vm949, %vm950
        %v952 = vsel %vm951, %v944, %v948
        %v953 = vand.u32 2147483647, %v746
        %vm954 = vcmp.eq.f32.partialorder %v953, 8.507059e+37
        %v955 = vand.u32 %v746, 2147483648
        %v956 = vor.u32 1.1754944e-38, %v955
        %v957 = vsel %vm954, %v956, %v952
        %v958 = vmul.f32 1.0, %v957
        %v959 = vrcp.pop %v747
        %v960 = vmul.f32 %v747, %v959
        %v961 = vsub.f32 1.0, %v960
        %v962 = vmul.f32 %v959, %v961
        %v963 = vadd.f32 %v959, %v962
        %vm964 = vweird.f32 %v747
        %vm965 = vweird.f32 %v959
        %vm966 = vmor %vm964, %vm965
        %v967 = vsel %vm966, %v959, %v963
        %v968 = vand.u32 2147483647, %v747
        %vm969 = vcmp.eq.f32.partialorder %v968, 8.507059e+37
        %v970 = vand.u32 %v747, 2147483648
        %v971 = vor.u32 1.1754944e-38, %v970
        %v972 = vsel %vm969, %v971, %v967
        %v973 = vmul.f32 1.0, %v972
        %v974 = vrcp.pop %v748
        %v975 = vmul.f32 %v748, %v974
        %v976 = vsub.f32 1.0, %v975
        %v977 = vmul.f32 %v974, %v976
        %v978 = vadd.f32 %v974, %v977
        %vm979 = vweird.f32 %v748
        %vm980 = vweird.f32 %v974
        %vm981 = vmor %vm979, %vm980
        %v982 = vsel %vm981, %v974, %v978
        %v983 = vand.u32 2147483647, %v748
        %vm984 = vcmp.eq.f32.partialorder %v983, 8.507059e+37
        %v985 = vand.u32 %v748, 2147483648
        %v986 = vor.u32 1.1754944e-38, %v985
        %v987 = vsel %vm984, %v986, %v982
        %v988 = vmul.f32 1.0, %v987
        %v989 = vunpack.c.l.bf16 %v406
        %v990 = vunpack.c.l.bf16 %v407
        %v991 = vunpack.c.l.bf16 %v408
        %v992 = vunpack.c.l.bf16 %v409
        %v993 = vunpack.c.l.bf16 %v410
        %v994 = vunpack.c.l.bf16 %v411
        %v995 = vunpack.c.l.bf16 %v412
        %v996 = vunpack.c.l.bf16 %v413
        %v997 = vunpack.c.l.bf16 %v414
        %v998 = vunpack.c.l.bf16 %v415
        %v999 = vunpack.c.l.bf16 %v416
        %v1000 = vunpack.c.l.bf16 %v417
        %v1001 = vunpack.c.l.bf16 %v418
        %v1002 = vunpack.c.l.bf16 %v419
        %v1003 = vunpack.c.l.bf16 %v420
        %v1004 = vunpack.c.l.bf16 %v421
        %v1005 = vmul.f32 %v763, %v989
        %v1006 = vmul.f32 %v778, %v990
        %v1007 = vmul.f32 %v793, %v991
        %v1008 = vmul.f32 %v808, %v992
        %v1009 = vmul.f32 %v823, %v993
        %v1010 = vmul.f32 %v838, %v994
        %v1011 = vmul.f32 %v853, %v995
        %v1012 = vmul.f32 %v868, %v996
        %v1013 = vmul.f32 %v883, %v997
        %v1014 = vmul.f32 %v898, %v998
        %v1015 = vmul.f32 %v913, %v999
        %v1016 = vmul.f32 %v928, %v1000
        %v1017 = vmul.f32 %v943, %v1001
        %v1018 = vmul.f32 %v958, %v1002
        %v1019 = vmul.f32 %v973, %v1003
        %v1020 = vmul.f32 %v988, %v1004
        %v1021 = vsub.f32 1.0, %v763
        %v1022 = vsub.f32 1.0, %v778
        %v1023 = vsub.f32 1.0, %v793
        %v1024 = vsub.f32 1.0, %v808
        %v1025 = vsub.f32 1.0, %v823
        %v1026 = vsub.f32 1.0, %v838
        %v1027 = vsub.f32 1.0, %v853
        %v1028 = vsub.f32 1.0, %v868
        %v1029 = vsub.f32 1.0, %v883
        %v1030 = vsub.f32 1.0, %v898
        %v1031 = vsub.f32 1.0, %v913
        %v1032 = vsub.f32 1.0, %v928
        %v1033 = vsub.f32 1.0, %v943
        %v1034 = vsub.f32 1.0, %v958
        %v1035 = vsub.f32 1.0, %v973
        %v1036 = vsub.f32 1.0, %v988
        %v1037 = vunpack.c.l.bf16 %v422
        %v1038 = vunpack.c.l.bf16 %v423
        %v1039 = vunpack.c.l.bf16 %v424
        %v1040 = vunpack.c.l.bf16 %v425
        %v1041 = vunpack.c.l.bf16 %v426
        %v1042 = vunpack.c.l.bf16 %v427
        %v1043 = vunpack.c.l.bf16 %v428
        %v1044 = vunpack.c.l.bf16 %v429
        %v1045 = vunpack.c.l.bf16 %v430
        %v1046 = vunpack.c.l.bf16 %v431
        %v1047 = vunpack.c.l.bf16 %v432
        %v1048 = vunpack.c.l.bf16 %v433
        %v1049 = vunpack.c.l.bf16 %v434
        %v1050 = vunpack.c.l.bf16 %v435
        %v1051 = vunpack.c.l.bf16 %v436
        %v1052 = vunpack.c.l.bf16 %v437
        %v1053 = vmul.f32 %v1021, %v1037
        %v1054 = vmul.f32 %v1022, %v1038
        %v1055 = vmul.f32 %v1023, %v1039
        %v1056 = vmul.f32 %v1024, %v1040
        %v1057 = vmul.f32 %v1025, %v1041
        %v1058 = vmul.f32 %v1026, %v1042
        %v1059 = vmul.f32 %v1027, %v1043
        %v1060 = vmul.f32 %v1028, %v1044
        %v1061 = vmul.f32 %v1029, %v1045
        %v1062 = vmul.f32 %v1030, %v1046
        %v1063 = vmul.f32 %v1031, %v1047
        %v1064 = vmul.f32 %v1032, %v1048
        %v1065 = vmul.f32 %v1033, %v1049
        %v1066 = vmul.f32 %v1034, %v1050
        %v1067 = vmul.f32 %v1035, %v1051
        %v1068 = vmul.f32 %v1036, %v1052
        %v1069 = vadd.f32 %v1005, %v1053
        %v1070 = vadd.f32 %v1006, %v1054
        %v1071 = vadd.f32 %v1007, %v1055
        %v1072 = vadd.f32 %v1008, %v1056
        %v1073 = vadd.f32 %v1009, %v1057
        %v1074 = vadd.f32 %v1010, %v1058
        %v1075 = vadd.f32 %v1011, %v1059
        %v1076 = vadd.f32 %v1012, %v1060
        %v1077 = vadd.f32 %v1013, %v1061
        %v1078 = vadd.f32 %v1014, %v1062
        %v1079 = vadd.f32 %v1015, %v1063
        %v1080 = vadd.f32 %v1016, %v1064
        %v1081 = vadd.f32 %v1017, %v1065
        %v1082 = vadd.f32 %v1018, %v1066
        %v1083 = vadd.f32 %v1019, %v1067
        %v1084 = vadd.f32 %v1020, %v1068
        %v1085 = vpack.c.bf16 %v1070, %v1069
        %v1086 = vpack.c.bf16 %v1072, %v1071
        %v1087 = vpack.c.bf16 %v1074, %v1073
        %v1088 = vpack.c.bf16 %v1076, %v1075
        %v1089 = vpack.c.bf16 %v1078, %v1077
        %v1090 = vpack.c.bf16 %v1080, %v1079
        %v1091 = vpack.c.bf16 %v1082, %v1081
        %v1092 = vpack.c.bf16 %v1084, %v1083
        %v1093 = vld [vmem:[%s6] sm:$0xf]
        %v1094 = vld [vmem:[%s6 + $0x4] sm:$0xf]
        %v1095 = vld [vmem:[%s7] sm:$0x1]
        %v1097 = vperm.slane %v1095, 0
        %v1101 = vunpack.c.l.b16 %v1093
        %v1102 = vunpack.c.l.b16 %v1094
        %v1103 = vpack.c.b16 %v1102, %v1101
        %v1106 = vsel %vm492, %v1085, 0
        %v1109 = vsel %vm492, %v1086, 0
        %v1112 = vsel %vm492, %v1087, 0
        %v1115 = vsel %vm492, %v1088, 0
        %v1118 = vsel %vm492, %v1089, 0
        %v1121 = vsel %vm492, %v1090, 0
        %v1124 = vsel %vm492, %v1091, 0
        %v1127 = vsel %vm492, %v1092, 0
        %1129 = vmatpush.bf16.msra.mxu0 0
        %1130 = vmatpush.bf16.msra.mxu0 0
        %1131 = vmatpush.bf16.msra.mxu0 0
        %1132 = vmatpush.bf16.msra.mxu0 0
        %1133 = vmatpush.bf16.msra.mxu0 0
        %1134 = vmatpush.bf16.msra.mxu0 0
        %1135 = vmatpush.bf16.msra.mxu0 0
        %1136 = vmatpush.bf16.msra.mxu0 %v1103
        %1137 = vmatmul.bf16.gmra.mxu0 %v1106
        %v1138 = vpop.f32.mrf.mxu0
        %v1139 = vadd.f32 %v1097, %v1138
        %v1140 = vpop.f32.mrf.mxu0
        %v1141 = vadd.f32 %v1097, %v1140
        %1142 = vmatmul.bf16.gmra.mxu0 %v1109
        %v1143 = vpop.f32.mrf.mxu0
        %v1144 = vadd.f32 %v1097, %v1143
        %v1145 = vpop.f32.mrf.mxu0
        %v1146 = vadd.f32 %v1097, %v1145
        %1147 = vmatmul.bf16.gmra.mxu0 %v1112
        %v1148 = vpop.f32.mrf.mxu0
        %v1149 = vadd.f32 %v1097, %v1148
        %v1150 = vpop.f32.mrf.mxu0
        %v1151 = vadd.f32 %v1097, %v1150
        %1152 = vmatmul.bf16.gmra.mxu0 %v1115
        %v1153 = vpop.f32.mrf.mxu0
        %v1154 = vadd.f32 %v1097, %v1153
        %v1155 = vpop.f32.mrf.mxu0
        %v1156 = vadd.f32 %v1097, %v1155
        %1157 = vmatmul.bf16.gmra.mxu0 %v1118
        %v1158 = vpop.f32.mrf.mxu0
        %v1159 = vadd.f32 %v1097, %v1158
        %v1160 = vpop.f32.mrf.mxu0
        %v1161 = vadd.f32 %v1097, %v1160
        %1162 = vmatmul.bf16.gmra.mxu0 %v1121
        %v1163 = vpop.f32.mrf.mxu0
        %v1164 = vadd.f32 %v1097, %v1163
        %v1165 = vpop.f32.mrf.mxu0
        %v1166 = vadd.f32 %v1097, %v1165
        %1167 = vmatmul.bf16.gmra.mxu0 %v1124
        %v1168 = vpop.f32.mrf.mxu0
        %v1169 = vadd.f32 %v1097, %v1168
        %v1170 = vpop.f32.mrf.mxu0
        %v1171 = vadd.f32 %v1097, %v1170
        %1172 = vmatmul.bf16.gmra.mxu0 %v1127
        %v1173 = vpop.f32.mrf.mxu0
        %v1174 = vadd.f32 %v1097, %v1173
        %v1175 = vpop.f32.mrf.mxu0
        %v1176 = vadd.f32 %v1097, %v1175
        %1177 = vdwg.mxu0
        %v1178 = vmax.f32 %v1139, 0.0
        %v1179 = vmax.f32 %v1141, 0.0
        %v1180 = vmax.f32 %v1144, 0.0
        %v1181 = vmax.f32 %v1146, 0.0
        %v1182 = vmax.f32 %v1149, 0.0
        %v1183 = vmax.f32 %v1151, 0.0
        %v1184 = vmax.f32 %v1154, 0.0
        %v1185 = vmax.f32 %v1156, 0.0
        %v1186 = vmax.f32 %v1159, 0.0
        %v1187 = vmax.f32 %v1161, 0.0
        %v1188 = vmax.f32 %v1164, 0.0
        %v1189 = vmax.f32 %v1166, 0.0
        %v1190 = vmax.f32 %v1169, 0.0
        %v1191 = vmax.f32 %v1171, 0.0
        %v1192 = vmax.f32 %v1174, 0.0
        %v1193 = vmax.f32 %v1176, 0.0
        %v1194 = vpack.c.bf16 %v1179, %v1178
        %v1195 = vpack.c.bf16 %v1181, %v1180
        %v1196 = vpack.c.bf16 %v1183, %v1182
        %v1197 = vpack.c.bf16 %v1185, %v1184
        %v1198 = vpack.c.bf16 %v1187, %v1186
        %v1199 = vpack.c.bf16 %v1189, %v1188
        %v1200 = vpack.c.bf16 %v1191, %v1190
        %v1201 = vpack.c.bf16 %v1193, %v1192
        %v1202 = vld [vmem:[%s8] sm:$0xf]
        %v1203 = vld [vmem:[%s8 + $0x4] sm:$0xf]
        %v1204 = vld [vmem:[%s9] sm:$0x1]
        %v1206 = vperm.slane %v1204, 0
        %v1210 = vunpack.c.l.b16 %v1202
        %v1211 = vunpack.c.l.b16 %v1203
        %v1212 = vpack.c.b16 %v1211, %v1210
        %v1215 = vsel %vm492, %v1194, 0
        %v1218 = vsel %vm492, %v1195, 0
        %v1221 = vsel %vm492, %v1196, 0
        %v1224 = vsel %vm492, %v1197, 0
        %v1227 = vsel %vm492, %v1198, 0
        %v1230 = vsel %vm492, %v1199, 0
        %v1233 = vsel %vm492, %v1200, 0
        %v1236 = vsel %vm492, %v1201, 0
        %1238 = vmatpush.bf16.msra.mxu0 0
        %1239 = vmatpush.bf16.msra.mxu0 0
        %1240 = vmatpush.bf16.msra.mxu0 0
        %1241 = vmatpush.bf16.msra.mxu0 0
        %1242 = vmatpush.bf16.msra.mxu0 0
        %1243 = vmatpush.bf16.msra.mxu0 0
        %1244 = vmatpush.bf16.msra.mxu0 0
        %1245 = vmatpush.bf16.msra.mxu0 %v1212
        %1246 = vmatmul.bf16.gmra.mxu0 %v1215
        %v1247 = vpop.f32.mrf.mxu0
        %v1248 = vadd.f32 %v1206, %v1247
        %v1249 = vpop.f32.mrf.mxu0
        %v1250 = vadd.f32 %v1206, %v1249
        %1251 = vmatmul.bf16.gmra.mxu0 %v1218
        %v1252 = vpop.f32.mrf.mxu0
        %v1253 = vadd.f32 %v1206, %v1252
        %v1254 = vpop.f32.mrf.mxu0
        %v1255 = vadd.f32 %v1206, %v1254
        %1256 = vmatmul.bf16.gmra.mxu0 %v1221
        %v1257 = vpop.f32.mrf.mxu0
        %v1258 = vadd.f32 %v1206, %v1257
        %v1259 = vpop.f32.mrf.mxu0
        %v1260 = vadd.f32 %v1206, %v1259
        %1261 = vmatmul.bf16.gmra.mxu0 %v1224
        %v1262 = vpop.f32.mrf.mxu0
        %v1263 = vadd.f32 %v1206, %v1262
        %v1264 = vpop.f32.mrf.mxu0
        %v1265 = vadd.f32 %v1206, %v1264
        %1266 = vmatmul.bf16.gmra.mxu0 %v1227
        %v1267 = vpop.f32.mrf.mxu0
        %v1268 = vadd.f32 %v1206, %v1267
        %v1269 = vpop.f32.mrf.mxu0
        %v1270 = vadd.f32 %v1206, %v1269
        %1271 = vmatmul.bf16.gmra.mxu0 %v1230
        %v1272 = vpop.f32.mrf.mxu0
        %v1273 = vadd.f32 %v1206, %v1272
        %v1274 = vpop.f32.mrf.mxu0
        %v1275 = vadd.f32 %v1206, %v1274
        %1276 = vmatmul.bf16.gmra.mxu0 %v1233
        %v1277 = vpop.f32.mrf.mxu0
        %v1278 = vadd.f32 %v1206, %v1277
        %v1279 = vpop.f32.mrf.mxu0
        %v1280 = vadd.f32 %v1206, %v1279
        %1281 = vmatmul.bf16.gmra.mxu0 %v1236
        %v1282 = vpop.f32.mrf.mxu0
        %v1283 = vadd.f32 %v1206, %v1282
        %v1284 = vpop.f32.mrf.mxu0
        %v1285 = vadd.f32 %v1206, %v1284
        %1286 = vdwg.mxu0
        %v1287 = vld [vmem:[%s390] sm:$0xff]
        %v1288 = vld [vmem:[%s390 + $0x8] sm:$0xff]
        %v1289 = vld [vmem:[%s390 + $0x10] sm:$0xff]
        %v1290 = vld [vmem:[%s390 + $0x18] sm:$0xff]
        %v1291 = vld [vmem:[%s390 + $0x20] sm:$0xff]
        %v1292 = vld [vmem:[%s390 + $0x28] sm:$0xff]
        %v1293 = vld [vmem:[%s390 + $0x30] sm:$0xff]
        %v1294 = vld [vmem:[%s390 + $0x38] sm:$0xff]
        %v1295 = vld [vmem:[%s390 + $0x40] sm:$0xff]
        %v1296 = vld [vmem:[%s390 + $0x48] sm:$0xff]
        %v1297 = vld [vmem:[%s390 + $0x50] sm:$0xff]
        %v1298 = vld [vmem:[%s390 + $0x58] sm:$0xff]
        %v1299 = vld [vmem:[%s390 + $0x60] sm:$0xff]
        %v1300 = vld [vmem:[%s390 + $0x68] sm:$0xff]
        %v1301 = vld [vmem:[%s390 + $0x70] sm:$0xff]
        %v1302 = vld [vmem:[%s390 + $0x78] sm:$0xff]
        %v1303 = vadd.f32 %v1287, %v1248
        %v1304 = vadd.f32 %v1288, %v1250
        %v1305 = vadd.f32 %v1289, %v1253
        %v1306 = vadd.f32 %v1290, %v1255
        %v1307 = vadd.f32 %v1291, %v1258
        %v1308 = vadd.f32 %v1292, %v1260
        %v1309 = vadd.f32 %v1293, %v1263
        %v1310 = vadd.f32 %v1294, %v1265
        %v1311 = vadd.f32 %v1295, %v1268
        %v1312 = vadd.f32 %v1296, %v1270
        %v1313 = vadd.f32 %v1297, %v1273
        %v1314 = vadd.f32 %v1298, %v1275
        %v1315 = vadd.f32 %v1299, %v1278
        %v1316 = vadd.f32 %v1300, %v1280
        %v1317 = vadd.f32 %v1301, %v1283
        %v1318 = vadd.f32 %v1302, %v1285
        %vm1319 = vcmask 162816
        %1320 = vst.msk [vmem:[%s385] sm:$0xff] %vm1319, %v1303
        %1321 = vst.msk [vmem:[%s385 + $0x8] sm:$0xff] %vm1319, %v1304
        %1322 = vst.msk [vmem:[%s385 + $0x10] sm:$0xff] %vm1319, %v1305
        %1323 = vst.msk [vmem:[%s385 + $0x18] sm:$0xff] %vm1319, %v1306
        %1324 = vst.msk [vmem:[%s385 + $0x20] sm:$0xff] %vm1319, %v1307
        %1325 = vst.msk [vmem:[%s385 + $0x28] sm:$0xff] %vm1319, %v1308
        %1326 = vst.msk [vmem:[%s385 + $0x30] sm:$0xff] %vm1319, %v1309
        %1327 = vst.msk [vmem:[%s385 + $0x38] sm:$0xff] %vm1319, %v1310
        %1328 = vst.msk [vmem:[%s385 + $0x40] sm:$0xff] %vm1319, %v1311
        %1329 = vst.msk [vmem:[%s385 + $0x48] sm:$0xff] %vm1319, %v1312
        %1330 = vst.msk [vmem:[%s385 + $0x50] sm:$0xff] %vm1319, %v1313
        %1331 = vst.msk [vmem:[%s385 + $0x58] sm:$0xff] %vm1319, %v1314
        %1332 = vst.msk [vmem:[%s385 + $0x60] sm:$0xff] %vm1319, %v1315
        %1333 = vst.msk [vmem:[%s385 + $0x68] sm:$0xff] %vm1319, %v1316
        %1334 = vst.msk [vmem:[%s385 + $0x70] sm:$0xff] %vm1319, %v1317
        %1335 = vst.msk [vmem:[%s385 + $0x78] sm:$0xff] %vm1319, %v1318
        %s1336 = sand.u32 %s257, 1
        %s1337 = scalar_lea.sflag [#allocation3], %s1336
        %s1338 = sand.u32 %s257, 1
        %s1339 = smul.addr %s1338, 128
        %s1340 = scalar_lea.vmem [#allocation2], %s1339
        // Predicated region
        $region61: #{_lambda_.5} parent=59 // pred_check
          %p1341 = pneg %p267
        $region62: #{_lambda_.5} parent=59 // pred_check_branch
          %1343 = sbr.rel (%p1341) target = $region64
        $region63: #{_lambda_.5} parent=59 // pred_region
          %s1344 = smul.u32 16, %s24
          %1346 = vsyncadd %s1337, 0
          %s1347 = smul.addr %s1344, 8
          %s1348 = scalar_lea.hbm %s10, %s1347
          %s1349 = sshll.u32 %s1340, 4
          %s1350 = int_to_ptr.vmem [resolvable:$true] %s1349
          %s1351 = sshll.u32 %s1348, 4
          %s1352 = int_to_ptr.hbm [resolvable:$true] %s1351
          %1357 = dma.vmem_to_hbm [thread:$0]  %s1350, 2048, %s1352, %s1337, 128, 128, 8
        $region64: #{_lambda_.5} parent=59 // pred_fallthru
          _
      $region60: #{_lambda_.5} parent=5 // pred_fallthru
        _
      %p1358 = scmp.le.s32.totalorder 2, %s19
      // Predicated region
      $region65: #{_lambda_.5} parent=5 // pred_check
        %p1359 = pneg %p1358
      $region66: #{_lambda_.5} parent=5 // pred_check_branch
        %1361 = sbr.rel (%p1359) target = $region68
      $region67: #{_lambda_.5} parent=5 // pred_region
        %s1362 = ssub.s32 %s19, 2
        // Predicated region
        $region69: #{_lambda_.5} parent=67 // pred_check
          %p1363 = pneg %p273
        $region70: #{_lambda_.5} parent=67 // pred_check_branch
          %1365 = sbr.rel (%p1363) target = $region72
        $region71: #{_lambda_.5} parent=67 // pred_region
          %s1366 = sand.u32 %s258, 1
          %s1367 = scalar_lea.sflag [#allocation3], %s1366
          %s1368 = sand.u32 %s258, 1
          %s1369 = smul.addr %s1368, 128
          %s1370 = scalar_lea.vmem [#allocation2], %s1369
          %1372 = dma.done %s1367, 2048
        $region72: #{_lambda_.5} parent=67 // pred_fallthru
          _
      $region68: #{_lambda_.5} parent=5 // pred_fallthru
        _
    $region6: #{_lambda_.5} parent=1 // loop_footer
      %s23 = sadd.s32 1, %s19
    $region7: #{_lambda_.5} parent=1 // loop_footer_branch
      %18 = sbr.rel target = $region3
    $region8: #{_lambda_.5} parent=1 // loop_exit
      _
    %1373 = vsyncpa [#allocation3], 1
    %s1374 = scalar_lea.sflag [#allocation3], 1
    %1375 = vsyncpa %s1374, 1

// kernel: _lambda_.3
$region0: #{_lambda_.3}
  #allocation0 [shape = 'u32[]', space=smem, size = 0x4, offset = 0x4, fixed_abs, tag = 'smem constant byte address 0x4 - core index']
  #allocation1 [shape = 'u32[72,128]{1,0:T(1,128)}', space=vmem, size = 0x9000, scoped, tag = 'internal scratch']
  %s0 = inlined_call_operand.vmem [shape: f32[16,16,20], index: 0, kind: input, shape index: {}]
  %s1 = inlined_call_operand.hbm [shape: f32[16,16,16], index: 1, kind: input, shape index: {}]
  %s2 = inlined_call_operand.vmem [shape: bf16[20,48], index: 2, kind: input, shape index: {}]
  %s3 = inlined_call_operand.vmem [shape: bf16[16,48], index: 3, kind: input, shape index: {}]
  %s4 = inlined_call_operand.vmem [shape: f32[1,48], index: 4, kind: input, shape index: {}]
  %s5 = inlined_call_operand.vmem [shape: bf16[16,16], index: 5, kind: input, shape index: {}]
  %s6 = inlined_call_operand.vmem [shape: f32[1,16], index: 6, kind: input, shape index: {}]
  %s7 = inlined_call_operand.vmem [shape: bf16[16,16,16], index: 7, kind: output, shape index: {}]
  %s8 = sld [smem:[#allocation0]]
  $region65: #{_lambda_.3} parent=0
    _
  %s10 = ssub.s32 1, %s8
  %s11 = scalar_select 0, %s10, %s8
  $region1: #{_lambda_.3} parent=0
    #allocation2 [shape = 'u8[131072]{0}', space=vmem, size = 0x20000, scoped, tag = 'input window, operand 1']
    #allocation3 [shape = 's32[2]{0}', space=sflag, size = 0x8, scoped, tag = 'scoped memory for _lambda_.3']
    %12 = vsyncpa [#allocation3], 0
    %s13 = scalar_lea.sflag [#allocation3], 1
    %14 = vsyncpa %s13, 0
    loop: start=0, step=1, limit=4
    $region2: #{_lambda_.3} parent=1 // loop_pre_header
      _
    $region3: #{_lambda_.3} parent=1 // loop_header
      %s16 = sphi 0, %s20
      %p17 = scmp.ge.s32.totalorder %s16, 4
      %s26 = sphi 0, %s28
      %s29 = sphi 0, %s26
      %s30 = sphi 0, %s29
      %s46 = sphi 0, %s30
      %s52 = sphi 0, %s54
      %s55 = sphi 0, %s52
      %s56 = sphi 0, %s55
      %s72 = sphi 0, %s56
      %s76 = sphi 0, %s76
      %s78 = sphi 0, %s76
      %s79 = sphi 0, %s78
      %s93 = sphi 0, %s79
      %s97 = sphi 0, %s97
      %s99 = sphi 0, %s97
      %s100 = sphi 0, %s99
      %s114 = sphi 0, %s100
      %s118 = sphi 0, %s118
      %s120 = sphi 0, %s118
      %s121 = sphi 0, %s120
      %s135 = sphi 0, %s121
      %s139 = sphi 0, %s139
      %s141 = sphi 0, %s139
      %s142 = sphi 0, %s141
      %s156 = sphi 0, %s142
      %s160 = sphi 0, %s160
      %s162 = sphi 0, %s160
      %s163 = sphi 0, %s162
      %s177 = sphi 0, %s163
      %s183 = sphi 0, %s185
      %s186 = sphi 0, %s183
      %s187 = sphi 0, %s186
      %s203 = sphi 0, %s187
    $region4: #{_lambda_.3} parent=1 // loop_header_branch
      %19 = sbr.rel (%p17) target = $region8
    $region5: #{_lambda_.3} parent=1 // loop_body
      %s21 = ssub.s32 %s16, 1
      %s22 = ssub.s32 %s16, 2
      %s23 = sadd.s32 %s16, 1
      %s24 = ssub.s32 %s16, %s23
      %p25 = scmp.eq.s32.totalorder %s24, 0
      %s27 = sadd.s32 %s26, 1
      %s28 = scalar_select %p25, %s26, %s27
      %p31 = pneg %p25
      %p32 = scmp.eq.s32.totalorder %s16, 1
      %p33 = por %p31, %p32
      %p34 = scmp.ne.s32.totalorder %s26, %s29
      %p35 = scmp.eq.s32.totalorder %s16, 0
      %p36 = por %p34, %p35
      %p37 = scmp.ne.s32.totalorder %s26, %s29
      %p38 = scmp.eq.s32.totalorder %s21, 1
      %p39 = por %p37, %p38
      %p40 = scmp.ne.s32.totalorder %s29, %s30
      %p41 = scmp.eq.s32.totalorder %s21, 0
      %p42 = por %p40, %p41
      %p43 = scmp.ne.s32.totalorder %s29, %s30
      %p44 = scmp.eq.s32.totalorder %s22, 1
      %p45 = por %p43, %p44
      %p47 = scmp.ne.s32.totalorder %s30, %s46
      %p48 = scmp.eq.s32.totalorder %s22, 0
      %p49 = por %p47, %p48
      %s50 = ssub.s32 %s16, %s23
      %p51 = scmp.eq.s32.totalorder %s50, 0
      %s53 = sadd.s32 %s52, 1
      %s54 = scalar_select %p51, %s52, %s53
      %p57 = pneg %p51
      %p58 = scmp.eq.s32.totalorder %s16, 1
      %p59 = por %p57, %p58
      %p60 = scmp.ne.s32.totalorder %s52, %s55
      %p61 = scmp.eq.s32.totalorder %s16, 0
      %p62 = por %p60, %p61
      %p63 = scmp.ne.s32.totalorder %s52, %s55
      %p64 = scmp.eq.s32.totalorder %s21, 1
      %p65 = por %p63, %p64
      %p66 = scmp.ne.s32.totalorder %s55, %s56
      %p67 = scmp.eq.s32.totalorder %s21, 0
      %p68 = por %p66, %p67
      %p69 = scmp.ne.s32.totalorder %s55, %s56
      %p70 = scmp.eq.s32.totalorder %s22, 1
      %p71 = por %p69, %p70
      %p73 = scmp.ne.s32.totalorder %s56, %s72
      %p74 = scmp.eq.s32.totalorder %s22, 0
      %p75 = por %p73, %p74
      %s77 = sadd.s32 %s76, 1
      %p80 = scmp.eq.s32.totalorder %s16, 1
      %p81 = scmp.ne.s32.totalorder %s76, %s78
      %p82 = scmp.eq.s32.totalorder %s16, 0
      %p83 = por %p81, %p82
      %p84 = scmp.ne.s32.totalorder %s76, %s78
      %p85 = scmp.eq.s32.totalorder %s21, 1
      %p86 = por %p84, %p85
      %p87 = scmp.ne.s32.totalorder %s78, %s79
      %p88 = scmp.eq.s32.totalorder %s21, 0
      %p89 = por %p87, %p88
      %p90 = scmp.ne.s32.totalorder %s78, %s79
      %p91 = scmp.eq.s32.totalorder %s22, 1
      %p92 = por %p90, %p91
      %p94 = scmp.ne.s32.totalorder %s79, %s93
      %p95 = scmp.eq.s32.totalorder %s22, 0
      %p96 = por %p94, %p95
      %s98 = sadd.s32 %s97, 1
      %p101 = scmp.eq.s32.totalorder %s16, 1
      %p102 = scmp.ne.s32.totalorder %s97, %s99
      %p103 = scmp.eq.s32.totalorder %s16, 0
      %p104 = por %p102, %p103
      %p105 = scmp.ne.s32.totalorder %s97, %s99
      %p106 = scmp.eq.s32.totalorder %s21, 1
      %p107 = por %p105, %p106
      %p108 = scmp.ne.s32.totalorder %s99, %s100
      %p109 = scmp.eq.s32.totalorder %s21, 0
      %p110 = por %p108, %p109
      %p111 = scmp.ne.s32.totalorder %s99, %s100
      %p112 = scmp.eq.s32.totalorder %s22, 1
      %p113 = por %p111, %p112
      %p115 = scmp.ne.s32.totalorder %s100, %s114
      %p116 = scmp.eq.s32.totalorder %s22, 0
      %p117 = por %p115, %p116
      %s119 = sadd.s32 %s118, 1
      %p122 = scmp.eq.s32.totalorder %s16, 1
      %p123 = scmp.ne.s32.totalorder %s118, %s120
      %p124 = scmp.eq.s32.totalorder %s16, 0
      %p125 = por %p123, %p124
      %p126 = scmp.ne.s32.totalorder %s118, %s120
      %p127 = scmp.eq.s32.totalorder %s21, 1
      %p128 = por %p126, %p127
      %p129 = scmp.ne.s32.totalorder %s120, %s121
      %p130 = scmp.eq.s32.totalorder %s21, 0
      %p131 = por %p129, %p130
      %p132 = scmp.ne.s32.totalorder %s120, %s121
      %p133 = scmp.eq.s32.totalorder %s22, 1
      %p134 = por %p132, %p133
      %p136 = scmp.ne.s32.totalorder %s121, %s135
      %p137 = scmp.eq.s32.totalorder %s22, 0
      %p138 = por %p136, %p137
      %s140 = sadd.s32 %s139, 1
      %p143 = scmp.eq.s32.totalorder %s16, 1
      %p144 = scmp.ne.s32.totalorder %s139, %s141
      %p145 = scmp.eq.s32.totalorder %s16, 0
      %p146 = por %p144, %p145
      %p147 = scmp.ne.s32.totalorder %s139, %s141
      %p148 = scmp.eq.s32.totalorder %s21, 1
      %p149 = por %p147, %p148
      %p150 = scmp.ne.s32.totalorder %s141, %s142
      %p151 = scmp.eq.s32.totalorder %s21, 0
      %p152 = por %p150, %p151
      %p153 = scmp.ne.s32.totalorder %s141, %s142
      %p154 = scmp.eq.s32.totalorder %s22, 1
      %p155 = por %p153, %p154
      %p157 = scmp.ne.s32.totalorder %s142, %s156
      %p158 = scmp.eq.s32.totalorder %s22, 0
      %p159 = por %p157, %p158
      %s161 = sadd.s32 %s160, 1
      %p164 = scmp.eq.s32.totalorder %s16, 1
      %p165 = scmp.ne.s32.totalorder %s160, %s162
      %p166 = scmp.eq.s32.totalorder %s16, 0
      %p167 = por %p165, %p166
      %p168 = scmp.ne.s32.totalorder %s160, %s162
      %p169 = scmp.eq.s32.totalorder %s21, 1
      %p170 = por %p168, %p169
      %p171 = scmp.ne.s32.totalorder %s162, %s163
      %p172 = scmp.eq.s32.totalorder %s21, 0
      %p173 = por %p171, %p172
      %p174 = scmp.ne.s32.totalorder %s162, %s163
      %p175 = scmp.eq.s32.totalorder %s22, 1
      %p176 = por %p174, %p175
      %p178 = scmp.ne.s32.totalorder %s163, %s177
      %p179 = scmp.eq.s32.totalorder %s22, 0
      %p180 = por %p178, %p179
      %s181 = ssub.s32 %s16, %s23
      %p182 = scmp.eq.s32.totalorder %s181, 0
      %s184 = sadd.s32 %s183, 1
      %s185 = scalar_select %p182, %s183, %s184
      %p188 = pneg %p182
      %p189 = scmp.eq.s32.totalorder %s16, 1
      %p190 = por %p188, %p189
      %p191 = scmp.ne.s32.totalorder %s183, %s186
      %p192 = scmp.eq.s32.totalorder %s16, 0
      %p193 = por %p191, %p192
      %p194 = scmp.ne.s32.totalorder %s183, %s186
      %p195 = scmp.eq.s32.totalorder %s21, 1
      %p196 = por %p194, %p195
      %p197 = scmp.ne.s32.totalorder %s186, %s187
      %p198 = scmp.eq.s32.totalorder %s21, 0
      %p199 = por %p197, %p198
      %p200 = scmp.ne.s32.totalorder %s186, %s187
      %p201 = scmp.eq.s32.totalorder %s22, 1
      %p202 = por %p200, %p201
      %p204 = scmp.ne.s32.totalorder %s187, %s203
      %p205 = scmp.eq.s32.totalorder %s22, 0
      %p206 = por %p204, %p205
      %p207 = scmp.le.s32.totalorder 1, %s16
      %p208 = scmp.lt.s32.totalorder %s16, 3
      %p209 = pnand %p207, %p208
      %p210 = pneg %p209
      // Predicated region
      $region9: #{_lambda_.3} parent=5 // pred_check
        _
      $region10: #{_lambda_.3} parent=5 // pred_check_branch
        %212 = sbr.rel (%p209) target = $region12
      $region11: #{_lambda_.3} parent=5 // pred_region
        %s213 = ssub.s32 %s16, 1
        // Predicated region
        $region13: #{_lambda_.3} parent=11 // pred_check
          %p214 = pneg %p89
        $region14: #{_lambda_.3} parent=11 // pred_check_branch
          %216 = sbr.rel (%p214) target = $region16
        $region15: #{_lambda_.3} parent=11 // pred_region
          _
        $region16: #{_lambda_.3} parent=11 // pred_fallthru
          _
        // Predicated region
        $region17: #{_lambda_.3} parent=11 // pred_check
          %p217 = pneg %p110
        $region18: #{_lambda_.3} parent=11 // pred_check_branch
          %219 = sbr.rel (%p217) target = $region20
        $region19: #{_lambda_.3} parent=11 // pred_region
          _
        $region20: #{_lambda_.3} parent=11 // pred_fallthru
          _
        // Predicated region
        $region21: #{_lambda_.3} parent=11 // pred_check
          %p220 = pneg %p131
        $region22: #{_lambda_.3} parent=11 // pred_check_branch
          %222 = sbr.rel (%p220) target = $region24
        $region23: #{_lambda_.3} parent=11 // pred_region
          _
        $region24: #{_lambda_.3} parent=11 // pred_fallthru
          _
        // Predicated region
        $region25: #{_lambda_.3} parent=11 // pred_check
          %p223 = pneg %p152
        $region26: #{_lambda_.3} parent=11 // pred_check_branch
          %225 = sbr.rel (%p223) target = $region28
        $region27: #{_lambda_.3} parent=11 // pred_region
          _
        $region28: #{_lambda_.3} parent=11 // pred_fallthru
          _
        // Predicated region
        $region29: #{_lambda_.3} parent=11 // pred_check
          %p226 = pneg %p173
        $region30: #{_lambda_.3} parent=11 // pred_check_branch
          %228 = sbr.rel (%p226) target = $region32
        $region31: #{_lambda_.3} parent=11 // pred_region
          _
        $region32: #{_lambda_.3} parent=11 // pred_fallthru
          _
      $region12: #{_lambda_.3} parent=5 // pred_fallthru
        _
      %p229 = scmp.lt.s32.totalorder %s16, 2
      // Predicated region
      $region33: #{_lambda_.3} parent=5 // pred_check
        %p230 = pneg %p229
      $region34: #{_lambda_.3} parent=5 // pred_check_branch
        %232 = sbr.rel (%p230) target = $region36
      $region35: #{_lambda_.3} parent=5 // pred_region
        // Predicated region
        $region37: #{_lambda_.3} parent=35 // pred_check
          %p233 = pneg %p36
        $region38: #{_lambda_.3} parent=35 // pred_check_branch
          %235 = sbr.rel (%p233) target = $region40
        $region39: #{_lambda_.3} parent=35 // pred_region
          %s236 = smul.u32 8, %s16
          %p237 = scmp.lt.s32.totalorder %s236, 15
          %s238 = scalar_select %p237, %s236, 15
          %s239 = smul.addr %s238, 2
          %s240 = smul.addr %s239, 8
          %s241 = scalar_lea.vmem %s0, %s240
          %s242 = smul.u32 8, %s16
        $region40: #{_lambda_.3} parent=35 // pred_fallthru
          _
        // Predicated region
        $region41: #{_lambda_.3} parent=35 // pred_check
          %p243 = pneg %p62
        $region42: #{_lambda_.3} parent=35 // pred_check_branch
          %245 = sbr.rel (%p243) target = $region44
        $region43: #{_lambda_.3} parent=35 // pred_region
          %s246 = sand.u32 %s52, 1
          %s247 = scalar_lea.sflag [#allocation3], %s246
          %s248 = sand.u32 %s52, 1
          %s249 = smul.addr %s248, 128
          %s250 = scalar_lea.vmem [#allocation2], %s249
          %s251 = smul.u32 8, %s16
          %253 = vsyncadd %s247, 0
          %s254 = smul.addr %s251, 2
          %s255 = smul.addr %s254, 8
          %s256 = scalar_lea.hbm %s1, %s255
          %s257 = sshll.u32 %s256, 4
          %s258 = int_to_ptr.hbm [resolvable:$true] %s257
          %s259 = sshll.u32 %s250, 4
          %s260 = int_to_ptr.vmem [resolvable:$true] %s259
          %265 = dma.hbm_to_vmem [thread:$0]  %s258, 2048, %s260, %s247, 128, 128, 8
        $region44: #{_lambda_.3} parent=35 // pred_fallthru
          _
      $region36: #{_lambda_.3} parent=5 // pred_fallthru
        _
      %p266 = scmp.le.s32.totalorder 1, %s16
      %p267 = scmp.lt.s32.totalorder %s16, 3
      %p268 = pnand %p266, %p267
      %p269 = pneg %p268
      // Predicated region
      $region45: #{_lambda_.3} parent=5 // pred_check
        _
      $region46: #{_lambda_.3} parent=5 // pred_check_branch
        %271 = sbr.rel (%p268) target = $region48
      $region47: #{_lambda_.3} parent=5 // pred_region
        %s272 = ssub.s32 %s16, 1
        %s273 = sand.u32 %s55, 1
        %s274 = scalar_lea.sflag [#allocation3], %s273
        %s275 = sand.u32 %s55, 1
        %s276 = smul.addr %s275, 128
        %s277 = scalar_lea.vmem [#allocation2], %s276
        // Predicated region
        $region49: #{_lambda_.3} parent=47 // pred_check
          %p278 = pneg %p68
        $region50: #{_lambda_.3} parent=47 // pred_check_branch
          %280 = sbr.rel (%p278) target = $region52
        $region51: #{_lambda_.3} parent=47 // pred_region
          %282 = dma.done %s274, 2048
        $region52: #{_lambda_.3} parent=47 // pred_fallthru
          _
        %s283 = smul.u32 8, %s21
        %p284 = scmp.lt.s32.totalorder %s283, 15
        %s285 = scalar_select %p284, %s283, 15
        %s286 = smul.addr %s285, 2
        %s287 = smul.addr %s286, 8
        %s288 = scalar_lea.vmem %s0, %s287
        %p289 = pneg %p42
        %p290 = pneg %p39
        %s291 = sand.u32 %s55, 1
        %s292 = scalar_lea.sflag [#allocation3], %s291
        %s293 = sand.u32 %s55, 1
        %s294 = smul.addr %s293, 128
        %s295 = scalar_lea.vmem [#allocation2], %s294
        %p296 = pneg %p68
        %p297 = pneg %p65
        %p298 = pneg %p89
        %p299 = pneg %p86
        %p300 = pneg %p110
        %p301 = pneg %p107
        %p302 = pneg %p131
        %p303 = pneg %p128
        %p304 = pneg %p152
        %p305 = pneg %p149
        %p306 = pneg %p173
        %p307 = pneg %p170
        %p308 = pneg %p199
        %p309 = pneg %p196
        %s310 = smul.u32 8, %s21
        %p311 = scmp.lt.s32.totalorder %s310, 15
        %s312 = scalar_select %p311, %s310, 15
        %s313 = smul.addr %s312, 2
        %s314 = smul.addr %s313, 4
        %s315 = scalar_lea.vmem %s7, %s314
        %s316 = smul.u32 8, %s21
        %p317 = scmp.lt.s32.totalorder %s316, 15
        %s318 = scalar_select %p317, %s316, 15
        %s319 = smul.addr %s318, 2
        %s320 = smul.addr %s319, 8
        %s321 = scalar_lea.vmem %s0, %s320
        %s322 = smul.u32 8, %s21
        %s323 = smul.u32 8, %s21
        %s324 = smul.u32 8, %s21
        %p325 = scmp.lt.s32.totalorder %s324, 15
        %s326 = scalar_select %p325, %s324, 15
        %s327 = smul.addr %s326, 2
        %s328 = smul.addr %s327, 4
        %s329 = scalar_lea.vmem %s7, %s328
        %s330 = smul.u32 8, %s21
        %v332 = vld [vmem:[%s321] sm:$0xff]
        %v333 = vld [vmem:[%s321 + $0x8] sm:$0xff]
        %v334 = vld [vmem:[%s321 + $0x10] sm:$0xff]
        %v335 = vld [vmem:[%s321 + $0x18] sm:$0xff]
        %v336 = vld [vmem:[%s321 + $0x20] sm:$0xff]
        %v337 = vld [vmem:[%s321 + $0x28] sm:$0xff]
        %v338 = vld [vmem:[%s321 + $0x30] sm:$0xff]
        %v339 = vld [vmem:[%s321 + $0x38] sm:$0xff]
        %v340 = vld [vmem:[%s321 + $0x40] sm:$0xff]
        %v341 = vld [vmem:[%s321 + $0x48] sm:$0xff]
        %v342 = vld [vmem:[%s321 + $0x50] sm:$0xff]
        %v343 = vld [vmem:[%s321 + $0x58] sm:$0xff]
        %v344 = vld [vmem:[%s321 + $0x60] sm:$0xff]
        %v345 = vld [vmem:[%s321 + $0x68] sm:$0xff]
        %v346 = vld [vmem:[%s321 + $0x70] sm:$0xff]
        %v347 = vld [vmem:[%s321 + $0x78] sm:$0xff]
        %v348 = vpack.c.bf16 %v333, %v332
        %v349 = vpack.c.bf16 %v335, %v334
        %v350 = vpack.c.bf16 %v337, %v336
        %v351 = vpack.c.bf16 %v339, %v338
        %v352 = vpack.c.bf16 %v341, %v340
        %v353 = vpack.c.bf16 %v343, %v342
        %v354 = vpack.c.bf16 %v345, %v344
        %v355 = vpack.c.bf16 %v347, %v346
        %v356 = vld [vmem:[%s277] sm:$0xff]
        %v357 = vld [vmem:[%s277 + $0x8] sm:$0xff]
        %v358 = vld [vmem:[%s277 + $0x10] sm:$0xff]
        %v359 = vld [vmem:[%s277 + $0x18] sm:$0xff]
        %v360 = vld [vmem:[%s277 + $0x20] sm:$0xff]
        %v361 = vld [vmem:[%s277 + $0x28] sm:$0xff]
        %v362 = vld [vmem:[%s277 + $0x30] sm:$0xff]
        %v363 = vld [vmem:[%s277 + $0x38] sm:$0xff]
        %v364 = vld [vmem:[%s277 + $0x40] sm:$0xff]
        %v365 = vld [vmem:[%s277 + $0x48] sm:$0xff]
        %v366 = vld [vmem:[%s277 + $0x50] sm:$0xff]
        %v367 = vld [vmem:[%s277 + $0x58] sm:$0xff]
        %v368 = vld [vmem:[%s277 + $0x60] sm:$0xff]
        %v369 = vld [vmem:[%s277 + $0x68] sm:$0xff]
        %v370 = vld [vmem:[%s277 + $0x70] sm:$0xff]
        %v371 = vld [vmem:[%s277 + $0x78] sm:$0xff]
        %v372 = vpack.c.bf16 %v357, %v356
        %v373 = vpack.c.bf16 %v359, %v358
        %v374 = vpack.c.bf16 %v361, %v360
        %v375 = vpack.c.bf16 %v363, %v362
        %v376 = vpack.c.bf16 %v365, %v364
        %v377 = vpack.c.bf16 %v367, %v366
        %v378 = vpack.c.bf16 %v369, %v368
        %v379 = vpack.c.bf16 %v371, %v370
        %v380 = vld [vmem:[%s2] sm:$0xf]
        %v381 = vld [vmem:[%s2 + $0x4] sm:$0xf]
        %v382 = vld [vmem:[%s2 + $0x8] sm:$0x3]
        %v383 = vld [vmem:[%s3] sm:$0xf]
        %v384 = vld [vmem:[%s3 + $0x4] sm:$0xf]
        %v387 = vunpack.c.l.b16 %v383
        %v388 = vunpack.c.l.b16 %v384
        %v389 = vpack.c.b16 %v388, %v387
        %vm391 = vcmask 130048
        %v393 = vsel %vm391, %v372, 0
        %v396 = vsel %vm391, %v373, 0
        %v399 = vsel %vm391, %v374, 0
        %v402 = vsel %vm391, %v375, 0
        %v405 = vsel %vm391, %v376, 0
        %v408 = vsel %vm391, %v377, 0
        %v411 = vsel %vm391, %v378, 0
        %v414 = vsel %vm391, %v379, 0
        %416 = vmatpush.bf16.msra.mxu0 0
        %417 = vmatpush.bf16.msra.mxu0 0
        %418 = vmatpush.bf16.msra.mxu0 0
        %419 = vmatpush.bf16.msra.mxu0 0
        %420 = vmatpush.bf16.msra.mxu0 0
        %421 = vmatpush.bf16.msra.mxu0 0
        %422 = vmatpush.bf16.msra.mxu0 0
        %423 = vmatpush.bf16.msra.mxu0 %v389
        %424 = vmatmul.bf16.gmra.mxu0 %v393
        %v425 = vpop.f32.mrf.mxu0
        %v426 = vadd.f32 0.0, %v425
        %v427 = vpop.f32.mrf.mxu0
        %v428 = vadd.f32 0.0, %v427
        %429 = vmatmul.bf16.gmra.mxu0 %v396
        %v430 = vpop.f32.mrf.mxu0
        %v431 = vadd.f32 0.0, %v430
        %v432 = vpop.f32.mrf.mxu0
        %v433 = vadd.f32 0.0, %v432
        %434 = vmatmul.bf16.gmra.mxu0 %v399
        %v435 = vpop.f32.mrf.mxu0
        %v436 = vadd.f32 0.0, %v435
        %v437 = vpop.f32.mrf.mxu0
        %v438 = vadd.f32 0.0, %v437
        %439 = vmatmul.bf16.gmra.mxu0 %v402
        %v440 = vpop.f32.mrf.mxu0
        %v441 = vadd.f32 0.0, %v440
        %v442 = vpop.f32.mrf.mxu0
        %v443 = vadd.f32 0.0, %v442
        %444 = vmatmul.bf16.gmra.mxu0 %v405
        %v445 = vpop.f32.mrf.mxu0
        %v446 = vadd.f32 0.0, %v445
        %v447 = vpop.f32.mrf.mxu0
        %v448 = vadd.f32 0.0, %v447
        %449 = vmatmul.bf16.gmra.mxu0 %v408
        %v450 = vpop.f32.mrf.mxu0
        %v451 = vadd.f32 0.0, %v450
        %v452 = vpop.f32.mrf.mxu0
        %v453 = vadd.f32 0.0, %v452
        %454 = vmatmul.bf16.gmra.mxu0 %v411
        %v455 = vpop.f32.mrf.mxu0
        %v456 = vadd.f32 0.0, %v455
        %v457 = vpop.f32.mrf.mxu0
        %v458 = vadd.f32 0.0, %v457
        %459 = vmatmul.bf16.gmra.mxu0 %v414
        %v460 = vpop.f32.mrf.mxu0
        %v461 = vadd.f32 0.0, %v460
        %v462 = vpop.f32.mrf.mxu0
        %v463 = vadd.f32 0.0, %v462
        %464 = vdwg.mxu0
        %v468 = vunpack.c.l.b16 %v380
        %v469 = vunpack.c.l.b16 %v381
        %v470 = vunpack.c.l.b16 %v382
        %v471 = vpack.c.b16 %v469, %v468
        %v472 = vpack.c.b16 %v470, %v470
        %vm474 = vcmask 162816
        %v476 = vsel %vm474, %v348, 0
        %v479 = vsel %vm474, %v349, 0
        %v482 = vsel %vm474, %v350, 0
        %v485 = vsel %vm474, %v351, 0
        %v488 = vsel %vm474, %v352, 0
        %v491 = vsel %vm474, %v353, 0
        %v494 = vsel %vm474, %v354, 0
        %v497 = vsel %vm474, %v355, 0
        %vm499 = vcmask 1041408
        %v501 = vsel %vm499, %v472, 0
        %503 = vmatpush.bf16.msra.mxu0 0
        %504 = vmatpush.bf16.msra.mxu0 0
        %505 = vmatpush.bf16.msra.mxu0 0
        %506 = vmatpush.bf16.msra.mxu0 0
        %507 = vmatpush.bf16.msra.mxu0 0
        %508 = vmatpush.bf16.msra.mxu0 0
        %509 = vmatpush.bf16.msra.mxu0 %v501
        %510 = vmatpush.bf16.msra.mxu0 %v471
        %511 = vmatmul.bf16.gmra.mxu0 %v476
        %v512 = vpop.f32.mrf.mxu0
        %v513 = vadd.f32 %v426, %v512
        %v514 = vpop.f32.mrf.mxu0
        %v515 = vadd.f32 %v428, %v514
        %516 = vmatmul.bf16.gmra.mxu0 %v479
        %v517 = vpop.f32.mrf.mxu0
        %v518 = vadd.f32 %v431, %v517
        %v519 = vpop.f32.mrf.mxu0
        %v520 = vadd.f32 %v433, %v519
        %521 = vmatmul.bf16.gmra.mxu0 %v482
        %v522 = vpop.f32.mrf.mxu0
        %v523 = vadd.f32 %v436, %v522
        %v524 = vpop.f32.mrf.mxu0
        %v525 = vadd.f32 %v438, %v524
        %526 = vmatmul.bf16.gmra.mxu0 %v485
        %v527 = vpop.f32.mrf.mxu0
        %v528 = vadd.f32 %v441, %v527
        %v529 = vpop.f32.mrf.mxu0
        %v530 = vadd.f32 %v443, %v529
        %531 = vmatmul.bf16.gmra.mxu0 %v488
        %v532 = vpop.f32.mrf.mxu0
        %v533 = vadd.f32 %v446, %v532
        %v534 = vpop.f32.mrf.mxu0
        %v535 = vadd.f32 %v448, %v534
        %536 = vmatmul.bf16.gmra.mxu0 %v491
        %v537 = vpop.f32.mrf.mxu0
        %v538 = vadd.f32 %v451, %v537
        %v539 = vpop.f32.mrf.mxu0
        %v540 = vadd.f32 %v453, %v539
        %541 = vmatmul.bf16.gmra.mxu0 %v494
        %v542 = vpop.f32.mrf.mxu0
        %v543 = vadd.f32 %v456, %v542
        %v544 = vpop.f32.mrf.mxu0
        %v545 = vadd.f32 %v458, %v544
        %546 = vmatmul.bf16.gmra.mxu0 %v497
        %v547 = vpop.f32.mrf.mxu0
        %v548 = vadd.f32 %v461, %v547
        %v549 = vpop.f32.mrf.mxu0
        %v550 = vadd.f32 %v463, %v549
        %551 = vdwg.mxu0
        %v552 = vld [vmem:[%s4] sm:$0x1]
        %v554 = vperm.slane %v552, 0
        %v556 = vadd.f32 %v513, %v554
        %v557 = vadd.f32 %v515, %v554
        %v558 = vadd.f32 %v518, %v554
        %v559 = vadd.f32 %v520, %v554
        %v560 = vadd.f32 %v523, %v554
        %v561 = vadd.f32 %v525, %v554
        %v562 = vadd.f32 %v528, %v554
        %v563 = vadd.f32 %v530, %v554
        %v564 = vadd.f32 %v533, %v554
        %v565 = vadd.f32 %v535, %v554
        %v566 = vadd.f32 %v538, %v554
        %v567 = vadd.f32 %v540, %v554
        %v568 = vadd.f32 %v543, %v554
        %v569 = vadd.f32 %v545, %v554
        %v570 = vadd.f32 %v548, %v554
        %v571 = vadd.f32 %v550, %v554
        %v572 = vmax.f32 %v556, 0.0
        %v573 = vmax.f32 %v557, 0.0
        %v574 = vmax.f32 %v558, 0.0
        %v575 = vmax.f32 %v559, 0.0
        %v576 = vmax.f32 %v560, 0.0
        %v577 = vmax.f32 %v561, 0.0
        %v578 = vmax.f32 %v562, 0.0
        %v579 = vmax.f32 %v563, 0.0
        %v580 = vmax.f32 %v564, 0.0
        %v581 = vmax.f32 %v565, 0.0
        %v582 = vmax.f32 %v566, 0.0
        %v583 = vmax.f32 %v567, 0.0
        %v584 = vmax.f32 %v568, 0.0
        %v585 = vmax.f32 %v569, 0.0
        %v586 = vmax.f32 %v570, 0.0
        %v587 = vmax.f32 %v571, 0.0
        %v588 = vpack.c.bf16 %v572, %v572
        %v589 = vpack.c.bf16 %v573, %v573
        %v590 = vpack.c.bf16 %v574, %v574
        %v591 = vpack.c.bf16 %v575, %v575
        %v592 = vpack.c.bf16 %v576, %v576
        %v593 = vpack.c.bf16 %v577, %v577
        %v594 = vpack.c.bf16 %v578, %v578
        %v595 = vpack.c.bf16 %v579, %v579
        %v596 = vpack.c.bf16 %v580, %v580
        %v597 = vpack.c.bf16 %v581, %v581
        %v598 = vpack.c.bf16 %v582, %v582
        %v599 = vpack.c.bf16 %v583, %v583
        %v600 = vpack.c.bf16 %v584, %v584
        %v601 = vpack.c.bf16 %v585, %v585
        %v602 = vpack.c.bf16 %v586, %v586
        %v603 = vpack.c.bf16 %v587, %v587
        %v606 = vunpack.c.l.b16 %v588
        %v607 = vunpack.c.l.b16 %v589
        %v608 = vpack.c.b16 %v607, %v606
        %609 = vrot.lane.b32.xlu0 %v608, 112
        %v610 = vpop.permute.xlu0 %609
        %vm611 = vcmask 64512
        %v613 = vsel %vm611, %v608, 0
        %v616 = vsel %vm611, %v610, 0
        %618 = vmatpush.bf16.xpose.msra.mxu0 0
        %619 = vmatpush.bf16.xpose.msra.mxu0 0
        %620 = vmatpush.bf16.xpose.msra.mxu0 0
        %621 = vmatpush.bf16.xpose.msra.mxu0 0
        %622 = vmatpush.bf16.xpose.msra.mxu0 0
        %623 = vmatpush.bf16.xpose.msra.mxu0 0
        %624 = vmatpush.bf16.xpose.msra.mxu0 0
        %625 = vmatpush.bf16.xpose.msra.mxu0 %v616
        %626 = vmatmul.bf16.gmra.mxu0 %v613
        %v627 = vpop.f32.mrf.mxu0
        %v628 = vadd.f32 0.0, %v627
        %v629 = vpop.f32.mrf.mxu0
        %v630 = vadd.f32 0.0, %v629
        %631 = vdwg.mxu0
        %v634 = vunpack.c.l.b16 %v590
        %v635 = vunpack.c.l.b16 %v591
        %v636 = vpack.c.b16 %v635, %v634
        %637 = vrot.lane.b32.xlu0 %v636, 112
        %v638 = vpop.permute.xlu0 %637
        %v640 = vsel %vm611, %v636, 0
        %v643 = vsel %vm611, %v638, 0
        %645 = vmatpush.bf16.xpose.msra.mxu0 0
        %646 = vmatpush.bf16.xpose.msra.mxu0 0
        %647 = vmatpush.bf16.xpose.msra.mxu0 0
        %648 = vmatpush.bf16.xpose.msra.mxu0 0
        %649 = vmatpush.bf16.xpose.msra.mxu0 0
        %650 = vmatpush.bf16.xpose.msra.mxu0 0
        %651 = vmatpush.bf16.xpose.msra.mxu0 0
        %652 = vmatpush.bf16.xpose.msra.mxu0 %v643
        %653 = vmatmul.bf16.gmra.mxu0 %v640
        %v654 = vpop.f32.mrf.mxu0
        %v655 = vadd.f32 0.0, %v654
        %v656 = vpop.f32.mrf.mxu0
        %v657 = vadd.f32 0.0, %v656
        %658 = vdwg.mxu0
        %v661 = vunpack.c.l.b16 %v592
        %v662 = vunpack.c.l.b16 %v593
        %v663 = vpack.c.b16 %v662, %v661
        %664 = vrot.lane.b32.xlu0 %v663, 112
        %v665 = vpop.permute.xlu0 %664
        %v667 = vsel %vm611, %v663, 0
        %v670 = vsel %vm611, %v665, 0
        %672 = vmatpush.bf16.xpose.msra.mxu0 0
        %673 = vmatpush.bf16.xpose.msra.mxu0 0
        %674 = vmatpush.bf16.xpose.msra.mxu0 0
        %675 = vmatpush.bf16.xpose.msra.mxu0 0
        %676 = vmatpush.bf16.xpose.msra.mxu0 0
        %677 = vmatpush.bf16.xpose.msra.mxu0 0
        %678 = vmatpush.bf16.xpose.msra.mxu0 0
        %679 = vmatpush.bf16.xpose.msra.mxu0 %v670
        %680 = vmatmul.bf16.gmra.mxu0 %v667
        %v681 = vpop.f32.mrf.mxu0
        %v682 = vadd.f32 0.0, %v681
        %v683 = vpop.f32.mrf.mxu0
        %v684 = vadd.f32 0.0, %v683
        %685 = vdwg.mxu0
        %v688 = vunpack.c.l.b16 %v594
        %v689 = vunpack.c.l.b16 %v595
        %v690 = vpack.c.b16 %v689, %v688
        %691 = vrot.lane.b32.xlu0 %v690, 112
        %v692 = vpop.permute.xlu0 %691
        %v694 = vsel %vm611, %v690, 0
        %v697 = vsel %vm611, %v692, 0
        %699 = vmatpush.bf16.xpose.msra.mxu0 0
        %700 = vmatpush.bf16.xpose.msra.mxu0 0
        %701 = vmatpush.bf16.xpose.msra.mxu0 0
        %702 = vmatpush.bf16.xpose.msra.mxu0 0
        %703 = vmatpush.bf16.xpose.msra.mxu0 0
        %704 = vmatpush.bf16.xpose.msra.mxu0 0
        %705 = vmatpush.bf16.xpose.msra.mxu0 0
        %706 = vmatpush.bf16.xpose.msra.mxu0 %v697
        %707 = vmatmul.bf16.gmra.mxu0 %v694
        %v708 = vpop.f32.mrf.mxu0
        %v709 = vadd.f32 0.0, %v708
        %v710 = vpop.f32.mrf.mxu0
        %v711 = vadd.f32 0.0, %v710
        %712 = vdwg.mxu0
        %v715 = vunpack.c.l.b16 %v596
        %v716 = vunpack.c.l.b16 %v597
        %v717 = vpack.c.b16 %v716, %v715
        %718 = vrot.lane.b32.xlu0 %v717, 112
        %v719 = vpop.permute.xlu0 %718
        %v721 = vsel %vm611, %v717, 0
        %v724 = vsel %vm611, %v719, 0
        %726 = vmatpush.bf16.xpose.msra.mxu0 0
        %727 = vmatpush.bf16.xpose.msra.mxu0 0
        %728 = vmatpush.bf16.xpose.msra.mxu0 0
        %729 = vmatpush.bf16.xpose.msra.mxu0 0
        %730 = vmatpush.bf16.xpose.msra.mxu0 0
        %731 = vmatpush.bf16.xpose.msra.mxu0 0
        %732 = vmatpush.bf16.xpose.msra.mxu0 0
        %733 = vmatpush.bf16.xpose.msra.mxu0 %v724
        %734 = vmatmul.bf16.gmra.mxu0 %v721
        %v735 = vpop.f32.mrf.mxu0
        %v736 = vadd.f32 0.0, %v735
        %v737 = vpop.f32.mrf.mxu0
        %v738 = vadd.f32 0.0, %v737
        %739 = vdwg.mxu0
        %v742 = vunpack.c.l.b16 %v598
        %v743 = vunpack.c.l.b16 %v599
        %v744 = vpack.c.b16 %v743, %v742
        %745 = vrot.lane.b32.xlu0 %v744, 112
        %v746 = vpop.permute.xlu0 %745
        %v748 = vsel %vm611, %v744, 0
        %v751 = vsel %vm611, %v746, 0
        %753 = vmatpush.bf16.xpose.msra.mxu0 0
        %754 = vmatpush.bf16.xpose.msra.mxu0 0
        %755 = vmatpush.bf16.xpose.msra.mxu0 0
        %756 = vmatpush.bf16.xpose.msra.mxu0 0
        %757 = vmatpush.bf16.xpose.msra.mxu0 0
        %758 = vmatpush.bf16.xpose.msra.mxu0 0
        %759 = vmatpush.bf16.xpose.msra.mxu0 0
        %760 = vmatpush.bf16.xpose.msra.mxu0 %v751
        %761 = vmatmul.bf16.gmra.mxu0 %v748
        %v762 = vpop.f32.mrf.mxu0
        %v763 = vadd.f32 0.0, %v762
        %v764 = vpop.f32.mrf.mxu0
        %v765 = vadd.f32 0.0, %v764
        %766 = vdwg.mxu0
        %v769 = vunpack.c.l.b16 %v600
        %v770 = vunpack.c.l.b16 %v601
        %v771 = vpack.c.b16 %v770, %v769
        %772 = vrot.lane.b32.xlu0 %v771, 112
        %v773 = vpop.permute.xlu0 %772
        %v775 = vsel %vm611, %v771, 0
        %v778 = vsel %vm611, %v773, 0
        %780 = vmatpush.bf16.xpose.msra.mxu0 0
        %781 = vmatpush.bf16.xpose.msra.mxu0 0
        %782 = vmatpush.bf16.xpose.msra.mxu0 0
        %783 = vmatpush.bf16.xpose.msra.mxu0 0
        %784 = vmatpush.bf16.xpose.msra.mxu0 0
        %785 = vmatpush.bf16.xpose.msra.mxu0 0
        %786 = vmatpush.bf16.xpose.msra.mxu0 0
        %787 = vmatpush.bf16.xpose.msra.mxu0 %v778
        %788 = vmatmul.bf16.gmra.mxu0 %v775
        %v789 = vpop.f32.mrf.mxu0
        %v790 = vadd.f32 0.0, %v789
        %v791 = vpop.f32.mrf.mxu0
        %v792 = vadd.f32 0.0, %v791
        %793 = vdwg.mxu0
        %v796 = vunpack.c.l.b16 %v602
        %v797 = vunpack.c.l.b16 %v603
        %v798 = vpack.c.b16 %v797, %v796
        %799 = vrot.lane.b32.xlu0 %v798, 112
        %v800 = vpop.permute.xlu0 %799
        %v802 = vsel %vm611, %v798, 0
        %v805 = vsel %vm611, %v800, 0
        %807 = vmatpush.bf16.xpose.msra.mxu0 0
        %808 = vmatpush.bf16.xpose.msra.mxu0 0
        %809 = vmatpush.bf16.xpose.msra.mxu0 0
        %810 = vmatpush.bf16.xpose.msra.mxu0 0
        %811 = vmatpush.bf16.xpose.msra.mxu0 0
        %812 = vmatpush.bf16.xpose.msra.mxu0 0
        %813 = vmatpush.bf16.xpose.msra.mxu0 0
        %814 = vmatpush.bf16.xpose.msra.mxu0 %v805
        %815 = vmatmul.bf16.gmra.mxu0 %v802
        %v816 = vpop.f32.mrf.mxu0
        %v817 = vadd.f32 0.0, %v816
        %v818 = vpop.f32.mrf.mxu0
        %v819 = vadd.f32 0.0, %v818
        %820 = vdwg.mxu0
        %v821 = vmul.f32 %v628, 0.35355338
        %v822 = vmul.f32 %v630, 0.35355338
        %v823 = vmul.f32 %v655, 0.35355338
        %v824 = vmul.f32 %v657, 0.35355338
        %v825 = vmul.f32 %v682, 0.35355338
        %v826 = vmul.f32 %v684, 0.35355338
        %v827 = vmul.f32 %v709, 0.35355338
        %v828 = vmul.f32 %v711, 0.35355338
        %v829 = vmul.f32 %v736, 0.35355338
        %v830 = vmul.f32 %v738, 0.35355338
        %v831 = vmul.f32 %v763, 0.35355338
        %v832 = vmul.f32 %v765, 0.35355338
        %v833 = vmul.f32 %v790, 0.35355338
        %v834 = vmul.f32 %v792, 0.35355338
        %v835 = vmul.f32 %v817, 0.35355338
        %v836 = vmul.f32 %v819, 0.35355338
        %v837 = vsel %vm391, %v821, -inf
        %838 = vmax.xlane.f32.xlu0 %v837
        %v839 = vpop.xlane.xlu0 %838
        %v840 = vsel %vm391, %v822, -inf
        %841 = vmax.xlane.f32.xlu0 %v840
        %v842 = vpop.xlane.xlu0 %841
        %v843 = vsel %vm391, %v823, -inf
        %844 = vmax.xlane.f32.xlu0 %v843
        %v845 = vpop.xlane.xlu0 %844
        %v846 = vsel %vm391, %v824, -inf
        %847 = vmax.xlane.f32.xlu0 %v846
        %v848 = vpop.xlane.xlu0 %847
        %v849 = vsel %vm391, %v825, -inf
        %850 = vmax.xlane.f32.xlu0 %v849
        %v851 = vpop.xlane.xlu0 %850
        %v852 = vsel %vm391, %v826, -inf
        %853 = vmax.xlane.f32.xlu0 %v852
        %v854 = vpop.xlane.xlu0 %853
        %v855 = vsel %vm391, %v827, -inf
        %856 = vmax.xlane.f32.xlu0 %v855
        %v857 = vpop.xlane.xlu0 %856
        %v858 = vsel %vm391, %v828, -inf
        %859 = vmax.xlane.f32.xlu0 %v858
        %v860 = vpop.xlane.xlu0 %859
        %v861 = vsel %vm391, %v829, -inf
        %862 = vmax.xlane.f32.xlu0 %v861
        %v863 = vpop.xlane.xlu0 %862
        %v864 = vsel %vm391, %v830, -inf
        %865 = vmax.xlane.f32.xlu0 %v864
        %v866 = vpop.xlane.xlu0 %865
        %v867 = vsel %vm391, %v831, -inf
        %868 = vmax.xlane.f32.xlu0 %v867
        %v869 = vpop.xlane.xlu0 %868
        %v870 = vsel %vm391, %v832, -inf
        %871 = vmax.xlane.f32.xlu0 %v870
        %v872 = vpop.xlane.xlu0 %871
        %v873 = vsel %vm391, %v833, -inf
        %874 = vmax.xlane.f32.xlu0 %v873
        %v875 = vpop.xlane.xlu0 %874
        %v876 = vsel %vm391, %v834, -inf
        %877 = vmax.xlane.f32.xlu0 %v876
        %v878 = vpop.xlane.xlu0 %877
        %v879 = vsel %vm391, %v835, -inf
        %880 = vmax.xlane.f32.xlu0 %v879
        %v881 = vpop.xlane.xlu0 %880
        %v882 = vsel %vm391, %v836, -inf
        %883 = vmax.xlane.f32.xlu0 %v882
        %v884 = vpop.xlane.xlu0 %883
        %v885 = vsub.f32 %v821, %v839
        %v886 = vsub.f32 %v822, %v842
        %v887 = vsub.f32 %v823, %v845
        %v888 = vsub.f32 %v824, %v848
        %v889 = vsub.f32 %v825, %v851
        %v890 = vsub.f32 %v826, %v854
        %v891 = vsub.f32 %v827, %v857
        %v892 = vsub.f32 %v828, %v860
        %v893 = vsub.f32 %v829, %v863
        %v894 = vsub.f32 %v830, %v866
        %v895 = vsub.f32 %v831, %v869
        %v896 = vsub.f32 %v832, %v872
        %v897 = vsub.f32 %v833, %v875
        %v898 = vsub.f32 %v834, %v878
        %v899 = vsub.f32 %v835, %v881
        %v900 = vsub.f32 %v836, %v884
        %v901 = vmul.f32 %v885, 1.442695
        %v902 = vpow.pop %v901
        %v903 = vmul.f32 %v886, 1.442695
        %v904 = vpow.pop %v903
        %v905 = vmul.f32 %v887, 1.442695
        %v906 = vpow.pop %v905
        %v907 = vmul.f32 %v888, 1.442695
        %v908 = vpow.pop %v907
        %v909 = vmul.f32 %v889, 1.442695
        %v910 = vpow.pop %v909
        %v911 = vmul.f32 %v890, 1.442695
        %v912 = vpow.pop %v911
        %v913 = vmul.f32 %v891, 1.442695
        %v914 = vpow.pop %v913
        %v915 = vmul.f32 %v892, 1.442695
        %v916 = vpow.pop %v915
        %v917 = vmul.f32 %v893, 1.442695
        %v918 = vpow.pop %v917
        %v919 = vmul.f32 %v894, 1.442695
        %v920 = vpow.pop %v919
        %v921 = vmul.f32 %v895, 1.442695
        %v922 = vpow.pop %v921
        %v923 = vmul.f32 %v896, 1.442695
        %v924 = vpow.pop %v923
        %v925 = vmul.f32 %v897, 1.442695
        %v926 = vpow.pop %v925
        %v927 = vmul.f32 %v898, 1.442695
        %v928 = vpow.pop %v927
        %v929 = vmul.f32 %v899, 1.442695
        %v930 = vpow.pop %v929
        %v931 = vmul.f32 %v900, 1.442695
        %v932 = vpow.pop %v931
        %v933 = vsel %vm391, %v902, 0.0
        %934 = vadd.xlane.f32.xlu0 %v933
        %v935 = vpop.xlane.xlu0 %934
        %v936 = vsel %vm391, %v904, 0.0
        %937 = vadd.xlane.f32.xlu0 %v936
        %v938 = vpop.xlane.xlu0 %937
        %v939 = vsel %vm391, %v906, 0.0
        %940 = vadd.xlane.f32.xlu0 %v939
        %v941 = vpop.xlane.xlu0 %940
        %v942 = vsel %vm391, %v908, 0.0
        %943 = vadd.xlane.f32.xlu0 %v942
        %v944 = vpop.xlane.xlu0 %943
        %v945 = vsel %vm391, %v910, 0.0
        %946 = vadd.xlane.f32.xlu0 %v945
        %v947 = vpop.xlane.xlu0 %946
        %v948 = vsel %vm391, %v912, 0.0
        %949 = vadd.xlane.f32.xlu0 %v948
        %v950 = vpop.xlane.xlu0 %949
        %v951 = vsel %vm391, %v914, 0.0
        %952 = vadd.xlane.f32.xlu0 %v951
        %v953 = vpop.xlane.xlu0 %952
        %v954 = vsel %vm391, %v916, 0.0
        %955 = vadd.xlane.f32.xlu0 %v954
        %v956 = vpop.xlane.xlu0 %955
        %v957 = vsel %vm391, %v918, 0.0
        %958 = vadd.xlane.f32.xlu0 %v957
        %v959 = vpop.xlane.xlu0 %958
        %v960 = vsel %vm391, %v920, 0.0
        %961 = vadd.xlane.f32.xlu0 %v960
        %v962 = vpop.xlane.xlu0 %961
        %v963 = vsel %vm391, %v922, 0.0
        %964 = vadd.xlane.f32.xlu0 %v963
        %v965 = vpop.xlane.xlu0 %964
        %v966 = vsel %vm391, %v924, 0.0
        %967 = vadd.xlane.f32.xlu0 %v966
        %v968 = vpop.xlane.xlu0 %967
        %v969 = vsel %vm391, %v926, 0.0
        %970 = vadd.xlane.f32.xlu0 %v969
        %v971 = vpop.xlane.xlu0 %970
        %v972 = vsel %vm391, %v928, 0.0
        %973 = vadd.xlane.f32.xlu0 %v972
        %v974 = vpop.xlane.xlu0 %973
        %v975 = vsel %vm391, %v930, 0.0
        %976 = vadd.xlane.f32.xlu0 %v975
        %v977 = vpop.xlane.xlu0 %976
        %v978 = vsel %vm391, %v932, 0.0
        %979 = vadd.xlane.f32.xlu0 %v978
        %v980 = vpop.xlane.xlu0 %979
        %v981 = vrcp.pop %v935
        %v982 = vmul.f32 %v935, %v981
        %v983 = vsub.f32 1.0, %v982
        %v984 = vmul.f32 %v981, %v983
        %v985 = vadd.f32 %v981, %v984
        %vm986 = vweird.f32 %v935
        %vm987 = vweird.f32 %v981
        %vm988 = vmor %vm986, %vm987
        %v989 = vsel %vm988, %v981, %v985
        %v990 = vand.u32 2147483647, %v935
        %vm991 = vcmp.eq.f32.partialorder %v990, 8.507059e+37
        %v992 = vand.u32 %v935, 2147483648
        %v993 = vor.u32 1.1754944e-38, %v992
        %v994 = vsel %vm991, %v993, %v989
        %v995 = vrcp.pop %v938
        %v996 = vmul.f32 %v938, %v995
        %v997 = vsub.f32 1.0, %v996
        %v998 = vmul.f32 %v995, %v997
        %v999 = vadd.f32 %v995, %v998
        %vm1000 = vweird.f32 %v938
        %vm1001 = vweird.f32 %v995
        %vm1002 = vmor %vm1000, %vm1001
        %v1003 = vsel %vm1002, %v995, %v999
        %v1004 = vand.u32 2147483647, %v938
        %vm1005 = vcmp.eq.f32.partialorder %v1004, 8.507059e+37
        %v1006 = vand.u32 %v938, 2147483648
        %v1007 = vor.u32 1.1754944e-38, %v1006
        %v1008 = vsel %vm1005, %v1007, %v1003
        %v1009 = vrcp.pop %v941
        %v1010 = vmul.f32 %v941, %v1009
        %v1011 = vsub.f32 1.0, %v1010
        %v1012 = vmul.f32 %v1009, %v1011
        %v1013 = vadd.f32 %v1009, %v1012
        %vm1014 = vweird.f32 %v941
        %vm1015 = vweird.f32 %v1009
        %vm1016 = vmor %vm1014, %vm1015
        %v1017 = vsel %vm1016, %v1009, %v1013
        %v1018 = vand.u32 2147483647, %v941
        %vm1019 = vcmp.eq.f32.partialorder %v1018, 8.507059e+37
        %v1020 = vand.u32 %v941, 2147483648
        %v1021 = vor.u32 1.1754944e-38, %v1020
        %v1022 = vsel %vm1019, %v1021, %v1017
        %v1023 = vrcp.pop %v944
        %v1024 = vmul.f32 %v944, %v1023
        %v1025 = vsub.f32 1.0, %v1024
        %v1026 = vmul.f32 %v1023, %v1025
        %v1027 = vadd.f32 %v1023, %v1026
        %vm1028 = vweird.f32 %v944
        %vm1029 = vweird.f32 %v1023
        %vm1030 = vmor %vm1028, %vm1029
        %v1031 = vsel %vm1030, %v1023, %v1027
        %v1032 = vand.u32 2147483647, %v944
        %vm1033 = vcmp.eq.f32.partialorder %v1032, 8.507059e+37
        %v1034 = vand.u32 %v944, 2147483648
        %v1035 = vor.u32 1.1754944e-38, %v1034
        %v1036 = vsel %vm1033, %v1035, %v1031
        %v1037 = vrcp.pop %v947
        %v1038 = vmul.f32 %v947, %v1037
        %v1039 = vsub.f32 1.0, %v1038
        %v1040 = vmul.f32 %v1037, %v1039
        %v1041 = vadd.f32 %v1037, %v1040
        %vm1042 = vweird.f32 %v947
        %vm1043 = vweird.f32 %v1037
        %vm1044 = vmor %vm1042, %vm1043
        %v1045 = vsel %vm1044, %v1037, %v1041
        %v1046 = vand.u32 2147483647, %v947
        %vm1047 = vcmp.eq.f32.partialorder %v1046, 8.507059e+37
        %v1048 = vand.u32 %v947, 2147483648
        %v1049 = vor.u32 1.1754944e-38, %v1048
        %v1050 = vsel %vm1047, %v1049, %v1045
        %v1051 = vrcp.pop %v950
        %v1052 = vmul.f32 %v950, %v1051
        %v1053 = vsub.f32 1.0, %v1052
        %v1054 = vmul.f32 %v1051, %v1053
        %v1055 = vadd.f32 %v1051, %v1054
        %vm1056 = vweird.f32 %v950
        %vm1057 = vweird.f32 %v1051
        %vm1058 = vmor %vm1056, %vm1057
        %v1059 = vsel %vm1058, %v1051, %v1055
        %v1060 = vand.u32 2147483647, %v950
        %vm1061 = vcmp.eq.f32.partialorder %v1060, 8.507059e+37
        %v1062 = vand.u32 %v950, 2147483648
        %v1063 = vor.u32 1.1754944e-38, %v1062
        %v1064 = vsel %vm1061, %v1063, %v1059
        %v1065 = vrcp.pop %v953
        %v1066 = vmul.f32 %v953, %v1065
        %v1067 = vsub.f32 1.0, %v1066
        %v1068 = vmul.f32 %v1065, %v1067
        %v1069 = vadd.f32 %v1065, %v1068
        %vm1070 = vweird.f32 %v953
        %vm1071 = vweird.f32 %v1065
        %vm1072 = vmor %vm1070, %vm1071
        %v1073 = vsel %vm1072, %v1065, %v1069
        %v1074 = vand.u32 2147483647, %v953
        %vm1075 = vcmp.eq.f32.partialorder %v1074, 8.507059e+37
        %v1076 = vand.u32 %v953, 2147483648
        %v1077 = vor.u32 1.1754944e-38, %v1076
        %v1078 = vsel %vm1075, %v1077, %v1073
        %v1079 = vrcp.pop %v956
        %v1080 = vmul.f32 %v956, %v1079
        %v1081 = vsub.f32 1.0, %v1080
        %v1082 = vmul.f32 %v1079, %v1081
        %v1083 = vadd.f32 %v1079, %v1082
        %vm1084 = vweird.f32 %v956
        %vm1085 = vweird.f32 %v1079
        %vm1086 = vmor %vm1084, %vm1085
        %v1087 = vsel %vm1086, %v1079, %v1083
        %v1088 = vand.u32 2147483647, %v956
        %vm1089 = vcmp.eq.f32.partialorder %v1088, 8.507059e+37
        %v1090 = vand.u32 %v956, 2147483648
        %v1091 = vor.u32 1.1754944e-38, %v1090
        %v1092 = vsel %vm1089, %v1091, %v1087
        %v1093 = vrcp.pop %v959
        %v1094 = vmul.f32 %v959, %v1093
        %v1095 = vsub.f32 1.0, %v1094
        %v1096 = vmul.f32 %v1093, %v1095
        %v1097 = vadd.f32 %v1093, %v1096
        %vm1098 = vweird.f32 %v959
        %vm1099 = vweird.f32 %v1093
        %vm1100 = vmor %vm1098, %vm1099
        %v1101 = vsel %vm1100, %v1093, %v1097
        %v1102 = vand.u32 2147483647, %v959
        %vm1103 = vcmp.eq.f32.partialorder %v1102, 8.507059e+37
        %v1104 = vand.u32 %v959, 2147483648
        %v1105 = vor.u32 1.1754944e-38, %v1104
        %v1106 = vsel %vm1103, %v1105, %v1101
        %v1107 = vrcp.pop %v962
        %v1108 = vmul.f32 %v962, %v1107
        %v1109 = vsub.f32 1.0, %v1108
        %v1110 = vmul.f32 %v1107, %v1109
        %v1111 = vadd.f32 %v1107, %v1110
        %vm1112 = vweird.f32 %v962
        %vm1113 = vweird.f32 %v1107
        %vm1114 = vmor %vm1112, %vm1113
        %v1115 = vsel %vm1114, %v1107, %v1111
        %v1116 = vand.u32 2147483647, %v962
        %vm1117 = vcmp.eq.f32.partialorder %v1116, 8.507059e+37
        %v1118 = vand.u32 %v962, 2147483648
        %v1119 = vor.u32 1.1754944e-38, %v1118
        %v1120 = vsel %vm1117, %v1119, %v1115
        %v1121 = vrcp.pop %v965
        %v1122 = vmul.f32 %v965, %v1121
        %v1123 = vsub.f32 1.0, %v1122
        %v1124 = vmul.f32 %v1121, %v1123
        %v1125 = vadd.f32 %v1121, %v1124
        %vm1126 = vweird.f32 %v965
        %vm1127 = vweird.f32 %v1121
        %vm1128 = vmor %vm1126, %vm1127
        %v1129 = vsel %vm1128, %v1121, %v1125
        %v1130 = vand.u32 2147483647, %v965
        %vm1131 = vcmp.eq.f32.partialorder %v1130, 8.507059e+37
        %v1132 = vand.u32 %v965, 2147483648
        %v1133 = vor.u32 1.1754944e-38, %v1132
        %v1134 = vsel %vm1131, %v1133, %v1129
        %v1135 = vrcp.pop %v968
        %v1136 = vmul.f32 %v968, %v1135
        %v1137 = vsub.f32 1.0, %v1136
        %v1138 = vmul.f32 %v1135, %v1137
        %v1139 = vadd.f32 %v1135, %v1138
        %vm1140 = vweird.f32 %v968
        %vm1141 = vweird.f32 %v1135
        %vm1142 = vmor %vm1140, %vm1141
        %v1143 = vsel %vm1142, %v1135, %v1139
        %v1144 = vand.u32 2147483647, %v968
        %vm1145 = vcmp.eq.f32.partialorder %v1144, 8.507059e+37
        %v1146 = vand.u32 %v968, 2147483648
        %v1147 = vor.u32 1.1754944e-38, %v1146
        %v1148 = vsel %vm1145, %v1147, %v1143
        %v1149 = vrcp.pop %v971
        %v1150 = vmul.f32 %v971, %v1149
        %v1151 = vsub.f32 1.0, %v1150
        %v1152 = vmul.f32 %v1149, %v1151
        %v1153 = vadd.f32 %v1149, %v1152
        %vm1154 = vweird.f32 %v971
        %vm1155 = vweird.f32 %v1149
        %vm1156 = vmor %vm1154, %vm1155
        %v1157 = vsel %vm1156, %v1149, %v1153
        %v1158 = vand.u32 2147483647, %v971
        %vm1159 = vcmp.eq.f32.partialorder %v1158, 8.507059e+37
        %v1160 = vand.u32 %v971, 2147483648
        %v1161 = vor.u32 1.1754944e-38, %v1160
        %v1162 = vsel %vm1159, %v1161, %v1157
        %v1163 = vrcp.pop %v974
        %v1164 = vmul.f32 %v974, %v1163
        %v1165 = vsub.f32 1.0, %v1164
        %v1166 = vmul.f32 %v1163, %v1165
        %v1167 = vadd.f32 %v1163, %v1166
        %vm1168 = vweird.f32 %v974
        %vm1169 = vweird.f32 %v1163
        %vm1170 = vmor %vm1168, %vm1169
        %v1171 = vsel %vm1170, %v1163, %v1167
        %v1172 = vand.u32 2147483647, %v974
        %vm1173 = vcmp.eq.f32.partialorder %v1172, 8.507059e+37
        %v1174 = vand.u32 %v974, 2147483648
        %v1175 = vor.u32 1.1754944e-38, %v1174
        %v1176 = vsel %vm1173, %v1175, %v1171
        %v1177 = vrcp.pop %v977
        %v1178 = vmul.f32 %v977, %v1177
        %v1179 = vsub.f32 1.0, %v1178
        %v1180 = vmul.f32 %v1177, %v1179
        %v1181 = vadd.f32 %v1177, %v1180
        %vm1182 = vweird.f32 %v977
        %vm1183 = vweird.f32 %v1177
        %vm1184 = vmor %vm1182, %vm1183
        %v1185 = vsel %vm1184, %v1177, %v1181
        %v1186 = vand.u32 2147483647, %v977
        %vm1187 = vcmp.eq.f32.partialorder %v1186, 8.507059e+37
        %v1188 = vand.u32 %v977, 2147483648
        %v1189 = vor.u32 1.1754944e-38, %v1188
        %v1190 = vsel %vm1187, %v1189, %v1185
        %v1191 = vrcp.pop %v980
        %v1192 = vmul.f32 %v980, %v1191
        %v1193 = vsub.f32 1.0, %v1192
        %v1194 = vmul.f32 %v1191, %v1193
        %v1195 = vadd.f32 %v1191, %v1194
        %vm1196 = vweird.f32 %v980
        %vm1197 = vweird.f32 %v1191
        %vm1198 = vmor %vm1196, %vm1197
        %v1199 = vsel %vm1198, %v1191, %v1195
        %v1200 = vand.u32 2147483647, %v980
        %vm1201 = vcmp.eq.f32.partialorder %v1200, 8.507059e+37
        %v1202 = vand.u32 %v980, 2147483648
        %v1203 = vor.u32 1.1754944e-38, %v1202
        %v1204 = vsel %vm1201, %v1203, %v1199
        %v1205 = vmul.f32 %v902, %v994
        %v1206 = vmul.f32 %v904, %v1008
        %v1207 = vmul.f32 %v906, %v1022
        %v1208 = vmul.f32 %v908, %v1036
        %v1209 = vmul.f32 %v910, %v1050
        %v1210 = vmul.f32 %v912, %v1064
        %v1211 = vmul.f32 %v914, %v1078
        %v1212 = vmul.f32 %v916, %v1092
        %v1213 = vmul.f32 %v918, %v1106
        %v1214 = vmul.f32 %v920, %v1120
        %v1215 = vmul.f32 %v922, %v1134
        %v1216 = vmul.f32 %v924, %v1148
        %v1217 = vmul.f32 %v926, %v1162
        %v1218 = vmul.f32 %v928, %v1176
        %v1219 = vmul.f32 %v930, %v1190
        %v1220 = vmul.f32 %v932, %v1204
        %v1221 = vpack.c.bf16 %v1205, %v1205
        %v1222 = vpack.c.bf16 %v1206, %v1206
        %v1223 = vpack.c.bf16 %v1207, %v1207
        %v1224 = vpack.c.bf16 %v1208, %v1208
        %v1225 = vpack.c.bf16 %v1209, %v1209
        %v1226 = vpack.c.bf16 %v1210, %v1210
        %v1227 = vpack.c.bf16 %v1211, %v1211
        %v1228 = vpack.c.bf16 %v1212, %v1212
        %v1229 = vpack.c.bf16 %v1213, %v1213
        %v1230 = vpack.c.bf16 %v1214, %v1214
        %v1231 = vpack.c.bf16 %v1215, %v1215
        %v1232 = vpack.c.bf16 %v1216, %v1216
        %v1233 = vpack.c.bf16 %v1217, %v1217
        %v1234 = vpack.c.bf16 %v1218, %v1218
        %v1235 = vpack.c.bf16 %v1219, %v1219
        %v1236 = vpack.c.bf16 %v1220, %v1220
        %v1239 = vunpack.c.l.b16 %v1221
        %v1240 = vunpack.c.l.b16 %v1222
        %v1241 = vpack.c.b16 %v1240, %v1239
        %1242 = vrot.lane.b32.xlu0 %v608, 96
        %v1243 = vpop.permute.xlu0 %1242
        %v1246 = vsel %vm391, %v1241, 0
        %1248 = vmatpush.bf16.msra.mxu0 0
        %1249 = vmatpush.bf16.msra.mxu0 0
        %1250 = vmatpush.bf16.msra.mxu0 0
        %1251 = vmatpush.bf16.msra.mxu0 0
        %1252 = vmatpush.bf16.msra.mxu0 0
        %1253 = vmatpush.bf16.msra.mxu0 0
        %1254 = vmatpush.bf16.msra.mxu0 0
        %1255 = vmatpush.bf16.msra.mxu0 %v1243
        %1256 = vmatmul.bf16.gmra.mxu0 %v1246
        %v1257 = vpop.f32.mrf.mxu0
        %v1258 = vadd.f32 0.0, %v1257
        %v1259 = vpop.f32.mrf.mxu0
        %v1260 = vadd.f32 0.0, %v1259
        %1261 = vdwg.mxu0
        %v1264 = vunpack.c.l.b16 %v1223
        %v1265 = vunpack.c.l.b16 %v1224
        %v1266 = vpack.c.b16 %v1265, %v1264
        %1267 = vrot.lane.b32.xlu0 %v636, 96
        %v1268 = vpop.permute.xlu0 %1267
        %v1271 = vsel %vm391, %v1266, 0
        %1273 = vmatpush.bf16.msra.mxu0 0
        %1274 = vmatpush.bf16.msra.mxu0 0
        %1275 = vmatpush.bf16.msra.mxu0 0
        %1276 = vmatpush.bf16.msra.mxu0 0
        %1277 = vmatpush.bf16.msra.mxu0 0
        %1278 = vmatpush.bf16.msra.mxu0 0
        %1279 = vmatpush.bf16.msra.mxu0 0
        %1280 = vmatpush.bf16.msra.mxu0 %v1268
        %1281 = vmatmul.bf16.gmra.mxu0 %v1271
        %v1282 = vpop.f32.mrf.mxu0
        %v1283 = vadd.f32 0.0, %v1282
        %v1284 = vpop.f32.mrf.mxu0
        %v1285 = vadd.f32 0.0, %v1284
        %1286 = vdwg.mxu0
        %v1289 = vunpack.c.l.b16 %v1225
        %v1290 = vunpack.c.l.b16 %v1226
        %v1291 = vpack.c.b16 %v1290, %v1289
        %1292 = vrot.lane.b32.xlu0 %v663, 96
        %v1293 = vpop.permute.xlu0 %1292
        %v1296 = vsel %vm391, %v1291, 0
        %1298 = vmatpush.bf16.msra.mxu0 0
        %1299 = vmatpush.bf16.msra.mxu0 0
        %1300 = vmatpush.bf16.msra.mxu0 0
        %1301 = vmatpush.bf16.msra.mxu0 0
        %1302 = vmatpush.bf16.msra.mxu0 0
        %1303 = vmatpush.bf16.msra.mxu0 0
        %1304 = vmatpush.bf16.msra.mxu0 0
        %1305 = vmatpush.bf16.msra.mxu0 %v1293
        %1306 = vmatmul.bf16.gmra.mxu0 %v1296
        %v1307 = vpop.f32.mrf.mxu0
        %v1308 = vadd.f32 0.0, %v1307
        %v1309 = vpop.f32.mrf.mxu0
        %v1310 = vadd.f32 0.0, %v1309
        %1311 = vdwg.mxu0
        %v1314 = vunpack.c.l.b16 %v1227
        %v1315 = vunpack.c.l.b16 %v1228
        %v1316 = vpack.c.b16 %v1315, %v1314
        %1317 = vrot.lane.b32.xlu0 %v690, 96
        %v1318 = vpop.permute.xlu0 %1317
        %v1321 = vsel %vm391, %v1316, 0
        %1323 = vmatpush.bf16.msra.mxu0 0
        %1324 = vmatpush.bf16.msra.mxu0 0
        %1325 = vmatpush.bf16.msra.mxu0 0
        %1326 = vmatpush.bf16.msra.mxu0 0
        %1327 = vmatpush.bf16.msra.mxu0 0
        %1328 = vmatpush.bf16.msra.mxu0 0
        %1329 = vmatpush.bf16.msra.mxu0 0
        %1330 = vmatpush.bf16.msra.mxu0 %v1318
        %1331 = vmatmul.bf16.gmra.mxu0 %v1321
        %v1332 = vpop.f32.mrf.mxu0
        %v1333 = vadd.f32 0.0, %v1332
        %v1334 = vpop.f32.mrf.mxu0
        %v1335 = vadd.f32 0.0, %v1334
        %1336 = vdwg.mxu0
        %v1339 = vunpack.c.l.b16 %v1229
        %v1340 = vunpack.c.l.b16 %v1230
        %v1341 = vpack.c.b16 %v1340, %v1339
        %1342 = vrot.lane.b32.xlu0 %v717, 96
        %v1343 = vpop.permute.xlu0 %1342
        %v1346 = vsel %vm391, %v1341, 0
        %1348 = vmatpush.bf16.msra.mxu0 0
        %1349 = vmatpush.bf16.msra.mxu0 0
        %1350 = vmatpush.bf16.msra.mxu0 0
        %1351 = vmatpush.bf16.msra.mxu0 0
        %1352 = vmatpush.bf16.msra.mxu0 0
        %1353 = vmatpush.bf16.msra.mxu0 0
        %1354 = vmatpush.bf16.msra.mxu0 0
        %1355 = vmatpush.bf16.msra.mxu0 %v1343
        %1356 = vmatmul.bf16.gmra.mxu0 %v1346
        %v1357 = vpop.f32.mrf.mxu0
        %v1358 = vadd.f32 0.0, %v1357
        %v1359 = vpop.f32.mrf.mxu0
        %v1360 = vadd.f32 0.0, %v1359
        %1361 = vdwg.mxu0
        %v1364 = vunpack.c.l.b16 %v1231
        %v1365 = vunpack.c.l.b16 %v1232
        %v1366 = vpack.c.b16 %v1365, %v1364
        %1367 = vrot.lane.b32.xlu0 %v744, 96
        %v1368 = vpop.permute.xlu0 %1367
        %v1371 = vsel %vm391, %v1366, 0
        %1373 = vmatpush.bf16.msra.mxu0 0
        %1374 = vmatpush.bf16.msra.mxu0 0
        %1375 = vmatpush.bf16.msra.mxu0 0
        %1376 = vmatpush.bf16.msra.mxu0 0
        %1377 = vmatpush.bf16.msra.mxu0 0
        %1378 = vmatpush.bf16.msra.mxu0 0
        %1379 = vmatpush.bf16.msra.mxu0 0
        %1380 = vmatpush.bf16.msra.mxu0 %v1368
        %1381 = vmatmul.bf16.gmra.mxu0 %v1371
        %v1382 = vpop.f32.mrf.mxu0
        %v1383 = vadd.f32 0.0, %v1382
        %v1384 = vpop.f32.mrf.mxu0
        %v1385 = vadd.f32 0.0, %v1384
        %1386 = vdwg.mxu0
        %v1389 = vunpack.c.l.b16 %v1233
        %v1390 = vunpack.c.l.b16 %v1234
        %v1391 = vpack.c.b16 %v1390, %v1389
        %1392 = vrot.lane.b32.xlu0 %v771, 96
        %v1393 = vpop.permute.xlu0 %1392
        %v1396 = vsel %vm391, %v1391, 0
        %1398 = vmatpush.bf16.msra.mxu0 0
        %1399 = vmatpush.bf16.msra.mxu0 0
        %1400 = vmatpush.bf16.msra.mxu0 0
        %1401 = vmatpush.bf16.msra.mxu0 0
        %1402 = vmatpush.bf16.msra.mxu0 0
        %1403 = vmatpush.bf16.msra.mxu0 0
        %1404 = vmatpush.bf16.msra.mxu0 0
        %1405 = vmatpush.bf16.msra.mxu0 %v1393
        %1406 = vmatmul.bf16.gmra.mxu0 %v1396
        %v1407 = vpop.f32.mrf.mxu0
        %v1408 = vadd.f32 0.0, %v1407
        %v1409 = vpop.f32.mrf.mxu0
        %v1410 = vadd.f32 0.0, %v1409
        %1411 = vdwg.mxu0
        %v1414 = vunpack.c.l.b16 %v1235
        %v1415 = vunpack.c.l.b16 %v1236
        %v1416 = vpack.c.b16 %v1415, %v1414
        %1417 = vrot.lane.b32.xlu0 %v798, 96
        %v1418 = vpop.permute.xlu0 %1417
        %v1421 = vsel %vm391, %v1416, 0
        %1423 = vmatpush.bf16.msra.mxu0 0
        %1424 = vmatpush.bf16.msra.mxu0 0
        %1425 = vmatpush.bf16.msra.mxu0 0
        %1426 = vmatpush.bf16.msra.mxu0 0
        %1427 = vmatpush.bf16.msra.mxu0 0
        %1428 = vmatpush.bf16.msra.mxu0 0
        %1429 = vmatpush.bf16.msra.mxu0 0
        %1430 = vmatpush.bf16.msra.mxu0 %v1418
        %1431 = vmatmul.bf16.gmra.mxu0 %v1421
        %v1432 = vpop.f32.mrf.mxu0
        %v1433 = vadd.f32 0.0, %v1432
        %v1434 = vpop.f32.mrf.mxu0
        %v1435 = vadd.f32 0.0, %v1434
        %1436 = vdwg.mxu0
        %1437 = vrot.lane.b32.xlu0 %v608, 120
        %v1438 = vpop.permute.xlu0 %1437
        %1439 = vrot.lane.b32.xlu0 %v608, 104
        %v1440 = vpop.permute.xlu0 %1439
        %v1442 = vsel %vm611, %v1438, 0
        %v1445 = vsel %vm611, %v1440, 0
        %1447 = vmatpush.bf16.xpose.msra.mxu0 0
        %1448 = vmatpush.bf16.xpose.msra.mxu0 0
        %1449 = vmatpush.bf16.xpose.msra.mxu0 0
        %1450 = vmatpush.bf16.xpose.msra.mxu0 0
        %1451 = vmatpush.bf16.xpose.msra.mxu0 0
        %1452 = vmatpush.bf16.xpose.msra.mxu0 0
        %1453 = vmatpush.bf16.xpose.msra.mxu0 0
        %1454 = vmatpush.bf16.xpose.msra.mxu0 %v1445
        %1455 = vmatmul.bf16.gmra.mxu0 %v1442
        %v1456 = vpop.f32.mrf.mxu0
        %v1457 = vadd.f32 0.0, %v1456
        %v1458 = vpop.f32.mrf.mxu0
        %v1459 = vadd.f32 0.0, %v1458
        %1460 = vdwg.mxu0
        %1461 = vrot.lane.b32.xlu0 %v636, 120
        %v1462 = vpop.permute.xlu0 %1461
        %1463 = vrot.lane.b32.xlu0 %v636, 104
        %v1464 = vpop.permute.xlu0 %1463
        %v1466 = vsel %vm611, %v1462, 0
        %v1469 = vsel %vm611, %v1464, 0
        %1471 = vmatpush.bf16.xpose.msra.mxu0 0
        %1472 = vmatpush.bf16.xpose.msra.mxu0 0
        %1473 = vmatpush.bf16.xpose.msra.mxu0 0
        %1474 = vmatpush.bf16.xpose.msra.mxu0 0
        %1475 = vmatpush.bf16.xpose.msra.mxu0 0
        %1476 = vmatpush.bf16.xpose.msra.mxu0 0
        %1477 = vmatpush.bf16.xpose.msra.mxu0 0
        %1478 = vmatpush.bf16.xpose.msra.mxu0 %v1469
        %1479 = vmatmul.bf16.gmra.mxu0 %v1466
        %v1480 = vpop.f32.mrf.mxu0
        %v1481 = vadd.f32 0.0, %v1480
        %v1482 = vpop.f32.mrf.mxu0
        %v1483 = vadd.f32 0.0, %v1482
        %1484 = vdwg.mxu0
        %1485 = vrot.lane.b32.xlu0 %v663, 120
        %v1486 = vpop.permute.xlu0 %1485
        %1487 = vrot.lane.b32.xlu0 %v663, 104
        %v1488 = vpop.permute.xlu0 %1487
        %v1490 = vsel %vm611, %v1486, 0
        %v1493 = vsel %vm611, %v1488, 0
        %1495 = vmatpush.bf16.xpose.msra.mxu0 0
        %1496 = vmatpush.bf16.xpose.msra.mxu0 0
        %1497 = vmatpush.bf16.xpose.msra.mxu0 0
        %1498 = vmatpush.bf16.xpose.msra.mxu0 0
        %1499 = vmatpush.bf16.xpose.msra.mxu0 0
        %1500 = vmatpush.bf16.xpose.msra.mxu0 0
        %1501 = vmatpush.bf16.xpose.msra.mxu0 0
        %1502 = vmatpush.bf16.xpose.msra.mxu0 %v1493
        %1503 = vmatmul.bf16.gmra.mxu0 %v1490
        %v1504 = vpop.f32.mrf.mxu0
        %v1505 = vadd.f32 0.0, %v1504
        %v1506 = vpop.f32.mrf.mxu0
        %v1507 = vadd.f32 0.0, %v1506
        %1508 = vdwg.mxu0
        %1509 = vrot.lane.b32.xlu0 %v690, 120
        %v1510 = vpop.permute.xlu0 %1509
        %1511 = vrot.lane.b32.xlu0 %v690, 104
        %v1512 = vpop.permute.xlu0 %1511
        %v1514 = vsel %vm611, %v1510, 0
        %v1517 = vsel %vm611, %v1512, 0
        %1519 = vmatpush.bf16.xpose.msra.mxu0 0
        %1520 = vmatpush.bf16.xpose.msra.mxu0 0
        %1521 = vmatpush.bf16.xpose.msra.mxu0 0
        %1522 = vmatpush.bf16.xpose.msra.mxu0 0
        %1523 = vmatpush.bf16.xpose.msra.mxu0 0
        %1524 = vmatpush.bf16.xpose.msra.mxu0 0
        %1525 = vmatpush.bf16.xpose.msra.mxu0 0
        %1526 = vmatpush.bf16.xpose.msra.mxu0 %v1517
        %1527 = vmatmul.bf16.gmra.mxu0 %v1514
        %v1528 = vpop.f32.mrf.mxu0
        %v1529 = vadd.f32 0.0, %v1528
        %v1530 = vpop.f32.mrf.mxu0
        %v1531 = vadd.f32 0.0, %v1530
        %1532 = vdwg.mxu0
        %1533 = vrot.lane.b32.xlu0 %v717, 120
        %v1534 = vpop.permute.xlu0 %1533
        %1535 = vrot.lane.b32.xlu0 %v717, 104
        %v1536 = vpop.permute.xlu0 %1535
        %v1538 = vsel %vm611, %v1534, 0
        %v1541 = vsel %vm611, %v1536, 0
        %1543 = vmatpush.bf16.xpose.msra.mxu0 0
        %1544 = vmatpush.bf16.xpose.msra.mxu0 0
        %1545 = vmatpush.bf16.xpose.msra.mxu0 0
        %1546 = vmatpush.bf16.xpose.msra.mxu0 0
        %1547 = vmatpush.bf16.xpose.msra.mxu0 0
        %1548 = vmatpush.bf16.xpose.msra.mxu0 0
        %1549 = vmatpush.bf16.xpose.msra.mxu0 0
        %1550 = vmatpush.bf16.xpose.msra.mxu0 %v1541
        %1551 = vmatmul.bf16.gmra.mxu0 %v1538
        %v1552 = vpop.f32.mrf.mxu0
        %v1553 = vadd.f32 0.0, %v1552
        %v1554 = vpop.f32.mrf.mxu0
        %v1555 = vadd.f32 0.0, %v1554
        %1556 = vdwg.mxu0
        %1557 = vrot.lane.b32.xlu0 %v744, 120
        %v1558 = vpop.permute.xlu0 %1557
        %1559 = vrot.lane.b32.xlu0 %v744, 104
        %v1560 = vpop.permute.xlu0 %1559
        %v1562 = vsel %vm611, %v1558, 0
        %v1565 = vsel %vm611, %v1560, 0
        %1567 = vmatpush.bf16.xpose.msra.mxu0 0
        %1568 = vmatpush.bf16.xpose.msra.mxu0 0
        %1569 = vmatpush.bf16.xpose.msra.mxu0 0
        %1570 = vmatpush.bf16.xpose.msra.mxu0 0
        %1571 = vmatpush.bf16.xpose.msra.mxu0 0
        %1572 = vmatpush.bf16.xpose.msra.mxu0 0
        %1573 = vmatpush.bf16.xpose.msra.mxu0 0
        %1574 = vmatpush.bf16.xpose.msra.mxu0 %v1565
        %1575 = vmatmul.bf16.gmra.mxu0 %v1562
        %v1576 = vpop.f32.mrf.mxu0
        %v1577 = vadd.f32 0.0, %v1576
        %v1578 = vpop.f32.mrf.mxu0
        %v1579 = vadd.f32 0.0, %v1578
        %1580 = vdwg.mxu0
        %1581 = vrot.lane.b32.xlu0 %v771, 120
        %v1582 = vpop.permute.xlu0 %1581
        %1583 = vrot.lane.b32.xlu0 %v771, 104
        %v1584 = vpop.permute.xlu0 %1583
        %v1586 = vsel %vm611, %v1582, 0
        %v1589 = vsel %vm611, %v1584, 0
        %1591 = vmatpush.bf16.xpose.msra.mxu0 0
        %1592 = vmatpush.bf16.xpose.msra.mxu0 0
        %1593 = vmatpush.bf16.xpose.msra.mxu0 0
        %1594 = vmatpush.bf16.xpose.msra.mxu0 0
        %1595 = vmatpush.bf16.xpose.msra.mxu0 0
        %1596 = vmatpush.bf16.xpose.msra.mxu0 0
        %1597 = vmatpush.bf16.xpose.msra.mxu0 0
        %1598 = vmatpush.bf16.xpose.msra.mxu0 %v1589
        %1599 = vmatmul.bf16.gmra.mxu0 %v1586
        %v1600 = vpop.f32.mrf.mxu0
        %v1601 = vadd.f32 0.0, %v1600
        %v1602 = vpop.f32.mrf.mxu0
        %v1603 = vadd.f32 0.0, %v1602
        %1604 = vdwg.mxu0
        %1605 = vrot.lane.b32.xlu0 %v798, 120
        %v1606 = vpop.permute.xlu0 %1605
        %1607 = vrot.lane.b32.xlu0 %v798, 104
        %v1608 = vpop.permute.xlu0 %1607
        %v1610 = vsel %vm611, %v1606, 0
        %v1613 = vsel %vm611, %v1608, 0
        %1615 = vmatpush.bf16.xpose.msra.mxu0 0
        %1616 = vmatpush.bf16.xpose.msra.mxu0 0
        %1617 = vmatpush.bf16.xpose.msra.mxu0 0
        %1618 = vmatpush.bf16.xpose.msra.mxu0 0
        %1619 = vmatpush.bf16.xpose.msra.mxu0 0
        %1620 = vmatpush.bf16.xpose.msra.mxu0 0
        %1621 = vmatpush.bf16.xpose.msra.mxu0 0
        %1622 = vmatpush.bf16.xpose.msra.mxu0 %v1613
        %1623 = vmatmul.bf16.gmra.mxu0 %v1610
        %v1624 = vpop.f32.mrf.mxu0
        %v1625 = vadd.f32 0.0, %v1624
        %v1626 = vpop.f32.mrf.mxu0
        %v1627 = vadd.f32 0.0, %v1626
        %1628 = vdwg.mxu0
        %v1629 = vmul.f32 %v1457, 0.35355338
        %v1630 = vmul.f32 %v1459, 0.35355338
        %v1631 = vmul.f32 %v1481, 0.35355338
        %v1632 = vmul.f32 %v1483, 0.35355338
        %v1633 = vmul.f32 %v1505, 0.35355338
        %v1634 = vmul.f32 %v1507, 0.35355338
        %v1635 = vmul.f32 %v1529, 0.35355338
        %v1636 = vmul.f32 %v1531, 0.35355338
        %v1637 = vmul.f32 %v1553, 0.35355338
        %v1638 = vmul.f32 %v1555, 0.35355338
        %v1639 = vmul.f32 %v1577, 0.35355338
        %v1640 = vmul.f32 %v1579, 0.35355338
        %v1641 = vmul.f32 %v1601, 0.35355338
        %v1642 = vmul.f32 %v1603, 0.35355338
        %v1643 = vmul.f32 %v1625, 0.35355338
        %v1644 = vmul.f32 %v1627, 0.35355338
        %v1645 = vsel %vm391, %v1629, -inf
        %1646 = vmax.xlane.f32.xlu0 %v1645
        %v1647 = vpop.xlane.xlu0 %1646
        %v1648 = vsel %vm391, %v1630, -inf
        %1649 = vmax.xlane.f32.xlu0 %v1648
        %v1650 = vpop.xlane.xlu0 %1649
        %v1651 = vsel %vm391, %v1631, -inf
        %1652 = vmax.xlane.f32.xlu0 %v1651
        %v1653 = vpop.xlane.xlu0 %1652
        %v1654 = vsel %vm391, %v1632, -inf
        %1655 = vmax.xlane.f32.xlu0 %v1654
        %v1656 = vpop.xlane.xlu0 %1655
        %v1657 = vsel %vm391, %v1633, -inf
        %1658 = vmax.xlane.f32.xlu0 %v1657
        %v1659 = vpop.xlane.xlu0 %1658
        %v1660 = vsel %vm391, %v1634, -inf
        %1661 = vmax.xlane.f32.xlu0 %v1660
        %v1662 = vpop.xlane.xlu0 %1661
        %v1663 = vsel %vm391, %v1635, -inf
        %1664 = vmax.xlane.f32.xlu0 %v1663
        %v1665 = vpop.xlane.xlu0 %1664
        %v1666 = vsel %vm391, %v1636, -inf
        %1667 = vmax.xlane.f32.xlu0 %v1666
        %v1668 = vpop.xlane.xlu0 %1667
        %v1669 = vsel %vm391, %v1637, -inf
        %1670 = vmax.xlane.f32.xlu0 %v1669
        %v1671 = vpop.xlane.xlu0 %1670
        %v1672 = vsel %vm391, %v1638, -inf
        %1673 = vmax.xlane.f32.xlu0 %v1672
        %v1674 = vpop.xlane.xlu0 %1673
        %v1675 = vsel %vm391, %v1639, -inf
        %1676 = vmax.xlane.f32.xlu0 %v1675
        %v1677 = vpop.xlane.xlu0 %1676
        %v1678 = vsel %vm391, %v1640, -inf
        %1679 = vmax.xlane.f32.xlu0 %v1678
        %v1680 = vpop.xlane.xlu0 %1679
        %v1681 = vsel %vm391, %v1641, -inf
        %1682 = vmax.xlane.f32.xlu0 %v1681
        %v1683 = vpop.xlane.xlu0 %1682
        %v1684 = vsel %vm391, %v1642, -inf
        %1685 = vmax.xlane.f32.xlu0 %v1684
        %v1686 = vpop.xlane.xlu0 %1685
        %v1687 = vsel %vm391, %v1643, -inf
        %1688 = vmax.xlane.f32.xlu0 %v1687
        %v1689 = vpop.xlane.xlu0 %1688
        %v1690 = vsel %vm391, %v1644, -inf
        %1691 = vmax.xlane.f32.xlu0 %v1690
        %v1692 = vpop.xlane.xlu0 %1691
        %v1693 = vsub.f32 %v1629, %v1647
        %v1694 = vsub.f32 %v1630, %v1650
        %v1695 = vsub.f32 %v1631, %v1653
        %v1696 = vsub.f32 %v1632, %v1656
        %v1697 = vsub.f32 %v1633, %v1659
        %v1698 = vsub.f32 %v1634, %v1662
        %v1699 = vsub.f32 %v1635, %v1665
        %v1700 = vsub.f32 %v1636, %v1668
        %v1701 = vsub.f32 %v1637, %v1671
        %v1702 = vsub.f32 %v1638, %v1674
        %v1703 = vsub.f32 %v1639, %v1677
        %v1704 = vsub.f32 %v1640, %v1680
        %v1705 = vsub.f32 %v1641, %v1683
        %v1706 = vsub.f32 %v1642, %v1686
        %v1707 = vsub.f32 %v1643, %v1689
        %v1708 = vsub.f32 %v1644, %v1692
        %v1709 = vmul.f32 %v1693, 1.442695
        %v1710 = vpow.pop %v1709
        %v1711 = vmul.f32 %v1694, 1.442695
        %v1712 = vpow.pop %v1711
        %v1713 = vmul.f32 %v1695, 1.442695
        %v1714 = vpow.pop %v1713
        %v1715 = vmul.f32 %v1696, 1.442695
        %v1716 = vpow.pop %v1715
        %v1717 = vmul.f32 %v1697, 1.442695
        %v1718 = vpow.pop %v1717
        %v1719 = vmul.f32 %v1698, 1.442695
        %v1720 = vpow.pop %v1719
        %v1721 = vmul.f32 %v1699, 1.442695
        %v1722 = vpow.pop %v1721
        %v1723 = vmul.f32 %v1700, 1.442695
        %v1724 = vpow.pop %v1723
        %v1725 = vmul.f32 %v1701, 1.442695
        %v1726 = vpow.pop %v1725
        %v1727 = vmul.f32 %v1702, 1.442695
        %v1728 = vpow.pop %v1727
        %v1729 = vmul.f32 %v1703, 1.442695
        %v1730 = vpow.pop %v1729
        %v1731 = vmul.f32 %v1704, 1.442695
        %v1732 = vpow.pop %v1731
        %v1733 = vmul.f32 %v1705, 1.442695
        %v1734 = vpow.pop %v1733
        %v1735 = vmul.f32 %v1706, 1.442695
        %v1736 = vpow.pop %v1735
        %v1737 = vmul.f32 %v1707, 1.442695
        %v1738 = vpow.pop %v1737
        %v1739 = vmul.f32 %v1708, 1.442695
        %v1740 = vpow.pop %v1739
        %v1741 = vsel %vm391, %v1710, 0.0
        %1742 = vadd.xlane.f32.xlu0 %v1741
        %v1743 = vpop.xlane.xlu0 %1742
        %v1744 = vsel %vm391, %v1712, 0.0
        %1745 = vadd.xlane.f32.xlu0 %v1744
        %v1746 = vpop.xlane.xlu0 %1745
        %v1747 = vsel %vm391, %v1714, 0.0
        %1748 = vadd.xlane.f32.xlu0 %v1747
        %v1749 = vpop.xlane.xlu0 %1748
        %v1750 = vsel %vm391, %v1716, 0.0
        %1751 = vadd.xlane.f32.xlu0 %v1750
        %v1752 = vpop.xlane.xlu0 %1751
        %v1753 = vsel %vm391, %v1718, 0.0
        %1754 = vadd.xlane.f32.xlu0 %v1753
        %v1755 = vpop.xlane.xlu0 %1754
        %v1756 = vsel %vm391, %v1720, 0.0
        %1757 = vadd.xlane.f32.xlu0 %v1756
        %v1758 = vpop.xlane.xlu0 %1757
        %v1759 = vsel %vm391, %v1722, 0.0
        %1760 = vadd.xlane.f32.xlu0 %v1759
        %v1761 = vpop.xlane.xlu0 %1760
        %v1762 = vsel %vm391, %v1724, 0.0
        %1763 = vadd.xlane.f32.xlu0 %v1762
        %v1764 = vpop.xlane.xlu0 %1763
        %v1765 = vsel %vm391, %v1726, 0.0
        %1766 = vadd.xlane.f32.xlu0 %v1765
        %v1767 = vpop.xlane.xlu0 %1766
        %v1768 = vsel %vm391, %v1728, 0.0
        %1769 = vadd.xlane.f32.xlu0 %v1768
        %v1770 = vpop.xlane.xlu0 %1769
        %v1771 = vsel %vm391, %v1730, 0.0
        %1772 = vadd.xlane.f32.xlu0 %v1771
        %v1773 = vpop.xlane.xlu0 %1772
        %v1774 = vsel %vm391, %v1732, 0.0
        %1775 = vadd.xlane.f32.xlu0 %v1774
        %v1776 = vpop.xlane.xlu0 %1775
        %v1777 = vsel %vm391, %v1734, 0.0
        %1778 = vadd.xlane.f32.xlu0 %v1777
        %v1779 = vpop.xlane.xlu0 %1778
        %v1780 = vsel %vm391, %v1736, 0.0
        %1781 = vadd.xlane.f32.xlu0 %v1780
        %v1782 = vpop.xlane.xlu0 %1781
        %v1783 = vsel %vm391, %v1738, 0.0
        %1784 = vadd.xlane.f32.xlu0 %v1783
        %v1785 = vpop.xlane.xlu0 %1784
        %v1786 = vsel %vm391, %v1740, 0.0
        %1787 = vadd.xlane.f32.xlu0 %v1786
        %v1788 = vpop.xlane.xlu0 %1787
        %v1789 = vrcp.pop %v1743
        %v1790 = vmul.f32 %v1743, %v1789
        %v1791 = vsub.f32 1.0, %v1790
        %v1792 = vmul.f32 %v1789, %v1791
        %v1793 = vadd.f32 %v1789, %v1792
        %vm1794 = vweird.f32 %v1743
        %vm1795 = vweird.f32 %v1789
        %vm1796 = vmor %vm1794, %vm1795
        %v1797 = vsel %vm1796, %v1789, %v1793
        %v1798 = vand.u32 2147483647, %v1743
        %vm1799 = vcmp.eq.f32.partialorder %v1798, 8.507059e+37
        %v1800 = vand.u32 %v1743, 2147483648
        %v1801 = vor.u32 1.1754944e-38, %v1800
        %v1802 = vsel %vm1799, %v1801, %v1797
        %v1803 = vrcp.pop %v1746
        %v1804 = vmul.f32 %v1746, %v1803
        %v1805 = vsub.f32 1.0, %v1804
        %v1806 = vmul.f32 %v1803, %v1805
        %v1807 = vadd.f32 %v1803, %v1806
        %vm1808 = vweird.f32 %v1746
        %vm1809 = vweird.f32 %v1803
        %vm1810 = vmor %vm1808, %vm1809
        %v1811 = vsel %vm1810, %v1803, %v1807
        %v1812 = vand.u32 2147483647, %v1746
        %vm1813 = vcmp.eq.f32.partialorder %v1812, 8.507059e+37
        %v1814 = vand.u32 %v1746, 2147483648
        %v1815 = vor.u32 1.1754944e-38, %v1814
        %v1816 = vsel %vm1813, %v1815, %v1811
        %v1817 = vrcp.pop %v1749
        %v1818 = vmul.f32 %v1749, %v1817
        %v1819 = vsub.f32 1.0, %v1818
        %v1820 = vmul.f32 %v1817, %v1819
        %v1821 = vadd.f32 %v1817, %v1820
        %vm1822 = vweird.f32 %v1749
        %vm1823 = vweird.f32 %v1817
        %vm1824 = vmor %vm1822, %vm1823
        %v1825 = vsel %vm1824, %v1817, %v1821
        %v1826 = vand.u32 2147483647, %v1749
        %vm1827 = vcmp.eq.f32.partialorder %v1826, 8.507059e+37
        %v1828 = vand.u32 %v1749, 2147483648
        %v1829 = vor.u32 1.1754944e-38, %v1828
        %v1830 = vsel %vm1827, %v1829, %v1825
        %v1831 = vrcp.pop %v1752
        %v1832 = vmul.f32 %v1752, %v1831
        %v1833 = vsub.f32 1.0, %v1832
        %v1834 = vmul.f32 %v1831, %v1833
        %v1835 = vadd.f32 %v1831, %v1834
        %vm1836 = vweird.f32 %v1752
        %vm1837 = vweird.f32 %v1831
        %vm1838 = vmor %vm1836, %vm1837
        %v1839 = vsel %vm1838, %v1831, %v1835
        %v1840 = vand.u32 2147483647, %v1752
        %vm1841 = vcmp.eq.f32.partialorder %v1840, 8.507059e+37
        %v1842 = vand.u32 %v1752, 2147483648
        %v1843 = vor.u32 1.1754944e-38, %v1842
        %v1844 = vsel %vm1841, %v1843, %v1839
        %v1845 = vrcp.pop %v1755
        %v1846 = vmul.f32 %v1755, %v1845
        %v1847 = vsub.f32 1.0, %v1846
        %v1848 = vmul.f32 %v1845, %v1847
        %v1849 = vadd.f32 %v1845, %v1848
        %vm1850 = vweird.f32 %v1755
        %vm1851 = vweird.f32 %v1845
        %vm1852 = vmor %vm1850, %vm1851
        %v1853 = vsel %vm1852, %v1845, %v1849
        %v1854 = vand.u32 2147483647, %v1755
        %vm1855 = vcmp.eq.f32.partialorder %v1854, 8.507059e+37
        %v1856 = vand.u32 %v1755, 2147483648
        %v1857 = vor.u32 1.1754944e-38, %v1856
        %v1858 = vsel %vm1855, %v1857, %v1853
        %v1859 = vrcp.pop %v1758
        %v1860 = vmul.f32 %v1758, %v1859
        %v1861 = vsub.f32 1.0, %v1860
        %v1862 = vmul.f32 %v1859, %v1861
        %v1863 = vadd.f32 %v1859, %v1862
        %vm1864 = vweird.f32 %v1758
        %vm1865 = vweird.f32 %v1859
        %vm1866 = vmor %vm1864, %vm1865
        %v1867 = vsel %vm1866, %v1859, %v1863
        %v1868 = vand.u32 2147483647, %v1758
        %vm1869 = vcmp.eq.f32.partialorder %v1868, 8.507059e+37
        %v1870 = vand.u32 %v1758, 2147483648
        %v1871 = vor.u32 1.1754944e-38, %v1870
        %v1872 = vsel %vm1869, %v1871, %v1867
        %v1873 = vrcp.pop %v1761
        %v1874 = vmul.f32 %v1761, %v1873
        %v1875 = vsub.f32 1.0, %v1874
        %v1876 = vmul.f32 %v1873, %v1875
        %v1877 = vadd.f32 %v1873, %v1876
        %vm1878 = vweird.f32 %v1761
        %vm1879 = vweird.f32 %v1873
        %vm1880 = vmor %vm1878, %vm1879
        %v1881 = vsel %vm1880, %v1873, %v1877
        %v1882 = vand.u32 2147483647, %v1761
        %vm1883 = vcmp.eq.f32.partialorder %v1882, 8.507059e+37
        %v1884 = vand.u32 %v1761, 2147483648
        %v1885 = vor.u32 1.1754944e-38, %v1884
        %v1886 = vsel %vm1883, %v1885, %v1881
        %v1887 = vrcp.pop %v1764
        %v1888 = vmul.f32 %v1764, %v1887
        %v1889 = vsub.f32 1.0, %v1888
        %v1890 = vmul.f32 %v1887, %v1889
        %v1891 = vadd.f32 %v1887, %v1890
        %vm1892 = vweird.f32 %v1764
        %vm1893 = vweird.f32 %v1887
        %vm1894 = vmor %vm1892, %vm1893
        %v1895 = vsel %vm1894, %v1887, %v1891
        %v1896 = vand.u32 2147483647, %v1764
        %vm1897 = vcmp.eq.f32.partialorder %v1896, 8.507059e+37
        %v1898 = vand.u32 %v1764, 2147483648
        %v1899 = vor.u32 1.1754944e-38, %v1898
        %v1900 = vsel %vm1897, %v1899, %v1895
        %v1901 = vrcp.pop %v1767
        %v1902 = vmul.f32 %v1767, %v1901
        %v1903 = vsub.f32 1.0, %v1902
        %v1904 = vmul.f32 %v1901, %v1903
        %v1905 = vadd.f32 %v1901, %v1904
        %vm1906 = vweird.f32 %v1767
        %vm1907 = vweird.f32 %v1901
        %vm1908 = vmor %vm1906, %vm1907
        %v1909 = vsel %vm1908, %v1901, %v1905
        %v1910 = vand.u32 2147483647, %v1767
        %vm1911 = vcmp.eq.f32.partialorder %v1910, 8.507059e+37
        %v1912 = vand.u32 %v1767, 2147483648
        %v1913 = vor.u32 1.1754944e-38, %v1912
        %v1914 = vsel %vm1911, %v1913, %v1909
        %v1915 = vrcp.pop %v1770
        %v1916 = vmul.f32 %v1770, %v1915
        %v1917 = vsub.f32 1.0, %v1916
        %v1918 = vmul.f32 %v1915, %v1917
        %v1919 = vadd.f32 %v1915, %v1918
        %vm1920 = vweird.f32 %v1770
        %vm1921 = vweird.f32 %v1915
        %vm1922 = vmor %vm1920, %vm1921
        %v1923 = vsel %vm1922, %v1915, %v1919
        %v1924 = vand.u32 2147483647, %v1770
        %vm1925 = vcmp.eq.f32.partialorder %v1924, 8.507059e+37
        %v1926 = vand.u32 %v1770, 2147483648
        %v1927 = vor.u32 1.1754944e-38, %v1926
        %v1928 = vsel %vm1925, %v1927, %v1923
        %v1929 = vrcp.pop %v1773
        %v1930 = vmul.f32 %v1773, %v1929
        %v1931 = vsub.f32 1.0, %v1930
        %v1932 = vmul.f32 %v1929, %v1931
        %v1933 = vadd.f32 %v1929, %v1932
        %vm1934 = vweird.f32 %v1773
        %vm1935 = vweird.f32 %v1929
        %vm1936 = vmor %vm1934, %vm1935
        %v1937 = vsel %vm1936, %v1929, %v1933
        %v1938 = vand.u32 2147483647, %v1773
        %vm1939 = vcmp.eq.f32.partialorder %v1938, 8.507059e+37
        %v1940 = vand.u32 %v1773, 2147483648
        %v1941 = vor.u32 1.1754944e-38, %v1940
        %v1942 = vsel %vm1939, %v1941, %v1937
        %v1943 = vrcp.pop %v1776
        %v1944 = vmul.f32 %v1776, %v1943
        %v1945 = vsub.f32 1.0, %v1944
        %v1946 = vmul.f32 %v1943, %v1945
        %v1947 = vadd.f32 %v1943, %v1946
        %vm1948 = vweird.f32 %v1776
        %vm1949 = vweird.f32 %v1943
        %vm1950 = vmor %vm1948, %vm1949
        %v1951 = vsel %vm1950, %v1943, %v1947
        %v1952 = vand.u32 2147483647, %v1776
        %vm1953 = vcmp.eq.f32.partialorder %v1952, 8.507059e+37
        %v1954 = vand.u32 %v1776, 2147483648
        %v1955 = vor.u32 1.1754944e-38, %v1954
        %v1956 = vsel %vm1953, %v1955, %v1951
        %v1957 = vrcp.pop %v1779
        %v1958 = vmul.f32 %v1779, %v1957
        %v1959 = vsub.f32 1.0, %v1958
        %v1960 = vmul.f32 %v1957, %v1959
        %v1961 = vadd.f32 %v1957, %v1960
        %vm1962 = vweird.f32 %v1779
        %vm1963 = vweird.f32 %v1957
        %vm1964 = vmor %vm1962, %vm1963
        %v1965 = vsel %vm1964, %v1957, %v1961
        %v1966 = vand.u32 2147483647, %v1779
        %vm1967 = vcmp.eq.f32.partialorder %v1966, 8.507059e+37
        %v1968 = vand.u32 %v1779, 2147483648
        %v1969 = vor.u32 1.1754944e-38, %v1968
        %v1970 = vsel %vm1967, %v1969, %v1965
        %v1971 = vrcp.pop %v1782
        %v1972 = vmul.f32 %v1782, %v1971
        %v1973 = vsub.f32 1.0, %v1972
        %v1974 = vmul.f32 %v1971, %v1973
        %v1975 = vadd.f32 %v1971, %v1974
        %vm1976 = vweird.f32 %v1782
        %vm1977 = vweird.f32 %v1971
        %vm1978 = vmor %vm1976, %vm1977
        %v1979 = vsel %vm1978, %v1971, %v1975
        %v1980 = vand.u32 2147483647, %v1782
        %vm1981 = vcmp.eq.f32.partialorder %v1980, 8.507059e+37
        %v1982 = vand.u32 %v1782, 2147483648
        %v1983 = vor.u32 1.1754944e-38, %v1982
        %v1984 = vsel %vm1981, %v1983, %v1979
        %v1985 = vrcp.pop %v1785
        %v1986 = vmul.f32 %v1785, %v1985
        %v1987 = vsub.f32 1.0, %v1986
        %v1988 = vmul.f32 %v1985, %v1987
        %v1989 = vadd.f32 %v1985, %v1988
        %vm1990 = vweird.f32 %v1785
        %vm1991 = vweird.f32 %v1985
        %vm1992 = vmor %vm1990, %vm1991
        %v1993 = vsel %vm1992, %v1985, %v1989
        %v1994 = vand.u32 2147483647, %v1785
        %vm1995 = vcmp.eq.f32.partialorder %v1994, 8.507059e+37
        %v1996 = vand.u32 %v1785, 2147483648
        %v1997 = vor.u32 1.1754944e-38, %v1996
        %v1998 = vsel %vm1995, %v1997, %v1993
        %v1999 = vrcp.pop %v1788
        %v2000 = vmul.f32 %v1788, %v1999
        %v2001 = vsub.f32 1.0, %v2000
        %v2002 = vmul.f32 %v1999, %v2001
        %v2003 = vadd.f32 %v1999, %v2002
        %vm2004 = vweird.f32 %v1788
        %vm2005 = vweird.f32 %v1999
        %vm2006 = vmor %vm2004, %vm2005
        %v2007 = vsel %vm2006, %v1999, %v2003
        %v2008 = vand.u32 2147483647, %v1788
        %vm2009 = vcmp.eq.f32.partialorder %v2008, 8.507059e+37
        %v2010 = vand.u32 %v1788, 2147483648
        %v2011 = vor.u32 1.1754944e-38, %v2010
        %v2012 = vsel %vm2009, %v2011, %v2007
        %v2013 = vmul.f32 %v1710, %v1802
        %v2014 = vmul.f32 %v1712, %v1816
        %v2015 = vmul.f32 %v1714, %v1830
        %v2016 = vmul.f32 %v1716, %v1844
        %v2017 = vmul.f32 %v1718, %v1858
        %v2018 = vmul.f32 %v1720, %v1872
        %v2019 = vmul.f32 %v1722, %v1886
        %v2020 = vmul.f32 %v1724, %v1900
        %v2021 = vmul.f32 %v1726, %v1914
        %v2022 = vmul.f32 %v1728, %v1928
        %v2023 = vmul.f32 %v1730, %v1942
        %v2024 = vmul.f32 %v1732, %v1956
        %v2025 = vmul.f32 %v1734, %v1970
        %v2026 = vmul.f32 %v1736, %v1984
        %v2027 = vmul.f32 %v1738, %v1998
        %v2028 = vmul.f32 %v1740, %v2012
        %v2029 = vpack.c.bf16 %v2013, %v2013
        %v2030 = vpack.c.bf16 %v2014, %v2014
        %v2031 = vpack.c.bf16 %v2015, %v2015
        %v2032 = vpack.c.bf16 %v2016, %v2016
        %v2033 = vpack.c.bf16 %v2017, %v2017
        %v2034 = vpack.c.bf16 %v2018, %v2018
        %v2035 = vpack.c.bf16 %v2019, %v2019
        %v2036 = vpack.c.bf16 %v2020, %v2020
        %v2037 = vpack.c.bf16 %v2021, %v2021
        %v2038 = vpack.c.bf16 %v2022, %v2022
        %v2039 = vpack.c.bf16 %v2023, %v2023
        %v2040 = vpack.c.bf16 %v2024, %v2024
        %v2041 = vpack.c.bf16 %v2025, %v2025
        %v2042 = vpack.c.bf16 %v2026, %v2026
        %v2043 = vpack.c.bf16 %v2027, %v2027
        %v2044 = vpack.c.bf16 %v2028, %v2028
        %v2047 = vunpack.c.l.b16 %v2029
        %v2048 = vunpack.c.l.b16 %v2030
        %v2049 = vpack.c.b16 %v2048, %v2047
        %2050 = vrot.lane.b32.xlu0 %v608, 88
        %v2051 = vpop.permute.xlu0 %2050
        %v2054 = vsel %vm391, %v2049, 0
        %2056 = vmatpush.bf16.msra.mxu0 0
        %2057 = vmatpush.bf16.msra.mxu0 0
        %2058 = vmatpush.bf16.msra.mxu0 0
        %2059 = vmatpush.bf16.msra.mxu0 0
        %2060 = vmatpush.bf16.msra.mxu0 0
        %2061 = vmatpush.bf16.msra.mxu0 0
        %2062 = vmatpush.bf16.msra.mxu0 0
        %2063 = vmatpush.bf16.msra.mxu0 %v2051
        %2064 = vmatmul.bf16.gmra.mxu0 %v2054
        %v2065 = vpop.f32.mrf.mxu0
        %v2066 = vadd.f32 0.0, %v2065
        %v2067 = vpop.f32.mrf.mxu0
        %v2068 = vadd.f32 0.0, %v2067
        %2069 = vdwg.mxu0
        %v2072 = vunpack.c.l.b16 %v2031
        %v2073 = vunpack.c.l.b16 %v2032
        %v2074 = vpack.c.b16 %v2073, %v2072
        %2075 = vrot.lane.b32.xlu0 %v636, 88
        %v2076 = vpop.permute.xlu0 %2075
        %v2079 = vsel %vm391, %v2074, 0
        %2081 = vmatpush.bf16.msra.mxu0 0
        %2082 = vmatpush.bf16.msra.mxu0 0
        %2083 = vmatpush.bf16.msra.mxu0 0
        %2084 = vmatpush.bf16.msra.mxu0 0
        %2085 = vmatpush.bf16.msra.mxu0 0
        %2086 = vmatpush.bf16.msra.mxu0 0
        %2087 = vmatpush.bf16.msra.mxu0 0
        %2088 = vmatpush.bf16.msra.mxu0 %v2076
        %2089 = vmatmul.bf16.gmra.mxu0 %v2079
        %v2090 = vpop.f32.mrf.mxu0
        %v2091 = vadd.f32 0.0, %v2090
        %v2092 = vpop.f32.mrf.mxu0
        %v2093 = vadd.f32 0.0, %v2092
        %2094 = vdwg.mxu0
        %v2097 = vunpack.c.l.b16 %v2033
        %v2098 = vunpack.c.l.b16 %v2034
        %v2099 = vpack.c.b16 %v2098, %v2097
        %2100 = vrot.lane.b32.xlu0 %v663, 88
        %v2101 = vpop.permute.xlu0 %2100
        %v2104 = vsel %vm391, %v2099, 0
        %2106 = vmatpush.bf16.msra.mxu0 0
        %2107 = vmatpush.bf16.msra.mxu0 0
        %2108 = vmatpush.bf16.msra.mxu0 0
        %2109 = vmatpush.bf16.msra.mxu0 0
        %2110 = vmatpush.bf16.msra.mxu0 0
        %2111 = vmatpush.bf16.msra.mxu0 0
        %2112 = vmatpush.bf16.msra.mxu0 0
        %2113 = vmatpush.bf16.msra.mxu0 %v2101
        %2114 = vmatmul.bf16.gmra.mxu0 %v2104
        %v2115 = vpop.f32.mrf.mxu0
        %v2116 = vadd.f32 0.0, %v2115
        %v2117 = vpop.f32.mrf.mxu0
        %v2118 = vadd.f32 0.0, %v2117
        %2119 = vdwg.mxu0
        %v2122 = vunpack.c.l.b16 %v2035
        %v2123 = vunpack.c.l.b16 %v2036
        %v2124 = vpack.c.b16 %v2123, %v2122
        %2125 = vrot.lane.b32.xlu0 %v690, 88
        %v2126 = vpop.permute.xlu0 %2125
        %v2129 = vsel %vm391, %v2124, 0
        %2131 = vmatpush.bf16.msra.mxu0 0
        %2132 = vmatpush.bf16.msra.mxu0 0
        %2133 = vmatpush.bf16.msra.mxu0 0
        %2134 = vmatpush.bf16.msra.mxu0 0
        %2135 = vmatpush.bf16.msra.mxu0 0
        %2136 = vmatpush.bf16.msra.mxu0 0
        %2137 = vmatpush.bf16.msra.mxu0 0
        %2138 = vmatpush.bf16.msra.mxu0 %v2126
        %2139 = vmatmul.bf16.gmra.mxu0 %v2129
        %v2140 = vpop.f32.mrf.mxu0
        %v2141 = vadd.f32 0.0, %v2140
        %v2142 = vpop.f32.mrf.mxu0
        %v2143 = vadd.f32 0.0, %v2142
        %2144 = vdwg.mxu0
        %v2147 = vunpack.c.l.b16 %v2037
        %v2148 = vunpack.c.l.b16 %v2038
        %v2149 = vpack.c.b16 %v2148, %v2147
        %2150 = vrot.lane.b32.xlu0 %v717, 88
        %v2151 = vpop.permute.xlu0 %2150
        %v2154 = vsel %vm391, %v2149, 0
        %2156 = vmatpush.bf16.msra.mxu0 0
        %2157 = vmatpush.bf16.msra.mxu0 0
        %2158 = vmatpush.bf16.msra.mxu0 0
        %2159 = vmatpush.bf16.msra.mxu0 0
        %2160 = vmatpush.bf16.msra.mxu0 0
        %2161 = vmatpush.bf16.msra.mxu0 0
        %2162 = vmatpush.bf16.msra.mxu0 0
        %2163 = vmatpush.bf16.msra.mxu0 %v2151
        %2164 = vmatmul.bf16.gmra.mxu0 %v2154
        %v2165 = vpop.f32.mrf.mxu0
        %v2166 = vadd.f32 0.0, %v2165
        %v2167 = vpop.f32.mrf.mxu0
        %v2168 = vadd.f32 0.0, %v2167
        %2169 = vdwg.mxu0
        %v2172 = vunpack.c.l.b16 %v2039
        %v2173 = vunpack.c.l.b16 %v2040
        %v2174 = vpack.c.b16 %v2173, %v2172
        %2175 = vrot.lane.b32.xlu0 %v744, 88
        %v2176 = vpop.permute.xlu0 %2175
        %v2179 = vsel %vm391, %v2174, 0
        %2181 = vmatpush.bf16.msra.mxu0 0
        %2182 = vmatpush.bf16.msra.mxu0 0
        %2183 = vmatpush.bf16.msra.mxu0 0
        %2184 = vmatpush.bf16.msra.mxu0 0
        %2185 = vmatpush.bf16.msra.mxu0 0
        %2186 = vmatpush.bf16.msra.mxu0 0
        %2187 = vmatpush.bf16.msra.mxu0 0
        %2188 = vmatpush.bf16.msra.mxu0 %v2176
        %2189 = vmatmul.bf16.gmra.mxu0 %v2179
        %v2190 = vpop.f32.mrf.mxu0
        %v2191 = vadd.f32 0.0, %v2190
        %v2192 = vpop.f32.mrf.mxu0
        %v2193 = vadd.f32 0.0, %v2192
        %2194 = vdwg.mxu0
        %v2197 = vunpack.c.l.b16 %v2041
        %v2198 = vunpack.c.l.b16 %v2042
        %v2199 = vpack.c.b16 %v2198, %v2197
        %2200 = vrot.lane.b32.xlu0 %v771, 88
        %v2201 = vpop.permute.xlu0 %2200
        %v2204 = vsel %vm391, %v2199, 0
        %2206 = vmatpush.bf16.msra.mxu0 0
        %2207 = vmatpush.bf16.msra.mxu0 0
        %2208 = vmatpush.bf16.msra.mxu0 0
        %2209 = vmatpush.bf16.msra.mxu0 0
        %2210 = vmatpush.bf16.msra.mxu0 0
        %2211 = vmatpush.bf16.msra.mxu0 0
        %2212 = vmatpush.bf16.msra.mxu0 0
        %2213 = vmatpush.bf16.msra.mxu0 %v2201
        %2214 = vmatmul.bf16.gmra.mxu0 %v2204
        %v2215 = vpop.f32.mrf.mxu0
        %v2216 = vadd.f32 0.0, %v2215
        %v2217 = vpop.f32.mrf.mxu0
        %v2218 = vadd.f32 0.0, %v2217
        %2219 = vdwg.mxu0
        %v2222 = vunpack.c.l.b16 %v2043
        %v2223 = vunpack.c.l.b16 %v2044
        %v2224 = vpack.c.b16 %v2223, %v2222
        %2225 = vrot.lane.b32.xlu0 %v798, 88
        %v2226 = vpop.permute.xlu0 %2225
        %v2229 = vsel %vm391, %v2224, 0
        %2231 = vmatpush.bf16.msra.mxu0 0
        %2232 = vmatpush.bf16.msra.mxu0 0
        %2233 = vmatpush.bf16.msra.mxu0 0
        %2234 = vmatpush.bf16.msra.mxu0 0
        %2235 = vmatpush.bf16.msra.mxu0 0
        %2236 = vmatpush.bf16.msra.mxu0 0
        %2237 = vmatpush.bf16.msra.mxu0 0
        %2238 = vmatpush.bf16.msra.mxu0 %v2226
        %2239 = vmatmul.bf16.gmra.mxu0 %v2229
        %v2240 = vpop.f32.mrf.mxu0
        %v2241 = vadd.f32 0.0, %v2240
        %v2242 = vpop.f32.mrf.mxu0
        %v2243 = vadd.f32 0.0, %v2242
        %2244 = vdwg.mxu0
        %2261 = vrot.lane.b32.xlu0 %v2066, 8
        %v2262 = vpop.permute.xlu0 %2261
        %2263 = vrot.lane.b32.xlu0 %v2068, 8
        %v2264 = vpop.permute.xlu0 %2263
        %2265 = vrot.lane.b32.xlu0 %v2091, 8
        %v2266 = vpop.permute.xlu0 %2265
        %2267 = vrot.lane.b32.xlu0 %v2093, 8
        %v2268 = vpop.permute.xlu0 %2267
        %2269 = vrot.lane.b32.xlu0 %v2116, 8
        %v2270 = vpop.permute.xlu0 %2269
        %2271 = vrot.lane.b32.xlu0 %v2118, 8
        %v2272 = vpop.permute.xlu0 %2271
        %2273 = vrot.lane.b32.xlu0 %v2141, 8
        %v2274 = vpop.permute.xlu0 %2273
        %2275 = vrot.lane.b32.xlu0 %v2143, 8
        %v2276 = vpop.permute.xlu0 %2275
        %2277 = vrot.lane.b32.xlu0 %v2166, 8
        %v2278 = vpop.permute.xlu0 %2277
        %2279 = vrot.lane.b32.xlu0 %v2168, 8
        %v2280 = vpop.permute.xlu0 %2279
        %2281 = vrot.lane.b32.xlu0 %v2191, 8
        %v2282 = vpop.permute.xlu0 %2281
        %2283 = vrot.lane.b32.xlu0 %v2193, 8
        %v2284 = vpop.permute.xlu0 %2283
        %2285 = vrot.lane.b32.xlu0 %v2216, 8
        %v2286 = vpop.permute.xlu0 %2285
        %2287 = vrot.lane.b32.xlu0 %v2218, 8
        %v2288 = vpop.permute.xlu0 %2287
        %2289 = vrot.lane.b32.xlu0 %v2241, 8
        %v2290 = vpop.permute.xlu0 %2289
        %2291 = vrot.lane.b32.xlu0 %v2243, 8
        %v2292 = vpop.permute.xlu0 %2291
        %v2309 = vsel %vm611, %v1258, %v2262
        %v2310 = vsel %vm611, %v1260, %v2264
        %v2311 = vsel %vm611, %v1283, %v2266
        %v2312 = vsel %vm611, %v1285, %v2268
        %v2313 = vsel %vm611, %v1308, %v2270
        %v2314 = vsel %vm611, %v1310, %v2272
        %v2315 = vsel %vm611, %v1333, %v2274
        %v2316 = vsel %vm611, %v1335, %v2276
        %v2317 = vsel %vm611, %v1358, %v2278
        %v2318 = vsel %vm611, %v1360, %v2280
        %v2319 = vsel %vm611, %v1383, %v2282
        %v2320 = vsel %vm611, %v1385, %v2284
        %v2321 = vsel %vm611, %v1408, %v2286
        %v2322 = vsel %vm611, %v1410, %v2288
        %v2323 = vsel %vm611, %v1433, %v2290
        %v2324 = vsel %vm611, %v1435, %v2292
        %v2325 = vpack.c.bf16 %v2310, %v2309
        %v2326 = vpack.c.bf16 %v2312, %v2311
        %v2327 = vpack.c.bf16 %v2314, %v2313
        %v2328 = vpack.c.bf16 %v2316, %v2315
        %v2329 = vpack.c.bf16 %v2318, %v2317
        %v2330 = vpack.c.bf16 %v2320, %v2319
        %v2331 = vpack.c.bf16 %v2322, %v2321
        %v2332 = vpack.c.bf16 %v2324, %v2323
        %v2333 = vld [vmem:[%s5] sm:$0xf]
        %v2334 = vld [vmem:[%s5 + $0x4] sm:$0xf]
        %v2335 = vld [vmem:[%s6] sm:$0x1]
        %v2337 = vperm.slane %v2335, 0
        %v2341 = vunpack.c.l.b16 %v2333
        %v2342 = vunpack.c.l.b16 %v2334
        %v2343 = vpack.c.b16 %v2342, %v2341
        %v2346 = vsel %vm391, %v2325, 0
        %v2349 = vsel %vm391, %v2326, 0
        %v2352 = vsel %vm391, %v2327, 0
        %v2355 = vsel %vm391, %v2328, 0
        %v2358 = vsel %vm391, %v2329, 0
        %v2361 = vsel %vm391, %v2330, 0
        %v2364 = vsel %vm391, %v2331, 0
        %v2367 = vsel %vm391, %v2332, 0
        %2369 = vmatpush.bf16.msra.mxu0 0
        %2370 = vmatpush.bf16.msra.mxu0 0
        %2371 = vmatpush.bf16.msra.mxu0 0
        %2372 = vmatpush.bf16.msra.mxu0 0
        %2373 = vmatpush.bf16.msra.mxu0 0
        %2374 = vmatpush.bf16.msra.mxu0 0
        %2375 = vmatpush.bf16.msra.mxu0 0
        %2376 = vmatpush.bf16.msra.mxu0 %v2343
        %2377 = vmatmul.bf16.gmra.mxu0 %v2346
        %v2378 = vpop.f32.mrf.mxu0
        %v2379 = vadd.f32 %v2337, %v2378
        %v2380 = vpop.f32.mrf.mxu0
        %v2381 = vadd.f32 %v2337, %v2380
        %2382 = vmatmul.bf16.gmra.mxu0 %v2349
        %v2383 = vpop.f32.mrf.mxu0
        %v2384 = vadd.f32 %v2337, %v2383
        %v2385 = vpop.f32.mrf.mxu0
        %v2386 = vadd.f32 %v2337, %v2385
        %2387 = vmatmul.bf16.gmra.mxu0 %v2352
        %v2388 = vpop.f32.mrf.mxu0
        %v2389 = vadd.f32 %v2337, %v2388
        %v2390 = vpop.f32.mrf.mxu0
        %v2391 = vadd.f32 %v2337, %v2390
        %2392 = vmatmul.bf16.gmra.mxu0 %v2355
        %v2393 = vpop.f32.mrf.mxu0
        %v2394 = vadd.f32 %v2337, %v2393
        %v2395 = vpop.f32.mrf.mxu0
        %v2396 = vadd.f32 %v2337, %v2395
        %2397 = vmatmul.bf16.gmra.mxu0 %v2358
        %v2398 = vpop.f32.mrf.mxu0
        %v2399 = vadd.f32 %v2337, %v2398
        %v2400 = vpop.f32.mrf.mxu0
        %v2401 = vadd.f32 %v2337, %v2400
        %2402 = vmatmul.bf16.gmra.mxu0 %v2361
        %v2403 = vpop.f32.mrf.mxu0
        %v2404 = vadd.f32 %v2337, %v2403
        %v2405 = vpop.f32.mrf.mxu0
        %v2406 = vadd.f32 %v2337, %v2405
        %2407 = vmatmul.bf16.gmra.mxu0 %v2364
        %v2408 = vpop.f32.mrf.mxu0
        %v2409 = vadd.f32 %v2337, %v2408
        %v2410 = vpop.f32.mrf.mxu0
        %v2411 = vadd.f32 %v2337, %v2410
        %2412 = vmatmul.bf16.gmra.mxu0 %v2367
        %v2413 = vpop.f32.mrf.mxu0
        %v2414 = vadd.f32 %v2337, %v2413
        %v2415 = vpop.f32.mrf.mxu0
        %v2416 = vadd.f32 %v2337, %v2415
        %2417 = vdwg.mxu0
        %v2418 = vmax.f32 %v2379, 0.0
        %v2419 = vmax.f32 %v2381, 0.0
        %v2420 = vmax.f32 %v2384, 0.0
        %v2421 = vmax.f32 %v2386, 0.0
        %v2422 = vmax.f32 %v2389, 0.0
        %v2423 = vmax.f32 %v2391, 0.0
        %v2424 = vmax.f32 %v2394, 0.0
        %v2425 = vmax.f32 %v2396, 0.0
        %v2426 = vmax.f32 %v2399, 0.0
        %v2427 = vmax.f32 %v2401, 0.0
        %v2428 = vmax.f32 %v2404, 0.0
        %v2429 = vmax.f32 %v2406, 0.0
        %v2430 = vmax.f32 %v2409, 0.0
        %v2431 = vmax.f32 %v2411, 0.0
        %v2432 = vmax.f32 %v2414, 0.0
        %v2433 = vmax.f32 %v2416, 0.0
        %v2434 = vpack.c.bf16 %v2418, %v2418
        %v2435 = vpack.c.bf16 %v2419, %v2419
        %v2436 = vpack.c.bf16 %v2420, %v2420
        %v2437 = vpack.c.bf16 %v2421, %v2421
        %v2438 = vpack.c.bf16 %v2422, %v2422
        %v2439 = vpack.c.bf16 %v2423, %v2423
        %v2440 = vpack.c.bf16 %v2424, %v2424
        %v2441 = vpack.c.bf16 %v2425, %v2425
        %v2442 = vpack.c.bf16 %v2426, %v2426
        %v2443 = vpack.c.bf16 %v2427, %v2427
        %v2444 = vpack.c.bf16 %v2428, %v2428
        %v2445 = vpack.c.bf16 %v2429, %v2429
        %v2446 = vpack.c.bf16 %v2430, %v2430
        %v2447 = vpack.c.bf16 %v2431, %v2431
        %v2448 = vpack.c.bf16 %v2432, %v2432
        %v2449 = vpack.c.bf16 %v2433, %v2433
        %vm2450 = vcmask 125952
        %2451 = vst.msk [vmem:[%s329] sm:$0xf] %vm2450, %v2434
        %2452 = vst.msk [vmem:[%s329 + $0x4] sm:$0xf] %vm2450, %v2435
        %2453 = vst.msk [vmem:[%s329 + $0x8] sm:$0xf] %vm2450, %v2436
        %2454 = vst.msk [vmem:[%s329 + $0xc] sm:$0xf] %vm2450, %v2437
        %2455 = vst.msk [vmem:[%s329 + $0x10] sm:$0xf] %vm2450, %v2438
        %2456 = vst.msk [vmem:[%s329 + $0x14] sm:$0xf] %vm2450, %v2439
        %2457 = vst.msk [vmem:[%s329 + $0x18] sm:$0xf] %vm2450, %v2440
        %2458 = vst.msk [vmem:[%s329 + $0x1c] sm:$0xf] %vm2450, %v2441
        %2459 = vst.msk [vmem:[%s329 + $0x20] sm:$0xf] %vm2450, %v2442
        %2460 = vst.msk [vmem:[%s329 + $0x24] sm:$0xf] %vm2450, %v2443
        %2461 = vst.msk [vmem:[%s329 + $0x28] sm:$0xf] %vm2450, %v2444
        %2462 = vst.msk [vmem:[%s329 + $0x2c] sm:$0xf] %vm2450, %v2445
        %2463 = vst.msk [vmem:[%s329 + $0x30] sm:$0xf] %vm2450, %v2446
        %2464 = vst.msk [vmem:[%s329 + $0x34] sm:$0xf] %vm2450, %v2447
        %2465 = vst.msk [vmem:[%s329 + $0x38] sm:$0xf] %vm2450, %v2448
        %2466 = vst.msk [vmem:[%s329 + $0x3c] sm:$0xf] %vm2450, %v2449
        %s2467 = smul.u32 8, %s21
        %p2468 = scmp.lt.s32.totalorder %s2467, 15
        %s2469 = scalar_select %p2468, %s2467, 15
        %s2470 = smul.addr %s2469, 2
        %s2471 = smul.addr %s2470, 4
        %s2472 = scalar_lea.vmem %s7, %s2471
        // Predicated region
        $region53: #{_lambda_.3} parent=47 // pred_check
          %p2473 = pneg %p196
        $region54: #{_lambda_.3} parent=47 // pred_check_branch
          %2475 = sbr.rel (%p2473) target = $region56
        $region55: #{_lambda_.3} parent=47 // pred_region
          %s2476 = smul.u32 8, %s21
        $region56: #{_lambda_.3} parent=47 // pred_fallthru
          _
      $region48: #{_lambda_.3} parent=5 // pred_fallthru
        _
      %p2477 = scmp.le.s32.totalorder 2, %s16
      // Predicated region
      $region57: #{_lambda_.3} parent=5 // pred_check
        %p2478 = pneg %p2477
      $region58: #{_lambda_.3} parent=5 // pred_check_branch
        %2480 = sbr.rel (%p2478) target = $region60
      $region59: #{_lambda_.3} parent=5 // pred_region
        %s2481 = ssub.s32 %s16, 2
        // Predicated region
        $region61: #{_lambda_.3} parent=59 // pred_check
          %p2482 = pneg %p202
        $region62: #{_lambda_.3} parent=59 // pred_check_branch
          %2484 = sbr.rel (%p2482) target = $region64
        $region63: #{_lambda_.3} parent=59 // pred_region
          %s2485 = smul.u32 8, %s22
          %p2486 = scmp.lt.s32.totalorder %s2485, 15
          %s2487 = scalar_select %p2486, %s2485, 15
          %s2488 = smul.addr %s2487, 2
          %s2489 = smul.addr %s2488, 4
          %s2490 = scalar_lea.vmem %s7, %s2489
        $region64: #{_lambda_.3} parent=59 // pred_fallthru
          _
      $region60: #{_lambda_.3} parent=5 // pred_fallthru
        _
    $region6: #{_lambda_.3} parent=1 // loop_footer
      %s20 = sadd.s32 1, %s16
    $region7: #{_lambda_.3} parent=1 // loop_footer_branch
      %15 = sbr.rel target = $region3
    $region8: #{_lambda_.3} parent=1 // loop_exit
      _
    %2491 = vsyncpa [#allocation3], 1
    %s2492 = scalar_lea.sflag [#allocation3], 1
    %2493 = vsyncpa %s2492, 1

// kernel: _lambda_.4
$region0: #{_lambda_.4}
  #allocation0 [shape = 'u32[]', space=smem, size = 0x4, offset = 0x4, fixed_abs, tag = 'smem constant byte address 0x4 - core index']
  #allocation1 [shape = 'u32[72,128]{1,0:T(1,128)}', space=vmem, size = 0x9000, scoped, tag = 'internal scratch']
  %s0 = inlined_call_operand.vmem [shape: f32[2,8,16,20], index: 0, kind: input, shape index: {}]
  %s1 = inlined_call_operand.hbm [shape: f32[2,8,16,16], index: 1, kind: input, shape index: {}]
  %s2 = inlined_call_operand.vmem [shape: bf16[20,48], index: 2, kind: input, shape index: {}]
  %s3 = inlined_call_operand.vmem [shape: bf16[16,48], index: 3, kind: input, shape index: {}]
  %s4 = inlined_call_operand.vmem [shape: f32[1,48], index: 4, kind: input, shape index: {}]
  %s5 = inlined_call_operand.vmem [shape: bf16[16,16], index: 5, kind: input, shape index: {}]
  %s6 = inlined_call_operand.vmem [shape: f32[1,16], index: 6, kind: input, shape index: {}]
  %s7 = inlined_call_operand.vmem [shape: bf16[2,8,16,16], index: 7, kind: output, shape index: {}]
  %s8 = sld [smem:[#allocation0]]
  $region65: #{_lambda_.4} parent=0
    _
  %s10 = ssub.s32 1, %s8
  %s11 = scalar_select 0, %s10, %s8
  $region1: #{_lambda_.4} parent=0
    #allocation2 [shape = 'u8[131072]{0}', space=vmem, size = 0x20000, scoped, tag = 'input window, operand 1']
    #allocation3 [shape = 's32[2]{0}', space=sflag, size = 0x8, scoped, tag = 'scoped memory for _lambda_.4']
    %12 = vsyncpa [#allocation3], 0
    %s13 = scalar_lea.sflag [#allocation3], 1
    %14 = vsyncpa %s13, 0
    loop: start=0, step=1, limit=4
    $region2: #{_lambda_.4} parent=1 // loop_pre_header
      _
    $region3: #{_lambda_.4} parent=1 // loop_header
      %s16 = sphi 0, %s20
      %p17 = scmp.ge.s32.totalorder %s16, 4
      %s26 = sphi 0, %s28
      %s29 = sphi 0, %s26
      %s30 = sphi 0, %s29
      %s46 = sphi 0, %s30
      %s52 = sphi 0, %s54
      %s55 = sphi 0, %s52
      %s56 = sphi 0, %s55
      %s72 = sphi 0, %s56
      %s76 = sphi 0, %s76
      %s78 = sphi 0, %s76
      %s79 = sphi 0, %s78
      %s93 = sphi 0, %s79
      %s97 = sphi 0, %s97
      %s99 = sphi 0, %s97
      %s100 = sphi 0, %s99
      %s114 = sphi 0, %s100
      %s118 = sphi 0, %s118
      %s120 = sphi 0, %s118
      %s121 = sphi 0, %s120
      %s135 = sphi 0, %s121
      %s139 = sphi 0, %s139
      %s141 = sphi 0, %s139
      %s142 = sphi 0, %s141
      %s156 = sphi 0, %s142
      %s160 = sphi 0, %s160
      %s162 = sphi 0, %s160
      %s163 = sphi 0, %s162
      %s177 = sphi 0, %s163
      %s183 = sphi 0, %s185
      %s186 = sphi 0, %s183
      %s187 = sphi 0, %s186
      %s203 = sphi 0, %s187
    $region4: #{_lambda_.4} parent=1 // loop_header_branch
      %19 = sbr.rel (%p17) target = $region8
    $region5: #{_lambda_.4} parent=1 // loop_body
      %s21 = ssub.s32 %s16, 1
      %s22 = ssub.s32 %s16, 2
      %s23 = sadd.s32 %s16, 1
      %s24 = ssub.s32 %s16, %s23
      %p25 = scmp.eq.s32.totalorder %s24, 0
      %s27 = sadd.s32 %s26, 1
      %s28 = scalar_select %p25, %s26, %s27
      %p31 = pneg %p25
      %p32 = scmp.eq.s32.totalorder %s16, 1
      %p33 = por %p31, %p32
      %p34 = scmp.ne.s32.totalorder %s26, %s29
      %p35 = scmp.eq.s32.totalorder %s16, 0
      %p36 = por %p34, %p35
      %p37 = scmp.ne.s32.totalorder %s26, %s29
      %p38 = scmp.eq.s32.totalorder %s21, 1
      %p39 = por %p37, %p38
      %p40 = scmp.ne.s32.totalorder %s29, %s30
      %p41 = scmp.eq.s32.totalorder %s21, 0
      %p42 = por %p40, %p41
      %p43 = scmp.ne.s32.totalorder %s29, %s30
      %p44 = scmp.eq.s32.totalorder %s22, 1
      %p45 = por %p43, %p44
      %p47 = scmp.ne.s32.totalorder %s30, %s46
      %p48 = scmp.eq.s32.totalorder %s22, 0
      %p49 = por %p47, %p48
      %s50 = ssub.s32 %s16, %s23
      %p51 = scmp.eq.s32.totalorder %s50, 0
      %s53 = sadd.s32 %s52, 1
      %s54 = scalar_select %p51, %s52, %s53
      %p57 = pneg %p51
      %p58 = scmp.eq.s32.totalorder %s16, 1
      %p59 = por %p57, %p58
      %p60 = scmp.ne.s32.totalorder %s52, %s55
      %p61 = scmp.eq.s32.totalorder %s16, 0
      %p62 = por %p60, %p61
      %p63 = scmp.ne.s32.totalorder %s52, %s55
      %p64 = scmp.eq.s32.totalorder %s21, 1
      %p65 = por %p63, %p64
      %p66 = scmp.ne.s32.totalorder %s55, %s56
      %p67 = scmp.eq.s32.totalorder %s21, 0
      %p68 = por %p66, %p67
      %p69 = scmp.ne.s32.totalorder %s55, %s56
      %p70 = scmp.eq.s32.totalorder %s22, 1
      %p71 = por %p69, %p70
      %p73 = scmp.ne.s32.totalorder %s56, %s72
      %p74 = scmp.eq.s32.totalorder %s22, 0
      %p75 = por %p73, %p74
      %s77 = sadd.s32 %s76, 1
      %p80 = scmp.eq.s32.totalorder %s16, 1
      %p81 = scmp.ne.s32.totalorder %s76, %s78
      %p82 = scmp.eq.s32.totalorder %s16, 0
      %p83 = por %p81, %p82
      %p84 = scmp.ne.s32.totalorder %s76, %s78
      %p85 = scmp.eq.s32.totalorder %s21, 1
      %p86 = por %p84, %p85
      %p87 = scmp.ne.s32.totalorder %s78, %s79
      %p88 = scmp.eq.s32.totalorder %s21, 0
      %p89 = por %p87, %p88
      %p90 = scmp.ne.s32.totalorder %s78, %s79
      %p91 = scmp.eq.s32.totalorder %s22, 1
      %p92 = por %p90, %p91
      %p94 = scmp.ne.s32.totalorder %s79, %s93
      %p95 = scmp.eq.s32.totalorder %s22, 0
      %p96 = por %p94, %p95
      %s98 = sadd.s32 %s97, 1
      %p101 = scmp.eq.s32.totalorder %s16, 1
      %p102 = scmp.ne.s32.totalorder %s97, %s99
      %p103 = scmp.eq.s32.totalorder %s16, 0
      %p104 = por %p102, %p103
      %p105 = scmp.ne.s32.totalorder %s97, %s99
      %p106 = scmp.eq.s32.totalorder %s21, 1
      %p107 = por %p105, %p106
      %p108 = scmp.ne.s32.totalorder %s99, %s100
      %p109 = scmp.eq.s32.totalorder %s21, 0
      %p110 = por %p108, %p109
      %p111 = scmp.ne.s32.totalorder %s99, %s100
      %p112 = scmp.eq.s32.totalorder %s22, 1
      %p113 = por %p111, %p112
      %p115 = scmp.ne.s32.totalorder %s100, %s114
      %p116 = scmp.eq.s32.totalorder %s22, 0
      %p117 = por %p115, %p116
      %s119 = sadd.s32 %s118, 1
      %p122 = scmp.eq.s32.totalorder %s16, 1
      %p123 = scmp.ne.s32.totalorder %s118, %s120
      %p124 = scmp.eq.s32.totalorder %s16, 0
      %p125 = por %p123, %p124
      %p126 = scmp.ne.s32.totalorder %s118, %s120
      %p127 = scmp.eq.s32.totalorder %s21, 1
      %p128 = por %p126, %p127
      %p129 = scmp.ne.s32.totalorder %s120, %s121
      %p130 = scmp.eq.s32.totalorder %s21, 0
      %p131 = por %p129, %p130
      %p132 = scmp.ne.s32.totalorder %s120, %s121
      %p133 = scmp.eq.s32.totalorder %s22, 1
      %p134 = por %p132, %p133
      %p136 = scmp.ne.s32.totalorder %s121, %s135
      %p137 = scmp.eq.s32.totalorder %s22, 0
      %p138 = por %p136, %p137
      %s140 = sadd.s32 %s139, 1
      %p143 = scmp.eq.s32.totalorder %s16, 1
      %p144 = scmp.ne.s32.totalorder %s139, %s141
      %p145 = scmp.eq.s32.totalorder %s16, 0
      %p146 = por %p144, %p145
      %p147 = scmp.ne.s32.totalorder %s139, %s141
      %p148 = scmp.eq.s32.totalorder %s21, 1
      %p149 = por %p147, %p148
      %p150 = scmp.ne.s32.totalorder %s141, %s142
      %p151 = scmp.eq.s32.totalorder %s21, 0
      %p152 = por %p150, %p151
      %p153 = scmp.ne.s32.totalorder %s141, %s142
      %p154 = scmp.eq.s32.totalorder %s22, 1
      %p155 = por %p153, %p154
      %p157 = scmp.ne.s32.totalorder %s142, %s156
      %p158 = scmp.eq.s32.totalorder %s22, 0
      %p159 = por %p157, %p158
      %s161 = sadd.s32 %s160, 1
      %p164 = scmp.eq.s32.totalorder %s16, 1
      %p165 = scmp.ne.s32.totalorder %s160, %s162
      %p166 = scmp.eq.s32.totalorder %s16, 0
      %p167 = por %p165, %p166
      %p168 = scmp.ne.s32.totalorder %s160, %s162
      %p169 = scmp.eq.s32.totalorder %s21, 1
      %p170 = por %p168, %p169
      %p171 = scmp.ne.s32.totalorder %s162, %s163
      %p172 = scmp.eq.s32.totalorder %s21, 0
      %p173 = por %p171, %p172
      %p174 = scmp.ne.s32.totalorder %s162, %s163
      %p175 = scmp.eq.s32.totalorder %s22, 1
      %p176 = por %p174, %p175
      %p178 = scmp.ne.s32.totalorder %s163, %s177
      %p179 = scmp.eq.s32.totalorder %s22, 0
      %p180 = por %p178, %p179
      %s181 = ssub.s32 %s16, %s23
      %p182 = scmp.eq.s32.totalorder %s181, 0
      %s184 = sadd.s32 %s183, 1
      %s185 = scalar_select %p182, %s183, %s184
      %p188 = pneg %p182
      %p189 = scmp.eq.s32.totalorder %s16, 1
      %p190 = por %p188, %p189
      %p191 = scmp.ne.s32.totalorder %s183, %s186
      %p192 = scmp.eq.s32.totalorder %s16, 0
      %p193 = por %p191, %p192
      %p194 = scmp.ne.s32.totalorder %s183, %s186
      %p195 = scmp.eq.s32.totalorder %s21, 1
      %p196 = por %p194, %p195
      %p197 = scmp.ne.s32.totalorder %s186, %s187
      %p198 = scmp.eq.s32.totalorder %s21, 0
      %p199 = por %p197, %p198
      %p200 = scmp.ne.s32.totalorder %s186, %s187
      %p201 = scmp.eq.s32.totalorder %s22, 1
      %p202 = por %p200, %p201
      %p204 = scmp.ne.s32.totalorder %s187, %s203
      %p205 = scmp.eq.s32.totalorder %s22, 0
      %p206 = por %p204, %p205
      %p207 = scmp.le.s32.totalorder 1, %s16
      %p208 = scmp.lt.s32.totalorder %s16, 3
      %p209 = pnand %p207, %p208
      %p210 = pneg %p209
      // Predicated region
      $region9: #{_lambda_.4} parent=5 // pred_check
        _
      $region10: #{_lambda_.4} parent=5 // pred_check_branch
        %212 = sbr.rel (%p209) target = $region12
      $region11: #{_lambda_.4} parent=5 // pred_region
        %s213 = ssub.s32 %s16, 1
        // Predicated region
        $region13: #{_lambda_.4} parent=11 // pred_check
          %p214 = pneg %p89
        $region14: #{_lambda_.4} parent=11 // pred_check_branch
          %216 = sbr.rel (%p214) target = $region16
        $region15: #{_lambda_.4} parent=11 // pred_region
          _
        $region16: #{_lambda_.4} parent=11 // pred_fallthru
          _
        // Predicated region
        $region17: #{_lambda_.4} parent=11 // pred_check
          %p217 = pneg %p110
        $region18: #{_lambda_.4} parent=11 // pred_check_branch
          %219 = sbr.rel (%p217) target = $region20
        $region19: #{_lambda_.4} parent=11 // pred_region
          _
        $region20: #{_lambda_.4} parent=11 // pred_fallthru
          _
        // Predicated region
        $region21: #{_lambda_.4} parent=11 // pred_check
          %p220 = pneg %p131
        $region22: #{_lambda_.4} parent=11 // pred_check_branch
          %222 = sbr.rel (%p220) target = $region24
        $region23: #{_lambda_.4} parent=11 // pred_region
          _
        $region24: #{_lambda_.4} parent=11 // pred_fallthru
          _
        // Predicated region
        $region25: #{_lambda_.4} parent=11 // pred_check
          %p223 = pneg %p152
        $region26: #{_lambda_.4} parent=11 // pred_check_branch
          %225 = sbr.rel (%p223) target = $region28
        $region27: #{_lambda_.4} parent=11 // pred_region
          _
        $region28: #{_lambda_.4} parent=11 // pred_fallthru
          _
        // Predicated region
        $region29: #{_lambda_.4} parent=11 // pred_check
          %p226 = pneg %p173
        $region30: #{_lambda_.4} parent=11 // pred_check_branch
          %228 = sbr.rel (%p226) target = $region32
        $region31: #{_lambda_.4} parent=11 // pred_region
          _
        $region32: #{_lambda_.4} parent=11 // pred_fallthru
          _
      $region12: #{_lambda_.4} parent=5 // pred_fallthru
        _
      %p229 = scmp.lt.s32.totalorder %s16, 2
      // Predicated region
      $region33: #{_lambda_.4} parent=5 // pred_check
        %p230 = pneg %p229
      $region34: #{_lambda_.4} parent=5 // pred_check_branch
        %232 = sbr.rel (%p230) target = $region36
      $region35: #{_lambda_.4} parent=5 // pred_region
        // Predicated region
        $region37: #{_lambda_.4} parent=35 // pred_check
          %p233 = pneg %p36
        $region38: #{_lambda_.4} parent=35 // pred_check_branch
          %235 = sbr.rel (%p233) target = $region40
        $region39: #{_lambda_.4} parent=35 // pred_region
          %p236 = scmp.lt.s32.totalorder %s16, 1
          %s237 = scalar_select %p236, %s16, 1
          %s238 = smul.addr %s237, 16
          %s239 = smul.addr %s238, 8
          %s240 = scalar_lea.vmem %s0, %s239
        $region40: #{_lambda_.4} parent=35 // pred_fallthru
          _
        // Predicated region
        $region41: #{_lambda_.4} parent=35 // pred_check
          %p241 = pneg %p62
        $region42: #{_lambda_.4} parent=35 // pred_check_branch
          %243 = sbr.rel (%p241) target = $region44
        $region43: #{_lambda_.4} parent=35 // pred_region
          %s244 = sand.u32 %s52, 1
          %s245 = scalar_lea.sflag [#allocation3], %s244
          %s246 = sand.u32 %s52, 1
          %s247 = smul.addr %s246, 128
          %s248 = scalar_lea.vmem [#allocation2], %s247
          %250 = vsyncadd %s245, 0
          %s251 = smul.addr %s16, 16
          %s252 = smul.addr %s251, 8
          %s253 = scalar_lea.hbm %s1, %s252
          %s254 = sshll.u32 %s253, 4
          %s255 = int_to_ptr.hbm [resolvable:$true] %s254
          %s256 = sshll.u32 %s248, 4
          %s257 = int_to_ptr.vmem [resolvable:$true] %s256
          %262 = dma.hbm_to_vmem [thread:$0]  %s255, 2048, %s257, %s245, 128, 128, 8
        $region44: #{_lambda_.4} parent=35 // pred_fallthru
          _
      $region36: #{_lambda_.4} parent=5 // pred_fallthru
        _
      %p263 = scmp.le.s32.totalorder 1, %s16
      %p264 = scmp.lt.s32.totalorder %s16, 3
      %p265 = pnand %p263, %p264
      %p266 = pneg %p265
      // Predicated region
      $region45: #{_lambda_.4} parent=5 // pred_check
        _
      $region46: #{_lambda_.4} parent=5 // pred_check_branch
        %268 = sbr.rel (%p265) target = $region48
      $region47: #{_lambda_.4} parent=5 // pred_region
        %s269 = ssub.s32 %s16, 1
        %s270 = sand.u32 %s55, 1
        %s271 = scalar_lea.sflag [#allocation3], %s270
        %s272 = sand.u32 %s55, 1
        %s273 = smul.addr %s272, 128
        %s274 = scalar_lea.vmem [#allocation2], %s273
        // Predicated region
        $region49: #{_lambda_.4} parent=47 // pred_check
          %p275 = pneg %p68
        $region50: #{_lambda_.4} parent=47 // pred_check_branch
          %277 = sbr.rel (%p275) target = $region52
        $region51: #{_lambda_.4} parent=47 // pred_region
          %279 = dma.done %s271, 2048
        $region52: #{_lambda_.4} parent=47 // pred_fallthru
          _
        %p280 = scmp.lt.s32.totalorder %s21, 1
        %s281 = scalar_select %p280, %s21, 1
        %s282 = smul.addr %s281, 16
        %s283 = smul.addr %s282, 8
        %s284 = scalar_lea.vmem %s0, %s283
        %p285 = pneg %p42
        %p286 = pneg %p39
        %s287 = sand.u32 %s55, 1
        %s288 = scalar_lea.sflag [#allocation3], %s287
        %s289 = sand.u32 %s55, 1
        %s290 = smul.addr %s289, 128
        %s291 = scalar_lea.vmem [#allocation2], %s290
        %p292 = pneg %p68
        %p293 = pneg %p65
        %p294 = pneg %p89
        %p295 = pneg %p86
        %p296 = pneg %p110
        %p297 = pneg %p107
        %p298 = pneg %p131
        %p299 = pneg %p128
        %p300 = pneg %p152
        %p301 = pneg %p149
        %p302 = pneg %p173
        %p303 = pneg %p170
        %p304 = pneg %p199
        %p305 = pneg %p196
        %p306 = scmp.lt.s32.totalorder %s21, 1
        %s307 = scalar_select %p306, %s21, 1
        %s308 = smul.addr %s307, 16
        %s309 = smul.addr %s308, 4
        %s310 = scalar_lea.vmem %s7, %s309
        %p311 = scmp.lt.s32.totalorder %s21, 1
        %s312 = scalar_select %p311, %s21, 1
        %s313 = smul.addr %s312, 16
        %s314 = smul.addr %s313, 8
        %s315 = scalar_lea.vmem %s0, %s314
        %p316 = scmp.lt.s32.totalorder %s21, 1
        %s317 = scalar_select %p316, %s21, 1
        %s318 = smul.addr %s317, 16
        %s319 = smul.addr %s318, 4
        %s320 = scalar_lea.vmem %s7, %s319
        %v322 = vld [vmem:[%s315] sm:$0xff]
        %v323 = vld [vmem:[%s315 + $0x8] sm:$0xff]
        %v324 = vld [vmem:[%s315 + $0x10] sm:$0xff]
        %v325 = vld [vmem:[%s315 + $0x18] sm:$0xff]
        %v326 = vld [vmem:[%s315 + $0x20] sm:$0xff]
        %v327 = vld [vmem:[%s315 + $0x28] sm:$0xff]
        %v328 = vld [vmem:[%s315 + $0x30] sm:$0xff]
        %v329 = vld [vmem:[%s315 + $0x38] sm:$0xff]
        %v330 = vld [vmem:[%s315 + $0x40] sm:$0xff]
        %v331 = vld [vmem:[%s315 + $0x48] sm:$0xff]
        %v332 = vld [vmem:[%s315 + $0x50] sm:$0xff]
        %v333 = vld [vmem:[%s315 + $0x58] sm:$0xff]
        %v334 = vld [vmem:[%s315 + $0x60] sm:$0xff]
        %v335 = vld [vmem:[%s315 + $0x68] sm:$0xff]
        %v336 = vld [vmem:[%s315 + $0x70] sm:$0xff]
        %v337 = vld [vmem:[%s315 + $0x78] sm:$0xff]
        %v338 = vpack.c.bf16 %v323, %v322
        %v339 = vpack.c.bf16 %v325, %v324
        %v340 = vpack.c.bf16 %v327, %v326
        %v341 = vpack.c.bf16 %v329, %v328
        %v342 = vpack.c.bf16 %v331, %v330
        %v343 = vpack.c.bf16 %v333, %v332
        %v344 = vpack.c.bf16 %v335, %v334
        %v345 = vpack.c.bf16 %v337, %v336
        %v346 = vld [vmem:[%s274] sm:$0xff]
        %v347 = vld [vmem:[%s274 + $0x8] sm:$0xff]
        %v348 = vld [vmem:[%s274 + $0x10] sm:$0xff]
        %v349 = vld [vmem:[%s274 + $0x18] sm:$0xff]
        %v350 = vld [vmem:[%s274 + $0x20] sm:$0xff]
        %v351 = vld [vmem:[%s274 + $0x28] sm:$0xff]
        %v352 = vld [vmem:[%s274 + $0x30] sm:$0xff]
        %v353 = vld [vmem:[%s274 + $0x38] sm:$0xff]
        %v354 = vld [vmem:[%s274 + $0x40] sm:$0xff]
        %v355 = vld [vmem:[%s274 + $0x48] sm:$0xff]
        %v356 = vld [vmem:[%s274 + $0x50] sm:$0xff]
        %v357 = vld [vmem:[%s274 + $0x58] sm:$0xff]
        %v358 = vld [vmem:[%s274 + $0x60] sm:$0xff]
        %v359 = vld [vmem:[%s274 + $0x68] sm:$0xff]
        %v360 = vld [vmem:[%s274 + $0x70] sm:$0xff]
        %v361 = vld [vmem:[%s274 + $0x78] sm:$0xff]
        %v362 = vpack.c.bf16 %v347, %v346
        %v363 = vpack.c.bf16 %v349, %v348
        %v364 = vpack.c.bf16 %v351, %v350
        %v365 = vpack.c.bf16 %v353, %v352
        %v366 = vpack.c.bf16 %v355, %v354
        %v367 = vpack.c.bf16 %v357, %v356
        %v368 = vpack.c.bf16 %v359, %v358
        %v369 = vpack.c.bf16 %v361, %v360
        %v370 = vld [vmem:[%s2] sm:$0xf]
        %v371 = vld [vmem:[%s2 + $0x4] sm:$0xf]
        %v372 = vld [vmem:[%s2 + $0x8] sm:$0x3]
        %v373 = vld [vmem:[%s3] sm:$0xf]
        %v374 = vld [vmem:[%s3 + $0x4] sm:$0xf]
        %v377 = vunpack.c.l.b16 %v373
        %v378 = vunpack.c.l.b16 %v374
        %v379 = vpack.c.b16 %v378, %v377
        %vm381 = vcmask 130048
        %v383 = vsel %vm381, %v362, 0
        %v386 = vsel %vm381, %v363, 0
        %v389 = vsel %vm381, %v364, 0
        %v392 = vsel %vm381, %v365, 0
        %v395 = vsel %vm381, %v366, 0
        %v398 = vsel %vm381, %v367, 0
        %v401 = vsel %vm381, %v368, 0
        %v404 = vsel %vm381, %v369, 0
        %406 = vmatpush.bf16.msra.mxu0 0
        %407 = vmatpush.bf16.msra.mxu0 0
        %408 = vmatpush.bf16.msra.mxu0 0
        %409 = vmatpush.bf16.msra.mxu0 0
        %410 = vmatpush.bf16.msra.mxu0 0
        %411 = vmatpush.bf16.msra.mxu0 0
        %412 = vmatpush.bf16.msra.mxu0 0
        %413 = vmatpush.bf16.msra.mxu0 %v379
        %414 = vmatmul.bf16.gmra.mxu0 %v383
        %v415 = vpop.f32.mrf.mxu0
        %v416 = vadd.f32 0.0, %v415
        %v417 = vpop.f32.mrf.mxu0
        %v418 = vadd.f32 0.0, %v417
        %419 = vmatmul.bf16.gmra.mxu0 %v386
        %v420 = vpop.f32.mrf.mxu0
        %v421 = vadd.f32 0.0, %v420
        %v422 = vpop.f32.mrf.mxu0
        %v423 = vadd.f32 0.0, %v422
        %424 = vmatmul.bf16.gmra.mxu0 %v389
        %v425 = vpop.f32.mrf.mxu0
        %v426 = vadd.f32 0.0, %v425
        %v427 = vpop.f32.mrf.mxu0
        %v428 = vadd.f32 0.0, %v427
        %429 = vmatmul.bf16.gmra.mxu0 %v392
        %v430 = vpop.f32.mrf.mxu0
        %v431 = vadd.f32 0.0, %v430
        %v432 = vpop.f32.mrf.mxu0
        %v433 = vadd.f32 0.0, %v432
        %434 = vmatmul.bf16.gmra.mxu0 %v395
        %v435 = vpop.f32.mrf.mxu0
        %v436 = vadd.f32 0.0, %v435
        %v437 = vpop.f32.mrf.mxu0
        %v438 = vadd.f32 0.0, %v437
        %439 = vmatmul.bf16.gmra.mxu0 %v398
        %v440 = vpop.f32.mrf.mxu0
        %v441 = vadd.f32 0.0, %v440
        %v442 = vpop.f32.mrf.mxu0
        %v443 = vadd.f32 0.0, %v442
        %444 = vmatmul.bf16.gmra.mxu0 %v401
        %v445 = vpop.f32.mrf.mxu0
        %v446 = vadd.f32 0.0, %v445
        %v447 = vpop.f32.mrf.mxu0
        %v448 = vadd.f32 0.0, %v447
        %449 = vmatmul.bf16.gmra.mxu0 %v404
        %v450 = vpop.f32.mrf.mxu0
        %v451 = vadd.f32 0.0, %v450
        %v452 = vpop.f32.mrf.mxu0
        %v453 = vadd.f32 0.0, %v452
        %454 = vdwg.mxu0
        %v458 = vunpack.c.l.b16 %v370
        %v459 = vunpack.c.l.b16 %v371
        %v460 = vunpack.c.l.b16 %v372
        %v461 = vpack.c.b16 %v459, %v458
        %v462 = vpack.c.b16 %v460, %v460
        %vm464 = vcmask 162816
        %v466 = vsel %vm464, %v338, 0
        %v469 = vsel %vm464, %v339, 0
        %v472 = vsel %vm464, %v340, 0
        %v475 = vsel %vm464, %v341, 0
        %v478 = vsel %vm464, %v342, 0
        %v481 = vsel %vm464, %v343, 0
        %v484 = vsel %vm464, %v344, 0
        %v487 = vsel %vm464, %v345, 0
        %vm489 = vcmask 1041408
        %v491 = vsel %vm489, %v462, 0
        %493 = vmatpush.bf16.msra.mxu0 0
        %494 = vmatpush.bf16.msra.mxu0 0
        %495 = vmatpush.bf16.msra.mxu0 0
        %496 = vmatpush.bf16.msra.mxu0 0
        %497 = vmatpush.bf16.msra.mxu0 0
        %498 = vmatpush.bf16.msra.mxu0 0
        %499 = vmatpush.bf16.msra.mxu0 %v491
        %500 = vmatpush.bf16.msra.mxu0 %v461
        %501 = vmatmul.bf16.gmra.mxu0 %v466
        %v502 = vpop.f32.mrf.mxu0
        %v503 = vadd.f32 %v416, %v502
        %v504 = vpop.f32.mrf.mxu0
        %v505 = vadd.f32 %v418, %v504
        %506 = vmatmul.bf16.gmra.mxu0 %v469
        %v507 = vpop.f32.mrf.mxu0
        %v508 = vadd.f32 %v421, %v507
        %v509 = vpop.f32.mrf.mxu0
        %v510 = vadd.f32 %v423, %v509
        %511 = vmatmul.bf16.gmra.mxu0 %v472
        %v512 = vpop.f32.mrf.mxu0
        %v513 = vadd.f32 %v426, %v512
        %v514 = vpop.f32.mrf.mxu0
        %v515 = vadd.f32 %v428, %v514
        %516 = vmatmul.bf16.gmra.mxu0 %v475
        %v517 = vpop.f32.mrf.mxu0
        %v518 = vadd.f32 %v431, %v517
        %v519 = vpop.f32.mrf.mxu0
        %v520 = vadd.f32 %v433, %v519
        %521 = vmatmul.bf16.gmra.mxu0 %v478
        %v522 = vpop.f32.mrf.mxu0
        %v523 = vadd.f32 %v436, %v522
        %v524 = vpop.f32.mrf.mxu0
        %v525 = vadd.f32 %v438, %v524
        %526 = vmatmul.bf16.gmra.mxu0 %v481
        %v527 = vpop.f32.mrf.mxu0
        %v528 = vadd.f32 %v441, %v527
        %v529 = vpop.f32.mrf.mxu0
        %v530 = vadd.f32 %v443, %v529
        %531 = vmatmul.bf16.gmra.mxu0 %v484
        %v532 = vpop.f32.mrf.mxu0
        %v533 = vadd.f32 %v446, %v532
        %v534 = vpop.f32.mrf.mxu0
        %v535 = vadd.f32 %v448, %v534
        %536 = vmatmul.bf16.gmra.mxu0 %v487
        %v537 = vpop.f32.mrf.mxu0
        %v538 = vadd.f32 %v451, %v537
        %v539 = vpop.f32.mrf.mxu0
        %v540 = vadd.f32 %v453, %v539
        %541 = vdwg.mxu0
        %v542 = vld [vmem:[%s4] sm:$0x1]
        %v544 = vperm.slane %v542, 0
        %v546 = vadd.f32 %v503, %v544
        %v547 = vadd.f32 %v505, %v544
        %v548 = vadd.f32 %v508, %v544
        %v549 = vadd.f32 %v510, %v544
        %v550 = vadd.f32 %v513, %v544
        %v551 = vadd.f32 %v515, %v544
        %v552 = vadd.f32 %v518, %v544
        %v553 = vadd.f32 %v520, %v544
        %v554 = vadd.f32 %v523, %v544
        %v555 = vadd.f32 %v525, %v544
        %v556 = vadd.f32 %v528, %v544
        %v557 = vadd.f32 %v530, %v544
        %v558 = vadd.f32 %v533, %v544
        %v559 = vadd.f32 %v535, %v544
        %v560 = vadd.f32 %v538, %v544
        %v561 = vadd.f32 %v540, %v544
        %v562 = vmax.f32 %v546, 0.0
        %v563 = vmax.f32 %v547, 0.0
        %v564 = vmax.f32 %v548, 0.0
        %v565 = vmax.f32 %v549, 0.0
        %v566 = vmax.f32 %v550, 0.0
        %v567 = vmax.f32 %v551, 0.0
        %v568 = vmax.f32 %v552, 0.0
        %v569 = vmax.f32 %v553, 0.0
        %v570 = vmax.f32 %v554, 0.0
        %v571 = vmax.f32 %v555, 0.0
        %v572 = vmax.f32 %v556, 0.0
        %v573 = vmax.f32 %v557, 0.0
        %v574 = vmax.f32 %v558, 0.0
        %v575 = vmax.f32 %v559, 0.0
        %v576 = vmax.f32 %v560, 0.0
        %v577 = vmax.f32 %v561, 0.0
        %v578 = vrot.slane %v566, 4
        %vm579 = vcmask 1047556
        %v580 = vsel %vm579, %v578, %v562
        %v581 = vrot.slane %v562, 4
        %v582 = vsel %vm579, %v566, %v581
        %v584 = vunpack.c.l.s4 1983009808
        %v585 = vunpack.c.0.s8 %v584
        %v586 = vperm.slane %v580, %v585
        %v588 = vunpack.c.l.s4 1983009808
        %v589 = vunpack.c.0.s8 %v588
        %v590 = vperm.slane %v582, %v589
        %v591 = vrot.slane %v568, 4
        %v592 = vsel %vm579, %v591, %v564
        %v593 = vrot.slane %v564, 4
        %v594 = vsel %vm579, %v568, %v593
        %v596 = vunpack.c.l.s4 1983009808
        %v597 = vunpack.c.0.s8 %v596
        %v598 = vperm.slane %v592, %v597
        %v600 = vunpack.c.l.s4 1983009808
        %v601 = vunpack.c.0.s8 %v600
        %v602 = vperm.slane %v594, %v601
        %v603 = vrot.slane %v574, 4
        %v604 = vsel %vm579, %v603, %v570
        %v605 = vrot.slane %v570, 4
        %v606 = vsel %vm579, %v574, %v605
        %v608 = vunpack.c.l.s4 1983009808
        %v609 = vunpack.c.0.s8 %v608
        %v610 = vperm.slane %v604, %v609
        %v612 = vunpack.c.l.s4 1983009808
        %v613 = vunpack.c.0.s8 %v612
        %v614 = vperm.slane %v606, %v613
        %v615 = vrot.slane %v576, 4
        %v616 = vsel %vm579, %v615, %v572
        %v617 = vrot.slane %v572, 4
        %v618 = vsel %vm579, %v576, %v617
        %v620 = vunpack.c.l.s4 1983009808
        %v621 = vunpack.c.0.s8 %v620
        %v622 = vperm.slane %v616, %v621
        %v624 = vunpack.c.l.s4 1983009808
        %v625 = vunpack.c.0.s8 %v624
        %v626 = vperm.slane %v618, %v625
        %v627 = vrot.slane %v598, 4
        %v628 = vsel %vm579, %v627, %v586
        %v629 = vrot.slane %v586, 4
        %v630 = vsel %vm579, %v598, %v629
        %v632 = vunpack.c.l.s4 1934713408
        %v633 = vunpack.c.0.s8 %v632
        %v634 = vperm.slane %v628, %v633
        %v636 = vunpack.c.l.s4 1934713408
        %v637 = vunpack.c.0.s8 %v636
        %v638 = vperm.slane %v630, %v637
        %v639 = vrot.slane %v602, 4
        %v640 = vsel %vm579, %v639, %v590
        %v641 = vrot.slane %v590, 4
        %v642 = vsel %vm579, %v602, %v641
        %v644 = vunpack.c.l.s4 1934713408
        %v645 = vunpack.c.0.s8 %v644
        %v646 = vperm.slane %v640, %v645
        %v648 = vunpack.c.l.s4 1934713408
        %v649 = vunpack.c.0.s8 %v648
        %v650 = vperm.slane %v642, %v649
        %v651 = vrot.slane %v622, 4
        %v652 = vsel %vm579, %v651, %v610
        %v653 = vrot.slane %v610, 4
        %v654 = vsel %vm579, %v622, %v653
        %v656 = vunpack.c.l.s4 1934713408
        %v657 = vunpack.c.0.s8 %v656
        %v658 = vperm.slane %v652, %v657
        %v660 = vunpack.c.l.s4 1934713408
        %v661 = vunpack.c.0.s8 %v660
        %v662 = vperm.slane %v654, %v661
        %v663 = vrot.slane %v626, 4
        %v664 = vsel %vm579, %v663, %v614
        %v665 = vrot.slane %v614, 4
        %v666 = vsel %vm579, %v626, %v665
        %v668 = vunpack.c.l.s4 1934713408
        %v669 = vunpack.c.0.s8 %v668
        %v670 = vperm.slane %v664, %v669
        %v672 = vunpack.c.l.s4 1934713408
        %v673 = vunpack.c.0.s8 %v672
        %v674 = vperm.slane %v666, %v673
        %v675 = vrot.slane %v658, 4
        %v676 = vsel %vm579, %v675, %v634
        %v677 = vrot.slane %v634, 4
        %v678 = vsel %vm579, %v658, %v677
        %v679 = vrot.slane %v662, 4
        %v680 = vsel %vm579, %v679, %v638
        %v681 = vrot.slane %v638, 4
        %v682 = vsel %vm579, %v662, %v681
        %v683 = vrot.slane %v670, 4
        %v684 = vsel %vm579, %v683, %v646
        %v685 = vrot.slane %v646, 4
        %v686 = vsel %vm579, %v670, %v685
        %v687 = vrot.slane %v674, 4
        %v688 = vsel %vm579, %v687, %v650
        %v689 = vrot.slane %v650, 4
        %v690 = vsel %vm579, %v674, %v689
        %v691 = vrot.slane %v567, 4
        %v692 = vsel %vm579, %v691, %v563
        %v693 = vrot.slane %v563, 4
        %v694 = vsel %vm579, %v567, %v693
        %v696 = vunpack.c.l.s4 1983009808
        %v697 = vunpack.c.0.s8 %v696
        %v698 = vperm.slane %v692, %v697
        %v700 = vunpack.c.l.s4 1983009808
        %v701 = vunpack.c.0.s8 %v700
        %v702 = vperm.slane %v694, %v701
        %v703 = vrot.slane %v569, 4
        %v704 = vsel %vm579, %v703, %v565
        %v705 = vrot.slane %v565, 4
        %v706 = vsel %vm579, %v569, %v705
        %v708 = vunpack.c.l.s4 1983009808
        %v709 = vunpack.c.0.s8 %v708
        %v710 = vperm.slane %v704, %v709
        %v712 = vunpack.c.l.s4 1983009808
        %v713 = vunpack.c.0.s8 %v712
        %v714 = vperm.slane %v706, %v713
        %v715 = vrot.slane %v575, 4
        %v716 = vsel %vm579, %v715, %v571
        %v717 = vrot.slane %v571, 4
        %v718 = vsel %vm579, %v575, %v717
        %v720 = vunpack.c.l.s4 1983009808
        %v721 = vunpack.c.0.s8 %v720
        %v722 = vperm.slane %v716, %v721
        %v724 = vunpack.c.l.s4 1983009808
        %v725 = vunpack.c.0.s8 %v724
        %v726 = vperm.slane %v718, %v725
        %v727 = vrot.slane %v577, 4
        %v728 = vsel %vm579, %v727, %v573
        %v729 = vrot.slane %v573, 4
        %v730 = vsel %vm579, %v577, %v729
        %v732 = vunpack.c.l.s4 1983009808
        %v733 = vunpack.c.0.s8 %v732
        %v734 = vperm.slane %v728, %v733
        %v736 = vunpack.c.l.s4 1983009808
        %v737 = vunpack.c.0.s8 %v736
        %v738 = vperm.slane %v730, %v737
        %v739 = vrot.slane %v710, 4
        %v740 = vsel %vm579, %v739, %v698
        %v741 = vrot.slane %v698, 4
        %v742 = vsel %vm579, %v710, %v741
        %v744 = vunpack.c.l.s4 1934713408
        %v745 = vunpack.c.0.s8 %v744
        %v746 = vperm.slane %v740, %v745
        %v748 = vunpack.c.l.s4 1934713408
        %v749 = vunpack.c.0.s8 %v748
        %v750 = vperm.slane %v742, %v749
        %v751 = vrot.slane %v714, 4
        %v752 = vsel %vm579, %v751, %v702
        %v753 = vrot.slane %v702, 4
        %v754 = vsel %vm579, %v714, %v753
        %v756 = vunpack.c.l.s4 1934713408
        %v757 = vunpack.c.0.s8 %v756
        %v758 = vperm.slane %v752, %v757
        %v760 = vunpack.c.l.s4 1934713408
        %v761 = vunpack.c.0.s8 %v760
        %v762 = vperm.slane %v754, %v761
        %v763 = vrot.slane %v734, 4
        %v764 = vsel %vm579, %v763, %v722
        %v765 = vrot.slane %v722, 4
        %v766 = vsel %vm579, %v734, %v765
        %v768 = vunpack.c.l.s4 1934713408
        %v769 = vunpack.c.0.s8 %v768
        %v770 = vperm.slane %v764, %v769
        %v772 = vunpack.c.l.s4 1934713408
        %v773 = vunpack.c.0.s8 %v772
        %v774 = vperm.slane %v766, %v773
        %v775 = vrot.slane %v738, 4
        %v776 = vsel %vm579, %v775, %v726
        %v777 = vrot.slane %v726, 4
        %v778 = vsel %vm579, %v738, %v777
        %v780 = vunpack.c.l.s4 1934713408
        %v781 = vunpack.c.0.s8 %v780
        %v782 = vperm.slane %v776, %v781
        %v784 = vunpack.c.l.s4 1934713408
        %v785 = vunpack.c.0.s8 %v784
        %v786 = vperm.slane %v778, %v785
        %v787 = vrot.slane %v770, 4
        %v788 = vsel %vm579, %v787, %v746
        %v789 = vrot.slane %v746, 4
        %v790 = vsel %vm579, %v770, %v789
        %v791 = vrot.slane %v774, 4
        %v792 = vsel %vm579, %v791, %v750
        %v793 = vrot.slane %v750, 4
        %v794 = vsel %vm579, %v774, %v793
        %v795 = vrot.slane %v782, 4
        %v796 = vsel %vm579, %v795, %v758
        %v797 = vrot.slane %v758, 4
        %v798 = vsel %vm579, %v782, %v797
        %v799 = vrot.slane %v786, 4
        %v800 = vsel %vm579, %v799, %v762
        %v801 = vrot.slane %v762, 4
        %v802 = vsel %vm579, %v786, %v801
        %v803 = vpack.c.bf16 %v676, %v676
        %v804 = vpack.c.bf16 %v678, %v678
        %v805 = vpack.c.bf16 %v680, %v680
        %v806 = vpack.c.bf16 %v682, %v682
        %v807 = vpack.c.bf16 %v684, %v684
        %v808 = vpack.c.bf16 %v686, %v686
        %v809 = vpack.c.bf16 %v688, %v688
        %v810 = vpack.c.bf16 %v690, %v690
        %v811 = vpack.c.bf16 %v788, %v788
        %v812 = vpack.c.bf16 %v790, %v790
        %v813 = vpack.c.bf16 %v792, %v792
        %v814 = vpack.c.bf16 %v794, %v794
        %v815 = vpack.c.bf16 %v796, %v796
        %v816 = vpack.c.bf16 %v798, %v798
        %v817 = vpack.c.bf16 %v800, %v800
        %v818 = vpack.c.bf16 %v802, %v802
        %v820 = vunpack.c.l.b16 %v803
        %v821 = vpack.c.b16 %v820, %v820
        %822 = vrot.lane.b32.xlu0 %v821, 112
        %v823 = vpop.permute.xlu0 %822
        %vm824 = vcmask 64512
        %v826 = vsel %vm824, %v803, 0
        %v829 = vsel %vm824, %v823, 0
        %831 = vmatpush.bf16.xpose.msra.mxu0 0
        %832 = vmatpush.bf16.xpose.msra.mxu0 0
        %833 = vmatpush.bf16.xpose.msra.mxu0 0
        %834 = vmatpush.bf16.xpose.msra.mxu0 0
        %835 = vmatpush.bf16.xpose.msra.mxu0 0
        %836 = vmatpush.bf16.xpose.msra.mxu0 0
        %837 = vmatpush.bf16.xpose.msra.mxu0 0
        %838 = vmatpush.bf16.xpose.msra.mxu0 %v829
        %839 = vmatmul.bf16.gmra.mxu0 %v826
        %v840 = vpop.f32.mrf.mxu0
        %v841 = vadd.f32 0.0, %v840
        %v842 = vpop.f32.mrf.mxu0
        %843 = vdwg.mxu0
        %v845 = vunpack.c.l.b16 %v804
        %v846 = vpack.c.b16 %v845, %v845
        %847 = vrot.lane.b32.xlu0 %v846, 112
        %v848 = vpop.permute.xlu0 %847
        %v850 = vsel %vm824, %v804, 0
        %v853 = vsel %vm824, %v848, 0
        %855 = vmatpush.bf16.xpose.msra.mxu0 0
        %856 = vmatpush.bf16.xpose.msra.mxu0 0
        %857 = vmatpush.bf16.xpose.msra.mxu0 0
        %858 = vmatpush.bf16.xpose.msra.mxu0 0
        %859 = vmatpush.bf16.xpose.msra.mxu0 0
        %860 = vmatpush.bf16.xpose.msra.mxu0 0
        %861 = vmatpush.bf16.xpose.msra.mxu0 0
        %862 = vmatpush.bf16.xpose.msra.mxu0 %v853
        %863 = vmatmul.bf16.gmra.mxu0 %v850
        %v864 = vpop.f32.mrf.mxu0
        %v865 = vadd.f32 0.0, %v864
        %v866 = vpop.f32.mrf.mxu0
        %867 = vdwg.mxu0
        %v869 = vunpack.c.l.b16 %v805
        %v870 = vpack.c.b16 %v869, %v869
        %871 = vrot.lane.b32.xlu0 %v870, 112
        %v872 = vpop.permute.xlu0 %871
        %v874 = vsel %vm824, %v805, 0
        %v877 = vsel %vm824, %v872, 0
        %879 = vmatpush.bf16.xpose.msra.mxu0 0
        %880 = vmatpush.bf16.xpose.msra.mxu0 0
        %881 = vmatpush.bf16.xpose.msra.mxu0 0
        %882 = vmatpush.bf16.xpose.msra.mxu0 0
        %883 = vmatpush.bf16.xpose.msra.mxu0 0
        %884 = vmatpush.bf16.xpose.msra.mxu0 0
        %885 = vmatpush.bf16.xpose.msra.mxu0 0
        %886 = vmatpush.bf16.xpose.msra.mxu0 %v877
        %887 = vmatmul.bf16.gmra.mxu0 %v874
        %v888 = vpop.f32.mrf.mxu0
        %v889 = vadd.f32 0.0, %v888
        %v890 = vpop.f32.mrf.mxu0
        %891 = vdwg.mxu0
        %v893 = vunpack.c.l.b16 %v806
        %v894 = vpack.c.b16 %v893, %v893
        %895 = vrot.lane.b32.xlu0 %v894, 112
        %v896 = vpop.permute.xlu0 %895
        %v898 = vsel %vm824, %v806, 0
        %v901 = vsel %vm824, %v896, 0
        %903 = vmatpush.bf16.xpose.msra.mxu0 0
        %904 = vmatpush.bf16.xpose.msra.mxu0 0
        %905 = vmatpush.bf16.xpose.msra.mxu0 0
        %906 = vmatpush.bf16.xpose.msra.mxu0 0
        %907 = vmatpush.bf16.xpose.msra.mxu0 0
        %908 = vmatpush.bf16.xpose.msra.mxu0 0
        %909 = vmatpush.bf16.xpose.msra.mxu0 0
        %910 = vmatpush.bf16.xpose.msra.mxu0 %v901
        %911 = vmatmul.bf16.gmra.mxu0 %v898
        %v912 = vpop.f32.mrf.mxu0
        %v913 = vadd.f32 0.0, %v912
        %v914 = vpop.f32.mrf.mxu0
        %915 = vdwg.mxu0
        %v917 = vunpack.c.l.b16 %v807
        %v918 = vpack.c.b16 %v917, %v917
        %919 = vrot.lane.b32.xlu0 %v918, 112
        %v920 = vpop.permute.xlu0 %919
        %v922 = vsel %vm824, %v807, 0
        %v925 = vsel %vm824, %v920, 0
        %927 = vmatpush.bf16.xpose.msra.mxu0 0
        %928 = vmatpush.bf16.xpose.msra.mxu0 0
        %929 = vmatpush.bf16.xpose.msra.mxu0 0
        %930 = vmatpush.bf16.xpose.msra.mxu0 0
        %931 = vmatpush.bf16.xpose.msra.mxu0 0
        %932 = vmatpush.bf16.xpose.msra.mxu0 0
        %933 = vmatpush.bf16.xpose.msra.mxu0 0
        %934 = vmatpush.bf16.xpose.msra.mxu0 %v925
        %935 = vmatmul.bf16.gmra.mxu0 %v922
        %v936 = vpop.f32.mrf.mxu0
        %v937 = vadd.f32 0.0, %v936
        %v938 = vpop.f32.mrf.mxu0
        %939 = vdwg.mxu0
        %v941 = vunpack.c.l.b16 %v808
        %v942 = vpack.c.b16 %v941, %v941
        %943 = vrot.lane.b32.xlu0 %v942, 112
        %v944 = vpop.permute.xlu0 %943
        %v946 = vsel %vm824, %v808, 0
        %v949 = vsel %vm824, %v944, 0
        %951 = vmatpush.bf16.xpose.msra.mxu0 0
        %952 = vmatpush.bf16.xpose.msra.mxu0 0
        %953 = vmatpush.bf16.xpose.msra.mxu0 0
        %954 = vmatpush.bf16.xpose.msra.mxu0 0
        %955 = vmatpush.bf16.xpose.msra.mxu0 0
        %956 = vmatpush.bf16.xpose.msra.mxu0 0
        %957 = vmatpush.bf16.xpose.msra.mxu0 0
        %958 = vmatpush.bf16.xpose.msra.mxu0 %v949
        %959 = vmatmul.bf16.gmra.mxu0 %v946
        %v960 = vpop.f32.mrf.mxu0
        %v961 = vadd.f32 0.0, %v960
        %v962 = vpop.f32.mrf.mxu0
        %963 = vdwg.mxu0
        %v965 = vunpack.c.l.b16 %v809
        %v966 = vpack.c.b16 %v965, %v965
        %967 = vrot.lane.b32.xlu0 %v966, 112
        %v968 = vpop.permute.xlu0 %967
        %v970 = vsel %vm824, %v809, 0
        %v973 = vsel %vm824, %v968, 0
        %975 = vmatpush.bf16.xpose.msra.mxu0 0
        %976 = vmatpush.bf16.xpose.msra.mxu0 0
        %977 = vmatpush.bf16.xpose.msra.mxu0 0
        %978 = vmatpush.bf16.xpose.msra.mxu0 0
        %979 = vmatpush.bf16.xpose.msra.mxu0 0
        %980 = vmatpush.bf16.xpose.msra.mxu0 0
        %981 = vmatpush.bf16.xpose.msra.mxu0 0
        %982 = vmatpush.bf16.xpose.msra.mxu0 %v973
        %983 = vmatmul.bf16.gmra.mxu0 %v970
        %v984 = vpop.f32.mrf.mxu0
        %v985 = vadd.f32 0.0, %v984
        %v986 = vpop.f32.mrf.mxu0
        %987 = vdwg.mxu0
        %v989 = vunpack.c.l.b16 %v810
        %v990 = vpack.c.b16 %v989, %v989
        %991 = vrot.lane.b32.xlu0 %v990, 112
        %v992 = vpop.permute.xlu0 %991
        %v994 = vsel %vm824, %v810, 0
        %v997 = vsel %vm824, %v992, 0
        %999 = vmatpush.bf16.xpose.msra.mxu0 0
        %1000 = vmatpush.bf16.xpose.msra.mxu0 0
        %1001 = vmatpush.bf16.xpose.msra.mxu0 0
        %1002 = vmatpush.bf16.xpose.msra.mxu0 0
        %1003 = vmatpush.bf16.xpose.msra.mxu0 0
        %1004 = vmatpush.bf16.xpose.msra.mxu0 0
        %1005 = vmatpush.bf16.xpose.msra.mxu0 0
        %1006 = vmatpush.bf16.xpose.msra.mxu0 %v997
        %1007 = vmatmul.bf16.gmra.mxu0 %v994
        %v1008 = vpop.f32.mrf.mxu0
        %v1009 = vadd.f32 0.0, %v1008
        %v1010 = vpop.f32.mrf.mxu0
        %1011 = vdwg.mxu0
        %v1013 = vunpack.c.l.b16 %v811
        %v1014 = vpack.c.b16 %v1013, %v1013
        %1015 = vrot.lane.b32.xlu0 %v1014, 112
        %v1016 = vpop.permute.xlu0 %1015
        %v1018 = vsel %vm824, %v811, 0
        %v1021 = vsel %vm824, %v1016, 0
        %1023 = vmatpush.bf16.xpose.msra.mxu0 0
        %1024 = vmatpush.bf16.xpose.msra.mxu0 0
        %1025 = vmatpush.bf16.xpose.msra.mxu0 0
        %1026 = vmatpush.bf16.xpose.msra.mxu0 0
        %1027 = vmatpush.bf16.xpose.msra.mxu0 0
        %1028 = vmatpush.bf16.xpose.msra.mxu0 0
        %1029 = vmatpush.bf16.xpose.msra.mxu0 0
        %1030 = vmatpush.bf16.xpose.msra.mxu0 %v1021
        %1031 = vmatmul.bf16.gmra.mxu0 %v1018
        %v1032 = vpop.f32.mrf.mxu0
        %v1033 = vadd.f32 0.0, %v1032
        %v1034 = vpop.f32.mrf.mxu0
        %1035 = vdwg.mxu0
        %v1037 = vunpack.c.l.b16 %v812
        %v1038 = vpack.c.b16 %v1037, %v1037
        %1039 = vrot.lane.b32.xlu0 %v1038, 112
        %v1040 = vpop.permute.xlu0 %1039
        %v1042 = vsel %vm824, %v812, 0
        %v1045 = vsel %vm824, %v1040, 0
        %1047 = vmatpush.bf16.xpose.msra.mxu0 0
        %1048 = vmatpush.bf16.xpose.msra.mxu0 0
        %1049 = vmatpush.bf16.xpose.msra.mxu0 0
        %1050 = vmatpush.bf16.xpose.msra.mxu0 0
        %1051 = vmatpush.bf16.xpose.msra.mxu0 0
        %1052 = vmatpush.bf16.xpose.msra.mxu0 0
        %1053 = vmatpush.bf16.xpose.msra.mxu0 0
        %1054 = vmatpush.bf16.xpose.msra.mxu0 %v1045
        %1055 = vmatmul.bf16.gmra.mxu0 %v1042
        %v1056 = vpop.f32.mrf.mxu0
        %v1057 = vadd.f32 0.0, %v1056
        %v1058 = vpop.f32.mrf.mxu0
        %1059 = vdwg.mxu0
        %v1061 = vunpack.c.l.b16 %v813
        %v1062 = vpack.c.b16 %v1061, %v1061
        %1063 = vrot.lane.b32.xlu0 %v1062, 112
        %v1064 = vpop.permute.xlu0 %1063
        %v1066 = vsel %vm824, %v813, 0
        %v1069 = vsel %vm824, %v1064, 0
        %1071 = vmatpush.bf16.xpose.msra.mxu0 0
        %1072 = vmatpush.bf16.xpose.msra.mxu0 0
        %1073 = vmatpush.bf16.xpose.msra.mxu0 0
        %1074 = vmatpush.bf16.xpose.msra.mxu0 0
        %1075 = vmatpush.bf16.xpose.msra.mxu0 0
        %1076 = vmatpush.bf16.xpose.msra.mxu0 0
        %1077 = vmatpush.bf16.xpose.msra.mxu0 0
        %1078 = vmatpush.bf16.xpose.msra.mxu0 %v1069
        %1079 = vmatmul.bf16.gmra.mxu0 %v1066
        %v1080 = vpop.f32.mrf.mxu0
        %v1081 = vadd.f32 0.0, %v1080
        %v1082 = vpop.f32.mrf.mxu0
        %1083 = vdwg.mxu0
        %v1085 = vunpack.c.l.b16 %v814
        %v1086 = vpack.c.b16 %v1085, %v1085
        %1087 = vrot.lane.b32.xlu0 %v1086, 112
        %v1088 = vpop.permute.xlu0 %1087
        %v1090 = vsel %vm824, %v814, 0
        %v1093 = vsel %vm824, %v1088, 0
        %1095 = vmatpush.bf16.xpose.msra.mxu0 0
        %1096 = vmatpush.bf16.xpose.msra.mxu0 0
        %1097 = vmatpush.bf16.xpose.msra.mxu0 0
        %1098 = vmatpush.bf16.xpose.msra.mxu0 0
        %1099 = vmatpush.bf16.xpose.msra.mxu0 0
        %1100 = vmatpush.bf16.xpose.msra.mxu0 0
        %1101 = vmatpush.bf16.xpose.msra.mxu0 0
        %1102 = vmatpush.bf16.xpose.msra.mxu0 %v1093
        %1103 = vmatmul.bf16.gmra.mxu0 %v1090
        %v1104 = vpop.f32.mrf.mxu0
        %v1105 = vadd.f32 0.0, %v1104
        %v1106 = vpop.f32.mrf.mxu0
        %1107 = vdwg.mxu0
        %v1109 = vunpack.c.l.b16 %v815
        %v1110 = vpack.c.b16 %v1109, %v1109
        %1111 = vrot.lane.b32.xlu0 %v1110, 112
        %v1112 = vpop.permute.xlu0 %1111
        %v1114 = vsel %vm824, %v815, 0
        %v1117 = vsel %vm824, %v1112, 0
        %1119 = vmatpush.bf16.xpose.msra.mxu0 0
        %1120 = vmatpush.bf16.xpose.msra.mxu0 0
        %1121 = vmatpush.bf16.xpose.msra.mxu0 0
        %1122 = vmatpush.bf16.xpose.msra.mxu0 0
        %1123 = vmatpush.bf16.xpose.msra.mxu0 0
        %1124 = vmatpush.bf16.xpose.msra.mxu0 0
        %1125 = vmatpush.bf16.xpose.msra.mxu0 0
        %1126 = vmatpush.bf16.xpose.msra.mxu0 %v1117
        %1127 = vmatmul.bf16.gmra.mxu0 %v1114
        %v1128 = vpop.f32.mrf.mxu0
        %v1129 = vadd.f32 0.0, %v1128
        %v1130 = vpop.f32.mrf.mxu0
        %1131 = vdwg.mxu0
        %v1133 = vunpack.c.l.b16 %v816
        %v1134 = vpack.c.b16 %v1133, %v1133
        %1135 = vrot.lane.b32.xlu0 %v1134, 112
        %v1136 = vpop.permute.xlu0 %1135
        %v1138 = vsel %vm824, %v816, 0
        %v1141 = vsel %vm824, %v1136, 0
        %1143 = vmatpush.bf16.xpose.msra.mxu0 0
        %1144 = vmatpush.bf16.xpose.msra.mxu0 0
        %1145 = vmatpush.bf16.xpose.msra.mxu0 0
        %1146 = vmatpush.bf16.xpose.msra.mxu0 0
        %1147 = vmatpush.bf16.xpose.msra.mxu0 0
        %1148 = vmatpush.bf16.xpose.msra.mxu0 0
        %1149 = vmatpush.bf16.xpose.msra.mxu0 0
        %1150 = vmatpush.bf16.xpose.msra.mxu0 %v1141
        %1151 = vmatmul.bf16.gmra.mxu0 %v1138
        %v1152 = vpop.f32.mrf.mxu0
        %v1153 = vadd.f32 0.0, %v1152
        %v1154 = vpop.f32.mrf.mxu0
        %1155 = vdwg.mxu0
        %v1157 = vunpack.c.l.b16 %v817
        %v1158 = vpack.c.b16 %v1157, %v1157
        %1159 = vrot.lane.b32.xlu0 %v1158, 112
        %v1160 = vpop.permute.xlu0 %1159
        %v1162 = vsel %vm824, %v817, 0
        %v1165 = vsel %vm824, %v1160, 0
        %1167 = vmatpush.bf16.xpose.msra.mxu0 0
        %1168 = vmatpush.bf16.xpose.msra.mxu0 0
        %1169 = vmatpush.bf16.xpose.msra.mxu0 0
        %1170 = vmatpush.bf16.xpose.msra.mxu0 0
        %1171 = vmatpush.bf16.xpose.msra.mxu0 0
        %1172 = vmatpush.bf16.xpose.msra.mxu0 0
        %1173 = vmatpush.bf16.xpose.msra.mxu0 0
        %1174 = vmatpush.bf16.xpose.msra.mxu0 %v1165
        %1175 = vmatmul.bf16.gmra.mxu0 %v1162
        %v1176 = vpop.f32.mrf.mxu0
        %v1177 = vadd.f32 0.0, %v1176
        %v1178 = vpop.f32.mrf.mxu0
        %1179 = vdwg.mxu0
        %v1181 = vunpack.c.l.b16 %v818
        %v1182 = vpack.c.b16 %v1181, %v1181
        %1183 = vrot.lane.b32.xlu0 %v1182, 112
        %v1184 = vpop.permute.xlu0 %1183
        %v1186 = vsel %vm824, %v818, 0
        %v1189 = vsel %vm824, %v1184, 0
        %1191 = vmatpush.bf16.xpose.msra.mxu0 0
        %1192 = vmatpush.bf16.xpose.msra.mxu0 0
        %1193 = vmatpush.bf16.xpose.msra.mxu0 0
        %1194 = vmatpush.bf16.xpose.msra.mxu0 0
        %1195 = vmatpush.bf16.xpose.msra.mxu0 0
        %1196 = vmatpush.bf16.xpose.msra.mxu0 0
        %1197 = vmatpush.bf16.xpose.msra.mxu0 0
        %1198 = vmatpush.bf16.xpose.msra.mxu0 %v1189
        %1199 = vmatmul.bf16.gmra.mxu0 %v1186
        %v1200 = vpop.f32.mrf.mxu0
        %v1201 = vadd.f32 0.0, %v1200
        %v1202 = vpop.f32.mrf.mxu0
        %1203 = vdwg.mxu0
        %v1204 = vmul.f32 %v841, 0.35355338
        %v1205 = vmul.f32 %v865, 0.35355338
        %v1206 = vmul.f32 %v889, 0.35355338
        %v1207 = vmul.f32 %v913, 0.35355338
        %v1208 = vmul.f32 %v937, 0.35355338
        %v1209 = vmul.f32 %v961, 0.35355338
        %v1210 = vmul.f32 %v985, 0.35355338
        %v1211 = vmul.f32 %v1009, 0.35355338
        %v1212 = vmul.f32 %v1033, 0.35355338
        %v1213 = vmul.f32 %v1057, 0.35355338
        %v1214 = vmul.f32 %v1081, 0.35355338
        %v1215 = vmul.f32 %v1105, 0.35355338
        %v1216 = vmul.f32 %v1129, 0.35355338
        %v1217 = vmul.f32 %v1153, 0.35355338
        %v1218 = vmul.f32 %v1177, 0.35355338
        %v1219 = vmul.f32 %v1201, 0.35355338
        %v1220 = vsel %vm824, %v1204, -inf
        %1221 = vmax.xlane.f32.xlu0 %v1220
        %v1222 = vpop.xlane.xlu0 %1221
        %v1223 = vsel %vm824, %v1205, -inf
        %1224 = vmax.xlane.f32.xlu0 %v1223
        %v1225 = vpop.xlane.xlu0 %1224
        %v1226 = vsel %vm824, %v1206, -inf
        %1227 = vmax.xlane.f32.xlu0 %v1226
        %v1228 = vpop.xlane.xlu0 %1227
        %v1229 = vsel %vm824, %v1207, -inf
        %1230 = vmax.xlane.f32.xlu0 %v1229
        %v1231 = vpop.xlane.xlu0 %1230
        %v1232 = vsel %vm824, %v1208, -inf
        %1233 = vmax.xlane.f32.xlu0 %v1232
        %v1234 = vpop.xlane.xlu0 %1233
        %v1235 = vsel %vm824, %v1209, -inf
        %1236 = vmax.xlane.f32.xlu0 %v1235
        %v1237 = vpop.xlane.xlu0 %1236
        %v1238 = vsel %vm824, %v1210, -inf
        %1239 = vmax.xlane.f32.xlu0 %v1238
        %v1240 = vpop.xlane.xlu0 %1239
        %v1241 = vsel %vm824, %v1211, -inf
        %1242 = vmax.xlane.f32.xlu0 %v1241
        %v1243 = vpop.xlane.xlu0 %1242
        %v1244 = vsel %vm824, %v1212, -inf
        %1245 = vmax.xlane.f32.xlu0 %v1244
        %v1246 = vpop.xlane.xlu0 %1245
        %v1247 = vsel %vm824, %v1213, -inf
        %1248 = vmax.xlane.f32.xlu0 %v1247
        %v1249 = vpop.xlane.xlu0 %1248
        %v1250 = vsel %vm824, %v1214, -inf
        %1251 = vmax.xlane.f32.xlu0 %v1250
        %v1252 = vpop.xlane.xlu0 %1251
        %v1253 = vsel %vm824, %v1215, -inf
        %1254 = vmax.xlane.f32.xlu0 %v1253
        %v1255 = vpop.xlane.xlu0 %1254
        %v1256 = vsel %vm824, %v1216, -inf
        %1257 = vmax.xlane.f32.xlu0 %v1256
        %v1258 = vpop.xlane.xlu0 %1257
        %v1259 = vsel %vm824, %v1217, -inf
        %1260 = vmax.xlane.f32.xlu0 %v1259
        %v1261 = vpop.xlane.xlu0 %1260
        %v1262 = vsel %vm824, %v1218, -inf
        %1263 = vmax.xlane.f32.xlu0 %v1262
        %v1264 = vpop.xlane.xlu0 %1263
        %v1265 = vsel %vm824, %v1219, -inf
        %1266 = vmax.xlane.f32.xlu0 %v1265
        %v1267 = vpop.xlane.xlu0 %1266
        %v1268 = vsub.f32 %v1204, %v1222
        %v1269 = vsub.f32 %v1205, %v1225
        %v1270 = vsub.f32 %v1206, %v1228
        %v1271 = vsub.f32 %v1207, %v1231
        %v1272 = vsub.f32 %v1208, %v1234
        %v1273 = vsub.f32 %v1209, %v1237
        %v1274 = vsub.f32 %v1210, %v1240
        %v1275 = vsub.f32 %v1211, %v1243
        %v1276 = vsub.f32 %v1212, %v1246
        %v1277 = vsub.f32 %v1213, %v1249
        %v1278 = vsub.f32 %v1214, %v1252
        %v1279 = vsub.f32 %v1215, %v1255
        %v1280 = vsub.f32 %v1216, %v1258
        %v1281 = vsub.f32 %v1217, %v1261
        %v1282 = vsub.f32 %v1218, %v1264
        %v1283 = vsub.f32 %v1219, %v1267
        %v1284 = vmul.f32 %v1268, 1.442695
        %v1285 = vpow.pop %v1284
        %v1286 = vmul.f32 %v1269, 1.442695
        %v1287 = vpow.pop %v1286
        %v1288 = vmul.f32 %v1270, 1.442695
        %v1289 = vpow.pop %v1288
        %v1290 = vmul.f32 %v1271, 1.442695
        %v1291 = vpow.pop %v1290
        %v1292 = vmul.f32 %v1272, 1.442695
        %v1293 = vpow.pop %v1292
        %v1294 = vmul.f32 %v1273, 1.442695
        %v1295 = vpow.pop %v1294
        %v1296 = vmul.f32 %v1274, 1.442695
        %v1297 = vpow.pop %v1296
        %v1298 = vmul.f32 %v1275, 1.442695
        %v1299 = vpow.pop %v1298
        %v1300 = vmul.f32 %v1276, 1.442695
        %v1301 = vpow.pop %v1300
        %v1302 = vmul.f32 %v1277, 1.442695
        %v1303 = vpow.pop %v1302
        %v1304 = vmul.f32 %v1278, 1.442695
        %v1305 = vpow.pop %v1304
        %v1306 = vmul.f32 %v1279, 1.442695
        %v1307 = vpow.pop %v1306
        %v1308 = vmul.f32 %v1280, 1.442695
        %v1309 = vpow.pop %v1308
        %v1310 = vmul.f32 %v1281, 1.442695
        %v1311 = vpow.pop %v1310
        %v1312 = vmul.f32 %v1282, 1.442695
        %v1313 = vpow.pop %v1312
        %v1314 = vmul.f32 %v1283, 1.442695
        %v1315 = vpow.pop %v1314
        %v1316 = vsel %vm824, %v1285, 0.0
        %1317 = vadd.xlane.f32.xlu0 %v1316
        %v1318 = vpop.xlane.xlu0 %1317
        %v1319 = vsel %vm824, %v1287, 0.0
        %1320 = vadd.xlane.f32.xlu0 %v1319
        %v1321 = vpop.xlane.xlu0 %1320
        %v1322 = vsel %vm824, %v1289, 0.0
        %1323 = vadd.xlane.f32.xlu0 %v1322
        %v1324 = vpop.xlane.xlu0 %1323
        %v1325 = vsel %vm824, %v1291, 0.0
        %1326 = vadd.xlane.f32.xlu0 %v1325
        %v1327 = vpop.xlane.xlu0 %1326
        %v1328 = vsel %vm824, %v1293, 0.0
        %1329 = vadd.xlane.f32.xlu0 %v1328
        %v1330 = vpop.xlane.xlu0 %1329
        %v1331 = vsel %vm824, %v1295, 0.0
        %1332 = vadd.xlane.f32.xlu0 %v1331
        %v1333 = vpop.xlane.xlu0 %1332
        %v1334 = vsel %vm824, %v1297, 0.0
        %1335 = vadd.xlane.f32.xlu0 %v1334
        %v1336 = vpop.xlane.xlu0 %1335
        %v1337 = vsel %vm824, %v1299, 0.0
        %1338 = vadd.xlane.f32.xlu0 %v1337
        %v1339 = vpop.xlane.xlu0 %1338
        %v1340 = vsel %vm824, %v1301, 0.0
        %1341 = vadd.xlane.f32.xlu0 %v1340
        %v1342 = vpop.xlane.xlu0 %1341
        %v1343 = vsel %vm824, %v1303, 0.0
        %1344 = vadd.xlane.f32.xlu0 %v1343
        %v1345 = vpop.xlane.xlu0 %1344
        %v1346 = vsel %vm824, %v1305, 0.0
        %1347 = vadd.xlane.f32.xlu0 %v1346
        %v1348 = vpop.xlane.xlu0 %1347
        %v1349 = vsel %vm824, %v1307, 0.0
        %1350 = vadd.xlane.f32.xlu0 %v1349
        %v1351 = vpop.xlane.xlu0 %1350
        %v1352 = vsel %vm824, %v1309, 0.0
        %1353 = vadd.xlane.f32.xlu0 %v1352
        %v1354 = vpop.xlane.xlu0 %1353
        %v1355 = vsel %vm824, %v1311, 0.0
        %1356 = vadd.xlane.f32.xlu0 %v1355
        %v1357 = vpop.xlane.xlu0 %1356
        %v1358 = vsel %vm824, %v1313, 0.0
        %1359 = vadd.xlane.f32.xlu0 %v1358
        %v1360 = vpop.xlane.xlu0 %1359
        %v1361 = vsel %vm824, %v1315, 0.0
        %1362 = vadd.xlane.f32.xlu0 %v1361
        %v1363 = vpop.xlane.xlu0 %1362
        %v1364 = vrcp.pop %v1318
        %v1365 = vmul.f32 %v1318, %v1364
        %v1366 = vsub.f32 1.0, %v1365
        %v1367 = vmul.f32 %v1364, %v1366
        %v1368 = vadd.f32 %v1364, %v1367
        %vm1369 = vweird.f32 %v1318
        %vm1370 = vweird.f32 %v1364
        %vm1371 = vmor %vm1369, %vm1370
        %v1372 = vsel %vm1371, %v1364, %v1368
        %v1373 = vand.u32 2147483647, %v1318
        %vm1374 = vcmp.eq.f32.partialorder %v1373, 8.507059e+37
        %v1375 = vand.u32 %v1318, 2147483648
        %v1376 = vor.u32 1.1754944e-38, %v1375
        %v1377 = vsel %vm1374, %v1376, %v1372
        %v1378 = vrcp.pop %v1321
        %v1379 = vmul.f32 %v1321, %v1378
        %v1380 = vsub.f32 1.0, %v1379
        %v1381 = vmul.f32 %v1378, %v1380
        %v1382 = vadd.f32 %v1378, %v1381
        %vm1383 = vweird.f32 %v1321
        %vm1384 = vweird.f32 %v1378
        %vm1385 = vmor %vm1383, %vm1384
        %v1386 = vsel %vm1385, %v1378, %v1382
        %v1387 = vand.u32 2147483647, %v1321
        %vm1388 = vcmp.eq.f32.partialorder %v1387, 8.507059e+37
        %v1389 = vand.u32 %v1321, 2147483648
        %v1390 = vor.u32 1.1754944e-38, %v1389
        %v1391 = vsel %vm1388, %v1390, %v1386
        %v1392 = vrcp.pop %v1324
        %v1393 = vmul.f32 %v1324, %v1392
        %v1394 = vsub.f32 1.0, %v1393
        %v1395 = vmul.f32 %v1392, %v1394
        %v1396 = vadd.f32 %v1392, %v1395
        %vm1397 = vweird.f32 %v1324
        %vm1398 = vweird.f32 %v1392
        %vm1399 = vmor %vm1397, %vm1398
        %v1400 = vsel %vm1399, %v1392, %v1396
        %v1401 = vand.u32 2147483647, %v1324
        %vm1402 = vcmp.eq.f32.partialorder %v1401, 8.507059e+37
        %v1403 = vand.u32 %v1324, 2147483648
        %v1404 = vor.u32 1.1754944e-38, %v1403
        %v1405 = vsel %vm1402, %v1404, %v1400
        %v1406 = vrcp.pop %v1327
        %v1407 = vmul.f32 %v1327, %v1406
        %v1408 = vsub.f32 1.0, %v1407
        %v1409 = vmul.f32 %v1406, %v1408
        %v1410 = vadd.f32 %v1406, %v1409
        %vm1411 = vweird.f32 %v1327
        %vm1412 = vweird.f32 %v1406
        %vm1413 = vmor %vm1411, %vm1412
        %v1414 = vsel %vm1413, %v1406, %v1410
        %v1415 = vand.u32 2147483647, %v1327
        %vm1416 = vcmp.eq.f32.partialorder %v1415, 8.507059e+37
        %v1417 = vand.u32 %v1327, 2147483648
        %v1418 = vor.u32 1.1754944e-38, %v1417
        %v1419 = vsel %vm1416, %v1418, %v1414
        %v1420 = vrcp.pop %v1330
        %v1421 = vmul.f32 %v1330, %v1420
        %v1422 = vsub.f32 1.0, %v1421
        %v1423 = vmul.f32 %v1420, %v1422
        %v1424 = vadd.f32 %v1420, %v1423
        %vm1425 = vweird.f32 %v1330
        %vm1426 = vweird.f32 %v1420
        %vm1427 = vmor %vm1425, %vm1426
        %v1428 = vsel %vm1427, %v1420, %v1424
        %v1429 = vand.u32 2147483647, %v1330
        %vm1430 = vcmp.eq.f32.partialorder %v1429, 8.507059e+37
        %v1431 = vand.u32 %v1330, 2147483648
        %v1432 = vor.u32 1.1754944e-38, %v1431
        %v1433 = vsel %vm1430, %v1432, %v1428
        %v1434 = vrcp.pop %v1333
        %v1435 = vmul.f32 %v1333, %v1434
        %v1436 = vsub.f32 1.0, %v1435
        %v1437 = vmul.f32 %v1434, %v1436
        %v1438 = vadd.f32 %v1434, %v1437
        %vm1439 = vweird.f32 %v1333
        %vm1440 = vweird.f32 %v1434
        %vm1441 = vmor %vm1439, %vm1440
        %v1442 = vsel %vm1441, %v1434, %v1438
        %v1443 = vand.u32 2147483647, %v1333
        %vm1444 = vcmp.eq.f32.partialorder %v1443, 8.507059e+37
        %v1445 = vand.u32 %v1333, 2147483648
        %v1446 = vor.u32 1.1754944e-38, %v1445
        %v1447 = vsel %vm1444, %v1446, %v1442
        %v1448 = vrcp.pop %v1336
        %v1449 = vmul.f32 %v1336, %v1448
        %v1450 = vsub.f32 1.0, %v1449
        %v1451 = vmul.f32 %v1448, %v1450
        %v1452 = vadd.f32 %v1448, %v1451
        %vm1453 = vweird.f32 %v1336
        %vm1454 = vweird.f32 %v1448
        %vm1455 = vmor %vm1453, %vm1454
        %v1456 = vsel %vm1455, %v1448, %v1452
        %v1457 = vand.u32 2147483647, %v1336
        %vm1458 = vcmp.eq.f32.partialorder %v1457, 8.507059e+37
        %v1459 = vand.u32 %v1336, 2147483648
        %v1460 = vor.u32 1.1754944e-38, %v1459
        %v1461 = vsel %vm1458, %v1460, %v1456
        %v1462 = vrcp.pop %v1339
        %v1463 = vmul.f32 %v1339, %v1462
        %v1464 = vsub.f32 1.0, %v1463
        %v1465 = vmul.f32 %v1462, %v1464
        %v1466 = vadd.f32 %v1462, %v1465
        %vm1467 = vweird.f32 %v1339
        %vm1468 = vweird.f32 %v1462
        %vm1469 = vmor %vm1467, %vm1468
        %v1470 = vsel %vm1469, %v1462, %v1466
        %v1471 = vand.u32 2147483647, %v1339
        %vm1472 = vcmp.eq.f32.partialorder %v1471, 8.507059e+37
        %v1473 = vand.u32 %v1339, 2147483648
        %v1474 = vor.u32 1.1754944e-38, %v1473
        %v1475 = vsel %vm1472, %v1474, %v1470
        %v1476 = vrcp.pop %v1342
        %v1477 = vmul.f32 %v1342, %v1476
        %v1478 = vsub.f32 1.0, %v1477
        %v1479 = vmul.f32 %v1476, %v1478
        %v1480 = vadd.f32 %v1476, %v1479
        %vm1481 = vweird.f32 %v1342
        %vm1482 = vweird.f32 %v1476
        %vm1483 = vmor %vm1481, %vm1482
        %v1484 = vsel %vm1483, %v1476, %v1480
        %v1485 = vand.u32 2147483647, %v1342
        %vm1486 = vcmp.eq.f32.partialorder %v1485, 8.507059e+37
        %v1487 = vand.u32 %v1342, 2147483648
        %v1488 = vor.u32 1.1754944e-38, %v1487
        %v1489 = vsel %vm1486, %v1488, %v1484
        %v1490 = vrcp.pop %v1345
        %v1491 = vmul.f32 %v1345, %v1490
        %v1492 = vsub.f32 1.0, %v1491
        %v1493 = vmul.f32 %v1490, %v1492
        %v1494 = vadd.f32 %v1490, %v1493
        %vm1495 = vweird.f32 %v1345
        %vm1496 = vweird.f32 %v1490
        %vm1497 = vmor %vm1495, %vm1496
        %v1498 = vsel %vm1497, %v1490, %v1494
        %v1499 = vand.u32 2147483647, %v1345
        %vm1500 = vcmp.eq.f32.partialorder %v1499, 8.507059e+37
        %v1501 = vand.u32 %v1345, 2147483648
        %v1502 = vor.u32 1.1754944e-38, %v1501
        %v1503 = vsel %vm1500, %v1502, %v1498
        %v1504 = vrcp.pop %v1348
        %v1505 = vmul.f32 %v1348, %v1504
        %v1506 = vsub.f32 1.0, %v1505
        %v1507 = vmul.f32 %v1504, %v1506
        %v1508 = vadd.f32 %v1504, %v1507
        %vm1509 = vweird.f32 %v1348
        %vm1510 = vweird.f32 %v1504
        %vm1511 = vmor %vm1509, %vm1510
        %v1512 = vsel %vm1511, %v1504, %v1508
        %v1513 = vand.u32 2147483647, %v1348
        %vm1514 = vcmp.eq.f32.partialorder %v1513, 8.507059e+37
        %v1515 = vand.u32 %v1348, 2147483648
        %v1516 = vor.u32 1.1754944e-38, %v1515
        %v1517 = vsel %vm1514, %v1516, %v1512
        %v1518 = vrcp.pop %v1351
        %v1519 = vmul.f32 %v1351, %v1518
        %v1520 = vsub.f32 1.0, %v1519
        %v1521 = vmul.f32 %v1518, %v1520
        %v1522 = vadd.f32 %v1518, %v1521
        %vm1523 = vweird.f32 %v1351
        %vm1524 = vweird.f32 %v1518
        %vm1525 = vmor %vm1523, %vm1524
        %v1526 = vsel %vm1525, %v1518, %v1522
        %v1527 = vand.u32 2147483647, %v1351
        %vm1528 = vcmp.eq.f32.partialorder %v1527, 8.507059e+37
        %v1529 = vand.u32 %v1351, 2147483648
        %v1530 = vor.u32 1.1754944e-38, %v1529
        %v1531 = vsel %vm1528, %v1530, %v1526
        %v1532 = vrcp.pop %v1354
        %v1533 = vmul.f32 %v1354, %v1532
        %v1534 = vsub.f32 1.0, %v1533
        %v1535 = vmul.f32 %v1532, %v1534
        %v1536 = vadd.f32 %v1532, %v1535
        %vm1537 = vweird.f32 %v1354
        %vm1538 = vweird.f32 %v1532
        %vm1539 = vmor %vm1537, %vm1538
        %v1540 = vsel %vm1539, %v1532, %v1536
        %v1541 = vand.u32 2147483647, %v1354
        %vm1542 = vcmp.eq.f32.partialorder %v1541, 8.507059e+37
        %v1543 = vand.u32 %v1354, 2147483648
        %v1544 = vor.u32 1.1754944e-38, %v1543
        %v1545 = vsel %vm1542, %v1544, %v1540
        %v1546 = vrcp.pop %v1357
        %v1547 = vmul.f32 %v1357, %v1546
        %v1548 = vsub.f32 1.0, %v1547
        %v1549 = vmul.f32 %v1546, %v1548
        %v1550 = vadd.f32 %v1546, %v1549
        %vm1551 = vweird.f32 %v1357
        %vm1552 = vweird.f32 %v1546
        %vm1553 = vmor %vm1551, %vm1552
        %v1554 = vsel %vm1553, %v1546, %v1550
        %v1555 = vand.u32 2147483647, %v1357
        %vm1556 = vcmp.eq.f32.partialorder %v1555, 8.507059e+37
        %v1557 = vand.u32 %v1357, 2147483648
        %v1558 = vor.u32 1.1754944e-38, %v1557
        %v1559 = vsel %vm1556, %v1558, %v1554
        %v1560 = vrcp.pop %v1360
        %v1561 = vmul.f32 %v1360, %v1560
        %v1562 = vsub.f32 1.0, %v1561
        %v1563 = vmul.f32 %v1560, %v1562
        %v1564 = vadd.f32 %v1560, %v1563
        %vm1565 = vweird.f32 %v1360
        %vm1566 = vweird.f32 %v1560
        %vm1567 = vmor %vm1565, %vm1566
        %v1568 = vsel %vm1567, %v1560, %v1564
        %v1569 = vand.u32 2147483647, %v1360
        %vm1570 = vcmp.eq.f32.partialorder %v1569, 8.507059e+37
        %v1571 = vand.u32 %v1360, 2147483648
        %v1572 = vor.u32 1.1754944e-38, %v1571
        %v1573 = vsel %vm1570, %v1572, %v1568
        %v1574 = vrcp.pop %v1363
        %v1575 = vmul.f32 %v1363, %v1574
        %v1576 = vsub.f32 1.0, %v1575
        %v1577 = vmul.f32 %v1574, %v1576
        %v1578 = vadd.f32 %v1574, %v1577
        %vm1579 = vweird.f32 %v1363
        %vm1580 = vweird.f32 %v1574
        %vm1581 = vmor %vm1579, %vm1580
        %v1582 = vsel %vm1581, %v1574, %v1578
        %v1583 = vand.u32 2147483647, %v1363
        %vm1584 = vcmp.eq.f32.partialorder %v1583, 8.507059e+37
        %v1585 = vand.u32 %v1363, 2147483648
        %v1586 = vor.u32 1.1754944e-38, %v1585
        %v1587 = vsel %vm1584, %v1586, %v1582
        %v1588 = vmul.f32 %v1285, %v1377
        %v1589 = vmul.f32 %v1287, %v1391
        %v1590 = vmul.f32 %v1289, %v1405
        %v1591 = vmul.f32 %v1291, %v1419
        %v1592 = vmul.f32 %v1293, %v1433
        %v1593 = vmul.f32 %v1295, %v1447
        %v1594 = vmul.f32 %v1297, %v1461
        %v1595 = vmul.f32 %v1299, %v1475
        %v1596 = vmul.f32 %v1301, %v1489
        %v1597 = vmul.f32 %v1303, %v1503
        %v1598 = vmul.f32 %v1305, %v1517
        %v1599 = vmul.f32 %v1307, %v1531
        %v1600 = vmul.f32 %v1309, %v1545
        %v1601 = vmul.f32 %v1311, %v1559
        %v1602 = vmul.f32 %v1313, %v1573
        %v1603 = vmul.f32 %v1315, %v1587
        %v1604 = vpack.c.bf16 %v1588, %v1588
        %v1605 = vpack.c.bf16 %v1589, %v1589
        %v1606 = vpack.c.bf16 %v1590, %v1590
        %v1607 = vpack.c.bf16 %v1591, %v1591
        %v1608 = vpack.c.bf16 %v1592, %v1592
        %v1609 = vpack.c.bf16 %v1593, %v1593
        %v1610 = vpack.c.bf16 %v1594, %v1594
        %v1611 = vpack.c.bf16 %v1595, %v1595
        %v1612 = vpack.c.bf16 %v1596, %v1596
        %v1613 = vpack.c.bf16 %v1597, %v1597
        %v1614 = vpack.c.bf16 %v1598, %v1598
        %v1615 = vpack.c.bf16 %v1599, %v1599
        %v1616 = vpack.c.bf16 %v1600, %v1600
        %v1617 = vpack.c.bf16 %v1601, %v1601
        %v1618 = vpack.c.bf16 %v1602, %v1602
        %v1619 = vpack.c.bf16 %v1603, %v1603
        %1620 = vrot.lane.b32.xlu0 %v821, 96
        %v1621 = vpop.permute.xlu0 %1620
        %v1623 = vsel %vm824, %v1604, 0
        %vm1625 = vcmask 1043456
        %v1627 = vsel %vm1625, %v1621, 0
        %1629 = vmatpush.bf16.msra.mxu0 0
        %1630 = vmatpush.bf16.msra.mxu0 0
        %1631 = vmatpush.bf16.msra.mxu0 0
        %1632 = vmatpush.bf16.msra.mxu0 0
        %1633 = vmatpush.bf16.msra.mxu0 0
        %1634 = vmatpush.bf16.msra.mxu0 0
        %1635 = vmatpush.bf16.msra.mxu0 0
        %1636 = vmatpush.bf16.msra.mxu0 %v1627
        %1637 = vmatmul.bf16.gmra.mxu0 %v1623
        %v1638 = vpop.f32.mrf.mxu0
        %v1639 = vadd.f32 0.0, %v1638
        %v1640 = vpop.f32.mrf.mxu0
        %1641 = vdwg.mxu0
        %1642 = vrot.lane.b32.xlu0 %v846, 96
        %v1643 = vpop.permute.xlu0 %1642
        %v1645 = vsel %vm824, %v1605, 0
        %v1648 = vsel %vm1625, %v1643, 0
        %1650 = vmatpush.bf16.msra.mxu0 0
        %1651 = vmatpush.bf16.msra.mxu0 0
        %1652 = vmatpush.bf16.msra.mxu0 0
        %1653 = vmatpush.bf16.msra.mxu0 0
        %1654 = vmatpush.bf16.msra.mxu0 0
        %1655 = vmatpush.bf16.msra.mxu0 0
        %1656 = vmatpush.bf16.msra.mxu0 0
        %1657 = vmatpush.bf16.msra.mxu0 %v1648
        %1658 = vmatmul.bf16.gmra.mxu0 %v1645
        %v1659 = vpop.f32.mrf.mxu0
        %v1660 = vadd.f32 0.0, %v1659
        %v1661 = vpop.f32.mrf.mxu0
        %1662 = vdwg.mxu0
        %1663 = vrot.lane.b32.xlu0 %v870, 96
        %v1664 = vpop.permute.xlu0 %1663
        %v1666 = vsel %vm824, %v1606, 0
        %v1669 = vsel %vm1625, %v1664, 0
        %1671 = vmatpush.bf16.msra.mxu0 0
        %1672 = vmatpush.bf16.msra.mxu0 0
        %1673 = vmatpush.bf16.msra.mxu0 0
        %1674 = vmatpush.bf16.msra.mxu0 0
        %1675 = vmatpush.bf16.msra.mxu0 0
        %1676 = vmatpush.bf16.msra.mxu0 0
        %1677 = vmatpush.bf16.msra.mxu0 0
        %1678 = vmatpush.bf16.msra.mxu0 %v1669
        %1679 = vmatmul.bf16.gmra.mxu0 %v1666
        %v1680 = vpop.f32.mrf.mxu0
        %v1681 = vadd.f32 0.0, %v1680
        %v1682 = vpop.f32.mrf.mxu0
        %1683 = vdwg.mxu0
        %1684 = vrot.lane.b32.xlu0 %v894, 96
        %v1685 = vpop.permute.xlu0 %1684
        %v1687 = vsel %vm824, %v1607, 0
        %v1690 = vsel %vm1625, %v1685, 0
        %1692 = vmatpush.bf16.msra.mxu0 0
        %1693 = vmatpush.bf16.msra.mxu0 0
        %1694 = vmatpush.bf16.msra.mxu0 0
        %1695 = vmatpush.bf16.msra.mxu0 0
        %1696 = vmatpush.bf16.msra.mxu0 0
        %1697 = vmatpush.bf16.msra.mxu0 0
        %1698 = vmatpush.bf16.msra.mxu0 0
        %1699 = vmatpush.bf16.msra.mxu0 %v1690
        %1700 = vmatmul.bf16.gmra.mxu0 %v1687
        %v1701 = vpop.f32.mrf.mxu0
        %v1702 = vadd.f32 0.0, %v1701
        %v1703 = vpop.f32.mrf.mxu0
        %1704 = vdwg.mxu0
        %1705 = vrot.lane.b32.xlu0 %v918, 96
        %v1706 = vpop.permute.xlu0 %1705
        %v1708 = vsel %vm824, %v1608, 0
        %v1711 = vsel %vm1625, %v1706, 0
        %1713 = vmatpush.bf16.msra.mxu0 0
        %1714 = vmatpush.bf16.msra.mxu0 0
        %1715 = vmatpush.bf16.msra.mxu0 0
        %1716 = vmatpush.bf16.msra.mxu0 0
        %1717 = vmatpush.bf16.msra.mxu0 0
        %1718 = vmatpush.bf16.msra.mxu0 0
        %1719 = vmatpush.bf16.msra.mxu0 0
        %1720 = vmatpush.bf16.msra.mxu0 %v1711
        %1721 = vmatmul.bf16.gmra.mxu0 %v1708
        %v1722 = vpop.f32.mrf.mxu0
        %v1723 = vadd.f32 0.0, %v1722
        %v1724 = vpop.f32.mrf.mxu0
        %1725 = vdwg.mxu0
        %1726 = vrot.lane.b32.xlu0 %v942, 96
        %v1727 = vpop.permute.xlu0 %1726
        %v1729 = vsel %vm824, %v1609, 0
        %v1732 = vsel %vm1625, %v1727, 0
        %1734 = vmatpush.bf16.msra.mxu0 0
        %1735 = vmatpush.bf16.msra.mxu0 0
        %1736 = vmatpush.bf16.msra.mxu0 0
        %1737 = vmatpush.bf16.msra.mxu0 0
        %1738 = vmatpush.bf16.msra.mxu0 0
        %1739 = vmatpush.bf16.msra.mxu0 0
        %1740 = vmatpush.bf16.msra.mxu0 0
        %1741 = vmatpush.bf16.msra.mxu0 %v1732
        %1742 = vmatmul.bf16.gmra.mxu0 %v1729
        %v1743 = vpop.f32.mrf.mxu0
        %v1744 = vadd.f32 0.0, %v1743
        %v1745 = vpop.f32.mrf.mxu0
        %1746 = vdwg.mxu0
        %1747 = vrot.lane.b32.xlu0 %v966, 96
        %v1748 = vpop.permute.xlu0 %1747
        %v1750 = vsel %vm824, %v1610, 0
        %v1753 = vsel %vm1625, %v1748, 0
        %1755 = vmatpush.bf16.msra.mxu0 0
        %1756 = vmatpush.bf16.msra.mxu0 0
        %1757 = vmatpush.bf16.msra.mxu0 0
        %1758 = vmatpush.bf16.msra.mxu0 0
        %1759 = vmatpush.bf16.msra.mxu0 0
        %1760 = vmatpush.bf16.msra.mxu0 0
        %1761 = vmatpush.bf16.msra.mxu0 0
        %1762 = vmatpush.bf16.msra.mxu0 %v1753
        %1763 = vmatmul.bf16.gmra.mxu0 %v1750
        %v1764 = vpop.f32.mrf.mxu0
        %v1765 = vadd.f32 0.0, %v1764
        %v1766 = vpop.f32.mrf.mxu0
        %1767 = vdwg.mxu0
        %1768 = vrot.lane.b32.xlu0 %v990, 96
        %v1769 = vpop.permute.xlu0 %1768
        %v1771 = vsel %vm824, %v1611, 0
        %v1774 = vsel %vm1625, %v1769, 0
        %1776 = vmatpush.bf16.msra.mxu0 0
        %1777 = vmatpush.bf16.msra.mxu0 0
        %1778 = vmatpush.bf16.msra.mxu0 0
        %1779 = vmatpush.bf16.msra.mxu0 0
        %1780 = vmatpush.bf16.msra.mxu0 0
        %1781 = vmatpush.bf16.msra.mxu0 0
        %1782 = vmatpush.bf16.msra.mxu0 0
        %1783 = vmatpush.bf16.msra.mxu0 %v1774
        %1784 = vmatmul.bf16.gmra.mxu0 %v1771
        %v1785 = vpop.f32.mrf.mxu0
        %v1786 = vadd.f32 0.0, %v1785
        %v1787 = vpop.f32.mrf.mxu0
        %1788 = vdwg.mxu0
        %1789 = vrot.lane.b32.xlu0 %v1014, 96
        %v1790 = vpop.permute.xlu0 %1789
        %v1792 = vsel %vm824, %v1612, 0
        %v1795 = vsel %vm1625, %v1790, 0
        %1797 = vmatpush.bf16.msra.mxu0 0
        %1798 = vmatpush.bf16.msra.mxu0 0
        %1799 = vmatpush.bf16.msra.mxu0 0
        %1800 = vmatpush.bf16.msra.mxu0 0
        %1801 = vmatpush.bf16.msra.mxu0 0
        %1802 = vmatpush.bf16.msra.mxu0 0
        %1803 = vmatpush.bf16.msra.mxu0 0
        %1804 = vmatpush.bf16.msra.mxu0 %v1795
        %1805 = vmatmul.bf16.gmra.mxu0 %v1792
        %v1806 = vpop.f32.mrf.mxu0
        %v1807 = vadd.f32 0.0, %v1806
        %v1808 = vpop.f32.mrf.mxu0
        %1809 = vdwg.mxu0
        %1810 = vrot.lane.b32.xlu0 %v1038, 96
        %v1811 = vpop.permute.xlu0 %1810
        %v1813 = vsel %vm824, %v1613, 0
        %v1816 = vsel %vm1625, %v1811, 0
        %1818 = vmatpush.bf16.msra.mxu0 0
        %1819 = vmatpush.bf16.msra.mxu0 0
        %1820 = vmatpush.bf16.msra.mxu0 0
        %1821 = vmatpush.bf16.msra.mxu0 0
        %1822 = vmatpush.bf16.msra.mxu0 0
        %1823 = vmatpush.bf16.msra.mxu0 0
        %1824 = vmatpush.bf16.msra.mxu0 0
        %1825 = vmatpush.bf16.msra.mxu0 %v1816
        %1826 = vmatmul.bf16.gmra.mxu0 %v1813
        %v1827 = vpop.f32.mrf.mxu0
        %v1828 = vadd.f32 0.0, %v1827
        %v1829 = vpop.f32.mrf.mxu0
        %1830 = vdwg.mxu0
        %1831 = vrot.lane.b32.xlu0 %v1062, 96
        %v1832 = vpop.permute.xlu0 %1831
        %v1834 = vsel %vm824, %v1614, 0
        %v1837 = vsel %vm1625, %v1832, 0
        %1839 = vmatpush.bf16.msra.mxu0 0
        %1840 = vmatpush.bf16.msra.mxu0 0
        %1841 = vmatpush.bf16.msra.mxu0 0
        %1842 = vmatpush.bf16.msra.mxu0 0
        %1843 = vmatpush.bf16.msra.mxu0 0
        %1844 = vmatpush.bf16.msra.mxu0 0
        %1845 = vmatpush.bf16.msra.mxu0 0
        %1846 = vmatpush.bf16.msra.mxu0 %v1837
        %1847 = vmatmul.bf16.gmra.mxu0 %v1834
        %v1848 = vpop.f32.mrf.mxu0
        %v1849 = vadd.f32 0.0, %v1848
        %v1850 = vpop.f32.mrf.mxu0
        %1851 = vdwg.mxu0
        %1852 = vrot.lane.b32.xlu0 %v1086, 96
        %v1853 = vpop.permute.xlu0 %1852
        %v1855 = vsel %vm824, %v1615, 0
        %v1858 = vsel %vm1625, %v1853, 0
        %1860 = vmatpush.bf16.msra.mxu0 0
        %1861 = vmatpush.bf16.msra.mxu0 0
        %1862 = vmatpush.bf16.msra.mxu0 0
        %1863 = vmatpush.bf16.msra.mxu0 0
        %1864 = vmatpush.bf16.msra.mxu0 0
        %1865 = vmatpush.bf16.msra.mxu0 0
        %1866 = vmatpush.bf16.msra.mxu0 0
        %1867 = vmatpush.bf16.msra.mxu0 %v1858
        %1868 = vmatmul.bf16.gmra.mxu0 %v1855
        %v1869 = vpop.f32.mrf.mxu0
        %v1870 = vadd.f32 0.0, %v1869
        %v1871 = vpop.f32.mrf.mxu0
        %1872 = vdwg.mxu0
        %1873 = vrot.lane.b32.xlu0 %v1110, 96
        %v1874 = vpop.permute.xlu0 %1873
        %v1876 = vsel %vm824, %v1616, 0
        %v1879 = vsel %vm1625, %v1874, 0
        %1881 = vmatpush.bf16.msra.mxu0 0
        %1882 = vmatpush.bf16.msra.mxu0 0
        %1883 = vmatpush.bf16.msra.mxu0 0
        %1884 = vmatpush.bf16.msra.mxu0 0
        %1885 = vmatpush.bf16.msra.mxu0 0
        %1886 = vmatpush.bf16.msra.mxu0 0
        %1887 = vmatpush.bf16.msra.mxu0 0
        %1888 = vmatpush.bf16.msra.mxu0 %v1879
        %1889 = vmatmul.bf16.gmra.mxu0 %v1876
        %v1890 = vpop.f32.mrf.mxu0
        %v1891 = vadd.f32 0.0, %v1890
        %v1892 = vpop.f32.mrf.mxu0
        %1893 = vdwg.mxu0
        %1894 = vrot.lane.b32.xlu0 %v1134, 96
        %v1895 = vpop.permute.xlu0 %1894
        %v1897 = vsel %vm824, %v1617, 0
        %v1900 = vsel %vm1625, %v1895, 0
        %1902 = vmatpush.bf16.msra.mxu0 0
        %1903 = vmatpush.bf16.msra.mxu0 0
        %1904 = vmatpush.bf16.msra.mxu0 0
        %1905 = vmatpush.bf16.msra.mxu0 0
        %1906 = vmatpush.bf16.msra.mxu0 0
        %1907 = vmatpush.bf16.msra.mxu0 0
        %1908 = vmatpush.bf16.msra.mxu0 0
        %1909 = vmatpush.bf16.msra.mxu0 %v1900
        %1910 = vmatmul.bf16.gmra.mxu0 %v1897
        %v1911 = vpop.f32.mrf.mxu0
        %v1912 = vadd.f32 0.0, %v1911
        %v1913 = vpop.f32.mrf.mxu0
        %1914 = vdwg.mxu0
        %1915 = vrot.lane.b32.xlu0 %v1158, 96
        %v1916 = vpop.permute.xlu0 %1915
        %v1918 = vsel %vm824, %v1618, 0
        %v1921 = vsel %vm1625, %v1916, 0
        %1923 = vmatpush.bf16.msra.mxu0 0
        %1924 = vmatpush.bf16.msra.mxu0 0
        %1925 = vmatpush.bf16.msra.mxu0 0
        %1926 = vmatpush.bf16.msra.mxu0 0
        %1927 = vmatpush.bf16.msra.mxu0 0
        %1928 = vmatpush.bf16.msra.mxu0 0
        %1929 = vmatpush.bf16.msra.mxu0 0
        %1930 = vmatpush.bf16.msra.mxu0 %v1921
        %1931 = vmatmul.bf16.gmra.mxu0 %v1918
        %v1932 = vpop.f32.mrf.mxu0
        %v1933 = vadd.f32 0.0, %v1932
        %v1934 = vpop.f32.mrf.mxu0
        %1935 = vdwg.mxu0
        %1936 = vrot.lane.b32.xlu0 %v1182, 96
        %v1937 = vpop.permute.xlu0 %1936
        %v1939 = vsel %vm824, %v1619, 0
        %v1942 = vsel %vm1625, %v1937, 0
        %1944 = vmatpush.bf16.msra.mxu0 0
        %1945 = vmatpush.bf16.msra.mxu0 0
        %1946 = vmatpush.bf16.msra.mxu0 0
        %1947 = vmatpush.bf16.msra.mxu0 0
        %1948 = vmatpush.bf16.msra.mxu0 0
        %1949 = vmatpush.bf16.msra.mxu0 0
        %1950 = vmatpush.bf16.msra.mxu0 0
        %1951 = vmatpush.bf16.msra.mxu0 %v1942
        %1952 = vmatmul.bf16.gmra.mxu0 %v1939
        %v1953 = vpop.f32.mrf.mxu0
        %v1954 = vadd.f32 0.0, %v1953
        %v1955 = vpop.f32.mrf.mxu0
        %1956 = vdwg.mxu0
        %1957 = vrot.lane.b32.xlu0 %v821, 120
        %v1958 = vpop.permute.xlu0 %1957
        %1959 = vrot.lane.b32.xlu0 %v821, 104
        %v1960 = vpop.permute.xlu0 %1959
        %v1962 = vsel %vm824, %v1958, 0
        %v1965 = vsel %vm824, %v1960, 0
        %1967 = vmatpush.bf16.xpose.msra.mxu0 0
        %1968 = vmatpush.bf16.xpose.msra.mxu0 0
        %1969 = vmatpush.bf16.xpose.msra.mxu0 0
        %1970 = vmatpush.bf16.xpose.msra.mxu0 0
        %1971 = vmatpush.bf16.xpose.msra.mxu0 0
        %1972 = vmatpush.bf16.xpose.msra.mxu0 0
        %1973 = vmatpush.bf16.xpose.msra.mxu0 0
        %1974 = vmatpush.bf16.xpose.msra.mxu0 %v1965
        %1975 = vmatmul.bf16.gmra.mxu0 %v1962
        %v1976 = vpop.f32.mrf.mxu0
        %v1977 = vadd.f32 0.0, %v1976
        %v1978 = vpop.f32.mrf.mxu0
        %1979 = vdwg.mxu0
        %1980 = vrot.lane.b32.xlu0 %v846, 120
        %v1981 = vpop.permute.xlu0 %1980
        %1982 = vrot.lane.b32.xlu0 %v846, 104
        %v1983 = vpop.permute.xlu0 %1982
        %v1985 = vsel %vm824, %v1981, 0
        %v1988 = vsel %vm824, %v1983, 0
        %1990 = vmatpush.bf16.xpose.msra.mxu0 0
        %1991 = vmatpush.bf16.xpose.msra.mxu0 0
        %1992 = vmatpush.bf16.xpose.msra.mxu0 0
        %1993 = vmatpush.bf16.xpose.msra.mxu0 0
        %1994 = vmatpush.bf16.xpose.msra.mxu0 0
        %1995 = vmatpush.bf16.xpose.msra.mxu0 0
        %1996 = vmatpush.bf16.xpose.msra.mxu0 0
        %1997 = vmatpush.bf16.xpose.msra.mxu0 %v1988
        %1998 = vmatmul.bf16.gmra.mxu0 %v1985
        %v1999 = vpop.f32.mrf.mxu0
        %v2000 = vadd.f32 0.0, %v1999
        %v2001 = vpop.f32.mrf.mxu0
        %2002 = vdwg.mxu0
        %2003 = vrot.lane.b32.xlu0 %v870, 120
        %v2004 = vpop.permute.xlu0 %2003
        %2005 = vrot.lane.b32.xlu0 %v870, 104
        %v2006 = vpop.permute.xlu0 %2005
        %v2008 = vsel %vm824, %v2004, 0
        %v2011 = vsel %vm824, %v2006, 0
        %2013 = vmatpush.bf16.xpose.msra.mxu0 0
        %2014 = vmatpush.bf16.xpose.msra.mxu0 0
        %2015 = vmatpush.bf16.xpose.msra.mxu0 0
        %2016 = vmatpush.bf16.xpose.msra.mxu0 0
        %2017 = vmatpush.bf16.xpose.msra.mxu0 0
        %2018 = vmatpush.bf16.xpose.msra.mxu0 0
        %2019 = vmatpush.bf16.xpose.msra.mxu0 0
        %2020 = vmatpush.bf16.xpose.msra.mxu0 %v2011
        %2021 = vmatmul.bf16.gmra.mxu0 %v2008
        %v2022 = vpop.f32.mrf.mxu0
        %v2023 = vadd.f32 0.0, %v2022
        %v2024 = vpop.f32.mrf.mxu0
        %2025 = vdwg.mxu0
        %2026 = vrot.lane.b32.xlu0 %v894, 120
        %v2027 = vpop.permute.xlu0 %2026
        %2028 = vrot.lane.b32.xlu0 %v894, 104
        %v2029 = vpop.permute.xlu0 %2028
        %v2031 = vsel %vm824, %v2027, 0
        %v2034 = vsel %vm824, %v2029, 0
        %2036 = vmatpush.bf16.xpose.msra.mxu0 0
        %2037 = vmatpush.bf16.xpose.msra.mxu0 0
        %2038 = vmatpush.bf16.xpose.msra.mxu0 0
        %2039 = vmatpush.bf16.xpose.msra.mxu0 0
        %2040 = vmatpush.bf16.xpose.msra.mxu0 0
        %2041 = vmatpush.bf16.xpose.msra.mxu0 0
        %2042 = vmatpush.bf16.xpose.msra.mxu0 0
        %2043 = vmatpush.bf16.xpose.msra.mxu0 %v2034
        %2044 = vmatmul.bf16.gmra.mxu0 %v2031
        %v2045 = vpop.f32.mrf.mxu0
        %v2046 = vadd.f32 0.0, %v2045
        %v2047 = vpop.f32.mrf.mxu0
        %2048 = vdwg.mxu0
        %2049 = vrot.lane.b32.xlu0 %v918, 120
        %v2050 = vpop.permute.xlu0 %2049
        %2051 = vrot.lane.b32.xlu0 %v918, 104
        %v2052 = vpop.permute.xlu0 %2051
        %v2054 = vsel %vm824, %v2050, 0
        %v2057 = vsel %vm824, %v2052, 0
        %2059 = vmatpush.bf16.xpose.msra.mxu0 0
        %2060 = vmatpush.bf16.xpose.msra.mxu0 0
        %2061 = vmatpush.bf16.xpose.msra.mxu0 0
        %2062 = vmatpush.bf16.xpose.msra.mxu0 0
        %2063 = vmatpush.bf16.xpose.msra.mxu0 0
        %2064 = vmatpush.bf16.xpose.msra.mxu0 0
        %2065 = vmatpush.bf16.xpose.msra.mxu0 0
        %2066 = vmatpush.bf16.xpose.msra.mxu0 %v2057
        %2067 = vmatmul.bf16.gmra.mxu0 %v2054
        %v2068 = vpop.f32.mrf.mxu0
        %v2069 = vadd.f32 0.0, %v2068
        %v2070 = vpop.f32.mrf.mxu0
        %2071 = vdwg.mxu0
        %2072 = vrot.lane.b32.xlu0 %v942, 120
        %v2073 = vpop.permute.xlu0 %2072
        %2074 = vrot.lane.b32.xlu0 %v942, 104
        %v2075 = vpop.permute.xlu0 %2074
        %v2077 = vsel %vm824, %v2073, 0
        %v2080 = vsel %vm824, %v2075, 0
        %2082 = vmatpush.bf16.xpose.msra.mxu0 0
        %2083 = vmatpush.bf16.xpose.msra.mxu0 0
        %2084 = vmatpush.bf16.xpose.msra.mxu0 0
        %2085 = vmatpush.bf16.xpose.msra.mxu0 0
        %2086 = vmatpush.bf16.xpose.msra.mxu0 0
        %2087 = vmatpush.bf16.xpose.msra.mxu0 0
        %2088 = vmatpush.bf16.xpose.msra.mxu0 0
        %2089 = vmatpush.bf16.xpose.msra.mxu0 %v2080
        %2090 = vmatmul.bf16.gmra.mxu0 %v2077
        %v2091 = vpop.f32.mrf.mxu0
        %v2092 = vadd.f32 0.0, %v2091
        %v2093 = vpop.f32.mrf.mxu0
        %2094 = vdwg.mxu0
        %2095 = vrot.lane.b32.xlu0 %v966, 120
        %v2096 = vpop.permute.xlu0 %2095
        %2097 = vrot.lane.b32.xlu0 %v966, 104
        %v2098 = vpop.permute.xlu0 %2097
        %v2100 = vsel %vm824, %v2096, 0
        %v2103 = vsel %vm824, %v2098, 0
        %2105 = vmatpush.bf16.xpose.msra.mxu0 0
        %2106 = vmatpush.bf16.xpose.msra.mxu0 0
        %2107 = vmatpush.bf16.xpose.msra.mxu0 0
        %2108 = vmatpush.bf16.xpose.msra.mxu0 0
        %2109 = vmatpush.bf16.xpose.msra.mxu0 0
        %2110 = vmatpush.bf16.xpose.msra.mxu0 0
        %2111 = vmatpush.bf16.xpose.msra.mxu0 0
        %2112 = vmatpush.bf16.xpose.msra.mxu0 %v2103
        %2113 = vmatmul.bf16.gmra.mxu0 %v2100
        %v2114 = vpop.f32.mrf.mxu0
        %v2115 = vadd.f32 0.0, %v2114
        %v2116 = vpop.f32.mrf.mxu0
        %2117 = vdwg.mxu0
        %2118 = vrot.lane.b32.xlu0 %v990, 120
        %v2119 = vpop.permute.xlu0 %2118
        %2120 = vrot.lane.b32.xlu0 %v990, 104
        %v2121 = vpop.permute.xlu0 %2120
        %v2123 = vsel %vm824, %v2119, 0
        %v2126 = vsel %vm824, %v2121, 0
        %2128 = vmatpush.bf16.xpose.msra.mxu0 0
        %2129 = vmatpush.bf16.xpose.msra.mxu0 0
        %2130 = vmatpush.bf16.xpose.msra.mxu0 0
        %2131 = vmatpush.bf16.xpose.msra.mxu0 0
        %2132 = vmatpush.bf16.xpose.msra.mxu0 0
        %2133 = vmatpush.bf16.xpose.msra.mxu0 0
        %2134 = vmatpush.bf16.xpose.msra.mxu0 0
        %2135 = vmatpush.bf16.xpose.msra.mxu0 %v2126
        %2136 = vmatmul.bf16.gmra.mxu0 %v2123
        %v2137 = vpop.f32.mrf.mxu0
        %v2138 = vadd.f32 0.0, %v2137
        %v2139 = vpop.f32.mrf.mxu0
        %2140 = vdwg.mxu0
        %2141 = vrot.lane.b32.xlu0 %v1014, 120
        %v2142 = vpop.permute.xlu0 %2141
        %2143 = vrot.lane.b32.xlu0 %v1014, 104
        %v2144 = vpop.permute.xlu0 %2143
        %v2146 = vsel %vm824, %v2142, 0
        %v2149 = vsel %vm824, %v2144, 0
        %2151 = vmatpush.bf16.xpose.msra.mxu0 0
        %2152 = vmatpush.bf16.xpose.msra.mxu0 0
        %2153 = vmatpush.bf16.xpose.msra.mxu0 0
        %2154 = vmatpush.bf16.xpose.msra.mxu0 0
        %2155 = vmatpush.bf16.xpose.msra.mxu0 0
        %2156 = vmatpush.bf16.xpose.msra.mxu0 0
        %2157 = vmatpush.bf16.xpose.msra.mxu0 0
        %2158 = vmatpush.bf16.xpose.msra.mxu0 %v2149
        %2159 = vmatmul.bf16.gmra.mxu0 %v2146
        %v2160 = vpop.f32.mrf.mxu0
        %v2161 = vadd.f32 0.0, %v2160
        %v2162 = vpop.f32.mrf.mxu0
        %2163 = vdwg.mxu0
        %2164 = vrot.lane.b32.xlu0 %v1038, 120
        %v2165 = vpop.permute.xlu0 %2164
        %2166 = vrot.lane.b32.xlu0 %v1038, 104
        %v2167 = vpop.permute.xlu0 %2166
        %v2169 = vsel %vm824, %v2165, 0
        %v2172 = vsel %vm824, %v2167, 0
        %2174 = vmatpush.bf16.xpose.msra.mxu0 0
        %2175 = vmatpush.bf16.xpose.msra.mxu0 0
        %2176 = vmatpush.bf16.xpose.msra.mxu0 0
        %2177 = vmatpush.bf16.xpose.msra.mxu0 0
        %2178 = vmatpush.bf16.xpose.msra.mxu0 0
        %2179 = vmatpush.bf16.xpose.msra.mxu0 0
        %2180 = vmatpush.bf16.xpose.msra.mxu0 0
        %2181 = vmatpush.bf16.xpose.msra.mxu0 %v2172
        %2182 = vmatmul.bf16.gmra.mxu0 %v2169
        %v2183 = vpop.f32.mrf.mxu0
        %v2184 = vadd.f32 0.0, %v2183
        %v2185 = vpop.f32.mrf.mxu0
        %2186 = vdwg.mxu0
        %2187 = vrot.lane.b32.xlu0 %v1062, 120
        %v2188 = vpop.permute.xlu0 %2187
        %2189 = vrot.lane.b32.xlu0 %v1062, 104
        %v2190 = vpop.permute.xlu0 %2189
        %v2192 = vsel %vm824, %v2188, 0
        %v2195 = vsel %vm824, %v2190, 0
        %2197 = vmatpush.bf16.xpose.msra.mxu0 0
        %2198 = vmatpush.bf16.xpose.msra.mxu0 0
        %2199 = vmatpush.bf16.xpose.msra.mxu0 0
        %2200 = vmatpush.bf16.xpose.msra.mxu0 0
        %2201 = vmatpush.bf16.xpose.msra.mxu0 0
        %2202 = vmatpush.bf16.xpose.msra.mxu0 0
        %2203 = vmatpush.bf16.xpose.msra.mxu0 0
        %2204 = vmatpush.bf16.xpose.msra.mxu0 %v2195
        %2205 = vmatmul.bf16.gmra.mxu0 %v2192
        %v2206 = vpop.f32.mrf.mxu0
        %v2207 = vadd.f32 0.0, %v2206
        %v2208 = vpop.f32.mrf.mxu0
        %2209 = vdwg.mxu0
        %2210 = vrot.lane.b32.xlu0 %v1086, 120
        %v2211 = vpop.permute.xlu0 %2210
        %2212 = vrot.lane.b32.xlu0 %v1086, 104
        %v2213 = vpop.permute.xlu0 %2212
        %v2215 = vsel %vm824, %v2211, 0
        %v2218 = vsel %vm824, %v2213, 0
        %2220 = vmatpush.bf16.xpose.msra.mxu0 0
        %2221 = vmatpush.bf16.xpose.msra.mxu0 0
        %2222 = vmatpush.bf16.xpose.msra.mxu0 0
        %2223 = vmatpush.bf16.xpose.msra.mxu0 0
        %2224 = vmatpush.bf16.xpose.msra.mxu0 0
        %2225 = vmatpush.bf16.xpose.msra.mxu0 0
        %2226 = vmatpush.bf16.xpose.msra.mxu0 0
        %2227 = vmatpush.bf16.xpose.msra.mxu0 %v2218
        %2228 = vmatmul.bf16.gmra.mxu0 %v2215
        %v2229 = vpop.f32.mrf.mxu0
        %v2230 = vadd.f32 0.0, %v2229
        %v2231 = vpop.f32.mrf.mxu0
        %2232 = vdwg.mxu0
        %2233 = vrot.lane.b32.xlu0 %v1110, 120
        %v2234 = vpop.permute.xlu0 %2233
        %2235 = vrot.lane.b32.xlu0 %v1110, 104
        %v2236 = vpop.permute.xlu0 %2235
        %v2238 = vsel %vm824, %v2234, 0
        %v2241 = vsel %vm824, %v2236, 0
        %2243 = vmatpush.bf16.xpose.msra.mxu0 0
        %2244 = vmatpush.bf16.xpose.msra.mxu0 0
        %2245 = vmatpush.bf16.xpose.msra.mxu0 0
        %2246 = vmatpush.bf16.xpose.msra.mxu0 0
        %2247 = vmatpush.bf16.xpose.msra.mxu0 0
        %2248 = vmatpush.bf16.xpose.msra.mxu0 0
        %2249 = vmatpush.bf16.xpose.msra.mxu0 0
        %2250 = vmatpush.bf16.xpose.msra.mxu0 %v2241
        %2251 = vmatmul.bf16.gmra.mxu0 %v2238
        %v2252 = vpop.f32.mrf.mxu0
        %v2253 = vadd.f32 0.0, %v2252
        %v2254 = vpop.f32.mrf.mxu0
        %2255 = vdwg.mxu0
        %2256 = vrot.lane.b32.xlu0 %v1134, 120
        %v2257 = vpop.permute.xlu0 %2256
        %2258 = vrot.lane.b32.xlu0 %v1134, 104
        %v2259 = vpop.permute.xlu0 %2258
        %v2261 = vsel %vm824, %v2257, 0
        %v2264 = vsel %vm824, %v2259, 0
        %2266 = vmatpush.bf16.xpose.msra.mxu0 0
        %2267 = vmatpush.bf16.xpose.msra.mxu0 0
        %2268 = vmatpush.bf16.xpose.msra.mxu0 0
        %2269 = vmatpush.bf16.xpose.msra.mxu0 0
        %2270 = vmatpush.bf16.xpose.msra.mxu0 0
        %2271 = vmatpush.bf16.xpose.msra.mxu0 0
        %2272 = vmatpush.bf16.xpose.msra.mxu0 0
        %2273 = vmatpush.bf16.xpose.msra.mxu0 %v2264
        %2274 = vmatmul.bf16.gmra.mxu0 %v2261
        %v2275 = vpop.f32.mrf.mxu0
        %v2276 = vadd.f32 0.0, %v2275
        %v2277 = vpop.f32.mrf.mxu0
        %2278 = vdwg.mxu0
        %2279 = vrot.lane.b32.xlu0 %v1158, 120
        %v2280 = vpop.permute.xlu0 %2279
        %2281 = vrot.lane.b32.xlu0 %v1158, 104
        %v2282 = vpop.permute.xlu0 %2281
        %v2284 = vsel %vm824, %v2280, 0
        %v2287 = vsel %vm824, %v2282, 0
        %2289 = vmatpush.bf16.xpose.msra.mxu0 0
        %2290 = vmatpush.bf16.xpose.msra.mxu0 0
        %2291 = vmatpush.bf16.xpose.msra.mxu0 0
        %2292 = vmatpush.bf16.xpose.msra.mxu0 0
        %2293 = vmatpush.bf16.xpose.msra.mxu0 0
        %2294 = vmatpush.bf16.xpose.msra.mxu0 0
        %2295 = vmatpush.bf16.xpose.msra.mxu0 0
        %2296 = vmatpush.bf16.xpose.msra.mxu0 %v2287
        %2297 = vmatmul.bf16.gmra.mxu0 %v2284
        %v2298 = vpop.f32.mrf.mxu0
        %v2299 = vadd.f32 0.0, %v2298
        %v2300 = vpop.f32.mrf.mxu0
        %2301 = vdwg.mxu0
        %2302 = vrot.lane.b32.xlu0 %v1182, 120
        %v2303 = vpop.permute.xlu0 %2302
        %2304 = vrot.lane.b32.xlu0 %v1182, 104
        %v2305 = vpop.permute.xlu0 %2304
        %v2307 = vsel %vm824, %v2303, 0
        %v2310 = vsel %vm824, %v2305, 0
        %2312 = vmatpush.bf16.xpose.msra.mxu0 0
        %2313 = vmatpush.bf16.xpose.msra.mxu0 0
        %2314 = vmatpush.bf16.xpose.msra.mxu0 0
        %2315 = vmatpush.bf16.xpose.msra.mxu0 0
        %2316 = vmatpush.bf16.xpose.msra.mxu0 0
        %2317 = vmatpush.bf16.xpose.msra.mxu0 0
        %2318 = vmatpush.bf16.xpose.msra.mxu0 0
        %2319 = vmatpush.bf16.xpose.msra.mxu0 %v2310
        %2320 = vmatmul.bf16.gmra.mxu0 %v2307
        %v2321 = vpop.f32.mrf.mxu0
        %v2322 = vadd.f32 0.0, %v2321
        %v2323 = vpop.f32.mrf.mxu0
        %2324 = vdwg.mxu0
        %v2325 = vmul.f32 %v1977, 0.35355338
        %v2326 = vmul.f32 %v2000, 0.35355338
        %v2327 = vmul.f32 %v2023, 0.35355338
        %v2328 = vmul.f32 %v2046, 0.35355338
        %v2329 = vmul.f32 %v2069, 0.35355338
        %v2330 = vmul.f32 %v2092, 0.35355338
        %v2331 = vmul.f32 %v2115, 0.35355338
        %v2332 = vmul.f32 %v2138, 0.35355338
        %v2333 = vmul.f32 %v2161, 0.35355338
        %v2334 = vmul.f32 %v2184, 0.35355338
        %v2335 = vmul.f32 %v2207, 0.35355338
        %v2336 = vmul.f32 %v2230, 0.35355338
        %v2337 = vmul.f32 %v2253, 0.35355338
        %v2338 = vmul.f32 %v2276, 0.35355338
        %v2339 = vmul.f32 %v2299, 0.35355338
        %v2340 = vmul.f32 %v2322, 0.35355338
        %v2341 = vsel %vm824, %v2325, -inf
        %2342 = vmax.xlane.f32.xlu0 %v2341
        %v2343 = vpop.xlane.xlu0 %2342
        %v2344 = vsel %vm824, %v2326, -inf
        %2345 = vmax.xlane.f32.xlu0 %v2344
        %v2346 = vpop.xlane.xlu0 %2345
        %v2347 = vsel %vm824, %v2327, -inf
        %2348 = vmax.xlane.f32.xlu0 %v2347
        %v2349 = vpop.xlane.xlu0 %2348
        %v2350 = vsel %vm824, %v2328, -inf
        %2351 = vmax.xlane.f32.xlu0 %v2350
        %v2352 = vpop.xlane.xlu0 %2351
        %v2353 = vsel %vm824, %v2329, -inf
        %2354 = vmax.xlane.f32.xlu0 %v2353
        %v2355 = vpop.xlane.xlu0 %2354
        %v2356 = vsel %vm824, %v2330, -inf
        %2357 = vmax.xlane.f32.xlu0 %v2356
        %v2358 = vpop.xlane.xlu0 %2357
        %v2359 = vsel %vm824, %v2331, -inf
        %2360 = vmax.xlane.f32.xlu0 %v2359
        %v2361 = vpop.xlane.xlu0 %2360
        %v2362 = vsel %vm824, %v2332, -inf
        %2363 = vmax.xlane.f32.xlu0 %v2362
        %v2364 = vpop.xlane.xlu0 %2363
        %v2365 = vsel %vm824, %v2333, -inf
        %2366 = vmax.xlane.f32.xlu0 %v2365
        %v2367 = vpop.xlane.xlu0 %2366
        %v2368 = vsel %vm824, %v2334, -inf
        %2369 = vmax.xlane.f32.xlu0 %v2368
        %v2370 = vpop.xlane.xlu0 %2369
        %v2371 = vsel %vm824, %v2335, -inf
        %2372 = vmax.xlane.f32.xlu0 %v2371
        %v2373 = vpop.xlane.xlu0 %2372
        %v2374 = vsel %vm824, %v2336, -inf
        %2375 = vmax.xlane.f32.xlu0 %v2374
        %v2376 = vpop.xlane.xlu0 %2375
        %v2377 = vsel %vm824, %v2337, -inf
        %2378 = vmax.xlane.f32.xlu0 %v2377
        %v2379 = vpop.xlane.xlu0 %2378
        %v2380 = vsel %vm824, %v2338, -inf
        %2381 = vmax.xlane.f32.xlu0 %v2380
        %v2382 = vpop.xlane.xlu0 %2381
        %v2383 = vsel %vm824, %v2339, -inf
        %2384 = vmax.xlane.f32.xlu0 %v2383
        %v2385 = vpop.xlane.xlu0 %2384
        %v2386 = vsel %vm824, %v2340, -inf
        %2387 = vmax.xlane.f32.xlu0 %v2386
        %v2388 = vpop.xlane.xlu0 %2387
        %v2389 = vsub.f32 %v2325, %v2343
        %v2390 = vsub.f32 %v2326, %v2346
        %v2391 = vsub.f32 %v2327, %v2349
        %v2392 = vsub.f32 %v2328, %v2352
        %v2393 = vsub.f32 %v2329, %v2355
        %v2394 = vsub.f32 %v2330, %v2358
        %v2395 = vsub.f32 %v2331, %v2361
        %v2396 = vsub.f32 %v2332, %v2364
        %v2397 = vsub.f32 %v2333, %v2367
        %v2398 = vsub.f32 %v2334, %v2370
        %v2399 = vsub.f32 %v2335, %v2373
        %v2400 = vsub.f32 %v2336, %v2376
        %v2401 = vsub.f32 %v2337, %v2379
        %v2402 = vsub.f32 %v2338, %v2382
        %v2403 = vsub.f32 %v2339, %v2385
        %v2404 = vsub.f32 %v2340, %v2388
        %v2405 = vmul.f32 %v2389, 1.442695
        %v2406 = vpow.pop %v2405
        %v2407 = vmul.f32 %v2390, 1.442695
        %v2408 = vpow.pop %v2407
        %v2409 = vmul.f32 %v2391, 1.442695
        %v2410 = vpow.pop %v2409
        %v2411 = vmul.f32 %v2392, 1.442695
        %v2412 = vpow.pop %v2411
        %v2413 = vmul.f32 %v2393, 1.442695
        %v2414 = vpow.pop %v2413
        %v2415 = vmul.f32 %v2394, 1.442695
        %v2416 = vpow.pop %v2415
        %v2417 = vmul.f32 %v2395, 1.442695
        %v2418 = vpow.pop %v2417
        %v2419 = vmul.f32 %v2396, 1.442695
        %v2420 = vpow.pop %v2419
        %v2421 = vmul.f32 %v2397, 1.442695
        %v2422 = vpow.pop %v2421
        %v2423 = vmul.f32 %v2398, 1.442695
        %v2424 = vpow.pop %v2423
        %v2425 = vmul.f32 %v2399, 1.442695
        %v2426 = vpow.pop %v2425
        %v2427 = vmul.f32 %v2400, 1.442695
        %v2428 = vpow.pop %v2427
        %v2429 = vmul.f32 %v2401, 1.442695
        %v2430 = vpow.pop %v2429
        %v2431 = vmul.f32 %v2402, 1.442695
        %v2432 = vpow.pop %v2431
        %v2433 = vmul.f32 %v2403, 1.442695
        %v2434 = vpow.pop %v2433
        %v2435 = vmul.f32 %v2404, 1.442695
        %v2436 = vpow.pop %v2435
        %v2437 = vsel %vm824, %v2406, 0.0
        %2438 = vadd.xlane.f32.xlu0 %v2437
        %v2439 = vpop.xlane.xlu0 %2438
        %v2440 = vsel %vm824, %v2408, 0.0
        %2441 = vadd.xlane.f32.xlu0 %v2440
        %v2442 = vpop.xlane.xlu0 %2441
        %v2443 = vsel %vm824, %v2410, 0.0
        %2444 = vadd.xlane.f32.xlu0 %v2443
        %v2445 = vpop.xlane.xlu0 %2444
        %v2446 = vsel %vm824, %v2412, 0.0
        %2447 = vadd.xlane.f32.xlu0 %v2446
        %v2448 = vpop.xlane.xlu0 %2447
        %v2449 = vsel %vm824, %v2414, 0.0
        %2450 = vadd.xlane.f32.xlu0 %v2449
        %v2451 = vpop.xlane.xlu0 %2450
        %v2452 = vsel %vm824, %v2416, 0.0
        %2453 = vadd.xlane.f32.xlu0 %v2452
        %v2454 = vpop.xlane.xlu0 %2453
        %v2455 = vsel %vm824, %v2418, 0.0
        %2456 = vadd.xlane.f32.xlu0 %v2455
        %v2457 = vpop.xlane.xlu0 %2456
        %v2458 = vsel %vm824, %v2420, 0.0
        %2459 = vadd.xlane.f32.xlu0 %v2458
        %v2460 = vpop.xlane.xlu0 %2459
        %v2461 = vsel %vm824, %v2422, 0.0
        %2462 = vadd.xlane.f32.xlu0 %v2461
        %v2463 = vpop.xlane.xlu0 %2462
        %v2464 = vsel %vm824, %v2424, 0.0
        %2465 = vadd.xlane.f32.xlu0 %v2464
        %v2466 = vpop.xlane.xlu0 %2465
        %v2467 = vsel %vm824, %v2426, 0.0
        %2468 = vadd.xlane.f32.xlu0 %v2467
        %v2469 = vpop.xlane.xlu0 %2468
        %v2470 = vsel %vm824, %v2428, 0.0
        %2471 = vadd.xlane.f32.xlu0 %v2470
        %v2472 = vpop.xlane.xlu0 %2471
        %v2473 = vsel %vm824, %v2430, 0.0
        %2474 = vadd.xlane.f32.xlu0 %v2473
        %v2475 = vpop.xlane.xlu0 %2474
        %v2476 = vsel %vm824, %v2432, 0.0
        %2477 = vadd.xlane.f32.xlu0 %v2476
        %v2478 = vpop.xlane.xlu0 %2477
        %v2479 = vsel %vm824, %v2434, 0.0
        %2480 = vadd.xlane.f32.xlu0 %v2479
        %v2481 = vpop.xlane.xlu0 %2480
        %v2482 = vsel %vm824, %v2436, 0.0
        %2483 = vadd.xlane.f32.xlu0 %v2482
        %v2484 = vpop.xlane.xlu0 %2483
        %v2485 = vrcp.pop %v2439
        %v2486 = vmul.f32 %v2439, %v2485
        %v2487 = vsub.f32 1.0, %v2486
        %v2488 = vmul.f32 %v2485, %v2487
        %v2489 = vadd.f32 %v2485, %v2488
        %vm2490 = vweird.f32 %v2439
        %vm2491 = vweird.f32 %v2485
        %vm2492 = vmor %vm2490, %vm2491
        %v2493 = vsel %vm2492, %v2485, %v2489
        %v2494 = vand.u32 2147483647, %v2439
        %vm2495 = vcmp.eq.f32.partialorder %v2494, 8.507059e+37
        %v2496 = vand.u32 %v2439, 2147483648
        %v2497 = vor.u32 1.1754944e-38, %v2496
        %v2498 = vsel %vm2495, %v2497, %v2493
        %v2499 = vrcp.pop %v2442
        %v2500 = vmul.f32 %v2442, %v2499
        %v2501 = vsub.f32 1.0, %v2500
        %v2502 = vmul.f32 %v2499, %v2501
        %v2503 = vadd.f32 %v2499, %v2502
        %vm2504 = vweird.f32 %v2442
        %vm2505 = vweird.f32 %v2499
        %vm2506 = vmor %vm2504, %vm2505
        %v2507 = vsel %vm2506, %v2499, %v2503
        %v2508 = vand.u32 2147483647, %v2442
        %vm2509 = vcmp.eq.f32.partialorder %v2508, 8.507059e+37
        %v2510 = vand.u32 %v2442, 2147483648
        %v2511 = vor.u32 1.1754944e-38, %v2510
        %v2512 = vsel %vm2509, %v2511, %v2507
        %v2513 = vrcp.pop %v2445
        %v2514 = vmul.f32 %v2445, %v2513
        %v2515 = vsub.f32 1.0, %v2514
        %v2516 = vmul.f32 %v2513, %v2515
        %v2517 = vadd.f32 %v2513, %v2516
        %vm2518 = vweird.f32 %v2445
        %vm2519 = vweird.f32 %v2513
        %vm2520 = vmor %vm2518, %vm2519
        %v2521 = vsel %vm2520, %v2513, %v2517
        %v2522 = vand.u32 2147483647, %v2445
        %vm2523 = vcmp.eq.f32.partialorder %v2522, 8.507059e+37
        %v2524 = vand.u32 %v2445, 2147483648
        %v2525 = vor.u32 1.1754944e-38, %v2524
        %v2526 = vsel %vm2523, %v2525, %v2521
        %v2527 = vrcp.pop %v2448
        %v2528 = vmul.f32 %v2448, %v2527
        %v2529 = vsub.f32 1.0, %v2528
        %v2530 = vmul.f32 %v2527, %v2529
        %v2531 = vadd.f32 %v2527, %v2530
        %vm2532 = vweird.f32 %v2448
        %vm2533 = vweird.f32 %v2527
        %vm2534 = vmor %vm2532, %vm2533
        %v2535 = vsel %vm2534, %v2527, %v2531
        %v2536 = vand.u32 2147483647, %v2448
        %vm2537 = vcmp.eq.f32.partialorder %v2536, 8.507059e+37
        %v2538 = vand.u32 %v2448, 2147483648
        %v2539 = vor.u32 1.1754944e-38, %v2538
        %v2540 = vsel %vm2537, %v2539, %v2535
        %v2541 = vrcp.pop %v2451
        %v2542 = vmul.f32 %v2451, %v2541
        %v2543 = vsub.f32 1.0, %v2542
        %v2544 = vmul.f32 %v2541, %v2543
        %v2545 = vadd.f32 %v2541, %v2544
        %vm2546 = vweird.f32 %v2451
        %vm2547 = vweird.f32 %v2541
        %vm2548 = vmor %vm2546, %vm2547
        %v2549 = vsel %vm2548, %v2541, %v2545
        %v2550 = vand.u32 2147483647, %v2451
        %vm2551 = vcmp.eq.f32.partialorder %v2550, 8.507059e+37
        %v2552 = vand.u32 %v2451, 2147483648
        %v2553 = vor.u32 1.1754944e-38, %v2552
        %v2554 = vsel %vm2551, %v2553, %v2549
        %v2555 = vrcp.pop %v2454
        %v2556 = vmul.f32 %v2454, %v2555
        %v2557 = vsub.f32 1.0, %v2556
        %v2558 = vmul.f32 %v2555, %v2557
        %v2559 = vadd.f32 %v2555, %v2558
        %vm2560 = vweird.f32 %v2454
        %vm2561 = vweird.f32 %v2555
        %vm2562 = vmor %vm2560, %vm2561
        %v2563 = vsel %vm2562, %v2555, %v2559
        %v2564 = vand.u32 2147483647, %v2454
        %vm2565 = vcmp.eq.f32.partialorder %v2564, 8.507059e+37
        %v2566 = vand.u32 %v2454, 2147483648
        %v2567 = vor.u32 1.1754944e-38, %v2566
        %v2568 = vsel %vm2565, %v2567, %v2563
        %v2569 = vrcp.pop %v2457
        %v2570 = vmul.f32 %v2457, %v2569
        %v2571 = vsub.f32 1.0, %v2570
        %v2572 = vmul.f32 %v2569, %v2571
        %v2573 = vadd.f32 %v2569, %v2572
        %vm2574 = vweird.f32 %v2457
        %vm2575 = vweird.f32 %v2569
        %vm2576 = vmor %vm2574, %vm2575
        %v2577 = vsel %vm2576, %v2569, %v2573
        %v2578 = vand.u32 2147483647, %v2457
        %vm2579 = vcmp.eq.f32.partialorder %v2578, 8.507059e+37
        %v2580 = vand.u32 %v2457, 2147483648
        %v2581 = vor.u32 1.1754944e-38, %v2580
        %v2582 = vsel %vm2579, %v2581, %v2577
        %v2583 = vrcp.pop %v2460
        %v2584 = vmul.f32 %v2460, %v2583
        %v2585 = vsub.f32 1.0, %v2584
        %v2586 = vmul.f32 %v2583, %v2585
        %v2587 = vadd.f32 %v2583, %v2586
        %vm2588 = vweird.f32 %v2460
        %vm2589 = vweird.f32 %v2583
        %vm2590 = vmor %vm2588, %vm2589
        %v2591 = vsel %vm2590, %v2583, %v2587
        %v2592 = vand.u32 2147483647, %v2460
        %vm2593 = vcmp.eq.f32.partialorder %v2592, 8.507059e+37
        %v2594 = vand.u32 %v2460, 2147483648
        %v2595 = vor.u32 1.1754944e-38, %v2594
        %v2596 = vsel %vm2593, %v2595, %v2591
        %v2597 = vrcp.pop %v2463
        %v2598 = vmul.f32 %v2463, %v2597
        %v2599 = vsub.f32 1.0, %v2598
        %v2600 = vmul.f32 %v2597, %v2599
        %v2601 = vadd.f32 %v2597, %v2600
        %vm2602 = vweird.f32 %v2463
        %vm2603 = vweird.f32 %v2597
        %vm2604 = vmor %vm2602, %vm2603
        %v2605 = vsel %vm2604, %v2597, %v2601
        %v2606 = vand.u32 2147483647, %v2463
        %vm2607 = vcmp.eq.f32.partialorder %v2606, 8.507059e+37
        %v2608 = vand.u32 %v2463, 2147483648
        %v2609 = vor.u32 1.1754944e-38, %v2608
        %v2610 = vsel %vm2607, %v2609, %v2605
        %v2611 = vrcp.pop %v2466
        %v2612 = vmul.f32 %v2466, %v2611
        %v2613 = vsub.f32 1.0, %v2612
        %v2614 = vmul.f32 %v2611, %v2613
        %v2615 = vadd.f32 %v2611, %v2614
        %vm2616 = vweird.f32 %v2466
        %vm2617 = vweird.f32 %v2611
        %vm2618 = vmor %vm2616, %vm2617
        %v2619 = vsel %vm2618, %v2611, %v2615
        %v2620 = vand.u32 2147483647, %v2466
        %vm2621 = vcmp.eq.f32.partialorder %v2620, 8.507059e+37
        %v2622 = vand.u32 %v2466, 2147483648
        %v2623 = vor.u32 1.1754944e-38, %v2622
        %v2624 = vsel %vm2621, %v2623, %v2619
        %v2625 = vrcp.pop %v2469
        %v2626 = vmul.f32 %v2469, %v2625
        %v2627 = vsub.f32 1.0, %v2626
        %v2628 = vmul.f32 %v2625, %v2627
        %v2629 = vadd.f32 %v2625, %v2628
        %vm2630 = vweird.f32 %v2469
        %vm2631 = vweird.f32 %v2625
        %vm2632 = vmor %vm2630, %vm2631
        %v2633 = vsel %vm2632, %v2625, %v2629
        %v2634 = vand.u32 2147483647, %v2469
        %vm2635 = vcmp.eq.f32.partialorder %v2634, 8.507059e+37
        %v2636 = vand.u32 %v2469, 2147483648
        %v2637 = vor.u32 1.1754944e-38, %v2636
        %v2638 = vsel %vm2635, %v2637, %v2633
        %v2639 = vrcp.pop %v2472
        %v2640 = vmul.f32 %v2472, %v2639
        %v2641 = vsub.f32 1.0, %v2640
        %v2642 = vmul.f32 %v2639, %v2641
        %v2643 = vadd.f32 %v2639, %v2642
        %vm2644 = vweird.f32 %v2472
        %vm2645 = vweird.f32 %v2639
        %vm2646 = vmor %vm2644, %vm2645
        %v2647 = vsel %vm2646, %v2639, %v2643
        %v2648 = vand.u32 2147483647, %v2472
        %vm2649 = vcmp.eq.f32.partialorder %v2648, 8.507059e+37
        %v2650 = vand.u32 %v2472, 2147483648
        %v2651 = vor.u32 1.1754944e-38, %v2650
        %v2652 = vsel %vm2649, %v2651, %v2647
        %v2653 = vrcp.pop %v2475
        %v2654 = vmul.f32 %v2475, %v2653
        %v2655 = vsub.f32 1.0, %v2654
        %v2656 = vmul.f32 %v2653, %v2655
        %v2657 = vadd.f32 %v2653, %v2656
        %vm2658 = vweird.f32 %v2475
        %vm2659 = vweird.f32 %v2653
        %vm2660 = vmor %vm2658, %vm2659
        %v2661 = vsel %vm2660, %v2653, %v2657
        %v2662 = vand.u32 2147483647, %v2475
        %vm2663 = vcmp.eq.f32.partialorder %v2662, 8.507059e+37
        %v2664 = vand.u32 %v2475, 2147483648
        %v2665 = vor.u32 1.1754944e-38, %v2664
        %v2666 = vsel %vm2663, %v2665, %v2661
        %v2667 = vrcp.pop %v2478
        %v2668 = vmul.f32 %v2478, %v2667
        %v2669 = vsub.f32 1.0, %v2668
        %v2670 = vmul.f32 %v2667, %v2669
        %v2671 = vadd.f32 %v2667, %v2670
        %vm2672 = vweird.f32 %v2478
        %vm2673 = vweird.f32 %v2667
        %vm2674 = vmor %vm2672, %vm2673
        %v2675 = vsel %vm2674, %v2667, %v2671
        %v2676 = vand.u32 2147483647, %v2478
        %vm2677 = vcmp.eq.f32.partialorder %v2676, 8.507059e+37
        %v2678 = vand.u32 %v2478, 2147483648
        %v2679 = vor.u32 1.1754944e-38, %v2678
        %v2680 = vsel %vm2677, %v2679, %v2675
        %v2681 = vrcp.pop %v2481
        %v2682 = vmul.f32 %v2481, %v2681
        %v2683 = vsub.f32 1.0, %v2682
        %v2684 = vmul.f32 %v2681, %v2683
        %v2685 = vadd.f32 %v2681, %v2684
        %vm2686 = vweird.f32 %v2481
        %vm2687 = vweird.f32 %v2681
        %vm2688 = vmor %vm2686, %vm2687
        %v2689 = vsel %vm2688, %v2681, %v2685
        %v2690 = vand.u32 2147483647, %v2481
        %vm2691 = vcmp.eq.f32.partialorder %v2690, 8.507059e+37
        %v2692 = vand.u32 %v2481, 2147483648
        %v2693 = vor.u32 1.1754944e-38, %v2692
        %v2694 = vsel %vm2691, %v2693, %v2689
        %v2695 = vrcp.pop %v2484
        %v2696 = vmul.f32 %v2484, %v2695
        %v2697 = vsub.f32 1.0, %v2696
        %v2698 = vmul.f32 %v2695, %v2697
        %v2699 = vadd.f32 %v2695, %v2698
        %vm2700 = vweird.f32 %v2484
        %vm2701 = vweird.f32 %v2695
        %vm2702 = vmor %vm2700, %vm2701
        %v2703 = vsel %vm2702, %v2695, %v2699
        %v2704 = vand.u32 2147483647, %v2484
        %vm2705 = vcmp.eq.f32.partialorder %v2704, 8.507059e+37
        %v2706 = vand.u32 %v2484, 2147483648
        %v2707 = vor.u32 1.1754944e-38, %v2706
        %v2708 = vsel %vm2705, %v2707, %v2703
        %v2709 = vmul.f32 %v2406, %v2498
        %v2710 = vmul.f32 %v2408, %v2512
        %v2711 = vmul.f32 %v2410, %v2526
        %v2712 = vmul.f32 %v2412, %v2540
        %v2713 = vmul.f32 %v2414, %v2554
        %v2714 = vmul.f32 %v2416, %v2568
        %v2715 = vmul.f32 %v2418, %v2582
        %v2716 = vmul.f32 %v2420, %v2596
        %v2717 = vmul.f32 %v2422, %v2610
        %v2718 = vmul.f32 %v2424, %v2624
        %v2719 = vmul.f32 %v2426, %v2638
        %v2720 = vmul.f32 %v2428, %v2652
        %v2721 = vmul.f32 %v2430, %v2666
        %v2722 = vmul.f32 %v2432, %v2680
        %v2723 = vmul.f32 %v2434, %v2694
        %v2724 = vmul.f32 %v2436, %v2708
        %v2725 = vpack.c.bf16 %v2709, %v2709
        %v2726 = vpack.c.bf16 %v2710, %v2710
        %v2727 = vpack.c.bf16 %v2711, %v2711
        %v2728 = vpack.c.bf16 %v2712, %v2712
        %v2729 = vpack.c.bf16 %v2713, %v2713
        %v2730 = vpack.c.bf16 %v2714, %v2714
        %v2731 = vpack.c.bf16 %v2715, %v2715
        %v2732 = vpack.c.bf16 %v2716, %v2716
        %v2733 = vpack.c.bf16 %v2717, %v2717
        %v2734 = vpack.c.bf16 %v2718, %v2718
        %v2735 = vpack.c.bf16 %v2719, %v2719
        %v2736 = vpack.c.bf16 %v2720, %v2720
        %v2737 = vpack.c.bf16 %v2721, %v2721
        %v2738 = vpack.c.bf16 %v2722, %v2722
        %v2739 = vpack.c.bf16 %v2723, %v2723
        %v2740 = vpack.c.bf16 %v2724, %v2724
        %2741 = vrot.lane.b32.xlu0 %v821, 88
        %v2742 = vpop.permute.xlu0 %2741
        %v2744 = vsel %vm824, %v2725, 0
        %v2747 = vsel %vm1625, %v2742, 0
        %2749 = vmatpush.bf16.msra.mxu0 0
        %2750 = vmatpush.bf16.msra.mxu0 0
        %2751 = vmatpush.bf16.msra.mxu0 0
        %2752 = vmatpush.bf16.msra.mxu0 0
        %2753 = vmatpush.bf16.msra.mxu0 0
        %2754 = vmatpush.bf16.msra.mxu0 0
        %2755 = vmatpush.bf16.msra.mxu0 0
        %2756 = vmatpush.bf16.msra.mxu0 %v2747
        %2757 = vmatmul.bf16.gmra.mxu0 %v2744
        %v2758 = vpop.f32.mrf.mxu0
        %v2759 = vadd.f32 0.0, %v2758
        %v2760 = vpop.f32.mrf.mxu0
        %2761 = vdwg.mxu0
        %2762 = vrot.lane.b32.xlu0 %v846, 88
        %v2763 = vpop.permute.xlu0 %2762
        %v2765 = vsel %vm824, %v2726, 0
        %v2768 = vsel %vm1625, %v2763, 0
        %2770 = vmatpush.bf16.msra.mxu0 0
        %2771 = vmatpush.bf16.msra.mxu0 0
        %2772 = vmatpush.bf16.msra.mxu0 0
        %2773 = vmatpush.bf16.msra.mxu0 0
        %2774 = vmatpush.bf16.msra.mxu0 0
        %2775 = vmatpush.bf16.msra.mxu0 0
        %2776 = vmatpush.bf16.msra.mxu0 0
        %2777 = vmatpush.bf16.msra.mxu0 %v2768
        %2778 = vmatmul.bf16.gmra.mxu0 %v2765
        %v2779 = vpop.f32.mrf.mxu0
        %v2780 = vadd.f32 0.0, %v2779
        %v2781 = vpop.f32.mrf.mxu0
        %2782 = vdwg.mxu0
        %2783 = vrot.lane.b32.xlu0 %v870, 88
        %v2784 = vpop.permute.xlu0 %2783
        %v2786 = vsel %vm824, %v2727, 0
        %v2789 = vsel %vm1625, %v2784, 0
        %2791 = vmatpush.bf16.msra.mxu0 0
        %2792 = vmatpush.bf16.msra.mxu0 0
        %2793 = vmatpush.bf16.msra.mxu0 0
        %2794 = vmatpush.bf16.msra.mxu0 0
        %2795 = vmatpush.bf16.msra.mxu0 0
        %2796 = vmatpush.bf16.msra.mxu0 0
        %2797 = vmatpush.bf16.msra.mxu0 0
        %2798 = vmatpush.bf16.msra.mxu0 %v2789
        %2799 = vmatmul.bf16.gmra.mxu0 %v2786
        %v2800 = vpop.f32.mrf.mxu0
        %v2801 = vadd.f32 0.0, %v2800
        %v2802 = vpop.f32.mrf.mxu0
        %2803 = vdwg.mxu0
        %2804 = vrot.lane.b32.xlu0 %v894, 88
        %v2805 = vpop.permute.xlu0 %2804
        %v2807 = vsel %vm824, %v2728, 0
        %v2810 = vsel %vm1625, %v2805, 0
        %2812 = vmatpush.bf16.msra.mxu0 0
        %2813 = vmatpush.bf16.msra.mxu0 0
        %2814 = vmatpush.bf16.msra.mxu0 0
        %2815 = vmatpush.bf16.msra.mxu0 0
        %2816 = vmatpush.bf16.msra.mxu0 0
        %2817 = vmatpush.bf16.msra.mxu0 0
        %2818 = vmatpush.bf16.msra.mxu0 0
        %2819 = vmatpush.bf16.msra.mxu0 %v2810
        %2820 = vmatmul.bf16.gmra.mxu0 %v2807
        %v2821 = vpop.f32.mrf.mxu0
        %v2822 = vadd.f32 0.0, %v2821
        %v2823 = vpop.f32.mrf.mxu0
        %2824 = vdwg.mxu0
        %2825 = vrot.lane.b32.xlu0 %v918, 88
        %v2826 = vpop.permute.xlu0 %2825
        %v2828 = vsel %vm824, %v2729, 0
        %v2831 = vsel %vm1625, %v2826, 0
        %2833 = vmatpush.bf16.msra.mxu0 0
        %2834 = vmatpush.bf16.msra.mxu0 0
        %2835 = vmatpush.bf16.msra.mxu0 0
        %2836 = vmatpush.bf16.msra.mxu0 0
        %2837 = vmatpush.bf16.msra.mxu0 0
        %2838 = vmatpush.bf16.msra.mxu0 0
        %2839 = vmatpush.bf16.msra.mxu0 0
        %2840 = vmatpush.bf16.msra.mxu0 %v2831
        %2841 = vmatmul.bf16.gmra.mxu0 %v2828
        %v2842 = vpop.f32.mrf.mxu0
        %v2843 = vadd.f32 0.0, %v2842
        %v2844 = vpop.f32.mrf.mxu0
        %2845 = vdwg.mxu0
        %2846 = vrot.lane.b32.xlu0 %v942, 88
        %v2847 = vpop.permute.xlu0 %2846
        %v2849 = vsel %vm824, %v2730, 0
        %v2852 = vsel %vm1625, %v2847, 0
        %2854 = vmatpush.bf16.msra.mxu0 0
        %2855 = vmatpush.bf16.msra.mxu0 0
        %2856 = vmatpush.bf16.msra.mxu0 0
        %2857 = vmatpush.bf16.msra.mxu0 0
        %2858 = vmatpush.bf16.msra.mxu0 0
        %2859 = vmatpush.bf16.msra.mxu0 0
        %2860 = vmatpush.bf16.msra.mxu0 0
        %2861 = vmatpush.bf16.msra.mxu0 %v2852
        %2862 = vmatmul.bf16.gmra.mxu0 %v2849
        %v2863 = vpop.f32.mrf.mxu0
        %v2864 = vadd.f32 0.0, %v2863
        %v2865 = vpop.f32.mrf.mxu0
        %2866 = vdwg.mxu0
        %2867 = vrot.lane.b32.xlu0 %v966, 88
        %v2868 = vpop.permute.xlu0 %2867
        %v2870 = vsel %vm824, %v2731, 0
        %v2873 = vsel %vm1625, %v2868, 0
        %2875 = vmatpush.bf16.msra.mxu0 0
        %2876 = vmatpush.bf16.msra.mxu0 0
        %2877 = vmatpush.bf16.msra.mxu0 0
        %2878 = vmatpush.bf16.msra.mxu0 0
        %2879 = vmatpush.bf16.msra.mxu0 0
        %2880 = vmatpush.bf16.msra.mxu0 0
        %2881 = vmatpush.bf16.msra.mxu0 0
        %2882 = vmatpush.bf16.msra.mxu0 %v2873
        %2883 = vmatmul.bf16.gmra.mxu0 %v2870
        %v2884 = vpop.f32.mrf.mxu0
        %v2885 = vadd.f32 0.0, %v2884
        %v2886 = vpop.f32.mrf.mxu0
        %2887 = vdwg.mxu0
        %2888 = vrot.lane.b32.xlu0 %v990, 88
        %v2889 = vpop.permute.xlu0 %2888
        %v2891 = vsel %vm824, %v2732, 0
        %v2894 = vsel %vm1625, %v2889, 0
        %2896 = vmatpush.bf16.msra.mxu0 0
        %2897 = vmatpush.bf16.msra.mxu0 0
        %2898 = vmatpush.bf16.msra.mxu0 0
        %2899 = vmatpush.bf16.msra.mxu0 0
        %2900 = vmatpush.bf16.msra.mxu0 0
        %2901 = vmatpush.bf16.msra.mxu0 0
        %2902 = vmatpush.bf16.msra.mxu0 0
        %2903 = vmatpush.bf16.msra.mxu0 %v2894
        %2904 = vmatmul.bf16.gmra.mxu0 %v2891
        %v2905 = vpop.f32.mrf.mxu0
        %v2906 = vadd.f32 0.0, %v2905
        %v2907 = vpop.f32.mrf.mxu0
        %2908 = vdwg.mxu0
        %2909 = vrot.lane.b32.xlu0 %v1014, 88
        %v2910 = vpop.permute.xlu0 %2909
        %v2912 = vsel %vm824, %v2733, 0
        %v2915 = vsel %vm1625, %v2910, 0
        %2917 = vmatpush.bf16.msra.mxu0 0
        %2918 = vmatpush.bf16.msra.mxu0 0
        %2919 = vmatpush.bf16.msra.mxu0 0
        %2920 = vmatpush.bf16.msra.mxu0 0
        %2921 = vmatpush.bf16.msra.mxu0 0
        %2922 = vmatpush.bf16.msra.mxu0 0
        %2923 = vmatpush.bf16.msra.mxu0 0
        %2924 = vmatpush.bf16.msra.mxu0 %v2915
        %2925 = vmatmul.bf16.gmra.mxu0 %v2912
        %v2926 = vpop.f32.mrf.mxu0
        %v2927 = vadd.f32 0.0, %v2926
        %v2928 = vpop.f32.mrf.mxu0
        %2929 = vdwg.mxu0
        %2930 = vrot.lane.b32.xlu0 %v1038, 88
        %v2931 = vpop.permute.xlu0 %2930
        %v2933 = vsel %vm824, %v2734, 0
        %v2936 = vsel %vm1625, %v2931, 0
        %2938 = vmatpush.bf16.msra.mxu0 0
        %2939 = vmatpush.bf16.msra.mxu0 0
        %2940 = vmatpush.bf16.msra.mxu0 0
        %2941 = vmatpush.bf16.msra.mxu0 0
        %2942 = vmatpush.bf16.msra.mxu0 0
        %2943 = vmatpush.bf16.msra.mxu0 0
        %2944 = vmatpush.bf16.msra.mxu0 0
        %2945 = vmatpush.bf16.msra.mxu0 %v2936
        %2946 = vmatmul.bf16.gmra.mxu0 %v2933
        %v2947 = vpop.f32.mrf.mxu0
        %v2948 = vadd.f32 0.0, %v2947
        %v2949 = vpop.f32.mrf.mxu0
        %2950 = vdwg.mxu0
        %2951 = vrot.lane.b32.xlu0 %v1062, 88
        %v2952 = vpop.permute.xlu0 %2951
        %v2954 = vsel %vm824, %v2735, 0
        %v2957 = vsel %vm1625, %v2952, 0
        %2959 = vmatpush.bf16.msra.mxu0 0
        %2960 = vmatpush.bf16.msra.mxu0 0
        %2961 = vmatpush.bf16.msra.mxu0 0
        %2962 = vmatpush.bf16.msra.mxu0 0
        %2963 = vmatpush.bf16.msra.mxu0 0
        %2964 = vmatpush.bf16.msra.mxu0 0
        %2965 = vmatpush.bf16.msra.mxu0 0
        %2966 = vmatpush.bf16.msra.mxu0 %v2957
        %2967 = vmatmul.bf16.gmra.mxu0 %v2954
        %v2968 = vpop.f32.mrf.mxu0
        %v2969 = vadd.f32 0.0, %v2968
        %v2970 = vpop.f32.mrf.mxu0
        %2971 = vdwg.mxu0
        %2972 = vrot.lane.b32.xlu0 %v1086, 88
        %v2973 = vpop.permute.xlu0 %2972
        %v2975 = vsel %vm824, %v2736, 0
        %v2978 = vsel %vm1625, %v2973, 0
        %2980 = vmatpush.bf16.msra.mxu0 0
        %2981 = vmatpush.bf16.msra.mxu0 0
        %2982 = vmatpush.bf16.msra.mxu0 0
        %2983 = vmatpush.bf16.msra.mxu0 0
        %2984 = vmatpush.bf16.msra.mxu0 0
        %2985 = vmatpush.bf16.msra.mxu0 0
        %2986 = vmatpush.bf16.msra.mxu0 0
        %2987 = vmatpush.bf16.msra.mxu0 %v2978
        %2988 = vmatmul.bf16.gmra.mxu0 %v2975
        %v2989 = vpop.f32.mrf.mxu0
        %v2990 = vadd.f32 0.0, %v2989
        %v2991 = vpop.f32.mrf.mxu0
        %2992 = vdwg.mxu0
        %2993 = vrot.lane.b32.xlu0 %v1110, 88
        %v2994 = vpop.permute.xlu0 %2993
        %v2996 = vsel %vm824, %v2737, 0
        %v2999 = vsel %vm1625, %v2994, 0
        %3001 = vmatpush.bf16.msra.mxu0 0
        %3002 = vmatpush.bf16.msra.mxu0 0
        %3003 = vmatpush.bf16.msra.mxu0 0
        %3004 = vmatpush.bf16.msra.mxu0 0
        %3005 = vmatpush.bf16.msra.mxu0 0
        %3006 = vmatpush.bf16.msra.mxu0 0
        %3007 = vmatpush.bf16.msra.mxu0 0
        %3008 = vmatpush.bf16.msra.mxu0 %v2999
        %3009 = vmatmul.bf16.gmra.mxu0 %v2996
        %v3010 = vpop.f32.mrf.mxu0
        %v3011 = vadd.f32 0.0, %v3010
        %v3012 = vpop.f32.mrf.mxu0
        %3013 = vdwg.mxu0
        %3014 = vrot.lane.b32.xlu0 %v1134, 88
        %v3015 = vpop.permute.xlu0 %3014
        %v3017 = vsel %vm824, %v2738, 0
        %v3020 = vsel %vm1625, %v3015, 0
        %3022 = vmatpush.bf16.msra.mxu0 0
        %3023 = vmatpush.bf16.msra.mxu0 0
        %3024 = vmatpush.bf16.msra.mxu0 0
        %3025 = vmatpush.bf16.msra.mxu0 0
        %3026 = vmatpush.bf16.msra.mxu0 0
        %3027 = vmatpush.bf16.msra.mxu0 0
        %3028 = vmatpush.bf16.msra.mxu0 0
        %3029 = vmatpush.bf16.msra.mxu0 %v3020
        %3030 = vmatmul.bf16.gmra.mxu0 %v3017
        %v3031 = vpop.f32.mrf.mxu0
        %v3032 = vadd.f32 0.0, %v3031
        %v3033 = vpop.f32.mrf.mxu0
        %3034 = vdwg.mxu0
        %3035 = vrot.lane.b32.xlu0 %v1158, 88
        %v3036 = vpop.permute.xlu0 %3035
        %v3038 = vsel %vm824, %v2739, 0
        %v3041 = vsel %vm1625, %v3036, 0
        %3043 = vmatpush.bf16.msra.mxu0 0
        %3044 = vmatpush.bf16.msra.mxu0 0
        %3045 = vmatpush.bf16.msra.mxu0 0
        %3046 = vmatpush.bf16.msra.mxu0 0
        %3047 = vmatpush.bf16.msra.mxu0 0
        %3048 = vmatpush.bf16.msra.mxu0 0
        %3049 = vmatpush.bf16.msra.mxu0 0
        %3050 = vmatpush.bf16.msra.mxu0 %v3041
        %3051 = vmatmul.bf16.gmra.mxu0 %v3038
        %v3052 = vpop.f32.mrf.mxu0
        %v3053 = vadd.f32 0.0, %v3052
        %v3054 = vpop.f32.mrf.mxu0
        %3055 = vdwg.mxu0
        %3056 = vrot.lane.b32.xlu0 %v1182, 88
        %v3057 = vpop.permute.xlu0 %3056
        %v3059 = vsel %vm824, %v2740, 0
        %v3062 = vsel %vm1625, %v3057, 0
        %3064 = vmatpush.bf16.msra.mxu0 0
        %3065 = vmatpush.bf16.msra.mxu0 0
        %3066 = vmatpush.bf16.msra.mxu0 0
        %3067 = vmatpush.bf16.msra.mxu0 0
        %3068 = vmatpush.bf16.msra.mxu0 0
        %3069 = vmatpush.bf16.msra.mxu0 0
        %3070 = vmatpush.bf16.msra.mxu0 0
        %3071 = vmatpush.bf16.msra.mxu0 %v3062
        %3072 = vmatmul.bf16.gmra.mxu0 %v3059
        %v3073 = vpop.f32.mrf.mxu0
        %v3074 = vadd.f32 0.0, %v3073
        %v3075 = vpop.f32.mrf.mxu0
        %3076 = vdwg.mxu0
        %3093 = vrot.lane.b32.xlu0 %v2759, 8
        %v3094 = vpop.permute.xlu0 %3093
        %3095 = vrot.lane.b32.xlu0 %v2780, 8
        %v3096 = vpop.permute.xlu0 %3095
        %3097 = vrot.lane.b32.xlu0 %v2801, 8
        %v3098 = vpop.permute.xlu0 %3097
        %3099 = vrot.lane.b32.xlu0 %v2822, 8
        %v3100 = vpop.permute.xlu0 %3099
        %3101 = vrot.lane.b32.xlu0 %v2843, 8
        %v3102 = vpop.permute.xlu0 %3101
        %3103 = vrot.lane.b32.xlu0 %v2864, 8
        %v3104 = vpop.permute.xlu0 %3103
        %3105 = vrot.lane.b32.xlu0 %v2885, 8
        %v3106 = vpop.permute.xlu0 %3105
        %3107 = vrot.lane.b32.xlu0 %v2906, 8
        %v3108 = vpop.permute.xlu0 %3107
        %3109 = vrot.lane.b32.xlu0 %v2927, 8
        %v3110 = vpop.permute.xlu0 %3109
        %3111 = vrot.lane.b32.xlu0 %v2948, 8
        %v3112 = vpop.permute.xlu0 %3111
        %3113 = vrot.lane.b32.xlu0 %v2969, 8
        %v3114 = vpop.permute.xlu0 %3113
        %3115 = vrot.lane.b32.xlu0 %v2990, 8
        %v3116 = vpop.permute.xlu0 %3115
        %3117 = vrot.lane.b32.xlu0 %v3011, 8
        %v3118 = vpop.permute.xlu0 %3117
        %3119 = vrot.lane.b32.xlu0 %v3032, 8
        %v3120 = vpop.permute.xlu0 %3119
        %3121 = vrot.lane.b32.xlu0 %v3053, 8
        %v3122 = vpop.permute.xlu0 %3121
        %3123 = vrot.lane.b32.xlu0 %v3074, 8
        %v3124 = vpop.permute.xlu0 %3123
        %v3141 = vsel %vm824, %v1639, %v3094
        %v3142 = vsel %vm824, %v1660, %v3096
        %v3143 = vsel %vm824, %v1681, %v3098
        %v3144 = vsel %vm824, %v1702, %v3100
        %v3145 = vsel %vm824, %v1723, %v3102
        %v3146 = vsel %vm824, %v1744, %v3104
        %v3147 = vsel %vm824, %v1765, %v3106
        %v3148 = vsel %vm824, %v1786, %v3108
        %v3149 = vsel %vm824, %v1807, %v3110
        %v3150 = vsel %vm824, %v1828, %v3112
        %v3151 = vsel %vm824, %v1849, %v3114
        %v3152 = vsel %vm824, %v1870, %v3116
        %v3153 = vsel %vm824, %v1891, %v3118
        %v3154 = vsel %vm824, %v1912, %v3120
        %v3155 = vsel %vm824, %v1933, %v3122
        %v3156 = vsel %vm824, %v1954, %v3124
        %v3157 = vpack.c.bf16 %v3142, %v3141
        %v3158 = vpack.c.bf16 %v3144, %v3143
        %v3159 = vpack.c.bf16 %v3146, %v3145
        %v3160 = vpack.c.bf16 %v3148, %v3147
        %v3161 = vpack.c.bf16 %v3150, %v3149
        %v3162 = vpack.c.bf16 %v3152, %v3151
        %v3163 = vpack.c.bf16 %v3154, %v3153
        %v3164 = vpack.c.bf16 %v3156, %v3155
        %v3165 = vld [vmem:[%s5] sm:$0xf]
        %v3166 = vld [vmem:[%s5 + $0x4] sm:$0xf]
        %v3167 = vld [vmem:[%s6] sm:$0x1]
        %v3169 = vperm.slane %v3167, 0
        %v3173 = vunpack.c.l.b16 %v3165
        %v3174 = vunpack.c.l.b16 %v3166
        %v3175 = vpack.c.b16 %v3174, %v3173
        %v3178 = vsel %vm381, %v3157, 0
        %v3181 = vsel %vm381, %v3158, 0
        %v3184 = vsel %vm381, %v3159, 0
        %v3187 = vsel %vm381, %v3160, 0
        %v3190 = vsel %vm381, %v3161, 0
        %v3193 = vsel %vm381, %v3162, 0
        %v3196 = vsel %vm381, %v3163, 0
        %v3199 = vsel %vm381, %v3164, 0
        %3201 = vmatpush.bf16.msra.mxu0 0
        %3202 = vmatpush.bf16.msra.mxu0 0
        %3203 = vmatpush.bf16.msra.mxu0 0
        %3204 = vmatpush.bf16.msra.mxu0 0
        %3205 = vmatpush.bf16.msra.mxu0 0
        %3206 = vmatpush.bf16.msra.mxu0 0
        %3207 = vmatpush.bf16.msra.mxu0 0
        %3208 = vmatpush.bf16.msra.mxu0 %v3175
        %3209 = vmatmul.bf16.gmra.mxu0 %v3178
        %v3210 = vpop.f32.mrf.mxu0
        %v3211 = vadd.f32 %v3169, %v3210
        %v3212 = vpop.f32.mrf.mxu0
        %v3213 = vadd.f32 %v3169, %v3212
        %3214 = vmatmul.bf16.gmra.mxu0 %v3181
        %v3215 = vpop.f32.mrf.mxu0
        %v3216 = vadd.f32 %v3169, %v3215
        %v3217 = vpop.f32.mrf.mxu0
        %v3218 = vadd.f32 %v3169, %v3217
        %3219 = vmatmul.bf16.gmra.mxu0 %v3184
        %v3220 = vpop.f32.mrf.mxu0
        %v3221 = vadd.f32 %v3169, %v3220
        %v3222 = vpop.f32.mrf.mxu0
        %v3223 = vadd.f32 %v3169, %v3222
        %3224 = vmatmul.bf16.gmra.mxu0 %v3187
        %v3225 = vpop.f32.mrf.mxu0
        %v3226 = vadd.f32 %v3169, %v3225
        %v3227 = vpop.f32.mrf.mxu0
        %v3228 = vadd.f32 %v3169, %v3227
        %3229 = vmatmul.bf16.gmra.mxu0 %v3190
        %v3230 = vpop.f32.mrf.mxu0
        %v3231 = vadd.f32 %v3169, %v3230
        %v3232 = vpop.f32.mrf.mxu0
        %v3233 = vadd.f32 %v3169, %v3232
        %3234 = vmatmul.bf16.gmra.mxu0 %v3193
        %v3235 = vpop.f32.mrf.mxu0
        %v3236 = vadd.f32 %v3169, %v3235
        %v3237 = vpop.f32.mrf.mxu0
        %v3238 = vadd.f32 %v3169, %v3237
        %3239 = vmatmul.bf16.gmra.mxu0 %v3196
        %v3240 = vpop.f32.mrf.mxu0
        %v3241 = vadd.f32 %v3169, %v3240
        %v3242 = vpop.f32.mrf.mxu0
        %v3243 = vadd.f32 %v3169, %v3242
        %3244 = vmatmul.bf16.gmra.mxu0 %v3199
        %v3245 = vpop.f32.mrf.mxu0
        %v3246 = vadd.f32 %v3169, %v3245
        %v3247 = vpop.f32.mrf.mxu0
        %v3248 = vadd.f32 %v3169, %v3247
        %3249 = vdwg.mxu0
        %v3250 = vmax.f32 %v3211, 0.0
        %v3251 = vmax.f32 %v3213, 0.0
        %v3252 = vmax.f32 %v3216, 0.0
        %v3253 = vmax.f32 %v3218, 0.0
        %v3254 = vmax.f32 %v3221, 0.0
        %v3255 = vmax.f32 %v3223, 0.0
        %v3256 = vmax.f32 %v3226, 0.0
        %v3257 = vmax.f32 %v3228, 0.0
        %v3258 = vmax.f32 %v3231, 0.0
        %v3259 = vmax.f32 %v3233, 0.0
        %v3260 = vmax.f32 %v3236, 0.0
        %v3261 = vmax.f32 %v3238, 0.0
        %v3262 = vmax.f32 %v3241, 0.0
        %v3263 = vmax.f32 %v3243, 0.0
        %v3264 = vmax.f32 %v3246, 0.0
        %v3265 = vmax.f32 %v3248, 0.0
        %v3266 = vrot.slane %v3252, 4
        %v3267 = vsel %vm579, %v3266, %v3250
        %v3268 = vrot.slane %v3250, 4
        %v3269 = vsel %vm579, %v3252, %v3268
        %v3271 = vunpack.c.l.s4 1983009808
        %v3272 = vunpack.c.0.s8 %v3271
        %v3273 = vperm.slane %v3267, %v3272
        %v3275 = vunpack.c.l.s4 1983009808
        %v3276 = vunpack.c.0.s8 %v3275
        %v3277 = vperm.slane %v3269, %v3276
        %v3278 = vrot.slane %v3253, 4
        %v3279 = vsel %vm579, %v3278, %v3251
        %v3280 = vrot.slane %v3251, 4
        %v3281 = vsel %vm579, %v3253, %v3280
        %v3283 = vunpack.c.l.s4 1983009808
        %v3284 = vunpack.c.0.s8 %v3283
        %v3285 = vperm.slane %v3279, %v3284
        %v3287 = vunpack.c.l.s4 1983009808
        %v3288 = vunpack.c.0.s8 %v3287
        %v3289 = vperm.slane %v3281, %v3288
        %v3290 = vrot.slane %v3256, 4
        %v3291 = vsel %vm579, %v3290, %v3254
        %v3292 = vrot.slane %v3254, 4
        %v3293 = vsel %vm579, %v3256, %v3292
        %v3295 = vunpack.c.l.s4 1983009808
        %v3296 = vunpack.c.0.s8 %v3295
        %v3297 = vperm.slane %v3291, %v3296
        %v3299 = vunpack.c.l.s4 1983009808
        %v3300 = vunpack.c.0.s8 %v3299
        %v3301 = vperm.slane %v3293, %v3300
        %v3302 = vrot.slane %v3257, 4
        %v3303 = vsel %vm579, %v3302, %v3255
        %v3304 = vrot.slane %v3255, 4
        %v3305 = vsel %vm579, %v3257, %v3304
        %v3307 = vunpack.c.l.s4 1983009808
        %v3308 = vunpack.c.0.s8 %v3307
        %v3309 = vperm.slane %v3303, %v3308
        %v3311 = vunpack.c.l.s4 1983009808
        %v3312 = vunpack.c.0.s8 %v3311
        %v3313 = vperm.slane %v3305, %v3312
        %v3314 = vrot.slane %v3285, 4
        %v3315 = vsel %vm579, %v3314, %v3273
        %v3316 = vrot.slane %v3273, 4
        %v3317 = vsel %vm579, %v3285, %v3316
        %v3319 = vunpack.c.l.s4 1934713408
        %v3320 = vunpack.c.0.s8 %v3319
        %v3321 = vperm.slane %v3315, %v3320
        %v3323 = vunpack.c.l.s4 1934713408
        %v3324 = vunpack.c.0.s8 %v3323
        %v3325 = vperm.slane %v3317, %v3324
        %v3326 = vrot.slane %v3289, 4
        %v3327 = vsel %vm579, %v3326, %v3277
        %v3328 = vrot.slane %v3277, 4
        %v3329 = vsel %vm579, %v3289, %v3328
        %v3331 = vunpack.c.l.s4 1934713408
        %v3332 = vunpack.c.0.s8 %v3331
        %v3333 = vperm.slane %v3327, %v3332
        %v3335 = vunpack.c.l.s4 1934713408
        %v3336 = vunpack.c.0.s8 %v3335
        %v3337 = vperm.slane %v3329, %v3336
        %v3338 = vrot.slane %v3309, 4
        %v3339 = vsel %vm579, %v3338, %v3297
        %v3340 = vrot.slane %v3297, 4
        %v3341 = vsel %vm579, %v3309, %v3340
        %v3343 = vunpack.c.l.s4 1934713408
        %v3344 = vunpack.c.0.s8 %v3343
        %v3345 = vperm.slane %v3339, %v3344
        %v3347 = vunpack.c.l.s4 1934713408
        %v3348 = vunpack.c.0.s8 %v3347
        %v3349 = vperm.slane %v3341, %v3348
        %v3350 = vrot.slane %v3313, 4
        %v3351 = vsel %vm579, %v3350, %v3301
        %v3352 = vrot.slane %v3301, 4
        %v3353 = vsel %vm579, %v3313, %v3352
        %v3355 = vunpack.c.l.s4 1934713408
        %v3356 = vunpack.c.0.s8 %v3355
        %v3357 = vperm.slane %v3351, %v3356
        %v3359 = vunpack.c.l.s4 1934713408
        %v3360 = vunpack.c.0.s8 %v3359
        %v3361 = vperm.slane %v3353, %v3360
        %v3362 = vrot.slane %v3345, 4
        %v3363 = vsel %vm579, %v3362, %v3321
        %v3364 = vrot.slane %v3321, 4
        %v3365 = vsel %vm579, %v3345, %v3364
        %v3366 = vrot.slane %v3349, 4
        %v3367 = vsel %vm579, %v3366, %v3325
        %v3368 = vrot.slane %v3325, 4
        %v3369 = vsel %vm579, %v3349, %v3368
        %v3370 = vrot.slane %v3357, 4
        %v3371 = vsel %vm579, %v3370, %v3333
        %v3372 = vrot.slane %v3333, 4
        %v3373 = vsel %vm579, %v3357, %v3372
        %v3374 = vrot.slane %v3361, 4
        %v3375 = vsel %vm579, %v3374, %v3337
        %v3376 = vrot.slane %v3337, 4
        %v3377 = vsel %vm579, %v3361, %v3376
        %v3378 = vrot.slane %v3260, 4
        %v3379 = vsel %vm579, %v3378, %v3258
        %v3380 = vrot.slane %v3258, 4
        %v3381 = vsel %vm579, %v3260, %v3380
        %v3383 = vunpack.c.l.s4 1983009808
        %v3384 = vunpack.c.0.s8 %v3383
        %v3385 = vperm.slane %v3379, %v3384
        %v3387 = vunpack.c.l.s4 1983009808
        %v3388 = vunpack.c.0.s8 %v3387
        %v3389 = vperm.slane %v3381, %v3388
        %v3390 = vrot.slane %v3261, 4
        %v3391 = vsel %vm579, %v3390, %v3259
        %v3392 = vrot.slane %v3259, 4
        %v3393 = vsel %vm579, %v3261, %v3392
        %v3395 = vunpack.c.l.s4 1983009808
        %v3396 = vunpack.c.0.s8 %v3395
        %v3397 = vperm.slane %v3391, %v3396
        %v3399 = vunpack.c.l.s4 1983009808
        %v3400 = vunpack.c.0.s8 %v3399
        %v3401 = vperm.slane %v3393, %v3400
        %v3402 = vrot.slane %v3264, 4
        %v3403 = vsel %vm579, %v3402, %v3262
        %v3404 = vrot.slane %v3262, 4
        %v3405 = vsel %vm579, %v3264, %v3404
        %v3407 = vunpack.c.l.s4 1983009808
        %v3408 = vunpack.c.0.s8 %v3407
        %v3409 = vperm.slane %v3403, %v3408
        %v3411 = vunpack.c.l.s4 1983009808
        %v3412 = vunpack.c.0.s8 %v3411
        %v3413 = vperm.slane %v3405, %v3412
        %v3414 = vrot.slane %v3265, 4
        %v3415 = vsel %vm579, %v3414, %v3263
        %v3416 = vrot.slane %v3263, 4
        %v3417 = vsel %vm579, %v3265, %v3416
        %v3419 = vunpack.c.l.s4 1983009808
        %v3420 = vunpack.c.0.s8 %v3419
        %v3421 = vperm.slane %v3415, %v3420
        %v3423 = vunpack.c.l.s4 1983009808
        %v3424 = vunpack.c.0.s8 %v3423
        %v3425 = vperm.slane %v3417, %v3424
        %v3426 = vrot.slane %v3397, 4
        %v3427 = vsel %vm579, %v3426, %v3385
        %v3428 = vrot.slane %v3385, 4
        %v3429 = vsel %vm579, %v3397, %v3428
        %v3431 = vunpack.c.l.s4 1934713408
        %v3432 = vunpack.c.0.s8 %v3431
        %v3433 = vperm.slane %v3427, %v3432
        %v3435 = vunpack.c.l.s4 1934713408
        %v3436 = vunpack.c.0.s8 %v3435
        %v3437 = vperm.slane %v3429, %v3436
        %v3438 = vrot.slane %v3401, 4
        %v3439 = vsel %vm579, %v3438, %v3389
        %v3440 = vrot.slane %v3389, 4
        %v3441 = vsel %vm579, %v3401, %v3440
        %v3443 = vunpack.c.l.s4 1934713408
        %v3444 = vunpack.c.0.s8 %v3443
        %v3445 = vperm.slane %v3439, %v3444
        %v3447 = vunpack.c.l.s4 1934713408
        %v3448 = vunpack.c.0.s8 %v3447
        %v3449 = vperm.slane %v3441, %v3448
        %v3450 = vrot.slane %v3421, 4
        %v3451 = vsel %vm579, %v3450, %v3409
        %v3452 = vrot.slane %v3409, 4
        %v3453 = vsel %vm579, %v3421, %v3452
        %v3455 = vunpack.c.l.s4 1934713408
        %v3456 = vunpack.c.0.s8 %v3455
        %v3457 = vperm.slane %v3451, %v3456
        %v3459 = vunpack.c.l.s4 1934713408
        %v3460 = vunpack.c.0.s8 %v3459
        %v3461 = vperm.slane %v3453, %v3460
        %v3462 = vrot.slane %v3425, 4
        %v3463 = vsel %vm579, %v3462, %v3413
        %v3464 = vrot.slane %v3413, 4
        %v3465 = vsel %vm579, %v3425, %v3464
        %v3467 = vunpack.c.l.s4 1934713408
        %v3468 = vunpack.c.0.s8 %v3467
        %v3469 = vperm.slane %v3463, %v3468
        %v3471 = vunpack.c.l.s4 1934713408
        %v3472 = vunpack.c.0.s8 %v3471
        %v3473 = vperm.slane %v3465, %v3472
        %v3474 = vrot.slane %v3457, 4
        %v3475 = vsel %vm579, %v3474, %v3433
        %v3476 = vrot.slane %v3433, 4
        %v3477 = vsel %vm579, %v3457, %v3476
        %v3478 = vrot.slane %v3461, 4
        %v3479 = vsel %vm579, %v3478, %v3437
        %v3480 = vrot.slane %v3437, 4
        %v3481 = vsel %vm579, %v3461, %v3480
        %v3482 = vrot.slane %v3469, 4
        %v3483 = vsel %vm579, %v3482, %v3445
        %v3484 = vrot.slane %v3445, 4
        %v3485 = vsel %vm579, %v3469, %v3484
        %v3486 = vrot.slane %v3473, 4
        %v3487 = vsel %vm579, %v3486, %v3449
        %v3488 = vrot.slane %v3449, 4
        %v3489 = vsel %vm579, %v3473, %v3488
        %v3490 = vpack.c.bf16 %v3363, %v3363
        %v3491 = vpack.c.bf16 %v3475, %v3475
        %v3492 = vpack.c.bf16 %v3365, %v3365
        %v3493 = vpack.c.bf16 %v3477, %v3477
        %v3494 = vpack.c.bf16 %v3367, %v3367
        %v3495 = vpack.c.bf16 %v3479, %v3479
        %v3496 = vpack.c.bf16 %v3369, %v3369
        %v3497 = vpack.c.bf16 %v3481, %v3481
        %v3498 = vpack.c.bf16 %v3371, %v3371
        %v3499 = vpack.c.bf16 %v3483, %v3483
        %v3500 = vpack.c.bf16 %v3373, %v3373
        %v3501 = vpack.c.bf16 %v3485, %v3485
        %v3502 = vpack.c.bf16 %v3375, %v3375
        %v3503 = vpack.c.bf16 %v3487, %v3487
        %v3504 = vpack.c.bf16 %v3377, %v3377
        %v3505 = vpack.c.bf16 %v3489, %v3489
        %vm3506 = vcmask 125952
        %3507 = vst.msk [vmem:[%s320] sm:$0xf] %vm3506, %v3490
        %3508 = vst.msk [vmem:[%s320 + $0x4] sm:$0xf] %vm3506, %v3491
        %3509 = vst.msk [vmem:[%s320 + $0x8] sm:$0xf] %vm3506, %v3492
        %3510 = vst.msk [vmem:[%s320 + $0xc] sm:$0xf] %vm3506, %v3493
        %3511 = vst.msk [vmem:[%s320 + $0x10] sm:$0xf] %vm3506, %v3494
        %3512 = vst.msk [vmem:[%s320 + $0x14] sm:$0xf] %vm3506, %v3495
        %3513 = vst.msk [vmem:[%s320 + $0x18] sm:$0xf] %vm3506, %v3496
        %3514 = vst.msk [vmem:[%s320 + $0x1c] sm:$0xf] %vm3506, %v3497
        %3515 = vst.msk [vmem:[%s320 + $0x20] sm:$0xf] %vm3506, %v3498
        %3516 = vst.msk [vmem:[%s320 + $0x24] sm:$0xf] %vm3506, %v3499
        %3517 = vst.msk [vmem:[%s320 + $0x28] sm:$0xf] %vm3506, %v3500
        %3518 = vst.msk [vmem:[%s320 + $0x2c] sm:$0xf] %vm3506, %v3501
        %3519 = vst.msk [vmem:[%s320 + $0x30] sm:$0xf] %vm3506, %v3502
        %3520 = vst.msk [vmem:[%s320 + $0x34] sm:$0xf] %vm3506, %v3503
        %3521 = vst.msk [vmem:[%s320 + $0x38] sm:$0xf] %vm3506, %v3504
        %3522 = vst.msk [vmem:[%s320 + $0x3c] sm:$0xf] %vm3506, %v3505
        %p3523 = scmp.lt.s32.totalorder %s21, 1
        %s3524 = scalar_select %p3523, %s21, 1
        %s3525 = smul.addr %s3524, 16
        %s3526 = smul.addr %s3525, 4
        %s3527 = scalar_lea.vmem %s7, %s3526
        // Predicated region
        $region53: #{_lambda_.4} parent=47 // pred_check
          %p3528 = pneg %p196
        $region54: #{_lambda_.4} parent=47 // pred_check_branch
          %3530 = sbr.rel (%p3528) target = $region56
        $region55: #{_lambda_.4} parent=47 // pred_region
          _
        $region56: #{_lambda_.4} parent=47 // pred_fallthru
          _
      $region48: #{_lambda_.4} parent=5 // pred_fallthru
        _
      %p3531 = scmp.le.s32.totalorder 2, %s16
      // Predicated region
      $region57: #{_lambda_.4} parent=5 // pred_check
        %p3532 = pneg %p3531
      $region58: #{_lambda_.4} parent=5 // pred_check_branch
        %3534 = sbr.rel (%p3532) target = $region60
      $region59: #{_lambda_.4} parent=5 // pred_region
        %s3535 = ssub.s32 %s16, 2
        // Predicated region
        $region61: #{_lambda_.4} parent=59 // pred_check
          %p3536 = pneg %p202
        $region62: #{_lambda_.4} parent=59 // pred_check_branch
          %3538 = sbr.rel (%p3536) target = $region64
        $region63: #{_lambda_.4} parent=59 // pred_region
          %p3539 = scmp.lt.s32.totalorder %s22, 1
          %s3540 = scalar_select %p3539, %s22, 1
          %s3541 = smul.addr %s3540, 16
          %s3542 = smul.addr %s3541, 4
          %s3543 = scalar_lea.vmem %s7, %s3542
        $region64: #{_lambda_.4} parent=59 // pred_fallthru
          _
      $region60: #{_lambda_.4} parent=5 // pred_fallthru
        _
    $region6: #{_lambda_.4} parent=1 // loop_footer
      %s20 = sadd.s32 1, %s16
    $region7: #{_lambda_.4} parent=1 // loop_footer_branch
      %15 = sbr.rel target = $region3
    $region8: #{_lambda_.4} parent=1 // loop_exit
      _
    %3544 = vsyncpa [#allocation3], 1
    %s3545 = scalar_lea.sflag [#allocation3], 1
    %3546 = vsyncpa %s3545, 1

</llo_original>
